<compile_context>
chip_gen: v6e
topology: v6e:2x2x1
jax: 0.10.0
libtpu: 0.0.40
codegen_flags: <defaults>
</compile_context>

<pallas_src>
import jax
import jax.numpy as jnp
from jax.experimental import pallas as pl
from jax.experimental.pallas import tpu as pltpu

D_IN = 784            # logical feature dim (PyTorch Linear(784, 784))
D_PAD = 896           # 7 * 128 -> lane-dense MXU tiles and unmasked stores
DEFAULT_TB_MAX = 512  # max batch tile; adaptive tiling picks <= this


def _round_up(n, m):
    return ((n + m - 1) // m) * m


def _ceil_div(a, b):
    return -(-a // b)


def _leaky_relu(x, slope=0.2):
    return jnp.where(x >= 0, x, slope * x)


def mnist_poisoner_kernel(x_ref, w1_ref, b1_ref, w2_ref, b2_ref, w3_ref, b3_ref,
                          o_ref):
    # x_ref: (TB, 896) in compute dtype (host-cast, no in-kernel cast needed).
    # w*_ref: (896, 896) [in, out] in compute dtype; b*_ref: (1, 896) f32.
    cdt = w1_ref.dtype  # MXU compute dtype (bf16 or f32); accumulate in f32.

    h = jnp.dot(x_ref[...], w1_ref[...],
                preferred_element_type=jnp.float32) + b1_ref[...]
    h = _leaky_relu(h).astype(cdt)

    h = jnp.dot(h, w2_ref[...],
                preferred_element_type=jnp.float32) + b2_ref[...]
    h = _leaky_relu(h).astype(cdt)

    h = jnp.dot(h, w3_ref[...],
                preferred_element_type=jnp.float32) + b3_ref[...]
    o_ref[...] = jnp.tanh(h).astype(o_ref.dtype)


def prepare_params(params, *, compute_dtype=jnp.bfloat16):
    """One-time prep: transpose to (in, out), zero-pad 784 -> 896, cast weights.

    params: PyTorch layout — w* is (out, in) = (784, 784), b* is (784,).
    Default compute dtype is bf16 (MXU-native on v5e/v6e/v7x); pass
    compute_dtype=jnp.float32 for accuracy mode.  Do this once at load time,
    not per forward call.
    """
    pad = D_PAD - D_IN

    def prep_w(w):
        wt = jnp.asarray(w).T.astype(compute_dtype)              # (in, out)
        return jnp.pad(wt, ((0, pad), (0, pad)))                  # (896, 896)

    def prep_b(b):
        b = jnp.asarray(b, jnp.float32).reshape(1, D_IN)
        return jnp.pad(b, ((0, 0), (0, pad)))                     # (1, 896)

    return (prep_w(params["w1"]), prep_b(params["b1"]),
            prep_w(params["w2"]), prep_b(params["b2"]),
            prep_w(params["w3"]), prep_b(params["b3"]))


def _pick_tiling(B, tb_max):
    """Adaptive batch tiling: minimize padded rows, keep grid >= 2 for v7x."""
    n_tiles = max(1, _ceil_div(B, tb_max))
    if B > 128 and n_tiles < 2:
        n_tiles = 2          # shard the 'parallel' axis across both v7x TCs
    tb = _round_up(_ceil_div(B, n_tiles), 8)
    bp = n_tiles * tb
    return n_tiles, tb, bp


def mnist_poisoner_forward(x, prepped, *, tb_max=DEFAULT_TB_MAX,
                           return_padded=False):
    """x: (B, 784). prepped: output of prepare_params()."""
    B, D = x.shape
    assert D == D_IN

    w1, b1, w2, b2, w3, b3 = prepped
    cdt = w1.dtype
    itemsize = jnp.dtype(cdt).itemsize

    n_tiles, tb, bp = _pick_tiling(B, tb_max)
    grid = (n_tiles,)

    # Cast to the compute dtype on the host (halves input DMA on bf16) and
    # zero-pad batch rows + feature columns. Zero-padded weight cols/bias keep
    # padded output columns exactly zero; both pads are sliced off below.
    xp = jnp.pad(x.astype(cdt), ((0, bp - B), (0, D_PAD - D_IN)))

    # Weights/biases are grid-invariant -> single-buffer them (VMEM-resident).
    weight_spec = pl.BlockSpec((D_PAD, D_PAD), lambda i: (0, 0),
                               pipeline_mode=pl.Buffered(1))
    bias_spec = pl.BlockSpec((1, D_PAD), lambda i: (0, 0),
                             pipeline_mode=pl.Buffered(1))

    # VMEM budget derived from the actual footprint (+40% headroom), clamped
    # to v7x's 64 MiB physical per-TC VMEM.
    w_bytes_vmem = 3 * D_PAD * D_PAD * itemsize + 3 * D_PAD * 4
    x_bytes_vmem = 2 * tb * D_PAD * itemsize        # double-buffered input
    o_bytes_vmem = 2 * tb * D_PAD * 4               # double-buffered f32 output
    live_bytes = 3 * tb * D_PAD * 4                 # live f32 intermediates
    vmem_limit = int(1.4 * (w_bytes_vmem + x_bytes_vmem + o_bytes_vmem
                            + live_bytes))
    vmem_limit = max(vmem_limit, 16 * 1024 * 1024)
    vmem_limit = min(vmem_limit, 64 * 1024 * 1024)

    # Cost estimate reflecting the padded computation actually executed.
    w_hbm_bytes = 3 * D_PAD * D_PAD * itemsize + 3 * D_PAD * 4
    io_hbm_bytes = bp * D_PAD * itemsize + bp * D_PAD * 4
    cost = pl.CostEstimate(
        flops=6 * bp * D_PAD * D_PAD,        # 3 matmuls, 2*M*N*K each
        transcendentals=bp * D_PAD,          # tanh
        bytes_accessed=w_hbm_bytes + io_hbm_bytes,
    )

    out = pl.pallas_call(
        mnist_poisoner_kernel,
        out_shape=jax.ShapeDtypeStruct((bp, D_PAD), jnp.float32),
        grid_spec=pltpu.PrefetchScalarGridSpec(
            num_scalar_prefetch=0,
            grid=grid,
            in_specs=[
                pl.BlockSpec((tb, D_PAD), lambda i: (i, 0)),  # x
                weight_spec, bias_spec,                       # fc1
                weight_spec, bias_spec,                       # fc2
                weight_spec, bias_spec,                       # fc3
            ],
            out_specs=pl.BlockSpec((tb, D_PAD), lambda i: (i, 0)),
        ),
        compiler_params=pltpu.CompilerParams(
            dimension_semantics=("parallel",),
            vmem_limit_bytes=vmem_limit,
        ),
        cost_estimate=cost,
    )(xp, w1, b1, w2, b2, w3, b3)

    if return_padded:
        return out            # (bp, 896); columns 784.. and rows B.. are junk/zero
    return out[:B, :D_IN]


def init_params(key):
    """Deterministic synthetic parameters, PyTorch Linear shapes."""
    ks = jax.random.split(key, 6)
    scale = 1.0 / jnp.sqrt(D_IN)
    return {
        "w1": jax.random.uniform(ks[0], (D_IN, D_IN), jnp.float32, -scale, scale),
        "b1": jax.random.uniform(ks[1], (D_IN,), jnp.float32, -scale, scale),
        "w2": jax.random.uniform(ks[2], (D_IN, D_IN), jnp.float32, -scale, scale),
        "b2": jax.random.uniform(ks[3], (D_IN,), jnp.float32, -scale, scale),
        "w3": jax.random.uniform(ks[4], (D_IN, D_IN), jnp.float32, -scale, scale),
        "b3": jax.random.uniform(ks[5], (D_IN,), jnp.float32, -scale, scale),
    }


def reference_forward(x, p):
    h = x @ p["w1"].T + p["b1"]
    h = jnp.where(h >= 0, h, 0.2 * h)
    h = h @ p["w2"].T + p["b2"]
    h = jnp.where(h >= 0, h, 0.2 * h)
    return jnp.tanh(h @ p["w3"].T + p["b3"])


if __name__ == "__main__":
    key = jax.random.PRNGKey(0)
    kx, kp = jax.random.split(key)
    params = init_params(kp)

    # 1) Small batch, f32 accuracy mode, tight tolerance. grid stays 1.
    B = 8
    x = jax.random.normal(kx, (B, D_IN), jnp.float32)
    prepped_f32 = prepare_params(params, compute_dtype=jnp.float32)
    out = jax.block_until_ready(mnist_poisoner_forward(x, prepped_f32))
    ref = reference_forward(x, params)
    assert out.shape == (B, D_IN)
    assert jnp.allclose(out, ref, atol=1e-4, rtol=1e-4)

    # 2) Non-tile-multiple batch, default bf16 fast path. Exercises adaptive
    #    tiling (B=300 -> 2 tiles of 152 rows, grid=2) and host-side bf16 cast.
    #    Looser tolerance is the intentional bf16 activation-quantization cost.
    B2 = 300
    x2 = jax.random.normal(jax.random.fold_in(kx, 1), (B2, D_IN), jnp.float32)
    prepped_bf16 = prepare_params(params)  # bf16 default (all TPU generations)
    out2 = jax.block_until_ready(mnist_poisoner_forward(x2, prepped_bf16))
    ref2 = reference_forward(x2, params)
    assert out2.shape == (B2, D_IN)
    assert jnp.allclose(out2, ref2, atol=5e-2, rtol=5e-2)

    print("KERNEL_OK")
</pallas_src>

<mosaic_0001>
module attributes {stable_mosaic.version = 11 : i64} {
  func.func @mnist_poisoner_kernel(%arg0: i32, %arg1: memref<8x896xf32, #tpu.memory_space<vmem>>, %arg2: memref<896x896xf32, #tpu.memory_space<vmem>>, %arg3: memref<1x896xf32, #tpu.memory_space<vmem>>, %arg4: memref<896x896xf32, #tpu.memory_space<vmem>>, %arg5: memref<1x896xf32, #tpu.memory_space<vmem>>, %arg6: memref<896x896xf32, #tpu.memory_space<vmem>>, %arg7: memref<1x896xf32, #tpu.memory_space<vmem>>, %arg8: memref<8x896xf32, #tpu.memory_space<vmem>>) attributes {dimension_semantics = [#tpu.dimension_semantics<parallel>], iteration_bounds = array<i64: 1>, scalar_prefetch = 0 : i64, scratch_operands = 0 : i64, tpu.core_type = #tpu.core_type<tc>, window_params = [{transform_indices = @transform_0, window_bounds = array<i64: 8, 896>}, {pipeline_mode = #tpu.pipeline_mode<synchronous>, transform_indices = @transform_1, window_bounds = array<i64: 896, 896>}, {pipeline_mode = #tpu.pipeline_mode<synchronous>, transform_indices = @transform_2, window_bounds = array<i64: 1, 896>}, {pipeline_mode = #tpu.pipeline_mode<synchronous>, transform_indices = @transform_3, window_bounds = array<i64: 896, 896>}, {pipeline_mode = #tpu.pipeline_mode<synchronous>, transform_indices = @transform_4, window_bounds = array<i64: 1, 896>}, {pipeline_mode = #tpu.pipeline_mode<synchronous>, transform_indices = @transform_5, window_bounds = array<i64: 896, 896>}, {pipeline_mode = #tpu.pipeline_mode<synchronous>, transform_indices = @transform_6, window_bounds = array<i64: 1, 896>}, {transform_indices = @transform_7, window_bounds = array<i64: 8, 896>}]} {
    %c0 = arith.constant 0 : index
    %c0_0 = arith.constant 0 : index
    %0 = vector.load %arg1[%c0, %c0_0] : memref<8x896xf32, #tpu.memory_space<vmem>>, vector<8x896xf32>
    %c0_1 = arith.constant 0 : index
    %c0_2 = arith.constant 0 : index
    %1 = vector.load %arg2[%c0_1, %c0_2] : memref<896x896xf32, #tpu.memory_space<vmem>>, vector<896x896xf32>
    %cst = arith.constant dense<0.000000e+00> : vector<8x896xf32>
    %2 = tpu.matmul %0, %1, %cst {dimension_numbers = #tpu.dot_dimension_numbers<[1], [0], [0], [1], [0, 0, 1, 1], [], []>} : vector<8x896xf32>, vector<896x896xf32>, vector<8x896xf32> -> vector<8x896xf32>
    %c0_3 = arith.constant 0 : index
    %c0_4 = arith.constant 0 : index
    %3 = vector.load %arg3[%c0_3, %c0_4] : memref<1x896xf32, #tpu.memory_space<vmem>>, vector<1x896xf32>
    %4 = vector.broadcast %3 : vector<1x896xf32> to vector<8x896xf32>
    %5 = arith.addf %2, %4 : vector<8x896xf32>
    %cst_5 = arith.constant 0.000000e+00 : f32
    %6 = vector.broadcast %cst_5 : f32 to vector<8x896xf32>
    %7 = arith.cmpf oge, %5, %6 : vector<8x896xf32>
    %cst_6 = arith.constant 2.000000e-01 : f32
    %8 = vector.broadcast %cst_6 : f32 to vector<8x896xf32>
    %9 = arith.mulf %8, %5 : vector<8x896xf32>
    %10 = arith.select %7, %5, %9 : vector<8x896xi1>, vector<8x896xf32>
    %c0_7 = arith.constant 0 : index
    %c0_8 = arith.constant 0 : index
    %11 = vector.load %arg4[%c0_7, %c0_8] : memref<896x896xf32, #tpu.memory_space<vmem>>, vector<896x896xf32>
    %cst_9 = arith.constant dense<0.000000e+00> : vector<8x896xf32>
    %12 = tpu.matmul %10, %11, %cst_9 {dimension_numbers = #tpu.dot_dimension_numbers<[1], [0], [0], [1], [0, 0, 1, 1], [], []>} : vector<8x896xf32>, vector<896x896xf32>, vector<8x896xf32> -> vector<8x896xf32>
    %c0_10 = arith.constant 0 : index
    %c0_11 = arith.constant 0 : index
    %13 = vector.load %arg5[%c0_10, %c0_11] : memref<1x896xf32, #tpu.memory_space<vmem>>, vector<1x896xf32>
    %14 = vector.broadcast %13 : vector<1x896xf32> to vector<8x896xf32>
    %15 = arith.addf %12, %14 : vector<8x896xf32>
    %cst_12 = arith.constant 0.000000e+00 : f32
    %16 = vector.broadcast %cst_12 : f32 to vector<8x896xf32>
    %17 = arith.cmpf oge, %15, %16 : vector<8x896xf32>
    %cst_13 = arith.constant 2.000000e-01 : f32
    %18 = vector.broadcast %cst_13 : f32 to vector<8x896xf32>
    %19 = arith.mulf %18, %15 : vector<8x896xf32>
    %20 = arith.select %17, %15, %19 : vector<8x896xi1>, vector<8x896xf32>
    %c0_14 = arith.constant 0 : index
    %c0_15 = arith.constant 0 : index
    %21 = vector.load %arg6[%c0_14, %c0_15] : memref<896x896xf32, #tpu.memory_space<vmem>>, vector<896x896xf32>
    %cst_16 = arith.constant dense<0.000000e+00> : vector<8x896xf32>
    %22 = tpu.matmul %20, %21, %cst_16 {dimension_numbers = #tpu.dot_dimension_numbers<[1], [0], [0], [1], [0, 0, 1, 1], [], []>} : vector<8x896xf32>, vector<896x896xf32>, vector<8x896xf32> -> vector<8x896xf32>
    %c0_17 = arith.constant 0 : index
    %c0_18 = arith.constant 0 : index
    %23 = vector.load %arg7[%c0_17, %c0_18] : memref<1x896xf32, #tpu.memory_space<vmem>>, vector<1x896xf32>
    %24 = vector.broadcast %23 : vector<1x896xf32> to vector<8x896xf32>
    %25 = arith.addf %22, %24 : vector<8x896xf32>
    %26 = math.tanh %25 : vector<8x896xf32>
    %c0_19 = arith.constant 0 : index
    %c0_20 = arith.constant 0 : index
    %27 = vector.load %arg8[%c0_19, %c0_20] : memref<8x896xf32, #tpu.memory_space<vmem>>, vector<8x896xf32>
    tpu.vector_store %arg8[%c0_19, %c0_20], %26 {strides = array<i32>} : memref<8x896xf32, #tpu.memory_space<vmem>>, vector<8x896xf32>,
    return
  }
  func.func @transform_0(%arg0: i32) -> (i32, i32) {
    %c0_i32 = arith.constant 0 : i32
    %c0_i32_0 = arith.constant 0 : i32
    return %arg0, %c0_i32 : i32, i32
  }
  func.func @transform_1(%arg0: i32) -> (i32, i32) {
    %c0_i32 = arith.constant 0 : i32
    %c0_i32_0 = arith.constant 0 : i32
    %c0_i32_1 = arith.constant 0 : i32
    return %c0_i32, %c0_i32_0 : i32, i32
  }
  func.func @transform_2(%arg0: i32) -> (i32, i32) {
    %c0_i32 = arith.constant 0 : i32
    %c0_i32_0 = arith.constant 0 : i32
    %c0_i32_1 = arith.constant 0 : i32
    return %c0_i32, %c0_i32_0 : i32, i32
  }
  func.func @transform_3(%arg0: i32) -> (i32, i32) {
    %c0_i32 = arith.constant 0 : i32
    %c0_i32_0 = arith.constant 0 : i32
    %c0_i32_1 = arith.constant 0 : i32
    return %c0_i32, %c0_i32_0 : i32, i32
  }
  func.func @transform_4(%arg0: i32) -> (i32, i32) {
    %c0_i32 = arith.constant 0 : i32
    %c0_i32_0 = arith.constant 0 : i32
    %c0_i32_1 = arith.constant 0 : i32
    return %c0_i32, %c0_i32_0 : i32, i32
  }
  func.func @transform_5(%arg0: i32) -> (i32, i32) {
    %c0_i32 = arith.constant 0 : i32
    %c0_i32_0 = arith.constant 0 : i32
    %c0_i32_1 = arith.constant 0 : i32
    return %c0_i32, %c0_i32_0 : i32, i32
  }
  func.func @transform_6(%arg0: i32) -> (i32, i32) {
    %c0_i32 = arith.constant 0 : i32
    %c0_i32_0 = arith.constant 0 : i32
    %c0_i32_1 = arith.constant 0 : i32
    return %c0_i32, %c0_i32_0 : i32, i32
  }
  func.func @transform_7(%arg0: i32) -> (i32, i32) {
    %c0_i32 = arith.constant 0 : i32
    %c0_i32_0 = arith.constant 0 : i32
    return %arg0, %c0_i32 : i32, i32
  }
}

</mosaic_0001>

<llo_original>
// kernel: tpu_custom_call.1
$region0: #{tpu_custom_call.1}
  #allocation0 [shape = 'u32[]', space=smem, size = 0x4, offset = 0x4, fixed_abs, tag = 'smem constant byte address 0x4 - core index']
  #allocation1 [shape = 'u32[144,128]{1,0:T(1,128)}', space=vmem, size = 0x12000, scoped, tag = 'internal scratch']
  %s0 = inlined_call_operand.hbm [shape: f32[8,896], index: 0, kind: input, shape index: {}]
  %s1 = inlined_call_operand.hbm [shape: f32[896,896], index: 1, kind: input, shape index: {}]
  %s2 = inlined_call_operand.hbm [shape: f32[1,896], index: 2, kind: input, shape index: {}]
  %s3 = inlined_call_operand.hbm [shape: f32[896,896], index: 3, kind: input, shape index: {}]
  %s4 = inlined_call_operand.hbm [shape: f32[1,896], index: 4, kind: input, shape index: {}]
  %s5 = inlined_call_operand.hbm [shape: f32[896,896], index: 5, kind: input, shape index: {}]
  %s6 = inlined_call_operand.hbm [shape: f32[1,896], index: 6, kind: input, shape index: {}]
  %s7 = inlined_call_operand.hbm [shape: f32[8,896], index: 7, kind: output, shape index: {}]
  %s8 = sld [smem:[#allocation0]]
  $region66: #{tpu_custom_call.1} parent=0
    _
  %s10 = ssub.s32 1, %s8
  %s11 = scalar_select 0, %s10, %s8
  $region1: #{tpu_custom_call.1} parent=0
    #allocation2 [shape = 'u8[28672]{0}', space=vmem, size = 0x7000, scoped, tag = 'input window, operand 0, single buffered']
    #allocation3 [shape = 's32[1]{0}', space=sflag, size = 0x4, scoped, tag = 'scoped memory for tpu_custom_call.1']
    #allocation4 [shape = 's32[1]{0}', space=sflag, size = 0x4, scoped, tag = 'scoped memory for tpu_custom_call.1']
    #allocation5 [shape = 'u8[3211264]{0}', space=vmem, size = 0x310000, scoped, tag = 'input window, operand 1, single buffered']
    #allocation6 [shape = 's32[1]{0}', space=sflag, size = 0x4, scoped, tag = 'scoped memory for tpu_custom_call.1']
    #allocation7 [shape = 'u8[3584]{0}', space=vmem, size = 0x1000, scoped, tag = 'input window, operand 2, single buffered']
    #allocation8 [shape = 'u8[3211264]{0}', space=vmem, size = 0x310000, scoped, tag = 'input window, operand 3, single buffered']
    #allocation9 [shape = 's32[1]{0}', space=sflag, size = 0x4, scoped, tag = 'scoped memory for tpu_custom_call.1']
    #allocation10 [shape = 'u8[3584]{0}', space=vmem, size = 0x1000, scoped, tag = 'input window, operand 4, single buffered']
    #allocation11 [shape = 'u8[3211264]{0}', space=vmem, size = 0x310000, scoped, tag = 'input window, operand 5, single buffered']
    #allocation12 [shape = 's32[1]{0}', space=sflag, size = 0x4, scoped, tag = 'scoped memory for tpu_custom_call.1']
    #allocation13 [shape = 'u8[3584]{0}', space=vmem, size = 0x1000, scoped, tag = 'input window, operand 6, single buffered']
    #allocation14 [shape = 'u8[28672]{0}', space=vmem, size = 0x7000, scoped, tag = 'output window, operand 0, single buffered']
    %12 = vsyncpa [#allocation3], 0
    %13 = vsyncpa [#allocation6], 0
    %14 = vsyncpa [#allocation9], 0
    %15 = vsyncpa [#allocation12], 0
    %16 = vsyncpa [#allocation4], 0
    // Predicated region
    $region2: #{tpu_custom_call.1} parent=1 // pred_check
      _
    $region3: #{tpu_custom_call.1} parent=1 // pred_check_branch
      %18 = sbr.rel (0) target = $region5
    $region4: #{tpu_custom_call.1} parent=1 // pred_region
      %s20 = ssub.s32 896, 896
      %21 = vsyncadd [#allocation3], %s20
      %s23 = sshll.u32 [#allocation2], 4
      %s24 = int_to_ptr.vmem [resolvable:$true] %s23
      %26 = dma.hbm_to_vmem [thread:$0]  %s0, 896, %s24, [#allocation3]
    $region5: #{tpu_custom_call.1} parent=1 // pred_fallthru
      _
    // Predicated region
    $region6: #{tpu_custom_call.1} parent=1 // pred_check
      _
    $region7: #{tpu_custom_call.1} parent=1 // pred_check_branch
      %28 = sbr.rel (0) target = $region9
    $region8: #{tpu_custom_call.1} parent=1 // pred_region
      %s30 = ssub.s32 100352, 100352
      %31 = vsyncadd [#allocation6], %s30
      %s32 = sshll.u32 [#allocation5], 4
      %s33 = int_to_ptr.vmem [resolvable:$true] %s32
      %38 = dma.hbm_to_vmem [thread:$0]  %s1, 100352, %s33, [#allocation6], 896, 896, 56
    $region9: #{tpu_custom_call.1} parent=1 // pred_fallthru
      _
    // Predicated region
    $region10: #{tpu_custom_call.1} parent=1 // pred_check
      _
    $region11: #{tpu_custom_call.1} parent=1 // pred_check_branch
      %40 = sbr.rel (0) target = $region13
    $region12: #{tpu_custom_call.1} parent=1 // pred_region
      %s42 = ssub.s32 112, 112
      %43 = vsyncadd [#allocation6], %s42
      %s45 = sshll.u32 [#allocation7], 4
      %s46 = int_to_ptr.vmem [resolvable:$true] %s45
      %48 = dma.hbm_to_vmem [thread:$0]  %s2, 112, %s46, [#allocation6]
    $region13: #{tpu_custom_call.1} parent=1 // pred_fallthru
      _
    // Predicated region
    $region14: #{tpu_custom_call.1} parent=1 // pred_check
      _
    $region15: #{tpu_custom_call.1} parent=1 // pred_check_branch
      %50 = sbr.rel (0) target = $region17
    $region16: #{tpu_custom_call.1} parent=1 // pred_region
      %s52 = ssub.s32 100352, 100352
      %53 = vsyncadd [#allocation9], %s52
      %s54 = sshll.u32 [#allocation8], 4
      %s55 = int_to_ptr.vmem [resolvable:$true] %s54
      %60 = dma.hbm_to_vmem [thread:$0]  %s3, 100352, %s55, [#allocation9], 896, 896, 56
    $region17: #{tpu_custom_call.1} parent=1 // pred_fallthru
      _
    // Predicated region
    $region18: #{tpu_custom_call.1} parent=1 // pred_check
      _
    $region19: #{tpu_custom_call.1} parent=1 // pred_check_branch
      %62 = sbr.rel (0) target = $region21
    $region20: #{tpu_custom_call.1} parent=1 // pred_region
      %s64 = ssub.s32 112, 112
      %65 = vsyncadd [#allocation9], %s64
      %s67 = sshll.u32 [#allocation10], 4
      %s68 = int_to_ptr.vmem [resolvable:$true] %s67
      %70 = dma.hbm_to_vmem [thread:$0]  %s4, 112, %s68, [#allocation9]
    $region21: #{tpu_custom_call.1} parent=1 // pred_fallthru
      _
    // Predicated region
    $region22: #{tpu_custom_call.1} parent=1 // pred_check
      _
    $region23: #{tpu_custom_call.1} parent=1 // pred_check_branch
      %72 = sbr.rel (0) target = $region25
    $region24: #{tpu_custom_call.1} parent=1 // pred_region
      %s74 = ssub.s32 100352, 100352
      %75 = vsyncadd [#allocation12], %s74
      %s76 = sshll.u32 [#allocation11], 4
      %s77 = int_to_ptr.vmem [resolvable:$true] %s76
      %82 = dma.hbm_to_vmem [thread:$0]  %s5, 100352, %s77, [#allocation12], 896, 896, 56
    $region25: #{tpu_custom_call.1} parent=1 // pred_fallthru
      _
    // Predicated region
    $region26: #{tpu_custom_call.1} parent=1 // pred_check
      _
    $region27: #{tpu_custom_call.1} parent=1 // pred_check_branch
      %84 = sbr.rel (0) target = $region29
    $region28: #{tpu_custom_call.1} parent=1 // pred_region
      %s86 = ssub.s32 112, 112
      %87 = vsyncadd [#allocation12], %s86
      %s89 = sshll.u32 [#allocation13], 4
      %s90 = int_to_ptr.vmem [resolvable:$true] %s89
      %92 = dma.hbm_to_vmem [thread:$0]  %s6, 112, %s90, [#allocation12]
    $region29: #{tpu_custom_call.1} parent=1 // pred_fallthru
      _
    // Predicated region
    $region30: #{tpu_custom_call.1} parent=1 // pred_check
      _
    $region31: #{tpu_custom_call.1} parent=1 // pred_check_branch
      %94 = sbr.rel (0) target = $region33
    $region32: #{tpu_custom_call.1} parent=1 // pred_region
      %95 = dma.done [#allocation3], 896
    $region33: #{tpu_custom_call.1} parent=1 // pred_fallthru
      _
    // Predicated region
    $region34: #{tpu_custom_call.1} parent=1 // pred_check
      _
    $region35: #{tpu_custom_call.1} parent=1 // pred_check_branch
      %97 = sbr.rel (0) target = $region37
    $region36: #{tpu_custom_call.1} parent=1 // pred_region
      %98 = dma.done [#allocation6], 100352
    $region37: #{tpu_custom_call.1} parent=1 // pred_fallthru
      _
    // Predicated region
    $region38: #{tpu_custom_call.1} parent=1 // pred_check
      _
    $region39: #{tpu_custom_call.1} parent=1 // pred_check_branch
      %100 = sbr.rel (0) target = $region41
    $region40: #{tpu_custom_call.1} parent=1 // pred_region
      %101 = dma.done [#allocation6], 112
    $region41: #{tpu_custom_call.1} parent=1 // pred_fallthru
      _
    // Predicated region
    $region42: #{tpu_custom_call.1} parent=1 // pred_check
      _
    $region43: #{tpu_custom_call.1} parent=1 // pred_check_branch
      %103 = sbr.rel (0) target = $region45
    $region44: #{tpu_custom_call.1} parent=1 // pred_region
      %104 = dma.done [#allocation9], 100352
    $region45: #{tpu_custom_call.1} parent=1 // pred_fallthru
      _
    // Predicated region
    $region46: #{tpu_custom_call.1} parent=1 // pred_check
      _
    $region47: #{tpu_custom_call.1} parent=1 // pred_check_branch
      %106 = sbr.rel (0) target = $region49
    $region48: #{tpu_custom_call.1} parent=1 // pred_region
      %107 = dma.done [#allocation9], 112
    $region49: #{tpu_custom_call.1} parent=1 // pred_fallthru
      _
    // Predicated region
    $region50: #{tpu_custom_call.1} parent=1 // pred_check
      _
    $region51: #{tpu_custom_call.1} parent=1 // pred_check_branch
      %109 = sbr.rel (0) target = $region53
    $region52: #{tpu_custom_call.1} parent=1 // pred_region
      %110 = dma.done [#allocation12], 100352
    $region53: #{tpu_custom_call.1} parent=1 // pred_fallthru
      _
    // Predicated region
    $region54: #{tpu_custom_call.1} parent=1 // pred_check
      _
    $region55: #{tpu_custom_call.1} parent=1 // pred_check_branch
      %112 = sbr.rel (0) target = $region57
    $region56: #{tpu_custom_call.1} parent=1 // pred_region
      %113 = dma.done [#allocation12], 112
    $region57: #{tpu_custom_call.1} parent=1 // pred_fallthru
      _
    %v114 = vld [vmem:[#allocation2] sm:$0xff]
    %v115 = vld [vmem:[#allocation2 + $0x8] sm:$0xff]
    %v116 = vld [vmem:[#allocation2 + $0x10] sm:$0xff]
    %v117 = vld [vmem:[#allocation2 + $0x18] sm:$0xff]
    %v118 = vld [vmem:[#allocation2 + $0x20] sm:$0xff]
    %v119 = vld [vmem:[#allocation2 + $0x28] sm:$0xff]
    %v120 = vld [vmem:[#allocation2 + $0x30] sm:$0xff]
    %v121 = vld [vmem:[#allocation5] sm:$0xff]
    %v122 = vld [vmem:[#allocation5 + $0x8] sm:$0xff]
    %v123 = vld [vmem:[#allocation5 + $0x10] sm:$0xff]
    %v124 = vld [vmem:[#allocation5 + $0x18] sm:$0xff]
    %v125 = vld [vmem:[#allocation5 + $0x20] sm:$0xff]
    %v126 = vld [vmem:[#allocation5 + $0x28] sm:$0xff]
    %v127 = vld [vmem:[#allocation5 + $0x30] sm:$0xff]
    %v128 = vld [vmem:[#allocation5 + $0x38] sm:$0xff]
    %v129 = vld [vmem:[#allocation5 + $0x40] sm:$0xff]
    %v130 = vld [vmem:[#allocation5 + $0x48] sm:$0xff]
    %v131 = vld [vmem:[#allocation5 + $0x50] sm:$0xff]
    %v132 = vld [vmem:[#allocation5 + $0x58] sm:$0xff]
    %v133 = vld [vmem:[#allocation5 + $0x60] sm:$0xff]
    %v134 = vld [vmem:[#allocation5 + $0x68] sm:$0xff]
    %v135 = vld [vmem:[#allocation5 + $0x70] sm:$0xff]
    %v136 = vld [vmem:[#allocation5 + $0x78] sm:$0xff]
    %v137 = vld [vmem:[#allocation5 + $0x80] sm:$0xff]
    %v138 = vld [vmem:[#allocation5 + $0x88] sm:$0xff]
    %v139 = vld [vmem:[#allocation5 + $0x90] sm:$0xff]
    %v140 = vld [vmem:[#allocation5 + $0x98] sm:$0xff]
    %v141 = vld [vmem:[#allocation5 + $0xa0] sm:$0xff]
    %v142 = vld [vmem:[#allocation5 + $0xa8] sm:$0xff]
    %v143 = vld [vmem:[#allocation5 + $0xb0] sm:$0xff]
    %v144 = vld [vmem:[#allocation5 + $0xb8] sm:$0xff]
    %v145 = vld [vmem:[#allocation5 + $0xc0] sm:$0xff]
    %v146 = vld [vmem:[#allocation5 + $0xc8] sm:$0xff]
    %v147 = vld [vmem:[#allocation5 + $0xd0] sm:$0xff]
    %v148 = vld [vmem:[#allocation5 + $0xd8] sm:$0xff]
    %v149 = vld [vmem:[#allocation5 + $0xe0] sm:$0xff]
    %v150 = vld [vmem:[#allocation5 + $0xe8] sm:$0xff]
    %v151 = vld [vmem:[#allocation5 + $0xf0] sm:$0xff]
    %v152 = vld [vmem:[#allocation5 + $0xf8] sm:$0xff]
    %v153 = vld [vmem:[#allocation5 + $0x100] sm:$0xff]
    %v154 = vld [vmem:[#allocation5 + $0x108] sm:$0xff]
    %v155 = vld [vmem:[#allocation5 + $0x110] sm:$0xff]
    %v156 = vld [vmem:[#allocation5 + $0x118] sm:$0xff]
    %v157 = vld [vmem:[#allocation5 + $0x120] sm:$0xff]
    %v158 = vld [vmem:[#allocation5 + $0x128] sm:$0xff]
    %v159 = vld [vmem:[#allocation5 + $0x130] sm:$0xff]
    %v160 = vld [vmem:[#allocation5 + $0x138] sm:$0xff]
    %v161 = vld [vmem:[#allocation5 + $0x140] sm:$0xff]
    %v162 = vld [vmem:[#allocation5 + $0x148] sm:$0xff]
    %v163 = vld [vmem:[#allocation5 + $0x150] sm:$0xff]
    %v164 = vld [vmem:[#allocation5 + $0x158] sm:$0xff]
    %v165 = vld [vmem:[#allocation5 + $0x160] sm:$0xff]
    %v166 = vld [vmem:[#allocation5 + $0x168] sm:$0xff]
    %v167 = vld [vmem:[#allocation5 + $0x170] sm:$0xff]
    %v168 = vld [vmem:[#allocation5 + $0x178] sm:$0xff]
    %v169 = vld [vmem:[#allocation5 + $0x180] sm:$0xff]
    %v170 = vld [vmem:[#allocation5 + $0x188] sm:$0xff]
    %v171 = vld [vmem:[#allocation5 + $0x190] sm:$0xff]
    %v172 = vld [vmem:[#allocation5 + $0x198] sm:$0xff]
    %v173 = vld [vmem:[#allocation5 + $0x1a0] sm:$0xff]
    %v174 = vld [vmem:[#allocation5 + $0x1a8] sm:$0xff]
    %v175 = vld [vmem:[#allocation5 + $0x1b0] sm:$0xff]
    %v176 = vld [vmem:[#allocation5 + $0x1b8] sm:$0xff]
    %v177 = vld [vmem:[#allocation5 + $0x1c0] sm:$0xff]
    %v178 = vld [vmem:[#allocation5 + $0x1c8] sm:$0xff]
    %v179 = vld [vmem:[#allocation5 + $0x1d0] sm:$0xff]
    %v180 = vld [vmem:[#allocation5 + $0x1d8] sm:$0xff]
    %v181 = vld [vmem:[#allocation5 + $0x1e0] sm:$0xff]
    %v182 = vld [vmem:[#allocation5 + $0x1e8] sm:$0xff]
    %v183 = vld [vmem:[#allocation5 + $0x1f0] sm:$0xff]
    %v184 = vld [vmem:[#allocation5 + $0x1f8] sm:$0xff]
    %v185 = vld [vmem:[#allocation5 + $0x200] sm:$0xff]
    %v186 = vld [vmem:[#allocation5 + $0x208] sm:$0xff]
    %v187 = vld [vmem:[#allocation5 + $0x210] sm:$0xff]
    %v188 = vld [vmem:[#allocation5 + $0x218] sm:$0xff]
    %v189 = vld [vmem:[#allocation5 + $0x220] sm:$0xff]
    %v190 = vld [vmem:[#allocation5 + $0x228] sm:$0xff]
    %v191 = vld [vmem:[#allocation5 + $0x230] sm:$0xff]
    %v192 = vld [vmem:[#allocation5 + $0x238] sm:$0xff]
    %v193 = vld [vmem:[#allocation5 + $0x240] sm:$0xff]
    %v194 = vld [vmem:[#allocation5 + $0x248] sm:$0xff]
    %v195 = vld [vmem:[#allocation5 + $0x250] sm:$0xff]
    %v196 = vld [vmem:[#allocation5 + $0x258] sm:$0xff]
    %v197 = vld [vmem:[#allocation5 + $0x260] sm:$0xff]
    %v198 = vld [vmem:[#allocation5 + $0x268] sm:$0xff]
    %v199 = vld [vmem:[#allocation5 + $0x270] sm:$0xff]
    %v200 = vld [vmem:[#allocation5 + $0x278] sm:$0xff]
    %v201 = vld [vmem:[#allocation5 + $0x280] sm:$0xff]
    %v202 = vld [vmem:[#allocation5 + $0x288] sm:$0xff]
    %v203 = vld [vmem:[#allocation5 + $0x290] sm:$0xff]
    %v204 = vld [vmem:[#allocation5 + $0x298] sm:$0xff]
    %v205 = vld [vmem:[#allocation5 + $0x2a0] sm:$0xff]
    %v206 = vld [vmem:[#allocation5 + $0x2a8] sm:$0xff]
    %v207 = vld [vmem:[#allocation5 + $0x2b0] sm:$0xff]
    %v208 = vld [vmem:[#allocation5 + $0x2b8] sm:$0xff]
    %v209 = vld [vmem:[#allocation5 + $0x2c0] sm:$0xff]
    %v210 = vld [vmem:[#allocation5 + $0x2c8] sm:$0xff]
    %v211 = vld [vmem:[#allocation5 + $0x2d0] sm:$0xff]
    %v212 = vld [vmem:[#allocation5 + $0x2d8] sm:$0xff]
    %v213 = vld [vmem:[#allocation5 + $0x2e0] sm:$0xff]
    %v214 = vld [vmem:[#allocation5 + $0x2e8] sm:$0xff]
    %v215 = vld [vmem:[#allocation5 + $0x2f0] sm:$0xff]
    %v216 = vld [vmem:[#allocation5 + $0x2f8] sm:$0xff]
    %v217 = vld [vmem:[#allocation5 + $0x300] sm:$0xff]
    %v218 = vld [vmem:[#allocation5 + $0x308] sm:$0xff]
    %v219 = vld [vmem:[#allocation5 + $0x310] sm:$0xff]
    %v220 = vld [vmem:[#allocation5 + $0x318] sm:$0xff]
    %v221 = vld [vmem:[#allocation5 + $0x320] sm:$0xff]
    %v222 = vld [vmem:[#allocation5 + $0x328] sm:$0xff]
    %v223 = vld [vmem:[#allocation5 + $0x330] sm:$0xff]
    %v224 = vld [vmem:[#allocation5 + $0x338] sm:$0xff]
    %v225 = vld [vmem:[#allocation5 + $0x340] sm:$0xff]
    %v226 = vld [vmem:[#allocation5 + $0x348] sm:$0xff]
    %v227 = vld [vmem:[#allocation5 + $0x350] sm:$0xff]
    %v228 = vld [vmem:[#allocation5 + $0x358] sm:$0xff]
    %v229 = vld [vmem:[#allocation5 + $0x360] sm:$0xff]
    %v230 = vld [vmem:[#allocation5 + $0x368] sm:$0xff]
    %v231 = vld [vmem:[#allocation5 + $0x370] sm:$0xff]
    %v232 = vld [vmem:[#allocation5 + $0x378] sm:$0xff]
    %v233 = vld [vmem:[#allocation5 + $0x380] sm:$0xff]
    %v234 = vld [vmem:[#allocation5 + $0x388] sm:$0xff]
    %v235 = vld [vmem:[#allocation5 + $0x390] sm:$0xff]
    %v236 = vld [vmem:[#allocation5 + $0x398] sm:$0xff]
    %v237 = vld [vmem:[#allocation5 + $0x3a0] sm:$0xff]
    %v238 = vld [vmem:[#allocation5 + $0x3a8] sm:$0xff]
    %v239 = vld [vmem:[#allocation5 + $0x3b0] sm:$0xff]
    %v240 = vld [vmem:[#allocation5 + $0x3b8] sm:$0xff]
    %v241 = vld [vmem:[#allocation5 + $0x3c0] sm:$0xff]
    %v242 = vld [vmem:[#allocation5 + $0x3c8] sm:$0xff]
    %v243 = vld [vmem:[#allocation5 + $0x3d0] sm:$0xff]
    %v244 = vld [vmem:[#allocation5 + $0x3d8] sm:$0xff]
    %v245 = vld [vmem:[#allocation5 + $0x3e0] sm:$0xff]
    %v246 = vld [vmem:[#allocation5 + $0x3e8] sm:$0xff]
    %v247 = vld [vmem:[#allocation5 + $0x3f0] sm:$0xff]
    %v248 = vld [vmem:[#allocation5 + $0x3f8] sm:$0xff]
    %v249 = vld [vmem:[#allocation5 + $0x400] sm:$0xff]
    %v250 = vld [vmem:[#allocation5 + $0x408] sm:$0xff]
    %v251 = vld [vmem:[#allocation5 + $0x410] sm:$0xff]
    %v252 = vld [vmem:[#allocation5 + $0x418] sm:$0xff]
    %v253 = vld [vmem:[#allocation5 + $0x420] sm:$0xff]
    %v254 = vld [vmem:[#allocation5 + $0x428] sm:$0xff]
    %v255 = vld [vmem:[#allocation5 + $0x430] sm:$0xff]
    %v256 = vld [vmem:[#allocation5 + $0x438] sm:$0xff]
    %v257 = vld [vmem:[#allocation5 + $0x440] sm:$0xff]
    %v258 = vld [vmem:[#allocation5 + $0x448] sm:$0xff]
    %v259 = vld [vmem:[#allocation5 + $0x450] sm:$0xff]
    %v260 = vld [vmem:[#allocation5 + $0x458] sm:$0xff]
    %v261 = vld [vmem:[#allocation5 + $0x460] sm:$0xff]
    %v262 = vld [vmem:[#allocation5 + $0x468] sm:$0xff]
    %v263 = vld [vmem:[#allocation5 + $0x470] sm:$0xff]
    %v264 = vld [vmem:[#allocation5 + $0x478] sm:$0xff]
    %v265 = vld [vmem:[#allocation5 + $0x480] sm:$0xff]
    %v266 = vld [vmem:[#allocation5 + $0x488] sm:$0xff]
    %v267 = vld [vmem:[#allocation5 + $0x490] sm:$0xff]
    %v268 = vld [vmem:[#allocation5 + $0x498] sm:$0xff]
    %v269 = vld [vmem:[#allocation5 + $0x4a0] sm:$0xff]
    %v270 = vld [vmem:[#allocation5 + $0x4a8] sm:$0xff]
    %v271 = vld [vmem:[#allocation5 + $0x4b0] sm:$0xff]
    %v272 = vld [vmem:[#allocation5 + $0x4b8] sm:$0xff]
    %v273 = vld [vmem:[#allocation5 + $0x4c0] sm:$0xff]
    %v274 = vld [vmem:[#allocation5 + $0x4c8] sm:$0xff]
    %v275 = vld [vmem:[#allocation5 + $0x4d0] sm:$0xff]
    %v276 = vld [vmem:[#allocation5 + $0x4d8] sm:$0xff]
    %v277 = vld [vmem:[#allocation5 + $0x4e0] sm:$0xff]
    %v278 = vld [vmem:[#allocation5 + $0x4e8] sm:$0xff]
    %v279 = vld [vmem:[#allocation5 + $0x4f0] sm:$0xff]
    %v280 = vld [vmem:[#allocation5 + $0x4f8] sm:$0xff]
    %v281 = vld [vmem:[#allocation5 + $0x500] sm:$0xff]
    %v282 = vld [vmem:[#allocation5 + $0x508] sm:$0xff]
    %v283 = vld [vmem:[#allocation5 + $0x510] sm:$0xff]
    %v284 = vld [vmem:[#allocation5 + $0x518] sm:$0xff]
    %v285 = vld [vmem:[#allocation5 + $0x520] sm:$0xff]
    %v286 = vld [vmem:[#allocation5 + $0x528] sm:$0xff]
    %v287 = vld [vmem:[#allocation5 + $0x530] sm:$0xff]
    %v288 = vld [vmem:[#allocation5 + $0x538] sm:$0xff]
    %v289 = vld [vmem:[#allocation5 + $0x540] sm:$0xff]
    %v290 = vld [vmem:[#allocation5 + $0x548] sm:$0xff]
    %v291 = vld [vmem:[#allocation5 + $0x550] sm:$0xff]
    %v292 = vld [vmem:[#allocation5 + $0x558] sm:$0xff]
    %v293 = vld [vmem:[#allocation5 + $0x560] sm:$0xff]
    %v294 = vld [vmem:[#allocation5 + $0x568] sm:$0xff]
    %v295 = vld [vmem:[#allocation5 + $0x570] sm:$0xff]
    %v296 = vld [vmem:[#allocation5 + $0x578] sm:$0xff]
    %v297 = vld [vmem:[#allocation5 + $0x580] sm:$0xff]
    %v298 = vld [vmem:[#allocation5 + $0x588] sm:$0xff]
    %v299 = vld [vmem:[#allocation5 + $0x590] sm:$0xff]
    %v300 = vld [vmem:[#allocation5 + $0x598] sm:$0xff]
    %v301 = vld [vmem:[#allocation5 + $0x5a0] sm:$0xff]
    %v302 = vld [vmem:[#allocation5 + $0x5a8] sm:$0xff]
    %v303 = vld [vmem:[#allocation5 + $0x5b0] sm:$0xff]
    %v304 = vld [vmem:[#allocation5 + $0x5b8] sm:$0xff]
    %v305 = vld [vmem:[#allocation5 + $0x5c0] sm:$0xff]
    %v306 = vld [vmem:[#allocation5 + $0x5c8] sm:$0xff]
    %v307 = vld [vmem:[#allocation5 + $0x5d0] sm:$0xff]
    %v308 = vld [vmem:[#allocation5 + $0x5d8] sm:$0xff]
    %v309 = vld [vmem:[#allocation5 + $0x5e0] sm:$0xff]
    %v310 = vld [vmem:[#allocation5 + $0x5e8] sm:$0xff]
    %v311 = vld [vmem:[#allocation5 + $0x5f0] sm:$0xff]
    %v312 = vld [vmem:[#allocation5 + $0x5f8] sm:$0xff]
    %v313 = vld [vmem:[#allocation5 + $0x600] sm:$0xff]
    %v314 = vld [vmem:[#allocation5 + $0x608] sm:$0xff]
    %v315 = vld [vmem:[#allocation5 + $0x610] sm:$0xff]
    %v316 = vld [vmem:[#allocation5 + $0x618] sm:$0xff]
    %v317 = vld [vmem:[#allocation5 + $0x620] sm:$0xff]
    %v318 = vld [vmem:[#allocation5 + $0x628] sm:$0xff]
    %v319 = vld [vmem:[#allocation5 + $0x630] sm:$0xff]
    %v320 = vld [vmem:[#allocation5 + $0x638] sm:$0xff]
    %v321 = vld [vmem:[#allocation5 + $0x640] sm:$0xff]
    %v322 = vld [vmem:[#allocation5 + $0x648] sm:$0xff]
    %v323 = vld [vmem:[#allocation5 + $0x650] sm:$0xff]
    %v324 = vld [vmem:[#allocation5 + $0x658] sm:$0xff]
    %v325 = vld [vmem:[#allocation5 + $0x660] sm:$0xff]
    %v326 = vld [vmem:[#allocation5 + $0x668] sm:$0xff]
    %v327 = vld [vmem:[#allocation5 + $0x670] sm:$0xff]
    %v328 = vld [vmem:[#allocation5 + $0x678] sm:$0xff]
    %v329 = vld [vmem:[#allocation5 + $0x680] sm:$0xff]
    %v330 = vld [vmem:[#allocation5 + $0x688] sm:$0xff]
    %v331 = vld [vmem:[#allocation5 + $0x690] sm:$0xff]
    %v332 = vld [vmem:[#allocation5 + $0x698] sm:$0xff]
    %v333 = vld [vmem:[#allocation5 + $0x6a0] sm:$0xff]
    %v334 = vld [vmem:[#allocation5 + $0x6a8] sm:$0xff]
    %v335 = vld [vmem:[#allocation5 + $0x6b0] sm:$0xff]
    %v336 = vld [vmem:[#allocation5 + $0x6b8] sm:$0xff]
    %v337 = vld [vmem:[#allocation5 + $0x6c0] sm:$0xff]
    %v338 = vld [vmem:[#allocation5 + $0x6c8] sm:$0xff]
    %v339 = vld [vmem:[#allocation5 + $0x6d0] sm:$0xff]
    %v340 = vld [vmem:[#allocation5 + $0x6d8] sm:$0xff]
    %v341 = vld [vmem:[#allocation5 + $0x6e0] sm:$0xff]
    %v342 = vld [vmem:[#allocation5 + $0x6e8] sm:$0xff]
    %v343 = vld [vmem:[#allocation5 + $0x6f0] sm:$0xff]
    %v344 = vld [vmem:[#allocation5 + $0x6f8] sm:$0xff]
    %v345 = vld [vmem:[#allocation5 + $0x700] sm:$0xff]
    %v346 = vld [vmem:[#allocation5 + $0x708] sm:$0xff]
    %v347 = vld [vmem:[#allocation5 + $0x710] sm:$0xff]
    %v348 = vld [vmem:[#allocation5 + $0x718] sm:$0xff]
    %v349 = vld [vmem:[#allocation5 + $0x720] sm:$0xff]
    %v350 = vld [vmem:[#allocation5 + $0x728] sm:$0xff]
    %v351 = vld [vmem:[#allocation5 + $0x730] sm:$0xff]
    %v352 = vld [vmem:[#allocation5 + $0x738] sm:$0xff]
    %v353 = vld [vmem:[#allocation5 + $0x740] sm:$0xff]
    %v354 = vld [vmem:[#allocation5 + $0x748] sm:$0xff]
    %v355 = vld [vmem:[#allocation5 + $0x750] sm:$0xff]
    %v356 = vld [vmem:[#allocation5 + $0x758] sm:$0xff]
    %v357 = vld [vmem:[#allocation5 + $0x760] sm:$0xff]
    %v358 = vld [vmem:[#allocation5 + $0x768] sm:$0xff]
    %v359 = vld [vmem:[#allocation5 + $0x770] sm:$0xff]
    %v360 = vld [vmem:[#allocation5 + $0x778] sm:$0xff]
    %v361 = vld [vmem:[#allocation5 + $0x780] sm:$0xff]
    %v362 = vld [vmem:[#allocation5 + $0x788] sm:$0xff]
    %v363 = vld [vmem:[#allocation5 + $0x790] sm:$0xff]
    %v364 = vld [vmem:[#allocation5 + $0x798] sm:$0xff]
    %v365 = vld [vmem:[#allocation5 + $0x7a0] sm:$0xff]
    %v366 = vld [vmem:[#allocation5 + $0x7a8] sm:$0xff]
    %v367 = vld [vmem:[#allocation5 + $0x7b0] sm:$0xff]
    %v368 = vld [vmem:[#allocation5 + $0x7b8] sm:$0xff]
    %v369 = vld [vmem:[#allocation5 + $0x7c0] sm:$0xff]
    %v370 = vld [vmem:[#allocation5 + $0x7c8] sm:$0xff]
    %v371 = vld [vmem:[#allocation5 + $0x7d0] sm:$0xff]
    %v372 = vld [vmem:[#allocation5 + $0x7d8] sm:$0xff]
    %v373 = vld [vmem:[#allocation5 + $0x7e0] sm:$0xff]
    %v374 = vld [vmem:[#allocation5 + $0x7e8] sm:$0xff]
    %v375 = vld [vmem:[#allocation5 + $0x7f0] sm:$0xff]
    %v376 = vld [vmem:[#allocation5 + $0x7f8] sm:$0xff]
    %v377 = vld [vmem:[#allocation5 + $0x800] sm:$0xff]
    %v378 = vld [vmem:[#allocation5 + $0x808] sm:$0xff]
    %v379 = vld [vmem:[#allocation5 + $0x810] sm:$0xff]
    %v380 = vld [vmem:[#allocation5 + $0x818] sm:$0xff]
    %v381 = vld [vmem:[#allocation5 + $0x820] sm:$0xff]
    %v382 = vld [vmem:[#allocation5 + $0x828] sm:$0xff]
    %v383 = vld [vmem:[#allocation5 + $0x830] sm:$0xff]
    %v384 = vld [vmem:[#allocation5 + $0x838] sm:$0xff]
    %v385 = vld [vmem:[#allocation5 + $0x840] sm:$0xff]
    %v386 = vld [vmem:[#allocation5 + $0x848] sm:$0xff]
    %v387 = vld [vmem:[#allocation5 + $0x850] sm:$0xff]
    %v388 = vld [vmem:[#allocation5 + $0x858] sm:$0xff]
    %v389 = vld [vmem:[#allocation5 + $0x860] sm:$0xff]
    %v390 = vld [vmem:[#allocation5 + $0x868] sm:$0xff]
    %v391 = vld [vmem:[#allocation5 + $0x870] sm:$0xff]
    %v392 = vld [vmem:[#allocation5 + $0x878] sm:$0xff]
    %v393 = vld [vmem:[#allocation5 + $0x880] sm:$0xff]
    %v394 = vld [vmem:[#allocation5 + $0x888] sm:$0xff]
    %v395 = vld [vmem:[#allocation5 + $0x890] sm:$0xff]
    %v396 = vld [vmem:[#allocation5 + $0x898] sm:$0xff]
    %v397 = vld [vmem:[#allocation5 + $0x8a0] sm:$0xff]
    %v398 = vld [vmem:[#allocation5 + $0x8a8] sm:$0xff]
    %v399 = vld [vmem:[#allocation5 + $0x8b0] sm:$0xff]
    %v400 = vld [vmem:[#allocation5 + $0x8b8] sm:$0xff]
    %v401 = vld [vmem:[#allocation5 + $0x8c0] sm:$0xff]
    %v402 = vld [vmem:[#allocation5 + $0x8c8] sm:$0xff]
    %v403 = vld [vmem:[#allocation5 + $0x8d0] sm:$0xff]
    %v404 = vld [vmem:[#allocation5 + $0x8d8] sm:$0xff]
    %v405 = vld [vmem:[#allocation5 + $0x8e0] sm:$0xff]
    %v406 = vld [vmem:[#allocation5 + $0x8e8] sm:$0xff]
    %v407 = vld [vmem:[#allocation5 + $0x8f0] sm:$0xff]
    %v408 = vld [vmem:[#allocation5 + $0x8f8] sm:$0xff]
    %v409 = vld [vmem:[#allocation5 + $0x900] sm:$0xff]
    %v410 = vld [vmem:[#allocation5 + $0x908] sm:$0xff]
    %v411 = vld [vmem:[#allocation5 + $0x910] sm:$0xff]
    %v412 = vld [vmem:[#allocation5 + $0x918] sm:$0xff]
    %v413 = vld [vmem:[#allocation5 + $0x920] sm:$0xff]
    %v414 = vld [vmem:[#allocation5 + $0x928] sm:$0xff]
    %v415 = vld [vmem:[#allocation5 + $0x930] sm:$0xff]
    %v416 = vld [vmem:[#allocation5 + $0x938] sm:$0xff]
    %v417 = vld [vmem:[#allocation5 + $0x940] sm:$0xff]
    %v418 = vld [vmem:[#allocation5 + $0x948] sm:$0xff]
    %v419 = vld [vmem:[#allocation5 + $0x950] sm:$0xff]
    %v420 = vld [vmem:[#allocation5 + $0x958] sm:$0xff]
    %v421 = vld [vmem:[#allocation5 + $0x960] sm:$0xff]
    %v422 = vld [vmem:[#allocation5 + $0x968] sm:$0xff]
    %v423 = vld [vmem:[#allocation5 + $0x970] sm:$0xff]
    %v424 = vld [vmem:[#allocation5 + $0x978] sm:$0xff]
    %v425 = vld [vmem:[#allocation5 + $0x980] sm:$0xff]
    %v426 = vld [vmem:[#allocation5 + $0x988] sm:$0xff]
    %v427 = vld [vmem:[#allocation5 + $0x990] sm:$0xff]
    %v428 = vld [vmem:[#allocation5 + $0x998] sm:$0xff]
    %v429 = vld [vmem:[#allocation5 + $0x9a0] sm:$0xff]
    %v430 = vld [vmem:[#allocation5 + $0x9a8] sm:$0xff]
    %v431 = vld [vmem:[#allocation5 + $0x9b0] sm:$0xff]
    %v432 = vld [vmem:[#allocation5 + $0x9b8] sm:$0xff]
    %v433 = vld [vmem:[#allocation5 + $0x9c0] sm:$0xff]
    %v434 = vld [vmem:[#allocation5 + $0x9c8] sm:$0xff]
    %v435 = vld [vmem:[#allocation5 + $0x9d0] sm:$0xff]
    %v436 = vld [vmem:[#allocation5 + $0x9d8] sm:$0xff]
    %v437 = vld [vmem:[#allocation5 + $0x9e0] sm:$0xff]
    %v438 = vld [vmem:[#allocation5 + $0x9e8] sm:$0xff]
    %v439 = vld [vmem:[#allocation5 + $0x9f0] sm:$0xff]
    %v440 = vld [vmem:[#allocation5 + $0x9f8] sm:$0xff]
    %v441 = vld [vmem:[#allocation5 + $0xa00] sm:$0xff]
    %v442 = vld [vmem:[#allocation5 + $0xa08] sm:$0xff]
    %v443 = vld [vmem:[#allocation5 + $0xa10] sm:$0xff]
    %v444 = vld [vmem:[#allocation5 + $0xa18] sm:$0xff]
    %v445 = vld [vmem:[#allocation5 + $0xa20] sm:$0xff]
    %v446 = vld [vmem:[#allocation5 + $0xa28] sm:$0xff]
    %v447 = vld [vmem:[#allocation5 + $0xa30] sm:$0xff]
    %v448 = vld [vmem:[#allocation5 + $0xa38] sm:$0xff]
    %v449 = vld [vmem:[#allocation5 + $0xa40] sm:$0xff]
    %v450 = vld [vmem:[#allocation5 + $0xa48] sm:$0xff]
    %v451 = vld [vmem:[#allocation5 + $0xa50] sm:$0xff]
    %v452 = vld [vmem:[#allocation5 + $0xa58] sm:$0xff]
    %v453 = vld [vmem:[#allocation5 + $0xa60] sm:$0xff]
    %v454 = vld [vmem:[#allocation5 + $0xa68] sm:$0xff]
    %v455 = vld [vmem:[#allocation5 + $0xa70] sm:$0xff]
    %v456 = vld [vmem:[#allocation5 + $0xa78] sm:$0xff]
    %v457 = vld [vmem:[#allocation5 + $0xa80] sm:$0xff]
    %v458 = vld [vmem:[#allocation5 + $0xa88] sm:$0xff]
    %v459 = vld [vmem:[#allocation5 + $0xa90] sm:$0xff]
    %v460 = vld [vmem:[#allocation5 + $0xa98] sm:$0xff]
    %v461 = vld [vmem:[#allocation5 + $0xaa0] sm:$0xff]
    %v462 = vld [vmem:[#allocation5 + $0xaa8] sm:$0xff]
    %v463 = vld [vmem:[#allocation5 + $0xab0] sm:$0xff]
    %v464 = vld [vmem:[#allocation5 + $0xab8] sm:$0xff]
    %v465 = vld [vmem:[#allocation5 + $0xac0] sm:$0xff]
    %v466 = vld [vmem:[#allocation5 + $0xac8] sm:$0xff]
    %v467 = vld [vmem:[#allocation5 + $0xad0] sm:$0xff]
    %v468 = vld [vmem:[#allocation5 + $0xad8] sm:$0xff]
    %v469 = vld [vmem:[#allocation5 + $0xae0] sm:$0xff]
    %v470 = vld [vmem:[#allocation5 + $0xae8] sm:$0xff]
    %v471 = vld [vmem:[#allocation5 + $0xaf0] sm:$0xff]
    %v472 = vld [vmem:[#allocation5 + $0xaf8] sm:$0xff]
    %v473 = vld [vmem:[#allocation5 + $0xb00] sm:$0xff]
    %v474 = vld [vmem:[#allocation5 + $0xb08] sm:$0xff]
    %v475 = vld [vmem:[#allocation5 + $0xb10] sm:$0xff]
    %v476 = vld [vmem:[#allocation5 + $0xb18] sm:$0xff]
    %v477 = vld [vmem:[#allocation5 + $0xb20] sm:$0xff]
    %v478 = vld [vmem:[#allocation5 + $0xb28] sm:$0xff]
    %v479 = vld [vmem:[#allocation5 + $0xb30] sm:$0xff]
    %v480 = vld [vmem:[#allocation5 + $0xb38] sm:$0xff]
    %v481 = vld [vmem:[#allocation5 + $0xb40] sm:$0xff]
    %v482 = vld [vmem:[#allocation5 + $0xb48] sm:$0xff]
    %v483 = vld [vmem:[#allocation5 + $0xb50] sm:$0xff]
    %v484 = vld [vmem:[#allocation5 + $0xb58] sm:$0xff]
    %v485 = vld [vmem:[#allocation5 + $0xb60] sm:$0xff]
    %v486 = vld [vmem:[#allocation5 + $0xb68] sm:$0xff]
    %v487 = vld [vmem:[#allocation5 + $0xb70] sm:$0xff]
    %v488 = vld [vmem:[#allocation5 + $0xb78] sm:$0xff]
    %v489 = vld [vmem:[#allocation5 + $0xb80] sm:$0xff]
    %v490 = vld [vmem:[#allocation5 + $0xb88] sm:$0xff]
    %v491 = vld [vmem:[#allocation5 + $0xb90] sm:$0xff]
    %v492 = vld [vmem:[#allocation5 + $0xb98] sm:$0xff]
    %v493 = vld [vmem:[#allocation5 + $0xba0] sm:$0xff]
    %v494 = vld [vmem:[#allocation5 + $0xba8] sm:$0xff]
    %v495 = vld [vmem:[#allocation5 + $0xbb0] sm:$0xff]
    %v496 = vld [vmem:[#allocation5 + $0xbb8] sm:$0xff]
    %v497 = vld [vmem:[#allocation5 + $0xbc0] sm:$0xff]
    %v498 = vld [vmem:[#allocation5 + $0xbc8] sm:$0xff]
    %v499 = vld [vmem:[#allocation5 + $0xbd0] sm:$0xff]
    %v500 = vld [vmem:[#allocation5 + $0xbd8] sm:$0xff]
    %v501 = vld [vmem:[#allocation5 + $0xbe0] sm:$0xff]
    %v502 = vld [vmem:[#allocation5 + $0xbe8] sm:$0xff]
    %v503 = vld [vmem:[#allocation5 + $0xbf0] sm:$0xff]
    %v504 = vld [vmem:[#allocation5 + $0xbf8] sm:$0xff]
    %v505 = vld [vmem:[#allocation5 + $0xc00] sm:$0xff]
    %v506 = vld [vmem:[#allocation5 + $0xc08] sm:$0xff]
    %v507 = vld [vmem:[#allocation5 + $0xc10] sm:$0xff]
    %v508 = vld [vmem:[#allocation5 + $0xc18] sm:$0xff]
    %v509 = vld [vmem:[#allocation5 + $0xc20] sm:$0xff]
    %v510 = vld [vmem:[#allocation5 + $0xc28] sm:$0xff]
    %v511 = vld [vmem:[#allocation5 + $0xc30] sm:$0xff]
    %v512 = vld [vmem:[#allocation5 + $0xc38] sm:$0xff]
    %v513 = vld [vmem:[#allocation5 + $0xc40] sm:$0xff]
    %v514 = vld [vmem:[#allocation5 + $0xc48] sm:$0xff]
    %v515 = vld [vmem:[#allocation5 + $0xc50] sm:$0xff]
    %v516 = vld [vmem:[#allocation5 + $0xc58] sm:$0xff]
    %v517 = vld [vmem:[#allocation5 + $0xc60] sm:$0xff]
    %v518 = vld [vmem:[#allocation5 + $0xc68] sm:$0xff]
    %v519 = vld [vmem:[#allocation5 + $0xc70] sm:$0xff]
    %v520 = vld [vmem:[#allocation5 + $0xc78] sm:$0xff]
    %v521 = vld [vmem:[#allocation5 + $0xc80] sm:$0xff]
    %v522 = vld [vmem:[#allocation5 + $0xc88] sm:$0xff]
    %v523 = vld [vmem:[#allocation5 + $0xc90] sm:$0xff]
    %v524 = vld [vmem:[#allocation5 + $0xc98] sm:$0xff]
    %v525 = vld [vmem:[#allocation5 + $0xca0] sm:$0xff]
    %v526 = vld [vmem:[#allocation5 + $0xca8] sm:$0xff]
    %v527 = vld [vmem:[#allocation5 + $0xcb0] sm:$0xff]
    %v528 = vld [vmem:[#allocation5 + $0xcb8] sm:$0xff]
    %v529 = vld [vmem:[#allocation5 + $0xcc0] sm:$0xff]
    %v530 = vld [vmem:[#allocation5 + $0xcc8] sm:$0xff]
    %v531 = vld [vmem:[#allocation5 + $0xcd0] sm:$0xff]
    %v532 = vld [vmem:[#allocation5 + $0xcd8] sm:$0xff]
    %v533 = vld [vmem:[#allocation5 + $0xce0] sm:$0xff]
    %v534 = vld [vmem:[#allocation5 + $0xce8] sm:$0xff]
    %v535 = vld [vmem:[#allocation5 + $0xcf0] sm:$0xff]
    %v536 = vld [vmem:[#allocation5 + $0xcf8] sm:$0xff]
    %v537 = vld [vmem:[#allocation5 + $0xd00] sm:$0xff]
    %v538 = vld [vmem:[#allocation5 + $0xd08] sm:$0xff]
    %v539 = vld [vmem:[#allocation5 + $0xd10] sm:$0xff]
    %v540 = vld [vmem:[#allocation5 + $0xd18] sm:$0xff]
    %v541 = vld [vmem:[#allocation5 + $0xd20] sm:$0xff]
    %v542 = vld [vmem:[#allocation5 + $0xd28] sm:$0xff]
    %v543 = vld [vmem:[#allocation5 + $0xd30] sm:$0xff]
    %v544 = vld [vmem:[#allocation5 + $0xd38] sm:$0xff]
    %v545 = vld [vmem:[#allocation5 + $0xd40] sm:$0xff]
    %v546 = vld [vmem:[#allocation5 + $0xd48] sm:$0xff]
    %v547 = vld [vmem:[#allocation5 + $0xd50] sm:$0xff]
    %v548 = vld [vmem:[#allocation5 + $0xd58] sm:$0xff]
    %v549 = vld [vmem:[#allocation5 + $0xd60] sm:$0xff]
    %v550 = vld [vmem:[#allocation5 + $0xd68] sm:$0xff]
    %v551 = vld [vmem:[#allocation5 + $0xd70] sm:$0xff]
    %v552 = vld [vmem:[#allocation5 + $0xd78] sm:$0xff]
    %v553 = vld [vmem:[#allocation5 + $0xd80] sm:$0xff]
    %v554 = vld [vmem:[#allocation5 + $0xd88] sm:$0xff]
    %v555 = vld [vmem:[#allocation5 + $0xd90] sm:$0xff]
    %v556 = vld [vmem:[#allocation5 + $0xd98] sm:$0xff]
    %v557 = vld [vmem:[#allocation5 + $0xda0] sm:$0xff]
    %v558 = vld [vmem:[#allocation5 + $0xda8] sm:$0xff]
    %v559 = vld [vmem:[#allocation5 + $0xdb0] sm:$0xff]
    %v560 = vld [vmem:[#allocation5 + $0xdb8] sm:$0xff]
    %v561 = vld [vmem:[#allocation5 + $0xdc0] sm:$0xff]
    %v562 = vld [vmem:[#allocation5 + $0xdc8] sm:$0xff]
    %v563 = vld [vmem:[#allocation5 + $0xdd0] sm:$0xff]
    %v564 = vld [vmem:[#allocation5 + $0xdd8] sm:$0xff]
    %v565 = vld [vmem:[#allocation5 + $0xde0] sm:$0xff]
    %v566 = vld [vmem:[#allocation5 + $0xde8] sm:$0xff]
    %v567 = vld [vmem:[#allocation5 + $0xdf0] sm:$0xff]
    %v568 = vld [vmem:[#allocation5 + $0xdf8] sm:$0xff]
    %v569 = vld [vmem:[#allocation5 + $0xe00] sm:$0xff]
    %v570 = vld [vmem:[#allocation5 + $0xe08] sm:$0xff]
    %v571 = vld [vmem:[#allocation5 + $0xe10] sm:$0xff]
    %v572 = vld [vmem:[#allocation5 + $0xe18] sm:$0xff]
    %v573 = vld [vmem:[#allocation5 + $0xe20] sm:$0xff]
    %v574 = vld [vmem:[#allocation5 + $0xe28] sm:$0xff]
    %v575 = vld [vmem:[#allocation5 + $0xe30] sm:$0xff]
    %v576 = vld [vmem:[#allocation5 + $0xe38] sm:$0xff]
    %v577 = vld [vmem:[#allocation5 + $0xe40] sm:$0xff]
    %v578 = vld [vmem:[#allocation5 + $0xe48] sm:$0xff]
    %v579 = vld [vmem:[#allocation5 + $0xe50] sm:$0xff]
    %v580 = vld [vmem:[#allocation5 + $0xe58] sm:$0xff]
    %v581 = vld [vmem:[#allocation5 + $0xe60] sm:$0xff]
    %v582 = vld [vmem:[#allocation5 + $0xe68] sm:$0xff]
    %v583 = vld [vmem:[#allocation5 + $0xe70] sm:$0xff]
    %v584 = vld [vmem:[#allocation5 + $0xe78] sm:$0xff]
    %v585 = vld [vmem:[#allocation5 + $0xe80] sm:$0xff]
    %v586 = vld [vmem:[#allocation5 + $0xe88] sm:$0xff]
    %v587 = vld [vmem:[#allocation5 + $0xe90] sm:$0xff]
    %v588 = vld [vmem:[#allocation5 + $0xe98] sm:$0xff]
    %v589 = vld [vmem:[#allocation5 + $0xea0] sm:$0xff]
    %v590 = vld [vmem:[#allocation5 + $0xea8] sm:$0xff]
    %v591 = vld [vmem:[#allocation5 + $0xeb0] sm:$0xff]
    %v592 = vld [vmem:[#allocation5 + $0xeb8] sm:$0xff]
    %v593 = vld [vmem:[#allocation5 + $0xec0] sm:$0xff]
    %v594 = vld [vmem:[#allocation5 + $0xec8] sm:$0xff]
    %v595 = vld [vmem:[#allocation5 + $0xed0] sm:$0xff]
    %v596 = vld [vmem:[#allocation5 + $0xed8] sm:$0xff]
    %v597 = vld [vmem:[#allocation5 + $0xee0] sm:$0xff]
    %v598 = vld [vmem:[#allocation5 + $0xee8] sm:$0xff]
    %v599 = vld [vmem:[#allocation5 + $0xef0] sm:$0xff]
    %v600 = vld [vmem:[#allocation5 + $0xef8] sm:$0xff]
    %v601 = vld [vmem:[#allocation5 + $0xf00] sm:$0xff]
    %v602 = vld [vmem:[#allocation5 + $0xf08] sm:$0xff]
    %v603 = vld [vmem:[#allocation5 + $0xf10] sm:$0xff]
    %v604 = vld [vmem:[#allocation5 + $0xf18] sm:$0xff]
    %v605 = vld [vmem:[#allocation5 + $0xf20] sm:$0xff]
    %v606 = vld [vmem:[#allocation5 + $0xf28] sm:$0xff]
    %v607 = vld [vmem:[#allocation5 + $0xf30] sm:$0xff]
    %v608 = vld [vmem:[#allocation5 + $0xf38] sm:$0xff]
    %v609 = vld [vmem:[#allocation5 + $0xf40] sm:$0xff]
    %v610 = vld [vmem:[#allocation5 + $0xf48] sm:$0xff]
    %v611 = vld [vmem:[#allocation5 + $0xf50] sm:$0xff]
    %v612 = vld [vmem:[#allocation5 + $0xf58] sm:$0xff]
    %v613 = vld [vmem:[#allocation5 + $0xf60] sm:$0xff]
    %v614 = vld [vmem:[#allocation5 + $0xf68] sm:$0xff]
    %v615 = vld [vmem:[#allocation5 + $0xf70] sm:$0xff]
    %v616 = vld [vmem:[#allocation5 + $0xf78] sm:$0xff]
    %v617 = vld [vmem:[#allocation5 + $0xf80] sm:$0xff]
    %v618 = vld [vmem:[#allocation5 + $0xf88] sm:$0xff]
    %v619 = vld [vmem:[#allocation5 + $0xf90] sm:$0xff]
    %v620 = vld [vmem:[#allocation5 + $0xf98] sm:$0xff]
    %v621 = vld [vmem:[#allocation5 + $0xfa0] sm:$0xff]
    %v622 = vld [vmem:[#allocation5 + $0xfa8] sm:$0xff]
    %v623 = vld [vmem:[#allocation5 + $0xfb0] sm:$0xff]
    %v624 = vld [vmem:[#allocation5 + $0xfb8] sm:$0xff]
    %v625 = vld [vmem:[#allocation5 + $0xfc0] sm:$0xff]
    %v626 = vld [vmem:[#allocation5 + $0xfc8] sm:$0xff]
    %v627 = vld [vmem:[#allocation5 + $0xfd0] sm:$0xff]
    %v628 = vld [vmem:[#allocation5 + $0xfd8] sm:$0xff]
    %v629 = vld [vmem:[#allocation5 + $0xfe0] sm:$0xff]
    %v630 = vld [vmem:[#allocation5 + $0xfe8] sm:$0xff]
    %v631 = vld [vmem:[#allocation5 + $0xff0] sm:$0xff]
    %v632 = vld [vmem:[#allocation5 + $0xff8] sm:$0xff]
    %v633 = vld [vmem:[#allocation5 + $0x1000] sm:$0xff]
    %v634 = vld [vmem:[#allocation5 + $0x1008] sm:$0xff]
    %v635 = vld [vmem:[#allocation5 + $0x1010] sm:$0xff]
    %v636 = vld [vmem:[#allocation5 + $0x1018] sm:$0xff]
    %v637 = vld [vmem:[#allocation5 + $0x1020] sm:$0xff]
    %v638 = vld [vmem:[#allocation5 + $0x1028] sm:$0xff]
    %v639 = vld [vmem:[#allocation5 + $0x1030] sm:$0xff]
    %v640 = vld [vmem:[#allocation5 + $0x1038] sm:$0xff]
    %v641 = vld [vmem:[#allocation5 + $0x1040] sm:$0xff]
    %v642 = vld [vmem:[#allocation5 + $0x1048] sm:$0xff]
    %v643 = vld [vmem:[#allocation5 + $0x1050] sm:$0xff]
    %v644 = vld [vmem:[#allocation5 + $0x1058] sm:$0xff]
    %v645 = vld [vmem:[#allocation5 + $0x1060] sm:$0xff]
    %v646 = vld [vmem:[#allocation5 + $0x1068] sm:$0xff]
    %v647 = vld [vmem:[#allocation5 + $0x1070] sm:$0xff]
    %v648 = vld [vmem:[#allocation5 + $0x1078] sm:$0xff]
    %v649 = vld [vmem:[#allocation5 + $0x1080] sm:$0xff]
    %v650 = vld [vmem:[#allocation5 + $0x1088] sm:$0xff]
    %v651 = vld [vmem:[#allocation5 + $0x1090] sm:$0xff]
    %v652 = vld [vmem:[#allocation5 + $0x1098] sm:$0xff]
    %v653 = vld [vmem:[#allocation5 + $0x10a0] sm:$0xff]
    %v654 = vld [vmem:[#allocation5 + $0x10a8] sm:$0xff]
    %v655 = vld [vmem:[#allocation5 + $0x10b0] sm:$0xff]
    %v656 = vld [vmem:[#allocation5 + $0x10b8] sm:$0xff]
    %v657 = vld [vmem:[#allocation5 + $0x10c0] sm:$0xff]
    %v658 = vld [vmem:[#allocation5 + $0x10c8] sm:$0xff]
    %v659 = vld [vmem:[#allocation5 + $0x10d0] sm:$0xff]
    %v660 = vld [vmem:[#allocation5 + $0x10d8] sm:$0xff]
    %v661 = vld [vmem:[#allocation5 + $0x10e0] sm:$0xff]
    %v662 = vld [vmem:[#allocation5 + $0x10e8] sm:$0xff]
    %v663 = vld [vmem:[#allocation5 + $0x10f0] sm:$0xff]
    %v664 = vld [vmem:[#allocation5 + $0x10f8] sm:$0xff]
    %v665 = vld [vmem:[#allocation5 + $0x1100] sm:$0xff]
    %v666 = vld [vmem:[#allocation5 + $0x1108] sm:$0xff]
    %v667 = vld [vmem:[#allocation5 + $0x1110] sm:$0xff]
    %v668 = vld [vmem:[#allocation5 + $0x1118] sm:$0xff]
    %v669 = vld [vmem:[#allocation5 + $0x1120] sm:$0xff]
    %v670 = vld [vmem:[#allocation5 + $0x1128] sm:$0xff]
    %v671 = vld [vmem:[#allocation5 + $0x1130] sm:$0xff]
    %v672 = vld [vmem:[#allocation5 + $0x1138] sm:$0xff]
    %v673 = vld [vmem:[#allocation5 + $0x1140] sm:$0xff]
    %v674 = vld [vmem:[#allocation5 + $0x1148] sm:$0xff]
    %v675 = vld [vmem:[#allocation5 + $0x1150] sm:$0xff]
    %v676 = vld [vmem:[#allocation5 + $0x1158] sm:$0xff]
    %v677 = vld [vmem:[#allocation5 + $0x1160] sm:$0xff]
    %v678 = vld [vmem:[#allocation5 + $0x1168] sm:$0xff]
    %v679 = vld [vmem:[#allocation5 + $0x1170] sm:$0xff]
    %v680 = vld [vmem:[#allocation5 + $0x1178] sm:$0xff]
    %v681 = vld [vmem:[#allocation5 + $0x1180] sm:$0xff]
    %v682 = vld [vmem:[#allocation5 + $0x1188] sm:$0xff]
    %v683 = vld [vmem:[#allocation5 + $0x1190] sm:$0xff]
    %v684 = vld [vmem:[#allocation5 + $0x1198] sm:$0xff]
    %v685 = vld [vmem:[#allocation5 + $0x11a0] sm:$0xff]
    %v686 = vld [vmem:[#allocation5 + $0x11a8] sm:$0xff]
    %v687 = vld [vmem:[#allocation5 + $0x11b0] sm:$0xff]
    %v688 = vld [vmem:[#allocation5 + $0x11b8] sm:$0xff]
    %v689 = vld [vmem:[#allocation5 + $0x11c0] sm:$0xff]
    %v690 = vld [vmem:[#allocation5 + $0x11c8] sm:$0xff]
    %v691 = vld [vmem:[#allocation5 + $0x11d0] sm:$0xff]
    %v692 = vld [vmem:[#allocation5 + $0x11d8] sm:$0xff]
    %v693 = vld [vmem:[#allocation5 + $0x11e0] sm:$0xff]
    %v694 = vld [vmem:[#allocation5 + $0x11e8] sm:$0xff]
    %v695 = vld [vmem:[#allocation5 + $0x11f0] sm:$0xff]
    %v696 = vld [vmem:[#allocation5 + $0x11f8] sm:$0xff]
    %v697 = vld [vmem:[#allocation5 + $0x1200] sm:$0xff]
    %v698 = vld [vmem:[#allocation5 + $0x1208] sm:$0xff]
    %v699 = vld [vmem:[#allocation5 + $0x1210] sm:$0xff]
    %v700 = vld [vmem:[#allocation5 + $0x1218] sm:$0xff]
    %v701 = vld [vmem:[#allocation5 + $0x1220] sm:$0xff]
    %v702 = vld [vmem:[#allocation5 + $0x1228] sm:$0xff]
    %v703 = vld [vmem:[#allocation5 + $0x1230] sm:$0xff]
    %v704 = vld [vmem:[#allocation5 + $0x1238] sm:$0xff]
    %v705 = vld [vmem:[#allocation5 + $0x1240] sm:$0xff]
    %v706 = vld [vmem:[#allocation5 + $0x1248] sm:$0xff]
    %v707 = vld [vmem:[#allocation5 + $0x1250] sm:$0xff]
    %v708 = vld [vmem:[#allocation5 + $0x1258] sm:$0xff]
    %v709 = vld [vmem:[#allocation5 + $0x1260] sm:$0xff]
    %v710 = vld [vmem:[#allocation5 + $0x1268] sm:$0xff]
    %v711 = vld [vmem:[#allocation5 + $0x1270] sm:$0xff]
    %v712 = vld [vmem:[#allocation5 + $0x1278] sm:$0xff]
    %v713 = vld [vmem:[#allocation5 + $0x1280] sm:$0xff]
    %v714 = vld [vmem:[#allocation5 + $0x1288] sm:$0xff]
    %v715 = vld [vmem:[#allocation5 + $0x1290] sm:$0xff]
    %v716 = vld [vmem:[#allocation5 + $0x1298] sm:$0xff]
    %v717 = vld [vmem:[#allocation5 + $0x12a0] sm:$0xff]
    %v718 = vld [vmem:[#allocation5 + $0x12a8] sm:$0xff]
    %v719 = vld [vmem:[#allocation5 + $0x12b0] sm:$0xff]
    %v720 = vld [vmem:[#allocation5 + $0x12b8] sm:$0xff]
    %v721 = vld [vmem:[#allocation5 + $0x12c0] sm:$0xff]
    %v722 = vld [vmem:[#allocation5 + $0x12c8] sm:$0xff]
    %v723 = vld [vmem:[#allocation5 + $0x12d0] sm:$0xff]
    %v724 = vld [vmem:[#allocation5 + $0x12d8] sm:$0xff]
    %v725 = vld [vmem:[#allocation5 + $0x12e0] sm:$0xff]
    %v726 = vld [vmem:[#allocation5 + $0x12e8] sm:$0xff]
    %v727 = vld [vmem:[#allocation5 + $0x12f0] sm:$0xff]
    %v728 = vld [vmem:[#allocation5 + $0x12f8] sm:$0xff]
    %v729 = vld [vmem:[#allocation5 + $0x1300] sm:$0xff]
    %v730 = vld [vmem:[#allocation5 + $0x1308] sm:$0xff]
    %v731 = vld [vmem:[#allocation5 + $0x1310] sm:$0xff]
    %v732 = vld [vmem:[#allocation5 + $0x1318] sm:$0xff]
    %v733 = vld [vmem:[#allocation5 + $0x1320] sm:$0xff]
    %v734 = vld [vmem:[#allocation5 + $0x1328] sm:$0xff]
    %v735 = vld [vmem:[#allocation5 + $0x1330] sm:$0xff]
    %v736 = vld [vmem:[#allocation5 + $0x1338] sm:$0xff]
    %v737 = vld [vmem:[#allocation5 + $0x1340] sm:$0xff]
    %v738 = vld [vmem:[#allocation5 + $0x1348] sm:$0xff]
    %v739 = vld [vmem:[#allocation5 + $0x1350] sm:$0xff]
    %v740 = vld [vmem:[#allocation5 + $0x1358] sm:$0xff]
    %v741 = vld [vmem:[#allocation5 + $0x1360] sm:$0xff]
    %v742 = vld [vmem:[#allocation5 + $0x1368] sm:$0xff]
    %v743 = vld [vmem:[#allocation5 + $0x1370] sm:$0xff]
    %v744 = vld [vmem:[#allocation5 + $0x1378] sm:$0xff]
    %v745 = vld [vmem:[#allocation5 + $0x1380] sm:$0xff]
    %v746 = vld [vmem:[#allocation5 + $0x1388] sm:$0xff]
    %v747 = vld [vmem:[#allocation5 + $0x1390] sm:$0xff]
    %v748 = vld [vmem:[#allocation5 + $0x1398] sm:$0xff]
    %v749 = vld [vmem:[#allocation5 + $0x13a0] sm:$0xff]
    %v750 = vld [vmem:[#allocation5 + $0x13a8] sm:$0xff]
    %v751 = vld [vmem:[#allocation5 + $0x13b0] sm:$0xff]
    %v752 = vld [vmem:[#allocation5 + $0x13b8] sm:$0xff]
    %v753 = vld [vmem:[#allocation5 + $0x13c0] sm:$0xff]
    %v754 = vld [vmem:[#allocation5 + $0x13c8] sm:$0xff]
    %v755 = vld [vmem:[#allocation5 + $0x13d0] sm:$0xff]
    %v756 = vld [vmem:[#allocation5 + $0x13d8] sm:$0xff]
    %v757 = vld [vmem:[#allocation5 + $0x13e0] sm:$0xff]
    %v758 = vld [vmem:[#allocation5 + $0x13e8] sm:$0xff]
    %v759 = vld [vmem:[#allocation5 + $0x13f0] sm:$0xff]
    %v760 = vld [vmem:[#allocation5 + $0x13f8] sm:$0xff]
    %v761 = vld [vmem:[#allocation5 + $0x1400] sm:$0xff]
    %v762 = vld [vmem:[#allocation5 + $0x1408] sm:$0xff]
    %v763 = vld [vmem:[#allocation5 + $0x1410] sm:$0xff]
    %v764 = vld [vmem:[#allocation5 + $0x1418] sm:$0xff]
    %v765 = vld [vmem:[#allocation5 + $0x1420] sm:$0xff]
    %v766 = vld [vmem:[#allocation5 + $0x1428] sm:$0xff]
    %v767 = vld [vmem:[#allocation5 + $0x1430] sm:$0xff]
    %v768 = vld [vmem:[#allocation5 + $0x1438] sm:$0xff]
    %v769 = vld [vmem:[#allocation5 + $0x1440] sm:$0xff]
    %v770 = vld [vmem:[#allocation5 + $0x1448] sm:$0xff]
    %v771 = vld [vmem:[#allocation5 + $0x1450] sm:$0xff]
    %v772 = vld [vmem:[#allocation5 + $0x1458] sm:$0xff]
    %v773 = vld [vmem:[#allocation5 + $0x1460] sm:$0xff]
    %v774 = vld [vmem:[#allocation5 + $0x1468] sm:$0xff]
    %v775 = vld [vmem:[#allocation5 + $0x1470] sm:$0xff]
    %v776 = vld [vmem:[#allocation5 + $0x1478] sm:$0xff]
    %v777 = vld [vmem:[#allocation5 + $0x1480] sm:$0xff]
    %v778 = vld [vmem:[#allocation5 + $0x1488] sm:$0xff]
    %v779 = vld [vmem:[#allocation5 + $0x1490] sm:$0xff]
    %v780 = vld [vmem:[#allocation5 + $0x1498] sm:$0xff]
    %v781 = vld [vmem:[#allocation5 + $0x14a0] sm:$0xff]
    %v782 = vld [vmem:[#allocation5 + $0x14a8] sm:$0xff]
    %v783 = vld [vmem:[#allocation5 + $0x14b0] sm:$0xff]
    %v784 = vld [vmem:[#allocation5 + $0x14b8] sm:$0xff]
    %v785 = vld [vmem:[#allocation5 + $0x14c0] sm:$0xff]
    %v786 = vld [vmem:[#allocation5 + $0x14c8] sm:$0xff]
    %v787 = vld [vmem:[#allocation5 + $0x14d0] sm:$0xff]
    %v788 = vld [vmem:[#allocation5 + $0x14d8] sm:$0xff]
    %v789 = vld [vmem:[#allocation5 + $0x14e0] sm:$0xff]
    %v790 = vld [vmem:[#allocation5 + $0x14e8] sm:$0xff]
    %v791 = vld [vmem:[#allocation5 + $0x14f0] sm:$0xff]
    %v792 = vld [vmem:[#allocation5 + $0x14f8] sm:$0xff]
    %v793 = vld [vmem:[#allocation5 + $0x1500] sm:$0xff]
    %v794 = vld [vmem:[#allocation5 + $0x1508] sm:$0xff]
    %v795 = vld [vmem:[#allocation5 + $0x1510] sm:$0xff]
    %v796 = vld [vmem:[#allocation5 + $0x1518] sm:$0xff]
    %v797 = vld [vmem:[#allocation5 + $0x1520] sm:$0xff]
    %v798 = vld [vmem:[#allocation5 + $0x1528] sm:$0xff]
    %v799 = vld [vmem:[#allocation5 + $0x1530] sm:$0xff]
    %v800 = vld [vmem:[#allocation5 + $0x1538] sm:$0xff]
    %v801 = vld [vmem:[#allocation5 + $0x1540] sm:$0xff]
    %v802 = vld [vmem:[#allocation5 + $0x1548] sm:$0xff]
    %v803 = vld [vmem:[#allocation5 + $0x1550] sm:$0xff]
    %v804 = vld [vmem:[#allocation5 + $0x1558] sm:$0xff]
    %v805 = vld [vmem:[#allocation5 + $0x1560] sm:$0xff]
    %v806 = vld [vmem:[#allocation5 + $0x1568] sm:$0xff]
    %v807 = vld [vmem:[#allocation5 + $0x1570] sm:$0xff]
    %v808 = vld [vmem:[#allocation5 + $0x1578] sm:$0xff]
    %v809 = vld [vmem:[#allocation5 + $0x1580] sm:$0xff]
    %v810 = vld [vmem:[#allocation5 + $0x1588] sm:$0xff]
    %v811 = vld [vmem:[#allocation5 + $0x1590] sm:$0xff]
    %v812 = vld [vmem:[#allocation5 + $0x1598] sm:$0xff]
    %v813 = vld [vmem:[#allocation5 + $0x15a0] sm:$0xff]
    %v814 = vld [vmem:[#allocation5 + $0x15a8] sm:$0xff]
    %v815 = vld [vmem:[#allocation5 + $0x15b0] sm:$0xff]
    %v816 = vld [vmem:[#allocation5 + $0x15b8] sm:$0xff]
    %v817 = vld [vmem:[#allocation5 + $0x15c0] sm:$0xff]
    %v818 = vld [vmem:[#allocation5 + $0x15c8] sm:$0xff]
    %v819 = vld [vmem:[#allocation5 + $0x15d0] sm:$0xff]
    %v820 = vld [vmem:[#allocation5 + $0x15d8] sm:$0xff]
    %v821 = vld [vmem:[#allocation5 + $0x15e0] sm:$0xff]
    %v822 = vld [vmem:[#allocation5 + $0x15e8] sm:$0xff]
    %v823 = vld [vmem:[#allocation5 + $0x15f0] sm:$0xff]
    %v824 = vld [vmem:[#allocation5 + $0x15f8] sm:$0xff]
    %v825 = vld [vmem:[#allocation5 + $0x1600] sm:$0xff]
    %v826 = vld [vmem:[#allocation5 + $0x1608] sm:$0xff]
    %v827 = vld [vmem:[#allocation5 + $0x1610] sm:$0xff]
    %v828 = vld [vmem:[#allocation5 + $0x1618] sm:$0xff]
    %v829 = vld [vmem:[#allocation5 + $0x1620] sm:$0xff]
    %v830 = vld [vmem:[#allocation5 + $0x1628] sm:$0xff]
    %v831 = vld [vmem:[#allocation5 + $0x1630] sm:$0xff]
    %v832 = vld [vmem:[#allocation5 + $0x1638] sm:$0xff]
    %v833 = vld [vmem:[#allocation5 + $0x1640] sm:$0xff]
    %v834 = vld [vmem:[#allocation5 + $0x1648] sm:$0xff]
    %v835 = vld [vmem:[#allocation5 + $0x1650] sm:$0xff]
    %v836 = vld [vmem:[#allocation5 + $0x1658] sm:$0xff]
    %v837 = vld [vmem:[#allocation5 + $0x1660] sm:$0xff]
    %v838 = vld [vmem:[#allocation5 + $0x1668] sm:$0xff]
    %v839 = vld [vmem:[#allocation5 + $0x1670] sm:$0xff]
    %v840 = vld [vmem:[#allocation5 + $0x1678] sm:$0xff]
    %v841 = vld [vmem:[#allocation5 + $0x1680] sm:$0xff]
    %v842 = vld [vmem:[#allocation5 + $0x1688] sm:$0xff]
    %v843 = vld [vmem:[#allocation5 + $0x1690] sm:$0xff]
    %v844 = vld [vmem:[#allocation5 + $0x1698] sm:$0xff]
    %v845 = vld [vmem:[#allocation5 + $0x16a0] sm:$0xff]
    %v846 = vld [vmem:[#allocation5 + $0x16a8] sm:$0xff]
    %v847 = vld [vmem:[#allocation5 + $0x16b0] sm:$0xff]
    %v848 = vld [vmem:[#allocation5 + $0x16b8] sm:$0xff]
    %v849 = vld [vmem:[#allocation5 + $0x16c0] sm:$0xff]
    %v850 = vld [vmem:[#allocation5 + $0x16c8] sm:$0xff]
    %v851 = vld [vmem:[#allocation5 + $0x16d0] sm:$0xff]
    %v852 = vld [vmem:[#allocation5 + $0x16d8] sm:$0xff]
    %v853 = vld [vmem:[#allocation5 + $0x16e0] sm:$0xff]
    %v854 = vld [vmem:[#allocation5 + $0x16e8] sm:$0xff]
    %v855 = vld [vmem:[#allocation5 + $0x16f0] sm:$0xff]
    %v856 = vld [vmem:[#allocation5 + $0x16f8] sm:$0xff]
    %v857 = vld [vmem:[#allocation5 + $0x1700] sm:$0xff]
    %v858 = vld [vmem:[#allocation5 + $0x1708] sm:$0xff]
    %v859 = vld [vmem:[#allocation5 + $0x1710] sm:$0xff]
    %v860 = vld [vmem:[#allocation5 + $0x1718] sm:$0xff]
    %v861 = vld [vmem:[#allocation5 + $0x1720] sm:$0xff]
    %v862 = vld [vmem:[#allocation5 + $0x1728] sm:$0xff]
    %v863 = vld [vmem:[#allocation5 + $0x1730] sm:$0xff]
    %v864 = vld [vmem:[#allocation5 + $0x1738] sm:$0xff]
    %v865 = vld [vmem:[#allocation5 + $0x1740] sm:$0xff]
    %v866 = vld [vmem:[#allocation5 + $0x1748] sm:$0xff]
    %v867 = vld [vmem:[#allocation5 + $0x1750] sm:$0xff]
    %v868 = vld [vmem:[#allocation5 + $0x1758] sm:$0xff]
    %v869 = vld [vmem:[#allocation5 + $0x1760] sm:$0xff]
    %v870 = vld [vmem:[#allocation5 + $0x1768] sm:$0xff]
    %v871 = vld [vmem:[#allocation5 + $0x1770] sm:$0xff]
    %v872 = vld [vmem:[#allocation5 + $0x1778] sm:$0xff]
    %v873 = vld [vmem:[#allocation5 + $0x1780] sm:$0xff]
    %v874 = vld [vmem:[#allocation5 + $0x1788] sm:$0xff]
    %v875 = vld [vmem:[#allocation5 + $0x1790] sm:$0xff]
    %v876 = vld [vmem:[#allocation5 + $0x1798] sm:$0xff]
    %v877 = vld [vmem:[#allocation5 + $0x17a0] sm:$0xff]
    %v878 = vld [vmem:[#allocation5 + $0x17a8] sm:$0xff]
    %v879 = vld [vmem:[#allocation5 + $0x17b0] sm:$0xff]
    %v880 = vld [vmem:[#allocation5 + $0x17b8] sm:$0xff]
    %v881 = vld [vmem:[#allocation5 + $0x17c0] sm:$0xff]
    %v882 = vld [vmem:[#allocation5 + $0x17c8] sm:$0xff]
    %v883 = vld [vmem:[#allocation5 + $0x17d0] sm:$0xff]
    %v884 = vld [vmem:[#allocation5 + $0x17d8] sm:$0xff]
    %v885 = vld [vmem:[#allocation5 + $0x17e0] sm:$0xff]
    %v886 = vld [vmem:[#allocation5 + $0x17e8] sm:$0xff]
    %v887 = vld [vmem:[#allocation5 + $0x17f0] sm:$0xff]
    %v888 = vld [vmem:[#allocation5 + $0x17f8] sm:$0xff]
    %v889 = vld [vmem:[#allocation5 + $0x1800] sm:$0xff]
    %v890 = vld [vmem:[#allocation5 + $0x1808] sm:$0xff]
    %v891 = vld [vmem:[#allocation5 + $0x1810] sm:$0xff]
    %v892 = vld [vmem:[#allocation5 + $0x1818] sm:$0xff]
    %v893 = vld [vmem:[#allocation5 + $0x1820] sm:$0xff]
    %v894 = vld [vmem:[#allocation5 + $0x1828] sm:$0xff]
    %v895 = vld [vmem:[#allocation5 + $0x1830] sm:$0xff]
    %v896 = vld [vmem:[#allocation5 + $0x1838] sm:$0xff]
    %v897 = vld [vmem:[#allocation5 + $0x1840] sm:$0xff]
    %v898 = vld [vmem:[#allocation5 + $0x1848] sm:$0xff]
    %v899 = vld [vmem:[#allocation5 + $0x1850] sm:$0xff]
    %v900 = vld [vmem:[#allocation5 + $0x1858] sm:$0xff]
    %v901 = vld [vmem:[#allocation5 + $0x1860] sm:$0xff]
    %v902 = vld [vmem:[#allocation5 + $0x1868] sm:$0xff]
    %v903 = vld [vmem:[#allocation5 + $0x1870] sm:$0xff]
    %v904 = vld [vmem:[#allocation5 + $0x1878] sm:$0xff]
    %v905 = vld [vmem:[#allocation7] sm:$0xff]
    %v907 = vlaneseq
    %v908 = vshrl.u32 %v907, 7
    %v909 = vsub.s32 0, %v908
    %v910 = vrot.slane %v905, %v909
    %v911 = vlaneseq
    %v912 = vshrl.u32 %v911, 7
    %v913 = vsub.s32 1, %v912
    %v914 = vrot.slane %v905, %v913
    %v915 = vlaneseq
    %v916 = vshrl.u32 %v915, 7
    %v917 = vsub.s32 2, %v916
    %v918 = vrot.slane %v905, %v917
    %v919 = vlaneseq
    %v920 = vshrl.u32 %v919, 7
    %v921 = vsub.s32 3, %v920
    %v922 = vrot.slane %v905, %v921
    %v923 = vlaneseq
    %v924 = vshrl.u32 %v923, 7
    %v925 = vsub.s32 4, %v924
    %v926 = vrot.slane %v905, %v925
    %v927 = vlaneseq
    %v928 = vshrl.u32 %v927, 7
    %v929 = vsub.s32 5, %v928
    %v930 = vrot.slane %v905, %v929
    %v931 = vlaneseq
    %v932 = vshrl.u32 %v931, 7
    %v933 = vsub.s32 6, %v932
    %v934 = vrot.slane %v905, %v933
    %942 = vmatprep.subr.mxu0 %v227
    %943 = vmatpush1.msra.mxu0 %v226
    %944 = vmatprep.subr.mxu0 %v220
    %945 = vmatpush1.msra.mxu0 %v219
    %946 = vmatprep.subr.mxu0 %v213
    %947 = vmatpush1.msra.mxu0 %v212
    %948 = vmatprep.subr.mxu0 %v206
    %949 = vmatpush1.msra.mxu0 %v205
    %950 = vmatprep.subr.mxu0 %v199
    %951 = vmatpush1.msra.mxu0 %v198
    %952 = vmatprep.subr.mxu0 %v192
    %953 = vmatpush1.msra.mxu0 %v191
    %954 = vmatprep.subr.mxu0 %v185
    %955 = vmatpush1.msra.mxu0 %v184
    %956 = vmatprep.subr.mxu0 %v178
    %957 = vmatpush1.msra.mxu0 %v177
    %958 = vmatprep.subr.mxu0 %v171
    %959 = vmatpush1.msra.mxu0 %v170
    %960 = vmatprep.subr.mxu0 %v164
    %961 = vmatpush1.msra.mxu0 %v163
    %962 = vmatprep.subr.mxu0 %v157
    %963 = vmatpush1.msra.mxu0 %v156
    %964 = vmatprep.subr.mxu0 %v150
    %965 = vmatpush1.msra.mxu0 %v149
    %966 = vmatprep.subr.mxu0 %v143
    %967 = vmatpush1.msra.mxu0 %v142
    %968 = vmatprep.subr.mxu0 %v136
    %969 = vmatpush1.msra.mxu0 %v135
    %970 = vmatprep.subr.mxu0 %v129
    %971 = vmatpush1.msra.mxu0 %v128
    %972 = vmatprep.subr.mxu0 %v122
    %973 = vmatpush1.msra.mxu0 %v121
    %974 = vmatprep.subr.mxu0 %v339
    %975 = vmatpush2.msra.mxu0 %v338
    %976 = vmatprep.subr.mxu0 %v332
    %977 = vmatpush2.msra.mxu0 %v331
    %978 = vmatprep.subr.mxu0 %v325
    %979 = vmatpush2.msra.mxu0 %v324
    %980 = vmatprep.subr.mxu0 %v318
    %981 = vmatpush2.msra.mxu0 %v317
    %982 = vmatprep.subr.mxu0 %v311
    %983 = vmatpush2.msra.mxu0 %v310
    %984 = vmatprep.subr.mxu0 %v304
    %985 = vmatpush2.msra.mxu0 %v303
    %986 = vmatprep.subr.mxu0 %v297
    %987 = vmatpush2.msra.mxu0 %v296
    %988 = vmatprep.subr.mxu0 %v290
    %989 = vmatpush2.msra.mxu0 %v289
    %990 = vmatprep.subr.mxu0 %v283
    %991 = vmatpush2.msra.mxu0 %v282
    %992 = vmatprep.subr.mxu0 %v276
    %993 = vmatpush2.msra.mxu0 %v275
    %994 = vmatprep.subr.mxu0 %v269
    %995 = vmatpush2.msra.mxu0 %v268
    %996 = vmatprep.subr.mxu0 %v262
    %997 = vmatpush2.msra.mxu0 %v261
    %998 = vmatprep.subr.mxu0 %v255
    %999 = vmatpush2.msra.mxu0 %v254
    %1000 = vmatprep.subr.mxu0 %v248
    %1001 = vmatpush2.msra.mxu0 %v247
    %1002 = vmatprep.subr.mxu0 %v241
    %1003 = vmatpush2.msra.mxu0 %v240
    %1004 = vmatprep.subr.mxu0 %v234
    %1005 = vmatpush2.msra.mxu0 %v233
    %1006 = vmatprep.mubr.f32.mxu0 %v115
    %1007 = vmatmul.mubr.f32.gmra.mxu0 %v114
    %v1008 = vpop.f32.mrf.mxu0
    %v1009 = vadd.f32 %v910, %v1008
    %v1010 = vpop.f32.mrf.mxu0
    %v1011 = vadd.f32 %v914, %v1010
    %1012 = vdwg.mxu0
    %1013 = vmatprep.subr.mxu0 %v451
    %1014 = vmatpush1.msra.mxu0 %v450
    %1015 = vmatprep.subr.mxu0 %v444
    %1016 = vmatpush1.msra.mxu0 %v443
    %1017 = vmatprep.subr.mxu0 %v437
    %1018 = vmatpush1.msra.mxu0 %v436
    %1019 = vmatprep.subr.mxu0 %v430
    %1020 = vmatpush1.msra.mxu0 %v429
    %1021 = vmatprep.subr.mxu0 %v423
    %1022 = vmatpush1.msra.mxu0 %v422
    %1023 = vmatprep.subr.mxu0 %v416
    %1024 = vmatpush1.msra.mxu0 %v415
    %1025 = vmatprep.subr.mxu0 %v409
    %1026 = vmatpush1.msra.mxu0 %v408
    %1027 = vmatprep.subr.mxu0 %v402
    %1028 = vmatpush1.msra.mxu0 %v401
    %1029 = vmatprep.subr.mxu0 %v395
    %1030 = vmatpush1.msra.mxu0 %v394
    %1031 = vmatprep.subr.mxu0 %v388
    %1032 = vmatpush1.msra.mxu0 %v387
    %1033 = vmatprep.subr.mxu0 %v381
    %1034 = vmatpush1.msra.mxu0 %v380
    %1035 = vmatprep.subr.mxu0 %v374
    %1036 = vmatpush1.msra.mxu0 %v373
    %1037 = vmatprep.subr.mxu0 %v367
    %1038 = vmatpush1.msra.mxu0 %v366
    %1039 = vmatprep.subr.mxu0 %v360
    %1040 = vmatpush1.msra.mxu0 %v359
    %1041 = vmatprep.subr.mxu0 %v353
    %1042 = vmatpush1.msra.mxu0 %v352
    %1043 = vmatprep.subr.mxu0 %v346
    %1044 = vmatpush1.msra.mxu0 %v345
    %1045 = vmatprep.subr.mxu0 %v563
    %1046 = vmatpush2.msra.mxu0 %v562
    %1047 = vmatprep.subr.mxu0 %v556
    %1048 = vmatpush2.msra.mxu0 %v555
    %1049 = vmatprep.subr.mxu0 %v549
    %1050 = vmatpush2.msra.mxu0 %v548
    %1051 = vmatprep.subr.mxu0 %v542
    %1052 = vmatpush2.msra.mxu0 %v541
    %1053 = vmatprep.subr.mxu0 %v535
    %1054 = vmatpush2.msra.mxu0 %v534
    %1055 = vmatprep.subr.mxu0 %v528
    %1056 = vmatpush2.msra.mxu0 %v527
    %1057 = vmatprep.subr.mxu0 %v521
    %1058 = vmatpush2.msra.mxu0 %v520
    %1059 = vmatprep.subr.mxu0 %v514
    %1060 = vmatpush2.msra.mxu0 %v513
    %1061 = vmatprep.subr.mxu0 %v507
    %1062 = vmatpush2.msra.mxu0 %v506
    %1063 = vmatprep.subr.mxu0 %v500
    %1064 = vmatpush2.msra.mxu0 %v499
    %1065 = vmatprep.subr.mxu0 %v493
    %1066 = vmatpush2.msra.mxu0 %v492
    %1067 = vmatprep.subr.mxu0 %v486
    %1068 = vmatpush2.msra.mxu0 %v485
    %1069 = vmatprep.subr.mxu0 %v479
    %1070 = vmatpush2.msra.mxu0 %v478
    %1071 = vmatprep.subr.mxu0 %v472
    %1072 = vmatpush2.msra.mxu0 %v471
    %1073 = vmatprep.subr.mxu0 %v465
    %1074 = vmatpush2.msra.mxu0 %v464
    %1075 = vmatprep.subr.mxu0 %v458
    %1076 = vmatpush2.msra.mxu0 %v457
    %1077 = vmatprep.mubr.f32.mxu0 %v117
    %1078 = vmatmul.mubr.f32.gmra.mxu0 %v116
    %v1079 = vpop.f32.mrf.mxu0
    %v1080 = vadd.f32 %v1009, %v1079
    %v1081 = vpop.f32.mrf.mxu0
    %v1082 = vadd.f32 %v1011, %v1081
    %1083 = vdwg.mxu0
    %1084 = vmatprep.subr.mxu0 %v675
    %1085 = vmatpush1.msra.mxu0 %v674
    %1086 = vmatprep.subr.mxu0 %v668
    %1087 = vmatpush1.msra.mxu0 %v667
    %1088 = vmatprep.subr.mxu0 %v661
    %1089 = vmatpush1.msra.mxu0 %v660
    %1090 = vmatprep.subr.mxu0 %v654
    %1091 = vmatpush1.msra.mxu0 %v653
    %1092 = vmatprep.subr.mxu0 %v647
    %1093 = vmatpush1.msra.mxu0 %v646
    %1094 = vmatprep.subr.mxu0 %v640
    %1095 = vmatpush1.msra.mxu0 %v639
    %1096 = vmatprep.subr.mxu0 %v633
    %1097 = vmatpush1.msra.mxu0 %v632
    %1098 = vmatprep.subr.mxu0 %v626
    %1099 = vmatpush1.msra.mxu0 %v625
    %1100 = vmatprep.subr.mxu0 %v619
    %1101 = vmatpush1.msra.mxu0 %v618
    %1102 = vmatprep.subr.mxu0 %v612
    %1103 = vmatpush1.msra.mxu0 %v611
    %1104 = vmatprep.subr.mxu0 %v605
    %1105 = vmatpush1.msra.mxu0 %v604
    %1106 = vmatprep.subr.mxu0 %v598
    %1107 = vmatpush1.msra.mxu0 %v597
    %1108 = vmatprep.subr.mxu0 %v591
    %1109 = vmatpush1.msra.mxu0 %v590
    %1110 = vmatprep.subr.mxu0 %v584
    %1111 = vmatpush1.msra.mxu0 %v583
    %1112 = vmatprep.subr.mxu0 %v577
    %1113 = vmatpush1.msra.mxu0 %v576
    %1114 = vmatprep.subr.mxu0 %v570
    %1115 = vmatpush1.msra.mxu0 %v569
    %1116 = vmatprep.subr.mxu0 %v787
    %1117 = vmatpush2.msra.mxu0 %v786
    %1118 = vmatprep.subr.mxu0 %v780
    %1119 = vmatpush2.msra.mxu0 %v779
    %1120 = vmatprep.subr.mxu0 %v773
    %1121 = vmatpush2.msra.mxu0 %v772
    %1122 = vmatprep.subr.mxu0 %v766
    %1123 = vmatpush2.msra.mxu0 %v765
    %1124 = vmatprep.subr.mxu0 %v759
    %1125 = vmatpush2.msra.mxu0 %v758
    %1126 = vmatprep.subr.mxu0 %v752
    %1127 = vmatpush2.msra.mxu0 %v751
    %1128 = vmatprep.subr.mxu0 %v745
    %1129 = vmatpush2.msra.mxu0 %v744
    %1130 = vmatprep.subr.mxu0 %v738
    %1131 = vmatpush2.msra.mxu0 %v737
    %1132 = vmatprep.subr.mxu0 %v731
    %1133 = vmatpush2.msra.mxu0 %v730
    %1134 = vmatprep.subr.mxu0 %v724
    %1135 = vmatpush2.msra.mxu0 %v723
    %1136 = vmatprep.subr.mxu0 %v717
    %1137 = vmatpush2.msra.mxu0 %v716
    %1138 = vmatprep.subr.mxu0 %v710
    %1139 = vmatpush2.msra.mxu0 %v709
    %1140 = vmatprep.subr.mxu0 %v703
    %1141 = vmatpush2.msra.mxu0 %v702
    %1142 = vmatprep.subr.mxu0 %v696
    %1143 = vmatpush2.msra.mxu0 %v695
    %1144 = vmatprep.subr.mxu0 %v689
    %1145 = vmatpush2.msra.mxu0 %v688
    %1146 = vmatprep.subr.mxu0 %v682
    %1147 = vmatpush2.msra.mxu0 %v681
    %1148 = vmatprep.mubr.f32.mxu0 %v119
    %1149 = vmatmul.mubr.f32.gmra.mxu0 %v118
    %v1150 = vpop.f32.mrf.mxu0
    %v1151 = vadd.f32 %v1080, %v1150
    %v1152 = vpop.f32.mrf.mxu0
    %v1153 = vadd.f32 %v1082, %v1152
    %1154 = vdwg.mxu0
    %1155 = vmatprep.subr.mxu0 %v899
    %1156 = vmatpush1.msra.mxu0 %v898
    %1157 = vmatprep.subr.mxu0 %v892
    %1158 = vmatpush1.msra.mxu0 %v891
    %1159 = vmatprep.subr.mxu0 %v885
    %1160 = vmatpush1.msra.mxu0 %v884
    %1161 = vmatprep.subr.mxu0 %v878
    %1162 = vmatpush1.msra.mxu0 %v877
    %1163 = vmatprep.subr.mxu0 %v871
    %1164 = vmatpush1.msra.mxu0 %v870
    %1165 = vmatprep.subr.mxu0 %v864
    %1166 = vmatpush1.msra.mxu0 %v863
    %1167 = vmatprep.subr.mxu0 %v857
    %1168 = vmatpush1.msra.mxu0 %v856
    %1169 = vmatprep.subr.mxu0 %v850
    %1170 = vmatpush1.msra.mxu0 %v849
    %1171 = vmatprep.subr.mxu0 %v843
    %1172 = vmatpush1.msra.mxu0 %v842
    %1173 = vmatprep.subr.mxu0 %v836
    %1174 = vmatpush1.msra.mxu0 %v835
    %1175 = vmatprep.subr.mxu0 %v829
    %1176 = vmatpush1.msra.mxu0 %v828
    %1177 = vmatprep.subr.mxu0 %v822
    %1178 = vmatpush1.msra.mxu0 %v821
    %1179 = vmatprep.subr.mxu0 %v815
    %1180 = vmatpush1.msra.mxu0 %v814
    %1181 = vmatprep.subr.mxu0 %v808
    %1182 = vmatpush1.msra.mxu0 %v807
    %1183 = vmatprep.subr.mxu0 %v801
    %1184 = vmatpush1.msra.mxu0 %v800
    %1185 = vmatprep.subr.mxu0 %v794
    %1186 = vmatpush1.msra.mxu0 %v793
    %1187 = vmatprep.subr.mxu0 0.0
    %1188 = vmatpush2.msra.mxu0 0.0
    %1189 = vmatprep.subr.mxu0 0.0
    %1190 = vmatpush2.msra.mxu0 0.0
    %1191 = vmatprep.subr.mxu0 0.0
    %1192 = vmatpush2.msra.mxu0 0.0
    %1193 = vmatprep.subr.mxu0 0.0
    %1194 = vmatpush2.msra.mxu0 0.0
    %1195 = vmatprep.subr.mxu0 0.0
    %1196 = vmatpush2.msra.mxu0 0.0
    %1197 = vmatprep.subr.mxu0 0.0
    %1198 = vmatpush2.msra.mxu0 0.0
    %1199 = vmatprep.subr.mxu0 0.0
    %1200 = vmatpush2.msra.mxu0 0.0
    %1201 = vmatprep.subr.mxu0 0.0
    %1202 = vmatpush2.msra.mxu0 0.0
    %1203 = vmatprep.subr.mxu0 0.0
    %1204 = vmatpush2.msra.mxu0 0.0
    %1205 = vmatprep.subr.mxu0 0.0
    %1206 = vmatpush2.msra.mxu0 0.0
    %1207 = vmatprep.subr.mxu0 0.0
    %1208 = vmatpush2.msra.mxu0 0.0
    %1209 = vmatprep.subr.mxu0 0.0
    %1210 = vmatpush2.msra.mxu0 0.0
    %1211 = vmatprep.subr.mxu0 0.0
    %1212 = vmatpush2.msra.mxu0 0.0
    %1213 = vmatprep.subr.mxu0 0.0
    %1214 = vmatpush2.msra.mxu0 0.0
    %1215 = vmatprep.subr.mxu0 0.0
    %1216 = vmatpush2.msra.mxu0 0.0
    %1217 = vmatprep.subr.mxu0 0.0
    %1218 = vmatpush2.msra.mxu0 0.0
    %1219 = vmatprep.mubr.f32.mxu0 0.0
    %1220 = vmatmul.mubr.f32.gmra.mxu0 %v120
    %v1221 = vpop.f32.mrf.mxu0
    %v1222 = vadd.f32 %v1151, %v1221
    %v1223 = vpop.f32.mrf.mxu0
    %v1224 = vadd.f32 %v1153, %v1223
    %1225 = vdwg.mxu0
    %1226 = vmatprep.subr.mxu0 %v229
    %1227 = vmatpush1.msra.mxu0 %v228
    %1228 = vmatprep.subr.mxu0 %v222
    %1229 = vmatpush1.msra.mxu0 %v221
    %1230 = vmatprep.subr.mxu0 %v215
    %1231 = vmatpush1.msra.mxu0 %v214
    %1232 = vmatprep.subr.mxu0 %v208
    %1233 = vmatpush1.msra.mxu0 %v207
    %1234 = vmatprep.subr.mxu0 %v201
    %1235 = vmatpush1.msra.mxu0 %v200
    %1236 = vmatprep.subr.mxu0 %v194
    %1237 = vmatpush1.msra.mxu0 %v193
    %1238 = vmatprep.subr.mxu0 %v187
    %1239 = vmatpush1.msra.mxu0 %v186
    %1240 = vmatprep.subr.mxu0 %v180
    %1241 = vmatpush1.msra.mxu0 %v179
    %1242 = vmatprep.subr.mxu0 %v173
    %1243 = vmatpush1.msra.mxu0 %v172
    %1244 = vmatprep.subr.mxu0 %v166
    %1245 = vmatpush1.msra.mxu0 %v165
    %1246 = vmatprep.subr.mxu0 %v159
    %1247 = vmatpush1.msra.mxu0 %v158
    %1248 = vmatprep.subr.mxu0 %v152
    %1249 = vmatpush1.msra.mxu0 %v151
    %1250 = vmatprep.subr.mxu0 %v145
    %1251 = vmatpush1.msra.mxu0 %v144
    %1252 = vmatprep.subr.mxu0 %v138
    %1253 = vmatpush1.msra.mxu0 %v137
    %1254 = vmatprep.subr.mxu0 %v131
    %1255 = vmatpush1.msra.mxu0 %v130
    %1256 = vmatprep.subr.mxu0 %v124
    %1257 = vmatpush1.msra.mxu0 %v123
    %1258 = vmatprep.subr.mxu0 %v341
    %1259 = vmatpush2.msra.mxu0 %v340
    %1260 = vmatprep.subr.mxu0 %v334
    %1261 = vmatpush2.msra.mxu0 %v333
    %1262 = vmatprep.subr.mxu0 %v327
    %1263 = vmatpush2.msra.mxu0 %v326
    %1264 = vmatprep.subr.mxu0 %v320
    %1265 = vmatpush2.msra.mxu0 %v319
    %1266 = vmatprep.subr.mxu0 %v313
    %1267 = vmatpush2.msra.mxu0 %v312
    %1268 = vmatprep.subr.mxu0 %v306
    %1269 = vmatpush2.msra.mxu0 %v305
    %1270 = vmatprep.subr.mxu0 %v299
    %1271 = vmatpush2.msra.mxu0 %v298
    %1272 = vmatprep.subr.mxu0 %v292
    %1273 = vmatpush2.msra.mxu0 %v291
    %1274 = vmatprep.subr.mxu0 %v285
    %1275 = vmatpush2.msra.mxu0 %v284
    %1276 = vmatprep.subr.mxu0 %v278
    %1277 = vmatpush2.msra.mxu0 %v277
    %1278 = vmatprep.subr.mxu0 %v271
    %1279 = vmatpush2.msra.mxu0 %v270
    %1280 = vmatprep.subr.mxu0 %v264
    %1281 = vmatpush2.msra.mxu0 %v263
    %1282 = vmatprep.subr.mxu0 %v257
    %1283 = vmatpush2.msra.mxu0 %v256
    %1284 = vmatprep.subr.mxu0 %v250
    %1285 = vmatpush2.msra.mxu0 %v249
    %1286 = vmatprep.subr.mxu0 %v243
    %1287 = vmatpush2.msra.mxu0 %v242
    %1288 = vmatprep.subr.mxu0 %v236
    %1289 = vmatpush2.msra.mxu0 %v235
    %1290 = vmatprep.mubr.f32.mxu0 %v115
    %1291 = vmatmul.mubr.f32.gmra.mxu0 %v114
    %v1292 = vpop.f32.mrf.mxu0
    %v1293 = vadd.f32 %v918, %v1292
    %v1294 = vpop.f32.mrf.mxu0
    %v1295 = vadd.f32 %v922, %v1294
    %1296 = vdwg.mxu0
    %1297 = vmatprep.subr.mxu0 %v453
    %1298 = vmatpush1.msra.mxu0 %v452
    %1299 = vmatprep.subr.mxu0 %v446
    %1300 = vmatpush1.msra.mxu0 %v445
    %1301 = vmatprep.subr.mxu0 %v439
    %1302 = vmatpush1.msra.mxu0 %v438
    %1303 = vmatprep.subr.mxu0 %v432
    %1304 = vmatpush1.msra.mxu0 %v431
    %1305 = vmatprep.subr.mxu0 %v425
    %1306 = vmatpush1.msra.mxu0 %v424
    %1307 = vmatprep.subr.mxu0 %v418
    %1308 = vmatpush1.msra.mxu0 %v417
    %1309 = vmatprep.subr.mxu0 %v411
    %1310 = vmatpush1.msra.mxu0 %v410
    %1311 = vmatprep.subr.mxu0 %v404
    %1312 = vmatpush1.msra.mxu0 %v403
    %1313 = vmatprep.subr.mxu0 %v397
    %1314 = vmatpush1.msra.mxu0 %v396
    %1315 = vmatprep.subr.mxu0 %v390
    %1316 = vmatpush1.msra.mxu0 %v389
    %1317 = vmatprep.subr.mxu0 %v383
    %1318 = vmatpush1.msra.mxu0 %v382
    %1319 = vmatprep.subr.mxu0 %v376
    %1320 = vmatpush1.msra.mxu0 %v375
    %1321 = vmatprep.subr.mxu0 %v369
    %1322 = vmatpush1.msra.mxu0 %v368
    %1323 = vmatprep.subr.mxu0 %v362
    %1324 = vmatpush1.msra.mxu0 %v361
    %1325 = vmatprep.subr.mxu0 %v355
    %1326 = vmatpush1.msra.mxu0 %v354
    %1327 = vmatprep.subr.mxu0 %v348
    %1328 = vmatpush1.msra.mxu0 %v347
    %1329 = vmatprep.subr.mxu0 %v565
    %1330 = vmatpush2.msra.mxu0 %v564
    %1331 = vmatprep.subr.mxu0 %v558
    %1332 = vmatpush2.msra.mxu0 %v557
    %1333 = vmatprep.subr.mxu0 %v551
    %1334 = vmatpush2.msra.mxu0 %v550
    %1335 = vmatprep.subr.mxu0 %v544
    %1336 = vmatpush2.msra.mxu0 %v543
    %1337 = vmatprep.subr.mxu0 %v537
    %1338 = vmatpush2.msra.mxu0 %v536
    %1339 = vmatprep.subr.mxu0 %v530
    %1340 = vmatpush2.msra.mxu0 %v529
    %1341 = vmatprep.subr.mxu0 %v523
    %1342 = vmatpush2.msra.mxu0 %v522
    %1343 = vmatprep.subr.mxu0 %v516
    %1344 = vmatpush2.msra.mxu0 %v515
    %1345 = vmatprep.subr.mxu0 %v509
    %1346 = vmatpush2.msra.mxu0 %v508
    %1347 = vmatprep.subr.mxu0 %v502
    %1348 = vmatpush2.msra.mxu0 %v501
    %1349 = vmatprep.subr.mxu0 %v495
    %1350 = vmatpush2.msra.mxu0 %v494
    %1351 = vmatprep.subr.mxu0 %v488
    %1352 = vmatpush2.msra.mxu0 %v487
    %1353 = vmatprep.subr.mxu0 %v481
    %1354 = vmatpush2.msra.mxu0 %v480
    %1355 = vmatprep.subr.mxu0 %v474
    %1356 = vmatpush2.msra.mxu0 %v473
    %1357 = vmatprep.subr.mxu0 %v467
    %1358 = vmatpush2.msra.mxu0 %v466
    %1359 = vmatprep.subr.mxu0 %v460
    %1360 = vmatpush2.msra.mxu0 %v459
    %1361 = vmatprep.mubr.f32.mxu0 %v117
    %1362 = vmatmul.mubr.f32.gmra.mxu0 %v116
    %v1363 = vpop.f32.mrf.mxu0
    %v1364 = vadd.f32 %v1293, %v1363
    %v1365 = vpop.f32.mrf.mxu0
    %v1366 = vadd.f32 %v1295, %v1365
    %1367 = vdwg.mxu0
    %1368 = vmatprep.subr.mxu0 %v677
    %1369 = vmatpush1.msra.mxu0 %v676
    %1370 = vmatprep.subr.mxu0 %v670
    %1371 = vmatpush1.msra.mxu0 %v669
    %1372 = vmatprep.subr.mxu0 %v663
    %1373 = vmatpush1.msra.mxu0 %v662
    %1374 = vmatprep.subr.mxu0 %v656
    %1375 = vmatpush1.msra.mxu0 %v655
    %1376 = vmatprep.subr.mxu0 %v649
    %1377 = vmatpush1.msra.mxu0 %v648
    %1378 = vmatprep.subr.mxu0 %v642
    %1379 = vmatpush1.msra.mxu0 %v641
    %1380 = vmatprep.subr.mxu0 %v635
    %1381 = vmatpush1.msra.mxu0 %v634
    %1382 = vmatprep.subr.mxu0 %v628
    %1383 = vmatpush1.msra.mxu0 %v627
    %1384 = vmatprep.subr.mxu0 %v621
    %1385 = vmatpush1.msra.mxu0 %v620
    %1386 = vmatprep.subr.mxu0 %v614
    %1387 = vmatpush1.msra.mxu0 %v613
    %1388 = vmatprep.subr.mxu0 %v607
    %1389 = vmatpush1.msra.mxu0 %v606
    %1390 = vmatprep.subr.mxu0 %v600
    %1391 = vmatpush1.msra.mxu0 %v599
    %1392 = vmatprep.subr.mxu0 %v593
    %1393 = vmatpush1.msra.mxu0 %v592
    %1394 = vmatprep.subr.mxu0 %v586
    %1395 = vmatpush1.msra.mxu0 %v585
    %1396 = vmatprep.subr.mxu0 %v579
    %1397 = vmatpush1.msra.mxu0 %v578
    %1398 = vmatprep.subr.mxu0 %v572
    %1399 = vmatpush1.msra.mxu0 %v571
    %1400 = vmatprep.subr.mxu0 %v789
    %1401 = vmatpush2.msra.mxu0 %v788
    %1402 = vmatprep.subr.mxu0 %v782
    %1403 = vmatpush2.msra.mxu0 %v781
    %1404 = vmatprep.subr.mxu0 %v775
    %1405 = vmatpush2.msra.mxu0 %v774
    %1406 = vmatprep.subr.mxu0 %v768
    %1407 = vmatpush2.msra.mxu0 %v767
    %1408 = vmatprep.subr.mxu0 %v761
    %1409 = vmatpush2.msra.mxu0 %v760
    %1410 = vmatprep.subr.mxu0 %v754
    %1411 = vmatpush2.msra.mxu0 %v753
    %1412 = vmatprep.subr.mxu0 %v747
    %1413 = vmatpush2.msra.mxu0 %v746
    %1414 = vmatprep.subr.mxu0 %v740
    %1415 = vmatpush2.msra.mxu0 %v739
    %1416 = vmatprep.subr.mxu0 %v733
    %1417 = vmatpush2.msra.mxu0 %v732
    %1418 = vmatprep.subr.mxu0 %v726
    %1419 = vmatpush2.msra.mxu0 %v725
    %1420 = vmatprep.subr.mxu0 %v719
    %1421 = vmatpush2.msra.mxu0 %v718
    %1422 = vmatprep.subr.mxu0 %v712
    %1423 = vmatpush2.msra.mxu0 %v711
    %1424 = vmatprep.subr.mxu0 %v705
    %1425 = vmatpush2.msra.mxu0 %v704
    %1426 = vmatprep.subr.mxu0 %v698
    %1427 = vmatpush2.msra.mxu0 %v697
    %1428 = vmatprep.subr.mxu0 %v691
    %1429 = vmatpush2.msra.mxu0 %v690
    %1430 = vmatprep.subr.mxu0 %v684
    %1431 = vmatpush2.msra.mxu0 %v683
    %1432 = vmatprep.mubr.f32.mxu0 %v119
    %1433 = vmatmul.mubr.f32.gmra.mxu0 %v118
    %v1434 = vpop.f32.mrf.mxu0
    %v1435 = vadd.f32 %v1364, %v1434
    %v1436 = vpop.f32.mrf.mxu0
    %v1437 = vadd.f32 %v1366, %v1436
    %1438 = vdwg.mxu0
    %1439 = vmatprep.subr.mxu0 %v901
    %1440 = vmatpush1.msra.mxu0 %v900
    %1441 = vmatprep.subr.mxu0 %v894
    %1442 = vmatpush1.msra.mxu0 %v893
    %1443 = vmatprep.subr.mxu0 %v887
    %1444 = vmatpush1.msra.mxu0 %v886
    %1445 = vmatprep.subr.mxu0 %v880
    %1446 = vmatpush1.msra.mxu0 %v879
    %1447 = vmatprep.subr.mxu0 %v873
    %1448 = vmatpush1.msra.mxu0 %v872
    %1449 = vmatprep.subr.mxu0 %v866
    %1450 = vmatpush1.msra.mxu0 %v865
    %1451 = vmatprep.subr.mxu0 %v859
    %1452 = vmatpush1.msra.mxu0 %v858
    %1453 = vmatprep.subr.mxu0 %v852
    %1454 = vmatpush1.msra.mxu0 %v851
    %1455 = vmatprep.subr.mxu0 %v845
    %1456 = vmatpush1.msra.mxu0 %v844
    %1457 = vmatprep.subr.mxu0 %v838
    %1458 = vmatpush1.msra.mxu0 %v837
    %1459 = vmatprep.subr.mxu0 %v831
    %1460 = vmatpush1.msra.mxu0 %v830
    %1461 = vmatprep.subr.mxu0 %v824
    %1462 = vmatpush1.msra.mxu0 %v823
    %1463 = vmatprep.subr.mxu0 %v817
    %1464 = vmatpush1.msra.mxu0 %v816
    %1465 = vmatprep.subr.mxu0 %v810
    %1466 = vmatpush1.msra.mxu0 %v809
    %1467 = vmatprep.subr.mxu0 %v803
    %1468 = vmatpush1.msra.mxu0 %v802
    %1469 = vmatprep.subr.mxu0 %v796
    %1470 = vmatpush1.msra.mxu0 %v795
    %1471 = vmatprep.subr.mxu0 0.0
    %1472 = vmatpush2.msra.mxu0 0.0
    %1473 = vmatprep.subr.mxu0 0.0
    %1474 = vmatpush2.msra.mxu0 0.0
    %1475 = vmatprep.subr.mxu0 0.0
    %1476 = vmatpush2.msra.mxu0 0.0
    %1477 = vmatprep.subr.mxu0 0.0
    %1478 = vmatpush2.msra.mxu0 0.0
    %1479 = vmatprep.subr.mxu0 0.0
    %1480 = vmatpush2.msra.mxu0 0.0
    %1481 = vmatprep.subr.mxu0 0.0
    %1482 = vmatpush2.msra.mxu0 0.0
    %1483 = vmatprep.subr.mxu0 0.0
    %1484 = vmatpush2.msra.mxu0 0.0
    %1485 = vmatprep.subr.mxu0 0.0
    %1486 = vmatpush2.msra.mxu0 0.0
    %1487 = vmatprep.subr.mxu0 0.0
    %1488 = vmatpush2.msra.mxu0 0.0
    %1489 = vmatprep.subr.mxu0 0.0
    %1490 = vmatpush2.msra.mxu0 0.0
    %1491 = vmatprep.subr.mxu0 0.0
    %1492 = vmatpush2.msra.mxu0 0.0
    %1493 = vmatprep.subr.mxu0 0.0
    %1494 = vmatpush2.msra.mxu0 0.0
    %1495 = vmatprep.subr.mxu0 0.0
    %1496 = vmatpush2.msra.mxu0 0.0
    %1497 = vmatprep.subr.mxu0 0.0
    %1498 = vmatpush2.msra.mxu0 0.0
    %1499 = vmatprep.subr.mxu0 0.0
    %1500 = vmatpush2.msra.mxu0 0.0
    %1501 = vmatprep.subr.mxu0 0.0
    %1502 = vmatpush2.msra.mxu0 0.0
    %1503 = vmatprep.mubr.f32.mxu0 0.0
    %1504 = vmatmul.mubr.f32.gmra.mxu0 %v120
    %v1505 = vpop.f32.mrf.mxu0
    %v1506 = vadd.f32 %v1435, %v1505
    %v1507 = vpop.f32.mrf.mxu0
    %v1508 = vadd.f32 %v1437, %v1507
    %1509 = vdwg.mxu0
    %1510 = vmatprep.subr.mxu0 %v231
    %1511 = vmatpush1.msra.mxu0 %v230
    %1512 = vmatprep.subr.mxu0 %v224
    %1513 = vmatpush1.msra.mxu0 %v223
    %1514 = vmatprep.subr.mxu0 %v217
    %1515 = vmatpush1.msra.mxu0 %v216
    %1516 = vmatprep.subr.mxu0 %v210
    %1517 = vmatpush1.msra.mxu0 %v209
    %1518 = vmatprep.subr.mxu0 %v203
    %1519 = vmatpush1.msra.mxu0 %v202
    %1520 = vmatprep.subr.mxu0 %v196
    %1521 = vmatpush1.msra.mxu0 %v195
    %1522 = vmatprep.subr.mxu0 %v189
    %1523 = vmatpush1.msra.mxu0 %v188
    %1524 = vmatprep.subr.mxu0 %v182
    %1525 = vmatpush1.msra.mxu0 %v181
    %1526 = vmatprep.subr.mxu0 %v175
    %1527 = vmatpush1.msra.mxu0 %v174
    %1528 = vmatprep.subr.mxu0 %v168
    %1529 = vmatpush1.msra.mxu0 %v167
    %1530 = vmatprep.subr.mxu0 %v161
    %1531 = vmatpush1.msra.mxu0 %v160
    %1532 = vmatprep.subr.mxu0 %v154
    %1533 = vmatpush1.msra.mxu0 %v153
    %1534 = vmatprep.subr.mxu0 %v147
    %1535 = vmatpush1.msra.mxu0 %v146
    %1536 = vmatprep.subr.mxu0 %v140
    %1537 = vmatpush1.msra.mxu0 %v139
    %1538 = vmatprep.subr.mxu0 %v133
    %1539 = vmatpush1.msra.mxu0 %v132
    %1540 = vmatprep.subr.mxu0 %v126
    %1541 = vmatpush1.msra.mxu0 %v125
    %1542 = vmatprep.subr.mxu0 %v343
    %1543 = vmatpush2.msra.mxu0 %v342
    %1544 = vmatprep.subr.mxu0 %v336
    %1545 = vmatpush2.msra.mxu0 %v335
    %1546 = vmatprep.subr.mxu0 %v329
    %1547 = vmatpush2.msra.mxu0 %v328
    %1548 = vmatprep.subr.mxu0 %v322
    %1549 = vmatpush2.msra.mxu0 %v321
    %1550 = vmatprep.subr.mxu0 %v315
    %1551 = vmatpush2.msra.mxu0 %v314
    %1552 = vmatprep.subr.mxu0 %v308
    %1553 = vmatpush2.msra.mxu0 %v307
    %1554 = vmatprep.subr.mxu0 %v301
    %1555 = vmatpush2.msra.mxu0 %v300
    %1556 = vmatprep.subr.mxu0 %v294
    %1557 = vmatpush2.msra.mxu0 %v293
    %1558 = vmatprep.subr.mxu0 %v287
    %1559 = vmatpush2.msra.mxu0 %v286
    %1560 = vmatprep.subr.mxu0 %v280
    %1561 = vmatpush2.msra.mxu0 %v279
    %1562 = vmatprep.subr.mxu0 %v273
    %1563 = vmatpush2.msra.mxu0 %v272
    %1564 = vmatprep.subr.mxu0 %v266
    %1565 = vmatpush2.msra.mxu0 %v265
    %1566 = vmatprep.subr.mxu0 %v259
    %1567 = vmatpush2.msra.mxu0 %v258
    %1568 = vmatprep.subr.mxu0 %v252
    %1569 = vmatpush2.msra.mxu0 %v251
    %1570 = vmatprep.subr.mxu0 %v245
    %1571 = vmatpush2.msra.mxu0 %v244
    %1572 = vmatprep.subr.mxu0 %v238
    %1573 = vmatpush2.msra.mxu0 %v237
    %1574 = vmatprep.mubr.f32.mxu0 %v115
    %1575 = vmatmul.mubr.f32.gmra.mxu0 %v114
    %v1576 = vpop.f32.mrf.mxu0
    %v1577 = vadd.f32 %v926, %v1576
    %v1578 = vpop.f32.mrf.mxu0
    %v1579 = vadd.f32 %v930, %v1578
    %1580 = vdwg.mxu0
    %1581 = vmatprep.subr.mxu0 %v455
    %1582 = vmatpush1.msra.mxu0 %v454
    %1583 = vmatprep.subr.mxu0 %v448
    %1584 = vmatpush1.msra.mxu0 %v447
    %1585 = vmatprep.subr.mxu0 %v441
    %1586 = vmatpush1.msra.mxu0 %v440
    %1587 = vmatprep.subr.mxu0 %v434
    %1588 = vmatpush1.msra.mxu0 %v433
    %1589 = vmatprep.subr.mxu0 %v427
    %1590 = vmatpush1.msra.mxu0 %v426
    %1591 = vmatprep.subr.mxu0 %v420
    %1592 = vmatpush1.msra.mxu0 %v419
    %1593 = vmatprep.subr.mxu0 %v413
    %1594 = vmatpush1.msra.mxu0 %v412
    %1595 = vmatprep.subr.mxu0 %v406
    %1596 = vmatpush1.msra.mxu0 %v405
    %1597 = vmatprep.subr.mxu0 %v399
    %1598 = vmatpush1.msra.mxu0 %v398
    %1599 = vmatprep.subr.mxu0 %v392
    %1600 = vmatpush1.msra.mxu0 %v391
    %1601 = vmatprep.subr.mxu0 %v385
    %1602 = vmatpush1.msra.mxu0 %v384
    %1603 = vmatprep.subr.mxu0 %v378
    %1604 = vmatpush1.msra.mxu0 %v377
    %1605 = vmatprep.subr.mxu0 %v371
    %1606 = vmatpush1.msra.mxu0 %v370
    %1607 = vmatprep.subr.mxu0 %v364
    %1608 = vmatpush1.msra.mxu0 %v363
    %1609 = vmatprep.subr.mxu0 %v357
    %1610 = vmatpush1.msra.mxu0 %v356
    %1611 = vmatprep.subr.mxu0 %v350
    %1612 = vmatpush1.msra.mxu0 %v349
    %1613 = vmatprep.subr.mxu0 %v567
    %1614 = vmatpush2.msra.mxu0 %v566
    %1615 = vmatprep.subr.mxu0 %v560
    %1616 = vmatpush2.msra.mxu0 %v559
    %1617 = vmatprep.subr.mxu0 %v553
    %1618 = vmatpush2.msra.mxu0 %v552
    %1619 = vmatprep.subr.mxu0 %v546
    %1620 = vmatpush2.msra.mxu0 %v545
    %1621 = vmatprep.subr.mxu0 %v539
    %1622 = vmatpush2.msra.mxu0 %v538
    %1623 = vmatprep.subr.mxu0 %v532
    %1624 = vmatpush2.msra.mxu0 %v531
    %1625 = vmatprep.subr.mxu0 %v525
    %1626 = vmatpush2.msra.mxu0 %v524
    %1627 = vmatprep.subr.mxu0 %v518
    %1628 = vmatpush2.msra.mxu0 %v517
    %1629 = vmatprep.subr.mxu0 %v511
    %1630 = vmatpush2.msra.mxu0 %v510
    %1631 = vmatprep.subr.mxu0 %v504
    %1632 = vmatpush2.msra.mxu0 %v503
    %1633 = vmatprep.subr.mxu0 %v497
    %1634 = vmatpush2.msra.mxu0 %v496
    %1635 = vmatprep.subr.mxu0 %v490
    %1636 = vmatpush2.msra.mxu0 %v489
    %1637 = vmatprep.subr.mxu0 %v483
    %1638 = vmatpush2.msra.mxu0 %v482
    %1639 = vmatprep.subr.mxu0 %v476
    %1640 = vmatpush2.msra.mxu0 %v475
    %1641 = vmatprep.subr.mxu0 %v469
    %1642 = vmatpush2.msra.mxu0 %v468
    %1643 = vmatprep.subr.mxu0 %v462
    %1644 = vmatpush2.msra.mxu0 %v461
    %1645 = vmatprep.mubr.f32.mxu0 %v117
    %1646 = vmatmul.mubr.f32.gmra.mxu0 %v116
    %v1647 = vpop.f32.mrf.mxu0
    %v1648 = vadd.f32 %v1577, %v1647
    %v1649 = vpop.f32.mrf.mxu0
    %v1650 = vadd.f32 %v1579, %v1649
    %1651 = vdwg.mxu0
    %1652 = vmatprep.subr.mxu0 %v679
    %1653 = vmatpush1.msra.mxu0 %v678
    %1654 = vmatprep.subr.mxu0 %v672
    %1655 = vmatpush1.msra.mxu0 %v671
    %1656 = vmatprep.subr.mxu0 %v665
    %1657 = vmatpush1.msra.mxu0 %v664
    %1658 = vmatprep.subr.mxu0 %v658
    %1659 = vmatpush1.msra.mxu0 %v657
    %1660 = vmatprep.subr.mxu0 %v651
    %1661 = vmatpush1.msra.mxu0 %v650
    %1662 = vmatprep.subr.mxu0 %v644
    %1663 = vmatpush1.msra.mxu0 %v643
    %1664 = vmatprep.subr.mxu0 %v637
    %1665 = vmatpush1.msra.mxu0 %v636
    %1666 = vmatprep.subr.mxu0 %v630
    %1667 = vmatpush1.msra.mxu0 %v629
    %1668 = vmatprep.subr.mxu0 %v623
    %1669 = vmatpush1.msra.mxu0 %v622
    %1670 = vmatprep.subr.mxu0 %v616
    %1671 = vmatpush1.msra.mxu0 %v615
    %1672 = vmatprep.subr.mxu0 %v609
    %1673 = vmatpush1.msra.mxu0 %v608
    %1674 = vmatprep.subr.mxu0 %v602
    %1675 = vmatpush1.msra.mxu0 %v601
    %1676 = vmatprep.subr.mxu0 %v595
    %1677 = vmatpush1.msra.mxu0 %v594
    %1678 = vmatprep.subr.mxu0 %v588
    %1679 = vmatpush1.msra.mxu0 %v587
    %1680 = vmatprep.subr.mxu0 %v581
    %1681 = vmatpush1.msra.mxu0 %v580
    %1682 = vmatprep.subr.mxu0 %v574
    %1683 = vmatpush1.msra.mxu0 %v573
    %1684 = vmatprep.subr.mxu0 %v791
    %1685 = vmatpush2.msra.mxu0 %v790
    %1686 = vmatprep.subr.mxu0 %v784
    %1687 = vmatpush2.msra.mxu0 %v783
    %1688 = vmatprep.subr.mxu0 %v777
    %1689 = vmatpush2.msra.mxu0 %v776
    %1690 = vmatprep.subr.mxu0 %v770
    %1691 = vmatpush2.msra.mxu0 %v769
    %1692 = vmatprep.subr.mxu0 %v763
    %1693 = vmatpush2.msra.mxu0 %v762
    %1694 = vmatprep.subr.mxu0 %v756
    %1695 = vmatpush2.msra.mxu0 %v755
    %1696 = vmatprep.subr.mxu0 %v749
    %1697 = vmatpush2.msra.mxu0 %v748
    %1698 = vmatprep.subr.mxu0 %v742
    %1699 = vmatpush2.msra.mxu0 %v741
    %1700 = vmatprep.subr.mxu0 %v735
    %1701 = vmatpush2.msra.mxu0 %v734
    %1702 = vmatprep.subr.mxu0 %v728
    %1703 = vmatpush2.msra.mxu0 %v727
    %1704 = vmatprep.subr.mxu0 %v721
    %1705 = vmatpush2.msra.mxu0 %v720
    %1706 = vmatprep.subr.mxu0 %v714
    %1707 = vmatpush2.msra.mxu0 %v713
    %1708 = vmatprep.subr.mxu0 %v707
    %1709 = vmatpush2.msra.mxu0 %v706
    %1710 = vmatprep.subr.mxu0 %v700
    %1711 = vmatpush2.msra.mxu0 %v699
    %1712 = vmatprep.subr.mxu0 %v693
    %1713 = vmatpush2.msra.mxu0 %v692
    %1714 = vmatprep.subr.mxu0 %v686
    %1715 = vmatpush2.msra.mxu0 %v685
    %1716 = vmatprep.mubr.f32.mxu0 %v119
    %1717 = vmatmul.mubr.f32.gmra.mxu0 %v118
    %v1718 = vpop.f32.mrf.mxu0
    %v1719 = vadd.f32 %v1648, %v1718
    %v1720 = vpop.f32.mrf.mxu0
    %v1721 = vadd.f32 %v1650, %v1720
    %1722 = vdwg.mxu0
    %1723 = vmatprep.subr.mxu0 %v903
    %1724 = vmatpush1.msra.mxu0 %v902
    %1725 = vmatprep.subr.mxu0 %v896
    %1726 = vmatpush1.msra.mxu0 %v895
    %1727 = vmatprep.subr.mxu0 %v889
    %1728 = vmatpush1.msra.mxu0 %v888
    %1729 = vmatprep.subr.mxu0 %v882
    %1730 = vmatpush1.msra.mxu0 %v881
    %1731 = vmatprep.subr.mxu0 %v875
    %1732 = vmatpush1.msra.mxu0 %v874
    %1733 = vmatprep.subr.mxu0 %v868
    %1734 = vmatpush1.msra.mxu0 %v867
    %1735 = vmatprep.subr.mxu0 %v861
    %1736 = vmatpush1.msra.mxu0 %v860
    %1737 = vmatprep.subr.mxu0 %v854
    %1738 = vmatpush1.msra.mxu0 %v853
    %1739 = vmatprep.subr.mxu0 %v847
    %1740 = vmatpush1.msra.mxu0 %v846
    %1741 = vmatprep.subr.mxu0 %v840
    %1742 = vmatpush1.msra.mxu0 %v839
    %1743 = vmatprep.subr.mxu0 %v833
    %1744 = vmatpush1.msra.mxu0 %v832
    %1745 = vmatprep.subr.mxu0 %v826
    %1746 = vmatpush1.msra.mxu0 %v825
    %1747 = vmatprep.subr.mxu0 %v819
    %1748 = vmatpush1.msra.mxu0 %v818
    %1749 = vmatprep.subr.mxu0 %v812
    %1750 = vmatpush1.msra.mxu0 %v811
    %1751 = vmatprep.subr.mxu0 %v805
    %1752 = vmatpush1.msra.mxu0 %v804
    %1753 = vmatprep.subr.mxu0 %v798
    %1754 = vmatpush1.msra.mxu0 %v797
    %1755 = vmatprep.subr.mxu0 0.0
    %1756 = vmatpush2.msra.mxu0 0.0
    %1757 = vmatprep.subr.mxu0 0.0
    %1758 = vmatpush2.msra.mxu0 0.0
    %1759 = vmatprep.subr.mxu0 0.0
    %1760 = vmatpush2.msra.mxu0 0.0
    %1761 = vmatprep.subr.mxu0 0.0
    %1762 = vmatpush2.msra.mxu0 0.0
    %1763 = vmatprep.subr.mxu0 0.0
    %1764 = vmatpush2.msra.mxu0 0.0
    %1765 = vmatprep.subr.mxu0 0.0
    %1766 = vmatpush2.msra.mxu0 0.0
    %1767 = vmatprep.subr.mxu0 0.0
    %1768 = vmatpush2.msra.mxu0 0.0
    %1769 = vmatprep.subr.mxu0 0.0
    %1770 = vmatpush2.msra.mxu0 0.0
    %1771 = vmatprep.subr.mxu0 0.0
    %1772 = vmatpush2.msra.mxu0 0.0
    %1773 = vmatprep.subr.mxu0 0.0
    %1774 = vmatpush2.msra.mxu0 0.0
    %1775 = vmatprep.subr.mxu0 0.0
    %1776 = vmatpush2.msra.mxu0 0.0
    %1777 = vmatprep.subr.mxu0 0.0
    %1778 = vmatpush2.msra.mxu0 0.0
    %1779 = vmatprep.subr.mxu0 0.0
    %1780 = vmatpush2.msra.mxu0 0.0
    %1781 = vmatprep.subr.mxu0 0.0
    %1782 = vmatpush2.msra.mxu0 0.0
    %1783 = vmatprep.subr.mxu0 0.0
    %1784 = vmatpush2.msra.mxu0 0.0
    %1785 = vmatprep.subr.mxu0 0.0
    %1786 = vmatpush2.msra.mxu0 0.0
    %1787 = vmatprep.mubr.f32.mxu0 0.0
    %1788 = vmatmul.mubr.f32.gmra.mxu0 %v120
    %v1789 = vpop.f32.mrf.mxu0
    %v1790 = vadd.f32 %v1719, %v1789
    %v1791 = vpop.f32.mrf.mxu0
    %v1792 = vadd.f32 %v1721, %v1791
    %1793 = vdwg.mxu0
    %1794 = vmatprep.subr.mxu0 0.0
    %1795 = vmatpush1.msra.mxu0 %v232
    %1796 = vmatprep.subr.mxu0 0.0
    %1797 = vmatpush1.msra.mxu0 %v225
    %1798 = vmatprep.subr.mxu0 0.0
    %1799 = vmatpush1.msra.mxu0 %v218
    %1800 = vmatprep.subr.mxu0 0.0
    %1801 = vmatpush1.msra.mxu0 %v211
    %1802 = vmatprep.subr.mxu0 0.0
    %1803 = vmatpush1.msra.mxu0 %v204
    %1804 = vmatprep.subr.mxu0 0.0
    %1805 = vmatpush1.msra.mxu0 %v197
    %1806 = vmatprep.subr.mxu0 0.0
    %1807 = vmatpush1.msra.mxu0 %v190
    %1808 = vmatprep.subr.mxu0 0.0
    %1809 = vmatpush1.msra.mxu0 %v183
    %1810 = vmatprep.subr.mxu0 0.0
    %1811 = vmatpush1.msra.mxu0 %v176
    %1812 = vmatprep.subr.mxu0 0.0
    %1813 = vmatpush1.msra.mxu0 %v169
    %1814 = vmatprep.subr.mxu0 0.0
    %1815 = vmatpush1.msra.mxu0 %v162
    %1816 = vmatprep.subr.mxu0 0.0
    %1817 = vmatpush1.msra.mxu0 %v155
    %1818 = vmatprep.subr.mxu0 0.0
    %1819 = vmatpush1.msra.mxu0 %v148
    %1820 = vmatprep.subr.mxu0 0.0
    %1821 = vmatpush1.msra.mxu0 %v141
    %1822 = vmatprep.subr.mxu0 0.0
    %1823 = vmatpush1.msra.mxu0 %v134
    %1824 = vmatprep.subr.mxu0 0.0
    %1825 = vmatpush1.msra.mxu0 %v127
    %1826 = vmatprep.subr.mxu0 0.0
    %1827 = vmatpush2.msra.mxu0 %v344
    %1828 = vmatprep.subr.mxu0 0.0
    %1829 = vmatpush2.msra.mxu0 %v337
    %1830 = vmatprep.subr.mxu0 0.0
    %1831 = vmatpush2.msra.mxu0 %v330
    %1832 = vmatprep.subr.mxu0 0.0
    %1833 = vmatpush2.msra.mxu0 %v323
    %1834 = vmatprep.subr.mxu0 0.0
    %1835 = vmatpush2.msra.mxu0 %v316
    %1836 = vmatprep.subr.mxu0 0.0
    %1837 = vmatpush2.msra.mxu0 %v309
    %1838 = vmatprep.subr.mxu0 0.0
    %1839 = vmatpush2.msra.mxu0 %v302
    %1840 = vmatprep.subr.mxu0 0.0
    %1841 = vmatpush2.msra.mxu0 %v295
    %1842 = vmatprep.subr.mxu0 0.0
    %1843 = vmatpush2.msra.mxu0 %v288
    %1844 = vmatprep.subr.mxu0 0.0
    %1845 = vmatpush2.msra.mxu0 %v281
    %1846 = vmatprep.subr.mxu0 0.0
    %1847 = vmatpush2.msra.mxu0 %v274
    %1848 = vmatprep.subr.mxu0 0.0
    %1849 = vmatpush2.msra.mxu0 %v267
    %1850 = vmatprep.subr.mxu0 0.0
    %1851 = vmatpush2.msra.mxu0 %v260
    %1852 = vmatprep.subr.mxu0 0.0
    %1853 = vmatpush2.msra.mxu0 %v253
    %1854 = vmatprep.subr.mxu0 0.0
    %1855 = vmatpush2.msra.mxu0 %v246
    %1856 = vmatprep.subr.mxu0 0.0
    %1857 = vmatpush2.msra.mxu0 %v239
    %1858 = vmatprep.mubr.f32.mxu0 %v115
    %1859 = vmatmul.mubr.f32.gmra.mxu0 %v114
    %v1860 = vpop.f32.mrf.mxu0
    %v1861 = vadd.f32 %v934, %v1860
    %v1862 = vpop.f32.mrf.mxu0
    %1863 = vdwg.mxu0
    %1864 = vmatprep.subr.mxu0 0.0
    %1865 = vmatpush1.msra.mxu0 %v456
    %1866 = vmatprep.subr.mxu0 0.0
    %1867 = vmatpush1.msra.mxu0 %v449
    %1868 = vmatprep.subr.mxu0 0.0
    %1869 = vmatpush1.msra.mxu0 %v442
    %1870 = vmatprep.subr.mxu0 0.0
    %1871 = vmatpush1.msra.mxu0 %v435
    %1872 = vmatprep.subr.mxu0 0.0
    %1873 = vmatpush1.msra.mxu0 %v428
    %1874 = vmatprep.subr.mxu0 0.0
    %1875 = vmatpush1.msra.mxu0 %v421
    %1876 = vmatprep.subr.mxu0 0.0
    %1877 = vmatpush1.msra.mxu0 %v414
    %1878 = vmatprep.subr.mxu0 0.0
    %1879 = vmatpush1.msra.mxu0 %v407
    %1880 = vmatprep.subr.mxu0 0.0
    %1881 = vmatpush1.msra.mxu0 %v400
    %1882 = vmatprep.subr.mxu0 0.0
    %1883 = vmatpush1.msra.mxu0 %v393
    %1884 = vmatprep.subr.mxu0 0.0
    %1885 = vmatpush1.msra.mxu0 %v386
    %1886 = vmatprep.subr.mxu0 0.0
    %1887 = vmatpush1.msra.mxu0 %v379
    %1888 = vmatprep.subr.mxu0 0.0
    %1889 = vmatpush1.msra.mxu0 %v372
    %1890 = vmatprep.subr.mxu0 0.0
    %1891 = vmatpush1.msra.mxu0 %v365
    %1892 = vmatprep.subr.mxu0 0.0
    %1893 = vmatpush1.msra.mxu0 %v358
    %1894 = vmatprep.subr.mxu0 0.0
    %1895 = vmatpush1.msra.mxu0 %v351
    %1896 = vmatprep.subr.mxu0 0.0
    %1897 = vmatpush2.msra.mxu0 %v568
    %1898 = vmatprep.subr.mxu0 0.0
    %1899 = vmatpush2.msra.mxu0 %v561
    %1900 = vmatprep.subr.mxu0 0.0
    %1901 = vmatpush2.msra.mxu0 %v554
    %1902 = vmatprep.subr.mxu0 0.0
    %1903 = vmatpush2.msra.mxu0 %v547
    %1904 = vmatprep.subr.mxu0 0.0
    %1905 = vmatpush2.msra.mxu0 %v540
    %1906 = vmatprep.subr.mxu0 0.0
    %1907 = vmatpush2.msra.mxu0 %v533
    %1908 = vmatprep.subr.mxu0 0.0
    %1909 = vmatpush2.msra.mxu0 %v526
    %1910 = vmatprep.subr.mxu0 0.0
    %1911 = vmatpush2.msra.mxu0 %v519
    %1912 = vmatprep.subr.mxu0 0.0
    %1913 = vmatpush2.msra.mxu0 %v512
    %1914 = vmatprep.subr.mxu0 0.0
    %1915 = vmatpush2.msra.mxu0 %v505
    %1916 = vmatprep.subr.mxu0 0.0
    %1917 = vmatpush2.msra.mxu0 %v498
    %1918 = vmatprep.subr.mxu0 0.0
    %1919 = vmatpush2.msra.mxu0 %v491
    %1920 = vmatprep.subr.mxu0 0.0
    %1921 = vmatpush2.msra.mxu0 %v484
    %1922 = vmatprep.subr.mxu0 0.0
    %1923 = vmatpush2.msra.mxu0 %v477
    %1924 = vmatprep.subr.mxu0 0.0
    %1925 = vmatpush2.msra.mxu0 %v470
    %1926 = vmatprep.subr.mxu0 0.0
    %1927 = vmatpush2.msra.mxu0 %v463
    %1928 = vmatprep.mubr.f32.mxu0 %v117
    %1929 = vmatmul.mubr.f32.gmra.mxu0 %v116
    %v1930 = vpop.f32.mrf.mxu0
    %v1931 = vadd.f32 %v1861, %v1930
    %v1932 = vpop.f32.mrf.mxu0
    %1933 = vdwg.mxu0
    %1934 = vmatprep.subr.mxu0 0.0
    %1935 = vmatpush1.msra.mxu0 %v680
    %1936 = vmatprep.subr.mxu0 0.0
    %1937 = vmatpush1.msra.mxu0 %v673
    %1938 = vmatprep.subr.mxu0 0.0
    %1939 = vmatpush1.msra.mxu0 %v666
    %1940 = vmatprep.subr.mxu0 0.0
    %1941 = vmatpush1.msra.mxu0 %v659
    %1942 = vmatprep.subr.mxu0 0.0
    %1943 = vmatpush1.msra.mxu0 %v652
    %1944 = vmatprep.subr.mxu0 0.0
    %1945 = vmatpush1.msra.mxu0 %v645
    %1946 = vmatprep.subr.mxu0 0.0
    %1947 = vmatpush1.msra.mxu0 %v638
    %1948 = vmatprep.subr.mxu0 0.0
    %1949 = vmatpush1.msra.mxu0 %v631
    %1950 = vmatprep.subr.mxu0 0.0
    %1951 = vmatpush1.msra.mxu0 %v624
    %1952 = vmatprep.subr.mxu0 0.0
    %1953 = vmatpush1.msra.mxu0 %v617
    %1954 = vmatprep.subr.mxu0 0.0
    %1955 = vmatpush1.msra.mxu0 %v610
    %1956 = vmatprep.subr.mxu0 0.0
    %1957 = vmatpush1.msra.mxu0 %v603
    %1958 = vmatprep.subr.mxu0 0.0
    %1959 = vmatpush1.msra.mxu0 %v596
    %1960 = vmatprep.subr.mxu0 0.0
    %1961 = vmatpush1.msra.mxu0 %v589
    %1962 = vmatprep.subr.mxu0 0.0
    %1963 = vmatpush1.msra.mxu0 %v582
    %1964 = vmatprep.subr.mxu0 0.0
    %1965 = vmatpush1.msra.mxu0 %v575
    %1966 = vmatprep.subr.mxu0 0.0
    %1967 = vmatpush2.msra.mxu0 %v792
    %1968 = vmatprep.subr.mxu0 0.0
    %1969 = vmatpush2.msra.mxu0 %v785
    %1970 = vmatprep.subr.mxu0 0.0
    %1971 = vmatpush2.msra.mxu0 %v778
    %1972 = vmatprep.subr.mxu0 0.0
    %1973 = vmatpush2.msra.mxu0 %v771
    %1974 = vmatprep.subr.mxu0 0.0
    %1975 = vmatpush2.msra.mxu0 %v764
    %1976 = vmatprep.subr.mxu0 0.0
    %1977 = vmatpush2.msra.mxu0 %v757
    %1978 = vmatprep.subr.mxu0 0.0
    %1979 = vmatpush2.msra.mxu0 %v750
    %1980 = vmatprep.subr.mxu0 0.0
    %1981 = vmatpush2.msra.mxu0 %v743
    %1982 = vmatprep.subr.mxu0 0.0
    %1983 = vmatpush2.msra.mxu0 %v736
    %1984 = vmatprep.subr.mxu0 0.0
    %1985 = vmatpush2.msra.mxu0 %v729
    %1986 = vmatprep.subr.mxu0 0.0
    %1987 = vmatpush2.msra.mxu0 %v722
    %1988 = vmatprep.subr.mxu0 0.0
    %1989 = vmatpush2.msra.mxu0 %v715
    %1990 = vmatprep.subr.mxu0 0.0
    %1991 = vmatpush2.msra.mxu0 %v708
    %1992 = vmatprep.subr.mxu0 0.0
    %1993 = vmatpush2.msra.mxu0 %v701
    %1994 = vmatprep.subr.mxu0 0.0
    %1995 = vmatpush2.msra.mxu0 %v694
    %1996 = vmatprep.subr.mxu0 0.0
    %1997 = vmatpush2.msra.mxu0 %v687
    %1998 = vmatprep.mubr.f32.mxu0 %v119
    %1999 = vmatmul.mubr.f32.gmra.mxu0 %v118
    %v2000 = vpop.f32.mrf.mxu0
    %v2001 = vadd.f32 %v1931, %v2000
    %v2002 = vpop.f32.mrf.mxu0
    %2003 = vdwg.mxu0
    %2004 = vmatprep.subr.mxu0 0.0
    %2005 = vmatpush1.msra.mxu0 %v904
    %2006 = vmatprep.subr.mxu0 0.0
    %2007 = vmatpush1.msra.mxu0 %v897
    %2008 = vmatprep.subr.mxu0 0.0
    %2009 = vmatpush1.msra.mxu0 %v890
    %2010 = vmatprep.subr.mxu0 0.0
    %2011 = vmatpush1.msra.mxu0 %v883
    %2012 = vmatprep.subr.mxu0 0.0
    %2013 = vmatpush1.msra.mxu0 %v876
    %2014 = vmatprep.subr.mxu0 0.0
    %2015 = vmatpush1.msra.mxu0 %v869
    %2016 = vmatprep.subr.mxu0 0.0
    %2017 = vmatpush1.msra.mxu0 %v862
    %2018 = vmatprep.subr.mxu0 0.0
    %2019 = vmatpush1.msra.mxu0 %v855
    %2020 = vmatprep.subr.mxu0 0.0
    %2021 = vmatpush1.msra.mxu0 %v848
    %2022 = vmatprep.subr.mxu0 0.0
    %2023 = vmatpush1.msra.mxu0 %v841
    %2024 = vmatprep.subr.mxu0 0.0
    %2025 = vmatpush1.msra.mxu0 %v834
    %2026 = vmatprep.subr.mxu0 0.0
    %2027 = vmatpush1.msra.mxu0 %v827
    %2028 = vmatprep.subr.mxu0 0.0
    %2029 = vmatpush1.msra.mxu0 %v820
    %2030 = vmatprep.subr.mxu0 0.0
    %2031 = vmatpush1.msra.mxu0 %v813
    %2032 = vmatprep.subr.mxu0 0.0
    %2033 = vmatpush1.msra.mxu0 %v806
    %2034 = vmatprep.subr.mxu0 0.0
    %2035 = vmatpush1.msra.mxu0 %v799
    %2036 = vmatprep.subr.mxu0 0.0
    %2037 = vmatpush2.msra.mxu0 0.0
    %2038 = vmatprep.subr.mxu0 0.0
    %2039 = vmatpush2.msra.mxu0 0.0
    %2040 = vmatprep.subr.mxu0 0.0
    %2041 = vmatpush2.msra.mxu0 0.0
    %2042 = vmatprep.subr.mxu0 0.0
    %2043 = vmatpush2.msra.mxu0 0.0
    %2044 = vmatprep.subr.mxu0 0.0
    %2045 = vmatpush2.msra.mxu0 0.0
    %2046 = vmatprep.subr.mxu0 0.0
    %2047 = vmatpush2.msra.mxu0 0.0
    %2048 = vmatprep.subr.mxu0 0.0
    %2049 = vmatpush2.msra.mxu0 0.0
    %2050 = vmatprep.subr.mxu0 0.0
    %2051 = vmatpush2.msra.mxu0 0.0
    %2052 = vmatprep.subr.mxu0 0.0
    %2053 = vmatpush2.msra.mxu0 0.0
    %2054 = vmatprep.subr.mxu0 0.0
    %2055 = vmatpush2.msra.mxu0 0.0
    %2056 = vmatprep.subr.mxu0 0.0
    %2057 = vmatpush2.msra.mxu0 0.0
    %2058 = vmatprep.subr.mxu0 0.0
    %2059 = vmatpush2.msra.mxu0 0.0
    %2060 = vmatprep.subr.mxu0 0.0
    %2061 = vmatpush2.msra.mxu0 0.0
    %2062 = vmatprep.subr.mxu0 0.0
    %2063 = vmatpush2.msra.mxu0 0.0
    %2064 = vmatprep.subr.mxu0 0.0
    %2065 = vmatpush2.msra.mxu0 0.0
    %2066 = vmatprep.subr.mxu0 0.0
    %2067 = vmatpush2.msra.mxu0 0.0
    %2068 = vmatprep.mubr.f32.mxu0 0.0
    %2069 = vmatmul.mubr.f32.gmra.mxu0 %v120
    %v2070 = vpop.f32.mrf.mxu0
    %v2071 = vadd.f32 %v2001, %v2070
    %v2072 = vpop.f32.mrf.mxu0
    %2073 = vdwg.mxu0
    %vm2074 = vcmp.ge.f32.partialorder %v1222, 0.0
    %vm2075 = vcmp.ge.f32.partialorder %v1224, 0.0
    %vm2076 = vcmp.ge.f32.partialorder %v1506, 0.0
    %vm2077 = vcmp.ge.f32.partialorder %v1508, 0.0
    %vm2078 = vcmp.ge.f32.partialorder %v1790, 0.0
    %vm2079 = vcmp.ge.f32.partialorder %v1792, 0.0
    %vm2080 = vcmp.ge.f32.partialorder %v2071, 0.0
    %v2081 = vmul.f32 %v1222, 0.2
    %v2082 = vmul.f32 %v1224, 0.2
    %v2083 = vmul.f32 %v1506, 0.2
    %v2084 = vmul.f32 %v1508, 0.2
    %v2085 = vmul.f32 %v1790, 0.2
    %v2086 = vmul.f32 %v1792, 0.2
    %v2087 = vmul.f32 %v2071, 0.2
    %v2088 = vsel %vm2074, %v1222, %v2081
    %v2089 = vsel %vm2075, %v1224, %v2082
    %v2090 = vsel %vm2076, %v1506, %v2083
    %v2091 = vsel %vm2077, %v1508, %v2084
    %v2092 = vsel %vm2078, %v1790, %v2085
    %v2093 = vsel %vm2079, %v1792, %v2086
    %v2094 = vsel %vm2080, %v2071, %v2087
    %v2095 = vld [vmem:[#allocation8] sm:$0xff]
    %v2096 = vld [vmem:[#allocation8 + $0x8] sm:$0xff]
    %v2097 = vld [vmem:[#allocation8 + $0x10] sm:$0xff]
    %v2098 = vld [vmem:[#allocation8 + $0x18] sm:$0xff]
    %v2099 = vld [vmem:[#allocation8 + $0x20] sm:$0xff]
    %v2100 = vld [vmem:[#allocation8 + $0x28] sm:$0xff]
    %v2101 = vld [vmem:[#allocation8 + $0x30] sm:$0xff]
    %v2102 = vld [vmem:[#allocation8 + $0x38] sm:$0xff]
    %v2103 = vld [vmem:[#allocation8 + $0x40] sm:$0xff]
    %v2104 = vld [vmem:[#allocation8 + $0x48] sm:$0xff]
    %v2105 = vld [vmem:[#allocation8 + $0x50] sm:$0xff]
    %v2106 = vld [vmem:[#allocation8 + $0x58] sm:$0xff]
    %v2107 = vld [vmem:[#allocation8 + $0x60] sm:$0xff]
    %v2108 = vld [vmem:[#allocation8 + $0x68] sm:$0xff]
    %v2109 = vld [vmem:[#allocation8 + $0x70] sm:$0xff]
    %v2110 = vld [vmem:[#allocation8 + $0x78] sm:$0xff]
    %v2111 = vld [vmem:[#allocation8 + $0x80] sm:$0xff]
    %v2112 = vld [vmem:[#allocation8 + $0x88] sm:$0xff]
    %v2113 = vld [vmem:[#allocation8 + $0x90] sm:$0xff]
    %v2114 = vld [vmem:[#allocation8 + $0x98] sm:$0xff]
    %v2115 = vld [vmem:[#allocation8 + $0xa0] sm:$0xff]
    %v2116 = vld [vmem:[#allocation8 + $0xa8] sm:$0xff]
    %v2117 = vld [vmem:[#allocation8 + $0xb0] sm:$0xff]
    %v2118 = vld [vmem:[#allocation8 + $0xb8] sm:$0xff]
    %v2119 = vld [vmem:[#allocation8 + $0xc0] sm:$0xff]
    %v2120 = vld [vmem:[#allocation8 + $0xc8] sm:$0xff]
    %v2121 = vld [vmem:[#allocation8 + $0xd0] sm:$0xff]
    %v2122 = vld [vmem:[#allocation8 + $0xd8] sm:$0xff]
    %v2123 = vld [vmem:[#allocation8 + $0xe0] sm:$0xff]
    %v2124 = vld [vmem:[#allocation8 + $0xe8] sm:$0xff]
    %v2125 = vld [vmem:[#allocation8 + $0xf0] sm:$0xff]
    %v2126 = vld [vmem:[#allocation8 + $0xf8] sm:$0xff]
    %v2127 = vld [vmem:[#allocation8 + $0x100] sm:$0xff]
    %v2128 = vld [vmem:[#allocation8 + $0x108] sm:$0xff]
    %v2129 = vld [vmem:[#allocation8 + $0x110] sm:$0xff]
    %v2130 = vld [vmem:[#allocation8 + $0x118] sm:$0xff]
    %v2131 = vld [vmem:[#allocation8 + $0x120] sm:$0xff]
    %v2132 = vld [vmem:[#allocation8 + $0x128] sm:$0xff]
    %v2133 = vld [vmem:[#allocation8 + $0x130] sm:$0xff]
    %v2134 = vld [vmem:[#allocation8 + $0x138] sm:$0xff]
    %v2135 = vld [vmem:[#allocation8 + $0x140] sm:$0xff]
    %v2136 = vld [vmem:[#allocation8 + $0x148] sm:$0xff]
    %v2137 = vld [vmem:[#allocation8 + $0x150] sm:$0xff]
    %v2138 = vld [vmem:[#allocation8 + $0x158] sm:$0xff]
    %v2139 = vld [vmem:[#allocation8 + $0x160] sm:$0xff]
    %v2140 = vld [vmem:[#allocation8 + $0x168] sm:$0xff]
    %v2141 = vld [vmem:[#allocation8 + $0x170] sm:$0xff]
    %v2142 = vld [vmem:[#allocation8 + $0x178] sm:$0xff]
    %v2143 = vld [vmem:[#allocation8 + $0x180] sm:$0xff]
    %v2144 = vld [vmem:[#allocation8 + $0x188] sm:$0xff]
    %v2145 = vld [vmem:[#allocation8 + $0x190] sm:$0xff]
    %v2146 = vld [vmem:[#allocation8 + $0x198] sm:$0xff]
    %v2147 = vld [vmem:[#allocation8 + $0x1a0] sm:$0xff]
    %v2148 = vld [vmem:[#allocation8 + $0x1a8] sm:$0xff]
    %v2149 = vld [vmem:[#allocation8 + $0x1b0] sm:$0xff]
    %v2150 = vld [vmem:[#allocation8 + $0x1b8] sm:$0xff]
    %v2151 = vld [vmem:[#allocation8 + $0x1c0] sm:$0xff]
    %v2152 = vld [vmem:[#allocation8 + $0x1c8] sm:$0xff]
    %v2153 = vld [vmem:[#allocation8 + $0x1d0] sm:$0xff]
    %v2154 = vld [vmem:[#allocation8 + $0x1d8] sm:$0xff]
    %v2155 = vld [vmem:[#allocation8 + $0x1e0] sm:$0xff]
    %v2156 = vld [vmem:[#allocation8 + $0x1e8] sm:$0xff]
    %v2157 = vld [vmem:[#allocation8 + $0x1f0] sm:$0xff]
    %v2158 = vld [vmem:[#allocation8 + $0x1f8] sm:$0xff]
    %v2159 = vld [vmem:[#allocation8 + $0x200] sm:$0xff]
    %v2160 = vld [vmem:[#allocation8 + $0x208] sm:$0xff]
    %v2161 = vld [vmem:[#allocation8 + $0x210] sm:$0xff]
    %v2162 = vld [vmem:[#allocation8 + $0x218] sm:$0xff]
    %v2163 = vld [vmem:[#allocation8 + $0x220] sm:$0xff]
    %v2164 = vld [vmem:[#allocation8 + $0x228] sm:$0xff]
    %v2165 = vld [vmem:[#allocation8 + $0x230] sm:$0xff]
    %v2166 = vld [vmem:[#allocation8 + $0x238] sm:$0xff]
    %v2167 = vld [vmem:[#allocation8 + $0x240] sm:$0xff]
    %v2168 = vld [vmem:[#allocation8 + $0x248] sm:$0xff]
    %v2169 = vld [vmem:[#allocation8 + $0x250] sm:$0xff]
    %v2170 = vld [vmem:[#allocation8 + $0x258] sm:$0xff]
    %v2171 = vld [vmem:[#allocation8 + $0x260] sm:$0xff]
    %v2172 = vld [vmem:[#allocation8 + $0x268] sm:$0xff]
    %v2173 = vld [vmem:[#allocation8 + $0x270] sm:$0xff]
    %v2174 = vld [vmem:[#allocation8 + $0x278] sm:$0xff]
    %v2175 = vld [vmem:[#allocation8 + $0x280] sm:$0xff]
    %v2176 = vld [vmem:[#allocation8 + $0x288] sm:$0xff]
    %v2177 = vld [vmem:[#allocation8 + $0x290] sm:$0xff]
    %v2178 = vld [vmem:[#allocation8 + $0x298] sm:$0xff]
    %v2179 = vld [vmem:[#allocation8 + $0x2a0] sm:$0xff]
    %v2180 = vld [vmem:[#allocation8 + $0x2a8] sm:$0xff]
    %v2181 = vld [vmem:[#allocation8 + $0x2b0] sm:$0xff]
    %v2182 = vld [vmem:[#allocation8 + $0x2b8] sm:$0xff]
    %v2183 = vld [vmem:[#allocation8 + $0x2c0] sm:$0xff]
    %v2184 = vld [vmem:[#allocation8 + $0x2c8] sm:$0xff]
    %v2185 = vld [vmem:[#allocation8 + $0x2d0] sm:$0xff]
    %v2186 = vld [vmem:[#allocation8 + $0x2d8] sm:$0xff]
    %v2187 = vld [vmem:[#allocation8 + $0x2e0] sm:$0xff]
    %v2188 = vld [vmem:[#allocation8 + $0x2e8] sm:$0xff]
    %v2189 = vld [vmem:[#allocation8 + $0x2f0] sm:$0xff]
    %v2190 = vld [vmem:[#allocation8 + $0x2f8] sm:$0xff]
    %v2191 = vld [vmem:[#allocation8 + $0x300] sm:$0xff]
    %v2192 = vld [vmem:[#allocation8 + $0x308] sm:$0xff]
    %v2193 = vld [vmem:[#allocation8 + $0x310] sm:$0xff]
    %v2194 = vld [vmem:[#allocation8 + $0x318] sm:$0xff]
    %v2195 = vld [vmem:[#allocation8 + $0x320] sm:$0xff]
    %v2196 = vld [vmem:[#allocation8 + $0x328] sm:$0xff]
    %v2197 = vld [vmem:[#allocation8 + $0x330] sm:$0xff]
    %v2198 = vld [vmem:[#allocation8 + $0x338] sm:$0xff]
    %v2199 = vld [vmem:[#allocation8 + $0x340] sm:$0xff]
    %v2200 = vld [vmem:[#allocation8 + $0x348] sm:$0xff]
    %v2201 = vld [vmem:[#allocation8 + $0x350] sm:$0xff]
    %v2202 = vld [vmem:[#allocation8 + $0x358] sm:$0xff]
    %v2203 = vld [vmem:[#allocation8 + $0x360] sm:$0xff]
    %v2204 = vld [vmem:[#allocation8 + $0x368] sm:$0xff]
    %v2205 = vld [vmem:[#allocation8 + $0x370] sm:$0xff]
    %v2206 = vld [vmem:[#allocation8 + $0x378] sm:$0xff]
    %v2207 = vld [vmem:[#allocation8 + $0x380] sm:$0xff]
    %v2208 = vld [vmem:[#allocation8 + $0x388] sm:$0xff]
    %v2209 = vld [vmem:[#allocation8 + $0x390] sm:$0xff]
    %v2210 = vld [vmem:[#allocation8 + $0x398] sm:$0xff]
    %v2211 = vld [vmem:[#allocation8 + $0x3a0] sm:$0xff]
    %v2212 = vld [vmem:[#allocation8 + $0x3a8] sm:$0xff]
    %v2213 = vld [vmem:[#allocation8 + $0x3b0] sm:$0xff]
    %v2214 = vld [vmem:[#allocation8 + $0x3b8] sm:$0xff]
    %v2215 = vld [vmem:[#allocation8 + $0x3c0] sm:$0xff]
    %v2216 = vld [vmem:[#allocation8 + $0x3c8] sm:$0xff]
    %v2217 = vld [vmem:[#allocation8 + $0x3d0] sm:$0xff]
    %v2218 = vld [vmem:[#allocation8 + $0x3d8] sm:$0xff]
    %v2219 = vld [vmem:[#allocation8 + $0x3e0] sm:$0xff]
    %v2220 = vld [vmem:[#allocation8 + $0x3e8] sm:$0xff]
    %v2221 = vld [vmem:[#allocation8 + $0x3f0] sm:$0xff]
    %v2222 = vld [vmem:[#allocation8 + $0x3f8] sm:$0xff]
    %v2223 = vld [vmem:[#allocation8 + $0x400] sm:$0xff]
    %v2224 = vld [vmem:[#allocation8 + $0x408] sm:$0xff]
    %v2225 = vld [vmem:[#allocation8 + $0x410] sm:$0xff]
    %v2226 = vld [vmem:[#allocation8 + $0x418] sm:$0xff]
    %v2227 = vld [vmem:[#allocation8 + $0x420] sm:$0xff]
    %v2228 = vld [vmem:[#allocation8 + $0x428] sm:$0xff]
    %v2229 = vld [vmem:[#allocation8 + $0x430] sm:$0xff]
    %v2230 = vld [vmem:[#allocation8 + $0x438] sm:$0xff]
    %v2231 = vld [vmem:[#allocation8 + $0x440] sm:$0xff]
    %v2232 = vld [vmem:[#allocation8 + $0x448] sm:$0xff]
    %v2233 = vld [vmem:[#allocation8 + $0x450] sm:$0xff]
    %v2234 = vld [vmem:[#allocation8 + $0x458] sm:$0xff]
    %v2235 = vld [vmem:[#allocation8 + $0x460] sm:$0xff]
    %v2236 = vld [vmem:[#allocation8 + $0x468] sm:$0xff]
    %v2237 = vld [vmem:[#allocation8 + $0x470] sm:$0xff]
    %v2238 = vld [vmem:[#allocation8 + $0x478] sm:$0xff]
    %v2239 = vld [vmem:[#allocation8 + $0x480] sm:$0xff]
    %v2240 = vld [vmem:[#allocation8 + $0x488] sm:$0xff]
    %v2241 = vld [vmem:[#allocation8 + $0x490] sm:$0xff]
    %v2242 = vld [vmem:[#allocation8 + $0x498] sm:$0xff]
    %v2243 = vld [vmem:[#allocation8 + $0x4a0] sm:$0xff]
    %v2244 = vld [vmem:[#allocation8 + $0x4a8] sm:$0xff]
    %v2245 = vld [vmem:[#allocation8 + $0x4b0] sm:$0xff]
    %v2246 = vld [vmem:[#allocation8 + $0x4b8] sm:$0xff]
    %v2247 = vld [vmem:[#allocation8 + $0x4c0] sm:$0xff]
    %v2248 = vld [vmem:[#allocation8 + $0x4c8] sm:$0xff]
    %v2249 = vld [vmem:[#allocation8 + $0x4d0] sm:$0xff]
    %v2250 = vld [vmem:[#allocation8 + $0x4d8] sm:$0xff]
    %v2251 = vld [vmem:[#allocation8 + $0x4e0] sm:$0xff]
    %v2252 = vld [vmem:[#allocation8 + $0x4e8] sm:$0xff]
    %v2253 = vld [vmem:[#allocation8 + $0x4f0] sm:$0xff]
    %v2254 = vld [vmem:[#allocation8 + $0x4f8] sm:$0xff]
    %v2255 = vld [vmem:[#allocation8 + $0x500] sm:$0xff]
    %v2256 = vld [vmem:[#allocation8 + $0x508] sm:$0xff]
    %v2257 = vld [vmem:[#allocation8 + $0x510] sm:$0xff]
    %v2258 = vld [vmem:[#allocation8 + $0x518] sm:$0xff]
    %v2259 = vld [vmem:[#allocation8 + $0x520] sm:$0xff]
    %v2260 = vld [vmem:[#allocation8 + $0x528] sm:$0xff]
    %v2261 = vld [vmem:[#allocation8 + $0x530] sm:$0xff]
    %v2262 = vld [vmem:[#allocation8 + $0x538] sm:$0xff]
    %v2263 = vld [vmem:[#allocation8 + $0x540] sm:$0xff]
    %v2264 = vld [vmem:[#allocation8 + $0x548] sm:$0xff]
    %v2265 = vld [vmem:[#allocation8 + $0x550] sm:$0xff]
    %v2266 = vld [vmem:[#allocation8 + $0x558] sm:$0xff]
    %v2267 = vld [vmem:[#allocation8 + $0x560] sm:$0xff]
    %v2268 = vld [vmem:[#allocation8 + $0x568] sm:$0xff]
    %v2269 = vld [vmem:[#allocation8 + $0x570] sm:$0xff]
    %v2270 = vld [vmem:[#allocation8 + $0x578] sm:$0xff]
    %v2271 = vld [vmem:[#allocation8 + $0x580] sm:$0xff]
    %v2272 = vld [vmem:[#allocation8 + $0x588] sm:$0xff]
    %v2273 = vld [vmem:[#allocation8 + $0x590] sm:$0xff]
    %v2274 = vld [vmem:[#allocation8 + $0x598] sm:$0xff]
    %v2275 = vld [vmem:[#allocation8 + $0x5a0] sm:$0xff]
    %v2276 = vld [vmem:[#allocation8 + $0x5a8] sm:$0xff]
    %v2277 = vld [vmem:[#allocation8 + $0x5b0] sm:$0xff]
    %v2278 = vld [vmem:[#allocation8 + $0x5b8] sm:$0xff]
    %v2279 = vld [vmem:[#allocation8 + $0x5c0] sm:$0xff]
    %v2280 = vld [vmem:[#allocation8 + $0x5c8] sm:$0xff]
    %v2281 = vld [vmem:[#allocation8 + $0x5d0] sm:$0xff]
    %v2282 = vld [vmem:[#allocation8 + $0x5d8] sm:$0xff]
    %v2283 = vld [vmem:[#allocation8 + $0x5e0] sm:$0xff]
    %v2284 = vld [vmem:[#allocation8 + $0x5e8] sm:$0xff]
    %v2285 = vld [vmem:[#allocation8 + $0x5f0] sm:$0xff]
    %v2286 = vld [vmem:[#allocation8 + $0x5f8] sm:$0xff]
    %v2287 = vld [vmem:[#allocation8 + $0x600] sm:$0xff]
    %v2288 = vld [vmem:[#allocation8 + $0x608] sm:$0xff]
    %v2289 = vld [vmem:[#allocation8 + $0x610] sm:$0xff]
    %v2290 = vld [vmem:[#allocation8 + $0x618] sm:$0xff]
    %v2291 = vld [vmem:[#allocation8 + $0x620] sm:$0xff]
    %v2292 = vld [vmem:[#allocation8 + $0x628] sm:$0xff]
    %v2293 = vld [vmem:[#allocation8 + $0x630] sm:$0xff]
    %v2294 = vld [vmem:[#allocation8 + $0x638] sm:$0xff]
    %v2295 = vld [vmem:[#allocation8 + $0x640] sm:$0xff]
    %v2296 = vld [vmem:[#allocation8 + $0x648] sm:$0xff]
    %v2297 = vld [vmem:[#allocation8 + $0x650] sm:$0xff]
    %v2298 = vld [vmem:[#allocation8 + $0x658] sm:$0xff]
    %v2299 = vld [vmem:[#allocation8 + $0x660] sm:$0xff]
    %v2300 = vld [vmem:[#allocation8 + $0x668] sm:$0xff]
    %v2301 = vld [vmem:[#allocation8 + $0x670] sm:$0xff]
    %v2302 = vld [vmem:[#allocation8 + $0x678] sm:$0xff]
    %v2303 = vld [vmem:[#allocation8 + $0x680] sm:$0xff]
    %v2304 = vld [vmem:[#allocation8 + $0x688] sm:$0xff]
    %v2305 = vld [vmem:[#allocation8 + $0x690] sm:$0xff]
    %v2306 = vld [vmem:[#allocation8 + $0x698] sm:$0xff]
    %v2307 = vld [vmem:[#allocation8 + $0x6a0] sm:$0xff]
    %v2308 = vld [vmem:[#allocation8 + $0x6a8] sm:$0xff]
    %v2309 = vld [vmem:[#allocation8 + $0x6b0] sm:$0xff]
    %v2310 = vld [vmem:[#allocation8 + $0x6b8] sm:$0xff]
    %v2311 = vld [vmem:[#allocation8 + $0x6c0] sm:$0xff]
    %v2312 = vld [vmem:[#allocation8 + $0x6c8] sm:$0xff]
    %v2313 = vld [vmem:[#allocation8 + $0x6d0] sm:$0xff]
    %v2314 = vld [vmem:[#allocation8 + $0x6d8] sm:$0xff]
    %v2315 = vld [vmem:[#allocation8 + $0x6e0] sm:$0xff]
    %v2316 = vld [vmem:[#allocation8 + $0x6e8] sm:$0xff]
    %v2317 = vld [vmem:[#allocation8 + $0x6f0] sm:$0xff]
    %v2318 = vld [vmem:[#allocation8 + $0x6f8] sm:$0xff]
    %v2319 = vld [vmem:[#allocation8 + $0x700] sm:$0xff]
    %v2320 = vld [vmem:[#allocation8 + $0x708] sm:$0xff]
    %v2321 = vld [vmem:[#allocation8 + $0x710] sm:$0xff]
    %v2322 = vld [vmem:[#allocation8 + $0x718] sm:$0xff]
    %v2323 = vld [vmem:[#allocation8 + $0x720] sm:$0xff]
    %v2324 = vld [vmem:[#allocation8 + $0x728] sm:$0xff]
    %v2325 = vld [vmem:[#allocation8 + $0x730] sm:$0xff]
    %v2326 = vld [vmem:[#allocation8 + $0x738] sm:$0xff]
    %v2327 = vld [vmem:[#allocation8 + $0x740] sm:$0xff]
    %v2328 = vld [vmem:[#allocation8 + $0x748] sm:$0xff]
    %v2329 = vld [vmem:[#allocation8 + $0x750] sm:$0xff]
    %v2330 = vld [vmem:[#allocation8 + $0x758] sm:$0xff]
    %v2331 = vld [vmem:[#allocation8 + $0x760] sm:$0xff]
    %v2332 = vld [vmem:[#allocation8 + $0x768] sm:$0xff]
    %v2333 = vld [vmem:[#allocation8 + $0x770] sm:$0xff]
    %v2334 = vld [vmem:[#allocation8 + $0x778] sm:$0xff]
    %v2335 = vld [vmem:[#allocation8 + $0x780] sm:$0xff]
    %v2336 = vld [vmem:[#allocation8 + $0x788] sm:$0xff]
    %v2337 = vld [vmem:[#allocation8 + $0x790] sm:$0xff]
    %v2338 = vld [vmem:[#allocation8 + $0x798] sm:$0xff]
    %v2339 = vld [vmem:[#allocation8 + $0x7a0] sm:$0xff]
    %v2340 = vld [vmem:[#allocation8 + $0x7a8] sm:$0xff]
    %v2341 = vld [vmem:[#allocation8 + $0x7b0] sm:$0xff]
    %v2342 = vld [vmem:[#allocation8 + $0x7b8] sm:$0xff]
    %v2343 = vld [vmem:[#allocation8 + $0x7c0] sm:$0xff]
    %v2344 = vld [vmem:[#allocation8 + $0x7c8] sm:$0xff]
    %v2345 = vld [vmem:[#allocation8 + $0x7d0] sm:$0xff]
    %v2346 = vld [vmem:[#allocation8 + $0x7d8] sm:$0xff]
    %v2347 = vld [vmem:[#allocation8 + $0x7e0] sm:$0xff]
    %v2348 = vld [vmem:[#allocation8 + $0x7e8] sm:$0xff]
    %v2349 = vld [vmem:[#allocation8 + $0x7f0] sm:$0xff]
    %v2350 = vld [vmem:[#allocation8 + $0x7f8] sm:$0xff]
    %v2351 = vld [vmem:[#allocation8 + $0x800] sm:$0xff]
    %v2352 = vld [vmem:[#allocation8 + $0x808] sm:$0xff]
    %v2353 = vld [vmem:[#allocation8 + $0x810] sm:$0xff]
    %v2354 = vld [vmem:[#allocation8 + $0x818] sm:$0xff]
    %v2355 = vld [vmem:[#allocation8 + $0x820] sm:$0xff]
    %v2356 = vld [vmem:[#allocation8 + $0x828] sm:$0xff]
    %v2357 = vld [vmem:[#allocation8 + $0x830] sm:$0xff]
    %v2358 = vld [vmem:[#allocation8 + $0x838] sm:$0xff]
    %v2359 = vld [vmem:[#allocation8 + $0x840] sm:$0xff]
    %v2360 = vld [vmem:[#allocation8 + $0x848] sm:$0xff]
    %v2361 = vld [vmem:[#allocation8 + $0x850] sm:$0xff]
    %v2362 = vld [vmem:[#allocation8 + $0x858] sm:$0xff]
    %v2363 = vld [vmem:[#allocation8 + $0x860] sm:$0xff]
    %v2364 = vld [vmem:[#allocation8 + $0x868] sm:$0xff]
    %v2365 = vld [vmem:[#allocation8 + $0x870] sm:$0xff]
    %v2366 = vld [vmem:[#allocation8 + $0x878] sm:$0xff]
    %v2367 = vld [vmem:[#allocation8 + $0x880] sm:$0xff]
    %v2368 = vld [vmem:[#allocation8 + $0x888] sm:$0xff]
    %v2369 = vld [vmem:[#allocation8 + $0x890] sm:$0xff]
    %v2370 = vld [vmem:[#allocation8 + $0x898] sm:$0xff]
    %v2371 = vld [vmem:[#allocation8 + $0x8a0] sm:$0xff]
    %v2372 = vld [vmem:[#allocation8 + $0x8a8] sm:$0xff]
    %v2373 = vld [vmem:[#allocation8 + $0x8b0] sm:$0xff]
    %v2374 = vld [vmem:[#allocation8 + $0x8b8] sm:$0xff]
    %v2375 = vld [vmem:[#allocation8 + $0x8c0] sm:$0xff]
    %v2376 = vld [vmem:[#allocation8 + $0x8c8] sm:$0xff]
    %v2377 = vld [vmem:[#allocation8 + $0x8d0] sm:$0xff]
    %v2378 = vld [vmem:[#allocation8 + $0x8d8] sm:$0xff]
    %v2379 = vld [vmem:[#allocation8 + $0x8e0] sm:$0xff]
    %v2380 = vld [vmem:[#allocation8 + $0x8e8] sm:$0xff]
    %v2381 = vld [vmem:[#allocation8 + $0x8f0] sm:$0xff]
    %v2382 = vld [vmem:[#allocation8 + $0x8f8] sm:$0xff]
    %v2383 = vld [vmem:[#allocation8 + $0x900] sm:$0xff]
    %v2384 = vld [vmem:[#allocation8 + $0x908] sm:$0xff]
    %v2385 = vld [vmem:[#allocation8 + $0x910] sm:$0xff]
    %v2386 = vld [vmem:[#allocation8 + $0x918] sm:$0xff]
    %v2387 = vld [vmem:[#allocation8 + $0x920] sm:$0xff]
    %v2388 = vld [vmem:[#allocation8 + $0x928] sm:$0xff]
    %v2389 = vld [vmem:[#allocation8 + $0x930] sm:$0xff]
    %v2390 = vld [vmem:[#allocation8 + $0x938] sm:$0xff]
    %v2391 = vld [vmem:[#allocation8 + $0x940] sm:$0xff]
    %v2392 = vld [vmem:[#allocation8 + $0x948] sm:$0xff]
    %v2393 = vld [vmem:[#allocation8 + $0x950] sm:$0xff]
    %v2394 = vld [vmem:[#allocation8 + $0x958] sm:$0xff]
    %v2395 = vld [vmem:[#allocation8 + $0x960] sm:$0xff]
    %v2396 = vld [vmem:[#allocation8 + $0x968] sm:$0xff]
    %v2397 = vld [vmem:[#allocation8 + $0x970] sm:$0xff]
    %v2398 = vld [vmem:[#allocation8 + $0x978] sm:$0xff]
    %v2399 = vld [vmem:[#allocation8 + $0x980] sm:$0xff]
    %v2400 = vld [vmem:[#allocation8 + $0x988] sm:$0xff]
    %v2401 = vld [vmem:[#allocation8 + $0x990] sm:$0xff]
    %v2402 = vld [vmem:[#allocation8 + $0x998] sm:$0xff]
    %v2403 = vld [vmem:[#allocation8 + $0x9a0] sm:$0xff]
    %v2404 = vld [vmem:[#allocation8 + $0x9a8] sm:$0xff]
    %v2405 = vld [vmem:[#allocation8 + $0x9b0] sm:$0xff]
    %v2406 = vld [vmem:[#allocation8 + $0x9b8] sm:$0xff]
    %v2407 = vld [vmem:[#allocation8 + $0x9c0] sm:$0xff]
    %v2408 = vld [vmem:[#allocation8 + $0x9c8] sm:$0xff]
    %v2409 = vld [vmem:[#allocation8 + $0x9d0] sm:$0xff]
    %v2410 = vld [vmem:[#allocation8 + $0x9d8] sm:$0xff]
    %v2411 = vld [vmem:[#allocation8 + $0x9e0] sm:$0xff]
    %v2412 = vld [vmem:[#allocation8 + $0x9e8] sm:$0xff]
    %v2413 = vld [vmem:[#allocation8 + $0x9f0] sm:$0xff]
    %v2414 = vld [vmem:[#allocation8 + $0x9f8] sm:$0xff]
    %v2415 = vld [vmem:[#allocation8 + $0xa00] sm:$0xff]
    %v2416 = vld [vmem:[#allocation8 + $0xa08] sm:$0xff]
    %v2417 = vld [vmem:[#allocation8 + $0xa10] sm:$0xff]
    %v2418 = vld [vmem:[#allocation8 + $0xa18] sm:$0xff]
    %v2419 = vld [vmem:[#allocation8 + $0xa20] sm:$0xff]
    %v2420 = vld [vmem:[#allocation8 + $0xa28] sm:$0xff]
    %v2421 = vld [vmem:[#allocation8 + $0xa30] sm:$0xff]
    %v2422 = vld [vmem:[#allocation8 + $0xa38] sm:$0xff]
    %v2423 = vld [vmem:[#allocation8 + $0xa40] sm:$0xff]
    %v2424 = vld [vmem:[#allocation8 + $0xa48] sm:$0xff]
    %v2425 = vld [vmem:[#allocation8 + $0xa50] sm:$0xff]
    %v2426 = vld [vmem:[#allocation8 + $0xa58] sm:$0xff]
    %v2427 = vld [vmem:[#allocation8 + $0xa60] sm:$0xff]
    %v2428 = vld [vmem:[#allocation8 + $0xa68] sm:$0xff]
    %v2429 = vld [vmem:[#allocation8 + $0xa70] sm:$0xff]
    %v2430 = vld [vmem:[#allocation8 + $0xa78] sm:$0xff]
    %v2431 = vld [vmem:[#allocation8 + $0xa80] sm:$0xff]
    %v2432 = vld [vmem:[#allocation8 + $0xa88] sm:$0xff]
    %v2433 = vld [vmem:[#allocation8 + $0xa90] sm:$0xff]
    %v2434 = vld [vmem:[#allocation8 + $0xa98] sm:$0xff]
    %v2435 = vld [vmem:[#allocation8 + $0xaa0] sm:$0xff]
    %v2436 = vld [vmem:[#allocation8 + $0xaa8] sm:$0xff]
    %v2437 = vld [vmem:[#allocation8 + $0xab0] sm:$0xff]
    %v2438 = vld [vmem:[#allocation8 + $0xab8] sm:$0xff]
    %v2439 = vld [vmem:[#allocation8 + $0xac0] sm:$0xff]
    %v2440 = vld [vmem:[#allocation8 + $0xac8] sm:$0xff]
    %v2441 = vld [vmem:[#allocation8 + $0xad0] sm:$0xff]
    %v2442 = vld [vmem:[#allocation8 + $0xad8] sm:$0xff]
    %v2443 = vld [vmem:[#allocation8 + $0xae0] sm:$0xff]
    %v2444 = vld [vmem:[#allocation8 + $0xae8] sm:$0xff]
    %v2445 = vld [vmem:[#allocation8 + $0xaf0] sm:$0xff]
    %v2446 = vld [vmem:[#allocation8 + $0xaf8] sm:$0xff]
    %v2447 = vld [vmem:[#allocation8 + $0xb00] sm:$0xff]
    %v2448 = vld [vmem:[#allocation8 + $0xb08] sm:$0xff]
    %v2449 = vld [vmem:[#allocation8 + $0xb10] sm:$0xff]
    %v2450 = vld [vmem:[#allocation8 + $0xb18] sm:$0xff]
    %v2451 = vld [vmem:[#allocation8 + $0xb20] sm:$0xff]
    %v2452 = vld [vmem:[#allocation8 + $0xb28] sm:$0xff]
    %v2453 = vld [vmem:[#allocation8 + $0xb30] sm:$0xff]
    %v2454 = vld [vmem:[#allocation8 + $0xb38] sm:$0xff]
    %v2455 = vld [vmem:[#allocation8 + $0xb40] sm:$0xff]
    %v2456 = vld [vmem:[#allocation8 + $0xb48] sm:$0xff]
    %v2457 = vld [vmem:[#allocation8 + $0xb50] sm:$0xff]
    %v2458 = vld [vmem:[#allocation8 + $0xb58] sm:$0xff]
    %v2459 = vld [vmem:[#allocation8 + $0xb60] sm:$0xff]
    %v2460 = vld [vmem:[#allocation8 + $0xb68] sm:$0xff]
    %v2461 = vld [vmem:[#allocation8 + $0xb70] sm:$0xff]
    %v2462 = vld [vmem:[#allocation8 + $0xb78] sm:$0xff]
    %v2463 = vld [vmem:[#allocation8 + $0xb80] sm:$0xff]
    %v2464 = vld [vmem:[#allocation8 + $0xb88] sm:$0xff]
    %v2465 = vld [vmem:[#allocation8 + $0xb90] sm:$0xff]
    %v2466 = vld [vmem:[#allocation8 + $0xb98] sm:$0xff]
    %v2467 = vld [vmem:[#allocation8 + $0xba0] sm:$0xff]
    %v2468 = vld [vmem:[#allocation8 + $0xba8] sm:$0xff]
    %v2469 = vld [vmem:[#allocation8 + $0xbb0] sm:$0xff]
    %v2470 = vld [vmem:[#allocation8 + $0xbb8] sm:$0xff]
    %v2471 = vld [vmem:[#allocation8 + $0xbc0] sm:$0xff]
    %v2472 = vld [vmem:[#allocation8 + $0xbc8] sm:$0xff]
    %v2473 = vld [vmem:[#allocation8 + $0xbd0] sm:$0xff]
    %v2474 = vld [vmem:[#allocation8 + $0xbd8] sm:$0xff]
    %v2475 = vld [vmem:[#allocation8 + $0xbe0] sm:$0xff]
    %v2476 = vld [vmem:[#allocation8 + $0xbe8] sm:$0xff]
    %v2477 = vld [vmem:[#allocation8 + $0xbf0] sm:$0xff]
    %v2478 = vld [vmem:[#allocation8 + $0xbf8] sm:$0xff]
    %v2479 = vld [vmem:[#allocation8 + $0xc00] sm:$0xff]
    %v2480 = vld [vmem:[#allocation8 + $0xc08] sm:$0xff]
    %v2481 = vld [vmem:[#allocation8 + $0xc10] sm:$0xff]
    %v2482 = vld [vmem:[#allocation8 + $0xc18] sm:$0xff]
    %v2483 = vld [vmem:[#allocation8 + $0xc20] sm:$0xff]
    %v2484 = vld [vmem:[#allocation8 + $0xc28] sm:$0xff]
    %v2485 = vld [vmem:[#allocation8 + $0xc30] sm:$0xff]
    %v2486 = vld [vmem:[#allocation8 + $0xc38] sm:$0xff]
    %v2487 = vld [vmem:[#allocation8 + $0xc40] sm:$0xff]
    %v2488 = vld [vmem:[#allocation8 + $0xc48] sm:$0xff]
    %v2489 = vld [vmem:[#allocation8 + $0xc50] sm:$0xff]
    %v2490 = vld [vmem:[#allocation8 + $0xc58] sm:$0xff]
    %v2491 = vld [vmem:[#allocation8 + $0xc60] sm:$0xff]
    %v2492 = vld [vmem:[#allocation8 + $0xc68] sm:$0xff]
    %v2493 = vld [vmem:[#allocation8 + $0xc70] sm:$0xff]
    %v2494 = vld [vmem:[#allocation8 + $0xc78] sm:$0xff]
    %v2495 = vld [vmem:[#allocation8 + $0xc80] sm:$0xff]
    %v2496 = vld [vmem:[#allocation8 + $0xc88] sm:$0xff]
    %v2497 = vld [vmem:[#allocation8 + $0xc90] sm:$0xff]
    %v2498 = vld [vmem:[#allocation8 + $0xc98] sm:$0xff]
    %v2499 = vld [vmem:[#allocation8 + $0xca0] sm:$0xff]
    %v2500 = vld [vmem:[#allocation8 + $0xca8] sm:$0xff]
    %v2501 = vld [vmem:[#allocation8 + $0xcb0] sm:$0xff]
    %v2502 = vld [vmem:[#allocation8 + $0xcb8] sm:$0xff]
    %v2503 = vld [vmem:[#allocation8 + $0xcc0] sm:$0xff]
    %v2504 = vld [vmem:[#allocation8 + $0xcc8] sm:$0xff]
    %v2505 = vld [vmem:[#allocation8 + $0xcd0] sm:$0xff]
    %v2506 = vld [vmem:[#allocation8 + $0xcd8] sm:$0xff]
    %v2507 = vld [vmem:[#allocation8 + $0xce0] sm:$0xff]
    %v2508 = vld [vmem:[#allocation8 + $0xce8] sm:$0xff]
    %v2509 = vld [vmem:[#allocation8 + $0xcf0] sm:$0xff]
    %v2510 = vld [vmem:[#allocation8 + $0xcf8] sm:$0xff]
    %v2511 = vld [vmem:[#allocation8 + $0xd00] sm:$0xff]
    %v2512 = vld [vmem:[#allocation8 + $0xd08] sm:$0xff]
    %v2513 = vld [vmem:[#allocation8 + $0xd10] sm:$0xff]
    %v2514 = vld [vmem:[#allocation8 + $0xd18] sm:$0xff]
    %v2515 = vld [vmem:[#allocation8 + $0xd20] sm:$0xff]
    %v2516 = vld [vmem:[#allocation8 + $0xd28] sm:$0xff]
    %v2517 = vld [vmem:[#allocation8 + $0xd30] sm:$0xff]
    %v2518 = vld [vmem:[#allocation8 + $0xd38] sm:$0xff]
    %v2519 = vld [vmem:[#allocation8 + $0xd40] sm:$0xff]
    %v2520 = vld [vmem:[#allocation8 + $0xd48] sm:$0xff]
    %v2521 = vld [vmem:[#allocation8 + $0xd50] sm:$0xff]
    %v2522 = vld [vmem:[#allocation8 + $0xd58] sm:$0xff]
    %v2523 = vld [vmem:[#allocation8 + $0xd60] sm:$0xff]
    %v2524 = vld [vmem:[#allocation8 + $0xd68] sm:$0xff]
    %v2525 = vld [vmem:[#allocation8 + $0xd70] sm:$0xff]
    %v2526 = vld [vmem:[#allocation8 + $0xd78] sm:$0xff]
    %v2527 = vld [vmem:[#allocation8 + $0xd80] sm:$0xff]
    %v2528 = vld [vmem:[#allocation8 + $0xd88] sm:$0xff]
    %v2529 = vld [vmem:[#allocation8 + $0xd90] sm:$0xff]
    %v2530 = vld [vmem:[#allocation8 + $0xd98] sm:$0xff]
    %v2531 = vld [vmem:[#allocation8 + $0xda0] sm:$0xff]
    %v2532 = vld [vmem:[#allocation8 + $0xda8] sm:$0xff]
    %v2533 = vld [vmem:[#allocation8 + $0xdb0] sm:$0xff]
    %v2534 = vld [vmem:[#allocation8 + $0xdb8] sm:$0xff]
    %v2535 = vld [vmem:[#allocation8 + $0xdc0] sm:$0xff]
    %v2536 = vld [vmem:[#allocation8 + $0xdc8] sm:$0xff]
    %v2537 = vld [vmem:[#allocation8 + $0xdd0] sm:$0xff]
    %v2538 = vld [vmem:[#allocation8 + $0xdd8] sm:$0xff]
    %v2539 = vld [vmem:[#allocation8 + $0xde0] sm:$0xff]
    %v2540 = vld [vmem:[#allocation8 + $0xde8] sm:$0xff]
    %v2541 = vld [vmem:[#allocation8 + $0xdf0] sm:$0xff]
    %v2542 = vld [vmem:[#allocation8 + $0xdf8] sm:$0xff]
    %v2543 = vld [vmem:[#allocation8 + $0xe00] sm:$0xff]
    %v2544 = vld [vmem:[#allocation8 + $0xe08] sm:$0xff]
    %v2545 = vld [vmem:[#allocation8 + $0xe10] sm:$0xff]
    %v2546 = vld [vmem:[#allocation8 + $0xe18] sm:$0xff]
    %v2547 = vld [vmem:[#allocation8 + $0xe20] sm:$0xff]
    %v2548 = vld [vmem:[#allocation8 + $0xe28] sm:$0xff]
    %v2549 = vld [vmem:[#allocation8 + $0xe30] sm:$0xff]
    %v2550 = vld [vmem:[#allocation8 + $0xe38] sm:$0xff]
    %v2551 = vld [vmem:[#allocation8 + $0xe40] sm:$0xff]
    %v2552 = vld [vmem:[#allocation8 + $0xe48] sm:$0xff]
    %v2553 = vld [vmem:[#allocation8 + $0xe50] sm:$0xff]
    %v2554 = vld [vmem:[#allocation8 + $0xe58] sm:$0xff]
    %v2555 = vld [vmem:[#allocation8 + $0xe60] sm:$0xff]
    %v2556 = vld [vmem:[#allocation8 + $0xe68] sm:$0xff]
    %v2557 = vld [vmem:[#allocation8 + $0xe70] sm:$0xff]
    %v2558 = vld [vmem:[#allocation8 + $0xe78] sm:$0xff]
    %v2559 = vld [vmem:[#allocation8 + $0xe80] sm:$0xff]
    %v2560 = vld [vmem:[#allocation8 + $0xe88] sm:$0xff]
    %v2561 = vld [vmem:[#allocation8 + $0xe90] sm:$0xff]
    %v2562 = vld [vmem:[#allocation8 + $0xe98] sm:$0xff]
    %v2563 = vld [vmem:[#allocation8 + $0xea0] sm:$0xff]
    %v2564 = vld [vmem:[#allocation8 + $0xea8] sm:$0xff]
    %v2565 = vld [vmem:[#allocation8 + $0xeb0] sm:$0xff]
    %v2566 = vld [vmem:[#allocation8 + $0xeb8] sm:$0xff]
    %v2567 = vld [vmem:[#allocation8 + $0xec0] sm:$0xff]
    %v2568 = vld [vmem:[#allocation8 + $0xec8] sm:$0xff]
    %v2569 = vld [vmem:[#allocation8 + $0xed0] sm:$0xff]
    %v2570 = vld [vmem:[#allocation8 + $0xed8] sm:$0xff]
    %v2571 = vld [vmem:[#allocation8 + $0xee0] sm:$0xff]
    %v2572 = vld [vmem:[#allocation8 + $0xee8] sm:$0xff]
    %v2573 = vld [vmem:[#allocation8 + $0xef0] sm:$0xff]
    %v2574 = vld [vmem:[#allocation8 + $0xef8] sm:$0xff]
    %v2575 = vld [vmem:[#allocation8 + $0xf00] sm:$0xff]
    %v2576 = vld [vmem:[#allocation8 + $0xf08] sm:$0xff]
    %v2577 = vld [vmem:[#allocation8 + $0xf10] sm:$0xff]
    %v2578 = vld [vmem:[#allocation8 + $0xf18] sm:$0xff]
    %v2579 = vld [vmem:[#allocation8 + $0xf20] sm:$0xff]
    %v2580 = vld [vmem:[#allocation8 + $0xf28] sm:$0xff]
    %v2581 = vld [vmem:[#allocation8 + $0xf30] sm:$0xff]
    %v2582 = vld [vmem:[#allocation8 + $0xf38] sm:$0xff]
    %v2583 = vld [vmem:[#allocation8 + $0xf40] sm:$0xff]
    %v2584 = vld [vmem:[#allocation8 + $0xf48] sm:$0xff]
    %v2585 = vld [vmem:[#allocation8 + $0xf50] sm:$0xff]
    %v2586 = vld [vmem:[#allocation8 + $0xf58] sm:$0xff]
    %v2587 = vld [vmem:[#allocation8 + $0xf60] sm:$0xff]
    %v2588 = vld [vmem:[#allocation8 + $0xf68] sm:$0xff]
    %v2589 = vld [vmem:[#allocation8 + $0xf70] sm:$0xff]
    %v2590 = vld [vmem:[#allocation8 + $0xf78] sm:$0xff]
    %v2591 = vld [vmem:[#allocation8 + $0xf80] sm:$0xff]
    %v2592 = vld [vmem:[#allocation8 + $0xf88] sm:$0xff]
    %v2593 = vld [vmem:[#allocation8 + $0xf90] sm:$0xff]
    %v2594 = vld [vmem:[#allocation8 + $0xf98] sm:$0xff]
    %v2595 = vld [vmem:[#allocation8 + $0xfa0] sm:$0xff]
    %v2596 = vld [vmem:[#allocation8 + $0xfa8] sm:$0xff]
    %v2597 = vld [vmem:[#allocation8 + $0xfb0] sm:$0xff]
    %v2598 = vld [vmem:[#allocation8 + $0xfb8] sm:$0xff]
    %v2599 = vld [vmem:[#allocation8 + $0xfc0] sm:$0xff]
    %v2600 = vld [vmem:[#allocation8 + $0xfc8] sm:$0xff]
    %v2601 = vld [vmem:[#allocation8 + $0xfd0] sm:$0xff]
    %v2602 = vld [vmem:[#allocation8 + $0xfd8] sm:$0xff]
    %v2603 = vld [vmem:[#allocation8 + $0xfe0] sm:$0xff]
    %v2604 = vld [vmem:[#allocation8 + $0xfe8] sm:$0xff]
    %v2605 = vld [vmem:[#allocation8 + $0xff0] sm:$0xff]
    %v2606 = vld [vmem:[#allocation8 + $0xff8] sm:$0xff]
    %v2607 = vld [vmem:[#allocation8 + $0x1000] sm:$0xff]
    %v2608 = vld [vmem:[#allocation8 + $0x1008] sm:$0xff]
    %v2609 = vld [vmem:[#allocation8 + $0x1010] sm:$0xff]
    %v2610 = vld [vmem:[#allocation8 + $0x1018] sm:$0xff]
    %v2611 = vld [vmem:[#allocation8 + $0x1020] sm:$0xff]
    %v2612 = vld [vmem:[#allocation8 + $0x1028] sm:$0xff]
    %v2613 = vld [vmem:[#allocation8 + $0x1030] sm:$0xff]
    %v2614 = vld [vmem:[#allocation8 + $0x1038] sm:$0xff]
    %v2615 = vld [vmem:[#allocation8 + $0x1040] sm:$0xff]
    %v2616 = vld [vmem:[#allocation8 + $0x1048] sm:$0xff]
    %v2617 = vld [vmem:[#allocation8 + $0x1050] sm:$0xff]
    %v2618 = vld [vmem:[#allocation8 + $0x1058] sm:$0xff]
    %v2619 = vld [vmem:[#allocation8 + $0x1060] sm:$0xff]
    %v2620 = vld [vmem:[#allocation8 + $0x1068] sm:$0xff]
    %v2621 = vld [vmem:[#allocation8 + $0x1070] sm:$0xff]
    %v2622 = vld [vmem:[#allocation8 + $0x1078] sm:$0xff]
    %v2623 = vld [vmem:[#allocation8 + $0x1080] sm:$0xff]
    %v2624 = vld [vmem:[#allocation8 + $0x1088] sm:$0xff]
    %v2625 = vld [vmem:[#allocation8 + $0x1090] sm:$0xff]
    %v2626 = vld [vmem:[#allocation8 + $0x1098] sm:$0xff]
    %v2627 = vld [vmem:[#allocation8 + $0x10a0] sm:$0xff]
    %v2628 = vld [vmem:[#allocation8 + $0x10a8] sm:$0xff]
    %v2629 = vld [vmem:[#allocation8 + $0x10b0] sm:$0xff]
    %v2630 = vld [vmem:[#allocation8 + $0x10b8] sm:$0xff]
    %v2631 = vld [vmem:[#allocation8 + $0x10c0] sm:$0xff]
    %v2632 = vld [vmem:[#allocation8 + $0x10c8] sm:$0xff]
    %v2633 = vld [vmem:[#allocation8 + $0x10d0] sm:$0xff]
    %v2634 = vld [vmem:[#allocation8 + $0x10d8] sm:$0xff]
    %v2635 = vld [vmem:[#allocation8 + $0x10e0] sm:$0xff]
    %v2636 = vld [vmem:[#allocation8 + $0x10e8] sm:$0xff]
    %v2637 = vld [vmem:[#allocation8 + $0x10f0] sm:$0xff]
    %v2638 = vld [vmem:[#allocation8 + $0x10f8] sm:$0xff]
    %v2639 = vld [vmem:[#allocation8 + $0x1100] sm:$0xff]
    %v2640 = vld [vmem:[#allocation8 + $0x1108] sm:$0xff]
    %v2641 = vld [vmem:[#allocation8 + $0x1110] sm:$0xff]
    %v2642 = vld [vmem:[#allocation8 + $0x1118] sm:$0xff]
    %v2643 = vld [vmem:[#allocation8 + $0x1120] sm:$0xff]
    %v2644 = vld [vmem:[#allocation8 + $0x1128] sm:$0xff]
    %v2645 = vld [vmem:[#allocation8 + $0x1130] sm:$0xff]
    %v2646 = vld [vmem:[#allocation8 + $0x1138] sm:$0xff]
    %v2647 = vld [vmem:[#allocation8 + $0x1140] sm:$0xff]
    %v2648 = vld [vmem:[#allocation8 + $0x1148] sm:$0xff]
    %v2649 = vld [vmem:[#allocation8 + $0x1150] sm:$0xff]
    %v2650 = vld [vmem:[#allocation8 + $0x1158] sm:$0xff]
    %v2651 = vld [vmem:[#allocation8 + $0x1160] sm:$0xff]
    %v2652 = vld [vmem:[#allocation8 + $0x1168] sm:$0xff]
    %v2653 = vld [vmem:[#allocation8 + $0x1170] sm:$0xff]
    %v2654 = vld [vmem:[#allocation8 + $0x1178] sm:$0xff]
    %v2655 = vld [vmem:[#allocation8 + $0x1180] sm:$0xff]
    %v2656 = vld [vmem:[#allocation8 + $0x1188] sm:$0xff]
    %v2657 = vld [vmem:[#allocation8 + $0x1190] sm:$0xff]
    %v2658 = vld [vmem:[#allocation8 + $0x1198] sm:$0xff]
    %v2659 = vld [vmem:[#allocation8 + $0x11a0] sm:$0xff]
    %v2660 = vld [vmem:[#allocation8 + $0x11a8] sm:$0xff]
    %v2661 = vld [vmem:[#allocation8 + $0x11b0] sm:$0xff]
    %v2662 = vld [vmem:[#allocation8 + $0x11b8] sm:$0xff]
    %v2663 = vld [vmem:[#allocation8 + $0x11c0] sm:$0xff]
    %v2664 = vld [vmem:[#allocation8 + $0x11c8] sm:$0xff]
    %v2665 = vld [vmem:[#allocation8 + $0x11d0] sm:$0xff]
    %v2666 = vld [vmem:[#allocation8 + $0x11d8] sm:$0xff]
    %v2667 = vld [vmem:[#allocation8 + $0x11e0] sm:$0xff]
    %v2668 = vld [vmem:[#allocation8 + $0x11e8] sm:$0xff]
    %v2669 = vld [vmem:[#allocation8 + $0x11f0] sm:$0xff]
    %v2670 = vld [vmem:[#allocation8 + $0x11f8] sm:$0xff]
    %v2671 = vld [vmem:[#allocation8 + $0x1200] sm:$0xff]
    %v2672 = vld [vmem:[#allocation8 + $0x1208] sm:$0xff]
    %v2673 = vld [vmem:[#allocation8 + $0x1210] sm:$0xff]
    %v2674 = vld [vmem:[#allocation8 + $0x1218] sm:$0xff]
    %v2675 = vld [vmem:[#allocation8 + $0x1220] sm:$0xff]
    %v2676 = vld [vmem:[#allocation8 + $0x1228] sm:$0xff]
    %v2677 = vld [vmem:[#allocation8 + $0x1230] sm:$0xff]
    %v2678 = vld [vmem:[#allocation8 + $0x1238] sm:$0xff]
    %v2679 = vld [vmem:[#allocation8 + $0x1240] sm:$0xff]
    %v2680 = vld [vmem:[#allocation8 + $0x1248] sm:$0xff]
    %v2681 = vld [vmem:[#allocation8 + $0x1250] sm:$0xff]
    %v2682 = vld [vmem:[#allocation8 + $0x1258] sm:$0xff]
    %v2683 = vld [vmem:[#allocation8 + $0x1260] sm:$0xff]
    %v2684 = vld [vmem:[#allocation8 + $0x1268] sm:$0xff]
    %v2685 = vld [vmem:[#allocation8 + $0x1270] sm:$0xff]
    %v2686 = vld [vmem:[#allocation8 + $0x1278] sm:$0xff]
    %v2687 = vld [vmem:[#allocation8 + $0x1280] sm:$0xff]
    %v2688 = vld [vmem:[#allocation8 + $0x1288] sm:$0xff]
    %v2689 = vld [vmem:[#allocation8 + $0x1290] sm:$0xff]
    %v2690 = vld [vmem:[#allocation8 + $0x1298] sm:$0xff]
    %v2691 = vld [vmem:[#allocation8 + $0x12a0] sm:$0xff]
    %v2692 = vld [vmem:[#allocation8 + $0x12a8] sm:$0xff]
    %v2693 = vld [vmem:[#allocation8 + $0x12b0] sm:$0xff]
    %v2694 = vld [vmem:[#allocation8 + $0x12b8] sm:$0xff]
    %v2695 = vld [vmem:[#allocation8 + $0x12c0] sm:$0xff]
    %v2696 = vld [vmem:[#allocation8 + $0x12c8] sm:$0xff]
    %v2697 = vld [vmem:[#allocation8 + $0x12d0] sm:$0xff]
    %v2698 = vld [vmem:[#allocation8 + $0x12d8] sm:$0xff]
    %v2699 = vld [vmem:[#allocation8 + $0x12e0] sm:$0xff]
    %v2700 = vld [vmem:[#allocation8 + $0x12e8] sm:$0xff]
    %v2701 = vld [vmem:[#allocation8 + $0x12f0] sm:$0xff]
    %v2702 = vld [vmem:[#allocation8 + $0x12f8] sm:$0xff]
    %v2703 = vld [vmem:[#allocation8 + $0x1300] sm:$0xff]
    %v2704 = vld [vmem:[#allocation8 + $0x1308] sm:$0xff]
    %v2705 = vld [vmem:[#allocation8 + $0x1310] sm:$0xff]
    %v2706 = vld [vmem:[#allocation8 + $0x1318] sm:$0xff]
    %v2707 = vld [vmem:[#allocation8 + $0x1320] sm:$0xff]
    %v2708 = vld [vmem:[#allocation8 + $0x1328] sm:$0xff]
    %v2709 = vld [vmem:[#allocation8 + $0x1330] sm:$0xff]
    %v2710 = vld [vmem:[#allocation8 + $0x1338] sm:$0xff]
    %v2711 = vld [vmem:[#allocation8 + $0x1340] sm:$0xff]
    %v2712 = vld [vmem:[#allocation8 + $0x1348] sm:$0xff]
    %v2713 = vld [vmem:[#allocation8 + $0x1350] sm:$0xff]
    %v2714 = vld [vmem:[#allocation8 + $0x1358] sm:$0xff]
    %v2715 = vld [vmem:[#allocation8 + $0x1360] sm:$0xff]
    %v2716 = vld [vmem:[#allocation8 + $0x1368] sm:$0xff]
    %v2717 = vld [vmem:[#allocation8 + $0x1370] sm:$0xff]
    %v2718 = vld [vmem:[#allocation8 + $0x1378] sm:$0xff]
    %v2719 = vld [vmem:[#allocation8 + $0x1380] sm:$0xff]
    %v2720 = vld [vmem:[#allocation8 + $0x1388] sm:$0xff]
    %v2721 = vld [vmem:[#allocation8 + $0x1390] sm:$0xff]
    %v2722 = vld [vmem:[#allocation8 + $0x1398] sm:$0xff]
    %v2723 = vld [vmem:[#allocation8 + $0x13a0] sm:$0xff]
    %v2724 = vld [vmem:[#allocation8 + $0x13a8] sm:$0xff]
    %v2725 = vld [vmem:[#allocation8 + $0x13b0] sm:$0xff]
    %v2726 = vld [vmem:[#allocation8 + $0x13b8] sm:$0xff]
    %v2727 = vld [vmem:[#allocation8 + $0x13c0] sm:$0xff]
    %v2728 = vld [vmem:[#allocation8 + $0x13c8] sm:$0xff]
    %v2729 = vld [vmem:[#allocation8 + $0x13d0] sm:$0xff]
    %v2730 = vld [vmem:[#allocation8 + $0x13d8] sm:$0xff]
    %v2731 = vld [vmem:[#allocation8 + $0x13e0] sm:$0xff]
    %v2732 = vld [vmem:[#allocation8 + $0x13e8] sm:$0xff]
    %v2733 = vld [vmem:[#allocation8 + $0x13f0] sm:$0xff]
    %v2734 = vld [vmem:[#allocation8 + $0x13f8] sm:$0xff]
    %v2735 = vld [vmem:[#allocation8 + $0x1400] sm:$0xff]
    %v2736 = vld [vmem:[#allocation8 + $0x1408] sm:$0xff]
    %v2737 = vld [vmem:[#allocation8 + $0x1410] sm:$0xff]
    %v2738 = vld [vmem:[#allocation8 + $0x1418] sm:$0xff]
    %v2739 = vld [vmem:[#allocation8 + $0x1420] sm:$0xff]
    %v2740 = vld [vmem:[#allocation8 + $0x1428] sm:$0xff]
    %v2741 = vld [vmem:[#allocation8 + $0x1430] sm:$0xff]
    %v2742 = vld [vmem:[#allocation8 + $0x1438] sm:$0xff]
    %v2743 = vld [vmem:[#allocation8 + $0x1440] sm:$0xff]
    %v2744 = vld [vmem:[#allocation8 + $0x1448] sm:$0xff]
    %v2745 = vld [vmem:[#allocation8 + $0x1450] sm:$0xff]
    %v2746 = vld [vmem:[#allocation8 + $0x1458] sm:$0xff]
    %v2747 = vld [vmem:[#allocation8 + $0x1460] sm:$0xff]
    %v2748 = vld [vmem:[#allocation8 + $0x1468] sm:$0xff]
    %v2749 = vld [vmem:[#allocation8 + $0x1470] sm:$0xff]
    %v2750 = vld [vmem:[#allocation8 + $0x1478] sm:$0xff]
    %v2751 = vld [vmem:[#allocation8 + $0x1480] sm:$0xff]
    %v2752 = vld [vmem:[#allocation8 + $0x1488] sm:$0xff]
    %v2753 = vld [vmem:[#allocation8 + $0x1490] sm:$0xff]
    %v2754 = vld [vmem:[#allocation8 + $0x1498] sm:$0xff]
    %v2755 = vld [vmem:[#allocation8 + $0x14a0] sm:$0xff]
    %v2756 = vld [vmem:[#allocation8 + $0x14a8] sm:$0xff]
    %v2757 = vld [vmem:[#allocation8 + $0x14b0] sm:$0xff]
    %v2758 = vld [vmem:[#allocation8 + $0x14b8] sm:$0xff]
    %v2759 = vld [vmem:[#allocation8 + $0x14c0] sm:$0xff]
    %v2760 = vld [vmem:[#allocation8 + $0x14c8] sm:$0xff]
    %v2761 = vld [vmem:[#allocation8 + $0x14d0] sm:$0xff]
    %v2762 = vld [vmem:[#allocation8 + $0x14d8] sm:$0xff]
    %v2763 = vld [vmem:[#allocation8 + $0x14e0] sm:$0xff]
    %v2764 = vld [vmem:[#allocation8 + $0x14e8] sm:$0xff]
    %v2765 = vld [vmem:[#allocation8 + $0x14f0] sm:$0xff]
    %v2766 = vld [vmem:[#allocation8 + $0x14f8] sm:$0xff]
    %v2767 = vld [vmem:[#allocation8 + $0x1500] sm:$0xff]
    %v2768 = vld [vmem:[#allocation8 + $0x1508] sm:$0xff]
    %v2769 = vld [vmem:[#allocation8 + $0x1510] sm:$0xff]
    %v2770 = vld [vmem:[#allocation8 + $0x1518] sm:$0xff]
    %v2771 = vld [vmem:[#allocation8 + $0x1520] sm:$0xff]
    %v2772 = vld [vmem:[#allocation8 + $0x1528] sm:$0xff]
    %v2773 = vld [vmem:[#allocation8 + $0x1530] sm:$0xff]
    %v2774 = vld [vmem:[#allocation8 + $0x1538] sm:$0xff]
    %v2775 = vld [vmem:[#allocation8 + $0x1540] sm:$0xff]
    %v2776 = vld [vmem:[#allocation8 + $0x1548] sm:$0xff]
    %v2777 = vld [vmem:[#allocation8 + $0x1550] sm:$0xff]
    %v2778 = vld [vmem:[#allocation8 + $0x1558] sm:$0xff]
    %v2779 = vld [vmem:[#allocation8 + $0x1560] sm:$0xff]
    %v2780 = vld [vmem:[#allocation8 + $0x1568] sm:$0xff]
    %v2781 = vld [vmem:[#allocation8 + $0x1570] sm:$0xff]
    %v2782 = vld [vmem:[#allocation8 + $0x1578] sm:$0xff]
    %v2783 = vld [vmem:[#allocation8 + $0x1580] sm:$0xff]
    %v2784 = vld [vmem:[#allocation8 + $0x1588] sm:$0xff]
    %v2785 = vld [vmem:[#allocation8 + $0x1590] sm:$0xff]
    %v2786 = vld [vmem:[#allocation8 + $0x1598] sm:$0xff]
    %v2787 = vld [vmem:[#allocation8 + $0x15a0] sm:$0xff]
    %v2788 = vld [vmem:[#allocation8 + $0x15a8] sm:$0xff]
    %v2789 = vld [vmem:[#allocation8 + $0x15b0] sm:$0xff]
    %v2790 = vld [vmem:[#allocation8 + $0x15b8] sm:$0xff]
    %v2791 = vld [vmem:[#allocation8 + $0x15c0] sm:$0xff]
    %v2792 = vld [vmem:[#allocation8 + $0x15c8] sm:$0xff]
    %v2793 = vld [vmem:[#allocation8 + $0x15d0] sm:$0xff]
    %v2794 = vld [vmem:[#allocation8 + $0x15d8] sm:$0xff]
    %v2795 = vld [vmem:[#allocation8 + $0x15e0] sm:$0xff]
    %v2796 = vld [vmem:[#allocation8 + $0x15e8] sm:$0xff]
    %v2797 = vld [vmem:[#allocation8 + $0x15f0] sm:$0xff]
    %v2798 = vld [vmem:[#allocation8 + $0x15f8] sm:$0xff]
    %v2799 = vld [vmem:[#allocation8 + $0x1600] sm:$0xff]
    %v2800 = vld [vmem:[#allocation8 + $0x1608] sm:$0xff]
    %v2801 = vld [vmem:[#allocation8 + $0x1610] sm:$0xff]
    %v2802 = vld [vmem:[#allocation8 + $0x1618] sm:$0xff]
    %v2803 = vld [vmem:[#allocation8 + $0x1620] sm:$0xff]
    %v2804 = vld [vmem:[#allocation8 + $0x1628] sm:$0xff]
    %v2805 = vld [vmem:[#allocation8 + $0x1630] sm:$0xff]
    %v2806 = vld [vmem:[#allocation8 + $0x1638] sm:$0xff]
    %v2807 = vld [vmem:[#allocation8 + $0x1640] sm:$0xff]
    %v2808 = vld [vmem:[#allocation8 + $0x1648] sm:$0xff]
    %v2809 = vld [vmem:[#allocation8 + $0x1650] sm:$0xff]
    %v2810 = vld [vmem:[#allocation8 + $0x1658] sm:$0xff]
    %v2811 = vld [vmem:[#allocation8 + $0x1660] sm:$0xff]
    %v2812 = vld [vmem:[#allocation8 + $0x1668] sm:$0xff]
    %v2813 = vld [vmem:[#allocation8 + $0x1670] sm:$0xff]
    %v2814 = vld [vmem:[#allocation8 + $0x1678] sm:$0xff]
    %v2815 = vld [vmem:[#allocation8 + $0x1680] sm:$0xff]
    %v2816 = vld [vmem:[#allocation8 + $0x1688] sm:$0xff]
    %v2817 = vld [vmem:[#allocation8 + $0x1690] sm:$0xff]
    %v2818 = vld [vmem:[#allocation8 + $0x1698] sm:$0xff]
    %v2819 = vld [vmem:[#allocation8 + $0x16a0] sm:$0xff]
    %v2820 = vld [vmem:[#allocation8 + $0x16a8] sm:$0xff]
    %v2821 = vld [vmem:[#allocation8 + $0x16b0] sm:$0xff]
    %v2822 = vld [vmem:[#allocation8 + $0x16b8] sm:$0xff]
    %v2823 = vld [vmem:[#allocation8 + $0x16c0] sm:$0xff]
    %v2824 = vld [vmem:[#allocation8 + $0x16c8] sm:$0xff]
    %v2825 = vld [vmem:[#allocation8 + $0x16d0] sm:$0xff]
    %v2826 = vld [vmem:[#allocation8 + $0x16d8] sm:$0xff]
    %v2827 = vld [vmem:[#allocation8 + $0x16e0] sm:$0xff]
    %v2828 = vld [vmem:[#allocation8 + $0x16e8] sm:$0xff]
    %v2829 = vld [vmem:[#allocation8 + $0x16f0] sm:$0xff]
    %v2830 = vld [vmem:[#allocation8 + $0x16f8] sm:$0xff]
    %v2831 = vld [vmem:[#allocation8 + $0x1700] sm:$0xff]
    %v2832 = vld [vmem:[#allocation8 + $0x1708] sm:$0xff]
    %v2833 = vld [vmem:[#allocation8 + $0x1710] sm:$0xff]
    %v2834 = vld [vmem:[#allocation8 + $0x1718] sm:$0xff]
    %v2835 = vld [vmem:[#allocation8 + $0x1720] sm:$0xff]
    %v2836 = vld [vmem:[#allocation8 + $0x1728] sm:$0xff]
    %v2837 = vld [vmem:[#allocation8 + $0x1730] sm:$0xff]
    %v2838 = vld [vmem:[#allocation8 + $0x1738] sm:$0xff]
    %v2839 = vld [vmem:[#allocation8 + $0x1740] sm:$0xff]
    %v2840 = vld [vmem:[#allocation8 + $0x1748] sm:$0xff]
    %v2841 = vld [vmem:[#allocation8 + $0x1750] sm:$0xff]
    %v2842 = vld [vmem:[#allocation8 + $0x1758] sm:$0xff]
    %v2843 = vld [vmem:[#allocation8 + $0x1760] sm:$0xff]
    %v2844 = vld [vmem:[#allocation8 + $0x1768] sm:$0xff]
    %v2845 = vld [vmem:[#allocation8 + $0x1770] sm:$0xff]
    %v2846 = vld [vmem:[#allocation8 + $0x1778] sm:$0xff]
    %v2847 = vld [vmem:[#allocation8 + $0x1780] sm:$0xff]
    %v2848 = vld [vmem:[#allocation8 + $0x1788] sm:$0xff]
    %v2849 = vld [vmem:[#allocation8 + $0x1790] sm:$0xff]
    %v2850 = vld [vmem:[#allocation8 + $0x1798] sm:$0xff]
    %v2851 = vld [vmem:[#allocation8 + $0x17a0] sm:$0xff]
    %v2852 = vld [vmem:[#allocation8 + $0x17a8] sm:$0xff]
    %v2853 = vld [vmem:[#allocation8 + $0x17b0] sm:$0xff]
    %v2854 = vld [vmem:[#allocation8 + $0x17b8] sm:$0xff]
    %v2855 = vld [vmem:[#allocation8 + $0x17c0] sm:$0xff]
    %v2856 = vld [vmem:[#allocation8 + $0x17c8] sm:$0xff]
    %v2857 = vld [vmem:[#allocation8 + $0x17d0] sm:$0xff]
    %v2858 = vld [vmem:[#allocation8 + $0x17d8] sm:$0xff]
    %v2859 = vld [vmem:[#allocation8 + $0x17e0] sm:$0xff]
    %v2860 = vld [vmem:[#allocation8 + $0x17e8] sm:$0xff]
    %v2861 = vld [vmem:[#allocation8 + $0x17f0] sm:$0xff]
    %v2862 = vld [vmem:[#allocation8 + $0x17f8] sm:$0xff]
    %v2863 = vld [vmem:[#allocation8 + $0x1800] sm:$0xff]
    %v2864 = vld [vmem:[#allocation8 + $0x1808] sm:$0xff]
    %v2865 = vld [vmem:[#allocation8 + $0x1810] sm:$0xff]
    %v2866 = vld [vmem:[#allocation8 + $0x1818] sm:$0xff]
    %v2867 = vld [vmem:[#allocation8 + $0x1820] sm:$0xff]
    %v2868 = vld [vmem:[#allocation8 + $0x1828] sm:$0xff]
    %v2869 = vld [vmem:[#allocation8 + $0x1830] sm:$0xff]
    %v2870 = vld [vmem:[#allocation8 + $0x1838] sm:$0xff]
    %v2871 = vld [vmem:[#allocation8 + $0x1840] sm:$0xff]
    %v2872 = vld [vmem:[#allocation8 + $0x1848] sm:$0xff]
    %v2873 = vld [vmem:[#allocation8 + $0x1850] sm:$0xff]
    %v2874 = vld [vmem:[#allocation8 + $0x1858] sm:$0xff]
    %v2875 = vld [vmem:[#allocation8 + $0x1860] sm:$0xff]
    %v2876 = vld [vmem:[#allocation8 + $0x1868] sm:$0xff]
    %v2877 = vld [vmem:[#allocation8 + $0x1870] sm:$0xff]
    %v2878 = vld [vmem:[#allocation8 + $0x1878] sm:$0xff]
    %v2879 = vld [vmem:[#allocation10] sm:$0xff]
    %v2881 = vlaneseq
    %v2882 = vshrl.u32 %v2881, 7
    %v2883 = vsub.s32 0, %v2882
    %v2884 = vrot.slane %v2879, %v2883
    %v2885 = vlaneseq
    %v2886 = vshrl.u32 %v2885, 7
    %v2887 = vsub.s32 1, %v2886
    %v2888 = vrot.slane %v2879, %v2887
    %v2889 = vlaneseq
    %v2890 = vshrl.u32 %v2889, 7
    %v2891 = vsub.s32 2, %v2890
    %v2892 = vrot.slane %v2879, %v2891
    %v2893 = vlaneseq
    %v2894 = vshrl.u32 %v2893, 7
    %v2895 = vsub.s32 3, %v2894
    %v2896 = vrot.slane %v2879, %v2895
    %v2897 = vlaneseq
    %v2898 = vshrl.u32 %v2897, 7
    %v2899 = vsub.s32 4, %v2898
    %v2900 = vrot.slane %v2879, %v2899
    %v2901 = vlaneseq
    %v2902 = vshrl.u32 %v2901, 7
    %v2903 = vsub.s32 5, %v2902
    %v2904 = vrot.slane %v2879, %v2903
    %v2905 = vlaneseq
    %v2906 = vshrl.u32 %v2905, 7
    %v2907 = vsub.s32 6, %v2906
    %v2908 = vrot.slane %v2879, %v2907
    %2916 = vmatprep.subr.mxu0 %v2201
    %2917 = vmatpush1.msra.mxu0 %v2200
    %2918 = vmatprep.subr.mxu0 %v2194
    %2919 = vmatpush1.msra.mxu0 %v2193
    %2920 = vmatprep.subr.mxu0 %v2187
    %2921 = vmatpush1.msra.mxu0 %v2186
    %2922 = vmatprep.subr.mxu0 %v2180
    %2923 = vmatpush1.msra.mxu0 %v2179
    %2924 = vmatprep.subr.mxu0 %v2173
    %2925 = vmatpush1.msra.mxu0 %v2172
    %2926 = vmatprep.subr.mxu0 %v2166
    %2927 = vmatpush1.msra.mxu0 %v2165
    %2928 = vmatprep.subr.mxu0 %v2159
    %2929 = vmatpush1.msra.mxu0 %v2158
    %2930 = vmatprep.subr.mxu0 %v2152
    %2931 = vmatpush1.msra.mxu0 %v2151
    %2932 = vmatprep.subr.mxu0 %v2145
    %2933 = vmatpush1.msra.mxu0 %v2144
    %2934 = vmatprep.subr.mxu0 %v2138
    %2935 = vmatpush1.msra.mxu0 %v2137
    %2936 = vmatprep.subr.mxu0 %v2131
    %2937 = vmatpush1.msra.mxu0 %v2130
    %2938 = vmatprep.subr.mxu0 %v2124
    %2939 = vmatpush1.msra.mxu0 %v2123
    %2940 = vmatprep.subr.mxu0 %v2117
    %2941 = vmatpush1.msra.mxu0 %v2116
    %2942 = vmatprep.subr.mxu0 %v2110
    %2943 = vmatpush1.msra.mxu0 %v2109
    %2944 = vmatprep.subr.mxu0 %v2103
    %2945 = vmatpush1.msra.mxu0 %v2102
    %2946 = vmatprep.subr.mxu0 %v2096
    %2947 = vmatpush1.msra.mxu0 %v2095
    %2948 = vmatprep.subr.mxu0 %v2313
    %2949 = vmatpush2.msra.mxu0 %v2312
    %2950 = vmatprep.subr.mxu0 %v2306
    %2951 = vmatpush2.msra.mxu0 %v2305
    %2952 = vmatprep.subr.mxu0 %v2299
    %2953 = vmatpush2.msra.mxu0 %v2298
    %2954 = vmatprep.subr.mxu0 %v2292
    %2955 = vmatpush2.msra.mxu0 %v2291
    %2956 = vmatprep.subr.mxu0 %v2285
    %2957 = vmatpush2.msra.mxu0 %v2284
    %2958 = vmatprep.subr.mxu0 %v2278
    %2959 = vmatpush2.msra.mxu0 %v2277
    %2960 = vmatprep.subr.mxu0 %v2271
    %2961 = vmatpush2.msra.mxu0 %v2270
    %2962 = vmatprep.subr.mxu0 %v2264
    %2963 = vmatpush2.msra.mxu0 %v2263
    %2964 = vmatprep.subr.mxu0 %v2257
    %2965 = vmatpush2.msra.mxu0 %v2256
    %2966 = vmatprep.subr.mxu0 %v2250
    %2967 = vmatpush2.msra.mxu0 %v2249
    %2968 = vmatprep.subr.mxu0 %v2243
    %2969 = vmatpush2.msra.mxu0 %v2242
    %2970 = vmatprep.subr.mxu0 %v2236
    %2971 = vmatpush2.msra.mxu0 %v2235
    %2972 = vmatprep.subr.mxu0 %v2229
    %2973 = vmatpush2.msra.mxu0 %v2228
    %2974 = vmatprep.subr.mxu0 %v2222
    %2975 = vmatpush2.msra.mxu0 %v2221
    %2976 = vmatprep.subr.mxu0 %v2215
    %2977 = vmatpush2.msra.mxu0 %v2214
    %2978 = vmatprep.subr.mxu0 %v2208
    %2979 = vmatpush2.msra.mxu0 %v2207
    %2980 = vmatprep.mubr.f32.mxu0 %v2089
    %2981 = vmatmul.mubr.f32.gmra.mxu0 %v2088
    %v2982 = vpop.f32.mrf.mxu0
    %v2983 = vadd.f32 %v2884, %v2982
    %v2984 = vpop.f32.mrf.mxu0
    %v2985 = vadd.f32 %v2888, %v2984
    %2986 = vdwg.mxu0
    %2987 = vmatprep.subr.mxu0 %v2425
    %2988 = vmatpush1.msra.mxu0 %v2424
    %2989 = vmatprep.subr.mxu0 %v2418
    %2990 = vmatpush1.msra.mxu0 %v2417
    %2991 = vmatprep.subr.mxu0 %v2411
    %2992 = vmatpush1.msra.mxu0 %v2410
    %2993 = vmatprep.subr.mxu0 %v2404
    %2994 = vmatpush1.msra.mxu0 %v2403
    %2995 = vmatprep.subr.mxu0 %v2397
    %2996 = vmatpush1.msra.mxu0 %v2396
    %2997 = vmatprep.subr.mxu0 %v2390
    %2998 = vmatpush1.msra.mxu0 %v2389
    %2999 = vmatprep.subr.mxu0 %v2383
    %3000 = vmatpush1.msra.mxu0 %v2382
    %3001 = vmatprep.subr.mxu0 %v2376
    %3002 = vmatpush1.msra.mxu0 %v2375
    %3003 = vmatprep.subr.mxu0 %v2369
    %3004 = vmatpush1.msra.mxu0 %v2368
    %3005 = vmatprep.subr.mxu0 %v2362
    %3006 = vmatpush1.msra.mxu0 %v2361
    %3007 = vmatprep.subr.mxu0 %v2355
    %3008 = vmatpush1.msra.mxu0 %v2354
    %3009 = vmatprep.subr.mxu0 %v2348
    %3010 = vmatpush1.msra.mxu0 %v2347
    %3011 = vmatprep.subr.mxu0 %v2341
    %3012 = vmatpush1.msra.mxu0 %v2340
    %3013 = vmatprep.subr.mxu0 %v2334
    %3014 = vmatpush1.msra.mxu0 %v2333
    %3015 = vmatprep.subr.mxu0 %v2327
    %3016 = vmatpush1.msra.mxu0 %v2326
    %3017 = vmatprep.subr.mxu0 %v2320
    %3018 = vmatpush1.msra.mxu0 %v2319
    %3019 = vmatprep.subr.mxu0 %v2537
    %3020 = vmatpush2.msra.mxu0 %v2536
    %3021 = vmatprep.subr.mxu0 %v2530
    %3022 = vmatpush2.msra.mxu0 %v2529
    %3023 = vmatprep.subr.mxu0 %v2523
    %3024 = vmatpush2.msra.mxu0 %v2522
    %3025 = vmatprep.subr.mxu0 %v2516
    %3026 = vmatpush2.msra.mxu0 %v2515
    %3027 = vmatprep.subr.mxu0 %v2509
    %3028 = vmatpush2.msra.mxu0 %v2508
    %3029 = vmatprep.subr.mxu0 %v2502
    %3030 = vmatpush2.msra.mxu0 %v2501
    %3031 = vmatprep.subr.mxu0 %v2495
    %3032 = vmatpush2.msra.mxu0 %v2494
    %3033 = vmatprep.subr.mxu0 %v2488
    %3034 = vmatpush2.msra.mxu0 %v2487
    %3035 = vmatprep.subr.mxu0 %v2481
    %3036 = vmatpush2.msra.mxu0 %v2480
    %3037 = vmatprep.subr.mxu0 %v2474
    %3038 = vmatpush2.msra.mxu0 %v2473
    %3039 = vmatprep.subr.mxu0 %v2467
    %3040 = vmatpush2.msra.mxu0 %v2466
    %3041 = vmatprep.subr.mxu0 %v2460
    %3042 = vmatpush2.msra.mxu0 %v2459
    %3043 = vmatprep.subr.mxu0 %v2453
    %3044 = vmatpush2.msra.mxu0 %v2452
    %3045 = vmatprep.subr.mxu0 %v2446
    %3046 = vmatpush2.msra.mxu0 %v2445
    %3047 = vmatprep.subr.mxu0 %v2439
    %3048 = vmatpush2.msra.mxu0 %v2438
    %3049 = vmatprep.subr.mxu0 %v2432
    %3050 = vmatpush2.msra.mxu0 %v2431
    %3051 = vmatprep.mubr.f32.mxu0 %v2091
    %3052 = vmatmul.mubr.f32.gmra.mxu0 %v2090
    %v3053 = vpop.f32.mrf.mxu0
    %v3054 = vadd.f32 %v2983, %v3053
    %v3055 = vpop.f32.mrf.mxu0
    %v3056 = vadd.f32 %v2985, %v3055
    %3057 = vdwg.mxu0
    %3058 = vmatprep.subr.mxu0 %v2649
    %3059 = vmatpush1.msra.mxu0 %v2648
    %3060 = vmatprep.subr.mxu0 %v2642
    %3061 = vmatpush1.msra.mxu0 %v2641
    %3062 = vmatprep.subr.mxu0 %v2635
    %3063 = vmatpush1.msra.mxu0 %v2634
    %3064 = vmatprep.subr.mxu0 %v2628
    %3065 = vmatpush1.msra.mxu0 %v2627
    %3066 = vmatprep.subr.mxu0 %v2621
    %3067 = vmatpush1.msra.mxu0 %v2620
    %3068 = vmatprep.subr.mxu0 %v2614
    %3069 = vmatpush1.msra.mxu0 %v2613
    %3070 = vmatprep.subr.mxu0 %v2607
    %3071 = vmatpush1.msra.mxu0 %v2606
    %3072 = vmatprep.subr.mxu0 %v2600
    %3073 = vmatpush1.msra.mxu0 %v2599
    %3074 = vmatprep.subr.mxu0 %v2593
    %3075 = vmatpush1.msra.mxu0 %v2592
    %3076 = vmatprep.subr.mxu0 %v2586
    %3077 = vmatpush1.msra.mxu0 %v2585
    %3078 = vmatprep.subr.mxu0 %v2579
    %3079 = vmatpush1.msra.mxu0 %v2578
    %3080 = vmatprep.subr.mxu0 %v2572
    %3081 = vmatpush1.msra.mxu0 %v2571
    %3082 = vmatprep.subr.mxu0 %v2565
    %3083 = vmatpush1.msra.mxu0 %v2564
    %3084 = vmatprep.subr.mxu0 %v2558
    %3085 = vmatpush1.msra.mxu0 %v2557
    %3086 = vmatprep.subr.mxu0 %v2551
    %3087 = vmatpush1.msra.mxu0 %v2550
    %3088 = vmatprep.subr.mxu0 %v2544
    %3089 = vmatpush1.msra.mxu0 %v2543
    %3090 = vmatprep.subr.mxu0 %v2761
    %3091 = vmatpush2.msra.mxu0 %v2760
    %3092 = vmatprep.subr.mxu0 %v2754
    %3093 = vmatpush2.msra.mxu0 %v2753
    %3094 = vmatprep.subr.mxu0 %v2747
    %3095 = vmatpush2.msra.mxu0 %v2746
    %3096 = vmatprep.subr.mxu0 %v2740
    %3097 = vmatpush2.msra.mxu0 %v2739
    %3098 = vmatprep.subr.mxu0 %v2733
    %3099 = vmatpush2.msra.mxu0 %v2732
    %3100 = vmatprep.subr.mxu0 %v2726
    %3101 = vmatpush2.msra.mxu0 %v2725
    %3102 = vmatprep.subr.mxu0 %v2719
    %3103 = vmatpush2.msra.mxu0 %v2718
    %3104 = vmatprep.subr.mxu0 %v2712
    %3105 = vmatpush2.msra.mxu0 %v2711
    %3106 = vmatprep.subr.mxu0 %v2705
    %3107 = vmatpush2.msra.mxu0 %v2704
    %3108 = vmatprep.subr.mxu0 %v2698
    %3109 = vmatpush2.msra.mxu0 %v2697
    %3110 = vmatprep.subr.mxu0 %v2691
    %3111 = vmatpush2.msra.mxu0 %v2690
    %3112 = vmatprep.subr.mxu0 %v2684
    %3113 = vmatpush2.msra.mxu0 %v2683
    %3114 = vmatprep.subr.mxu0 %v2677
    %3115 = vmatpush2.msra.mxu0 %v2676
    %3116 = vmatprep.subr.mxu0 %v2670
    %3117 = vmatpush2.msra.mxu0 %v2669
    %3118 = vmatprep.subr.mxu0 %v2663
    %3119 = vmatpush2.msra.mxu0 %v2662
    %3120 = vmatprep.subr.mxu0 %v2656
    %3121 = vmatpush2.msra.mxu0 %v2655
    %3122 = vmatprep.mubr.f32.mxu0 %v2093
    %3123 = vmatmul.mubr.f32.gmra.mxu0 %v2092
    %v3124 = vpop.f32.mrf.mxu0
    %v3125 = vadd.f32 %v3054, %v3124
    %v3126 = vpop.f32.mrf.mxu0
    %v3127 = vadd.f32 %v3056, %v3126
    %3128 = vdwg.mxu0
    %3129 = vmatprep.subr.mxu0 %v2873
    %3130 = vmatpush1.msra.mxu0 %v2872
    %3131 = vmatprep.subr.mxu0 %v2866
    %3132 = vmatpush1.msra.mxu0 %v2865
    %3133 = vmatprep.subr.mxu0 %v2859
    %3134 = vmatpush1.msra.mxu0 %v2858
    %3135 = vmatprep.subr.mxu0 %v2852
    %3136 = vmatpush1.msra.mxu0 %v2851
    %3137 = vmatprep.subr.mxu0 %v2845
    %3138 = vmatpush1.msra.mxu0 %v2844
    %3139 = vmatprep.subr.mxu0 %v2838
    %3140 = vmatpush1.msra.mxu0 %v2837
    %3141 = vmatprep.subr.mxu0 %v2831
    %3142 = vmatpush1.msra.mxu0 %v2830
    %3143 = vmatprep.subr.mxu0 %v2824
    %3144 = vmatpush1.msra.mxu0 %v2823
    %3145 = vmatprep.subr.mxu0 %v2817
    %3146 = vmatpush1.msra.mxu0 %v2816
    %3147 = vmatprep.subr.mxu0 %v2810
    %3148 = vmatpush1.msra.mxu0 %v2809
    %3149 = vmatprep.subr.mxu0 %v2803
    %3150 = vmatpush1.msra.mxu0 %v2802
    %3151 = vmatprep.subr.mxu0 %v2796
    %3152 = vmatpush1.msra.mxu0 %v2795
    %3153 = vmatprep.subr.mxu0 %v2789
    %3154 = vmatpush1.msra.mxu0 %v2788
    %3155 = vmatprep.subr.mxu0 %v2782
    %3156 = vmatpush1.msra.mxu0 %v2781
    %3157 = vmatprep.subr.mxu0 %v2775
    %3158 = vmatpush1.msra.mxu0 %v2774
    %3159 = vmatprep.subr.mxu0 %v2768
    %3160 = vmatpush1.msra.mxu0 %v2767
    %3161 = vmatprep.subr.mxu0 0.0
    %3162 = vmatpush2.msra.mxu0 0.0
    %3163 = vmatprep.subr.mxu0 0.0
    %3164 = vmatpush2.msra.mxu0 0.0
    %3165 = vmatprep.subr.mxu0 0.0
    %3166 = vmatpush2.msra.mxu0 0.0
    %3167 = vmatprep.subr.mxu0 0.0
    %3168 = vmatpush2.msra.mxu0 0.0
    %3169 = vmatprep.subr.mxu0 0.0
    %3170 = vmatpush2.msra.mxu0 0.0
    %3171 = vmatprep.subr.mxu0 0.0
    %3172 = vmatpush2.msra.mxu0 0.0
    %3173 = vmatprep.subr.mxu0 0.0
    %3174 = vmatpush2.msra.mxu0 0.0
    %3175 = vmatprep.subr.mxu0 0.0
    %3176 = vmatpush2.msra.mxu0 0.0
    %3177 = vmatprep.subr.mxu0 0.0
    %3178 = vmatpush2.msra.mxu0 0.0
    %3179 = vmatprep.subr.mxu0 0.0
    %3180 = vmatpush2.msra.mxu0 0.0
    %3181 = vmatprep.subr.mxu0 0.0
    %3182 = vmatpush2.msra.mxu0 0.0
    %3183 = vmatprep.subr.mxu0 0.0
    %3184 = vmatpush2.msra.mxu0 0.0
    %3185 = vmatprep.subr.mxu0 0.0
    %3186 = vmatpush2.msra.mxu0 0.0
    %3187 = vmatprep.subr.mxu0 0.0
    %3188 = vmatpush2.msra.mxu0 0.0
    %3189 = vmatprep.subr.mxu0 0.0
    %3190 = vmatpush2.msra.mxu0 0.0
    %3191 = vmatprep.subr.mxu0 0.0
    %3192 = vmatpush2.msra.mxu0 0.0
    %3193 = vmatprep.mubr.f32.mxu0 0.0
    %3194 = vmatmul.mubr.f32.gmra.mxu0 %v2094
    %v3195 = vpop.f32.mrf.mxu0
    %v3196 = vadd.f32 %v3125, %v3195
    %v3197 = vpop.f32.mrf.mxu0
    %v3198 = vadd.f32 %v3127, %v3197
    %3199 = vdwg.mxu0
    %3200 = vmatprep.subr.mxu0 %v2203
    %3201 = vmatpush1.msra.mxu0 %v2202
    %3202 = vmatprep.subr.mxu0 %v2196
    %3203 = vmatpush1.msra.mxu0 %v2195
    %3204 = vmatprep.subr.mxu0 %v2189
    %3205 = vmatpush1.msra.mxu0 %v2188
    %3206 = vmatprep.subr.mxu0 %v2182
    %3207 = vmatpush1.msra.mxu0 %v2181
    %3208 = vmatprep.subr.mxu0 %v2175
    %3209 = vmatpush1.msra.mxu0 %v2174
    %3210 = vmatprep.subr.mxu0 %v2168
    %3211 = vmatpush1.msra.mxu0 %v2167
    %3212 = vmatprep.subr.mxu0 %v2161
    %3213 = vmatpush1.msra.mxu0 %v2160
    %3214 = vmatprep.subr.mxu0 %v2154
    %3215 = vmatpush1.msra.mxu0 %v2153
    %3216 = vmatprep.subr.mxu0 %v2147
    %3217 = vmatpush1.msra.mxu0 %v2146
    %3218 = vmatprep.subr.mxu0 %v2140
    %3219 = vmatpush1.msra.mxu0 %v2139
    %3220 = vmatprep.subr.mxu0 %v2133
    %3221 = vmatpush1.msra.mxu0 %v2132
    %3222 = vmatprep.subr.mxu0 %v2126
    %3223 = vmatpush1.msra.mxu0 %v2125
    %3224 = vmatprep.subr.mxu0 %v2119
    %3225 = vmatpush1.msra.mxu0 %v2118
    %3226 = vmatprep.subr.mxu0 %v2112
    %3227 = vmatpush1.msra.mxu0 %v2111
    %3228 = vmatprep.subr.mxu0 %v2105
    %3229 = vmatpush1.msra.mxu0 %v2104
    %3230 = vmatprep.subr.mxu0 %v2098
    %3231 = vmatpush1.msra.mxu0 %v2097
    %3232 = vmatprep.subr.mxu0 %v2315
    %3233 = vmatpush2.msra.mxu0 %v2314
    %3234 = vmatprep.subr.mxu0 %v2308
    %3235 = vmatpush2.msra.mxu0 %v2307
    %3236 = vmatprep.subr.mxu0 %v2301
    %3237 = vmatpush2.msra.mxu0 %v2300
    %3238 = vmatprep.subr.mxu0 %v2294
    %3239 = vmatpush2.msra.mxu0 %v2293
    %3240 = vmatprep.subr.mxu0 %v2287
    %3241 = vmatpush2.msra.mxu0 %v2286
    %3242 = vmatprep.subr.mxu0 %v2280
    %3243 = vmatpush2.msra.mxu0 %v2279
    %3244 = vmatprep.subr.mxu0 %v2273
    %3245 = vmatpush2.msra.mxu0 %v2272
    %3246 = vmatprep.subr.mxu0 %v2266
    %3247 = vmatpush2.msra.mxu0 %v2265
    %3248 = vmatprep.subr.mxu0 %v2259
    %3249 = vmatpush2.msra.mxu0 %v2258
    %3250 = vmatprep.subr.mxu0 %v2252
    %3251 = vmatpush2.msra.mxu0 %v2251
    %3252 = vmatprep.subr.mxu0 %v2245
    %3253 = vmatpush2.msra.mxu0 %v2244
    %3254 = vmatprep.subr.mxu0 %v2238
    %3255 = vmatpush2.msra.mxu0 %v2237
    %3256 = vmatprep.subr.mxu0 %v2231
    %3257 = vmatpush2.msra.mxu0 %v2230
    %3258 = vmatprep.subr.mxu0 %v2224
    %3259 = vmatpush2.msra.mxu0 %v2223
    %3260 = vmatprep.subr.mxu0 %v2217
    %3261 = vmatpush2.msra.mxu0 %v2216
    %3262 = vmatprep.subr.mxu0 %v2210
    %3263 = vmatpush2.msra.mxu0 %v2209
    %3264 = vmatprep.mubr.f32.mxu0 %v2089
    %3265 = vmatmul.mubr.f32.gmra.mxu0 %v2088
    %v3266 = vpop.f32.mrf.mxu0
    %v3267 = vadd.f32 %v2892, %v3266
    %v3268 = vpop.f32.mrf.mxu0
    %v3269 = vadd.f32 %v2896, %v3268
    %3270 = vdwg.mxu0
    %3271 = vmatprep.subr.mxu0 %v2427
    %3272 = vmatpush1.msra.mxu0 %v2426
    %3273 = vmatprep.subr.mxu0 %v2420
    %3274 = vmatpush1.msra.mxu0 %v2419
    %3275 = vmatprep.subr.mxu0 %v2413
    %3276 = vmatpush1.msra.mxu0 %v2412
    %3277 = vmatprep.subr.mxu0 %v2406
    %3278 = vmatpush1.msra.mxu0 %v2405
    %3279 = vmatprep.subr.mxu0 %v2399
    %3280 = vmatpush1.msra.mxu0 %v2398
    %3281 = vmatprep.subr.mxu0 %v2392
    %3282 = vmatpush1.msra.mxu0 %v2391
    %3283 = vmatprep.subr.mxu0 %v2385
    %3284 = vmatpush1.msra.mxu0 %v2384
    %3285 = vmatprep.subr.mxu0 %v2378
    %3286 = vmatpush1.msra.mxu0 %v2377
    %3287 = vmatprep.subr.mxu0 %v2371
    %3288 = vmatpush1.msra.mxu0 %v2370
    %3289 = vmatprep.subr.mxu0 %v2364
    %3290 = vmatpush1.msra.mxu0 %v2363
    %3291 = vmatprep.subr.mxu0 %v2357
    %3292 = vmatpush1.msra.mxu0 %v2356
    %3293 = vmatprep.subr.mxu0 %v2350
    %3294 = vmatpush1.msra.mxu0 %v2349
    %3295 = vmatprep.subr.mxu0 %v2343
    %3296 = vmatpush1.msra.mxu0 %v2342
    %3297 = vmatprep.subr.mxu0 %v2336
    %3298 = vmatpush1.msra.mxu0 %v2335
    %3299 = vmatprep.subr.mxu0 %v2329
    %3300 = vmatpush1.msra.mxu0 %v2328
    %3301 = vmatprep.subr.mxu0 %v2322
    %3302 = vmatpush1.msra.mxu0 %v2321
    %3303 = vmatprep.subr.mxu0 %v2539
    %3304 = vmatpush2.msra.mxu0 %v2538
    %3305 = vmatprep.subr.mxu0 %v2532
    %3306 = vmatpush2.msra.mxu0 %v2531
    %3307 = vmatprep.subr.mxu0 %v2525
    %3308 = vmatpush2.msra.mxu0 %v2524
    %3309 = vmatprep.subr.mxu0 %v2518
    %3310 = vmatpush2.msra.mxu0 %v2517
    %3311 = vmatprep.subr.mxu0 %v2511
    %3312 = vmatpush2.msra.mxu0 %v2510
    %3313 = vmatprep.subr.mxu0 %v2504
    %3314 = vmatpush2.msra.mxu0 %v2503
    %3315 = vmatprep.subr.mxu0 %v2497
    %3316 = vmatpush2.msra.mxu0 %v2496
    %3317 = vmatprep.subr.mxu0 %v2490
    %3318 = vmatpush2.msra.mxu0 %v2489
    %3319 = vmatprep.subr.mxu0 %v2483
    %3320 = vmatpush2.msra.mxu0 %v2482
    %3321 = vmatprep.subr.mxu0 %v2476
    %3322 = vmatpush2.msra.mxu0 %v2475
    %3323 = vmatprep.subr.mxu0 %v2469
    %3324 = vmatpush2.msra.mxu0 %v2468
    %3325 = vmatprep.subr.mxu0 %v2462
    %3326 = vmatpush2.msra.mxu0 %v2461
    %3327 = vmatprep.subr.mxu0 %v2455
    %3328 = vmatpush2.msra.mxu0 %v2454
    %3329 = vmatprep.subr.mxu0 %v2448
    %3330 = vmatpush2.msra.mxu0 %v2447
    %3331 = vmatprep.subr.mxu0 %v2441
    %3332 = vmatpush2.msra.mxu0 %v2440
    %3333 = vmatprep.subr.mxu0 %v2434
    %3334 = vmatpush2.msra.mxu0 %v2433
    %3335 = vmatprep.mubr.f32.mxu0 %v2091
    %3336 = vmatmul.mubr.f32.gmra.mxu0 %v2090
    %v3337 = vpop.f32.mrf.mxu0
    %v3338 = vadd.f32 %v3267, %v3337
    %v3339 = vpop.f32.mrf.mxu0
    %v3340 = vadd.f32 %v3269, %v3339
    %3341 = vdwg.mxu0
    %3342 = vmatprep.subr.mxu0 %v2651
    %3343 = vmatpush1.msra.mxu0 %v2650
    %3344 = vmatprep.subr.mxu0 %v2644
    %3345 = vmatpush1.msra.mxu0 %v2643
    %3346 = vmatprep.subr.mxu0 %v2637
    %3347 = vmatpush1.msra.mxu0 %v2636
    %3348 = vmatprep.subr.mxu0 %v2630
    %3349 = vmatpush1.msra.mxu0 %v2629
    %3350 = vmatprep.subr.mxu0 %v2623
    %3351 = vmatpush1.msra.mxu0 %v2622
    %3352 = vmatprep.subr.mxu0 %v2616
    %3353 = vmatpush1.msra.mxu0 %v2615
    %3354 = vmatprep.subr.mxu0 %v2609
    %3355 = vmatpush1.msra.mxu0 %v2608
    %3356 = vmatprep.subr.mxu0 %v2602
    %3357 = vmatpush1.msra.mxu0 %v2601
    %3358 = vmatprep.subr.mxu0 %v2595
    %3359 = vmatpush1.msra.mxu0 %v2594
    %3360 = vmatprep.subr.mxu0 %v2588
    %3361 = vmatpush1.msra.mxu0 %v2587
    %3362 = vmatprep.subr.mxu0 %v2581
    %3363 = vmatpush1.msra.mxu0 %v2580
    %3364 = vmatprep.subr.mxu0 %v2574
    %3365 = vmatpush1.msra.mxu0 %v2573
    %3366 = vmatprep.subr.mxu0 %v2567
    %3367 = vmatpush1.msra.mxu0 %v2566
    %3368 = vmatprep.subr.mxu0 %v2560
    %3369 = vmatpush1.msra.mxu0 %v2559
    %3370 = vmatprep.subr.mxu0 %v2553
    %3371 = vmatpush1.msra.mxu0 %v2552
    %3372 = vmatprep.subr.mxu0 %v2546
    %3373 = vmatpush1.msra.mxu0 %v2545
    %3374 = vmatprep.subr.mxu0 %v2763
    %3375 = vmatpush2.msra.mxu0 %v2762
    %3376 = vmatprep.subr.mxu0 %v2756
    %3377 = vmatpush2.msra.mxu0 %v2755
    %3378 = vmatprep.subr.mxu0 %v2749
    %3379 = vmatpush2.msra.mxu0 %v2748
    %3380 = vmatprep.subr.mxu0 %v2742
    %3381 = vmatpush2.msra.mxu0 %v2741
    %3382 = vmatprep.subr.mxu0 %v2735
    %3383 = vmatpush2.msra.mxu0 %v2734
    %3384 = vmatprep.subr.mxu0 %v2728
    %3385 = vmatpush2.msra.mxu0 %v2727
    %3386 = vmatprep.subr.mxu0 %v2721
    %3387 = vmatpush2.msra.mxu0 %v2720
    %3388 = vmatprep.subr.mxu0 %v2714
    %3389 = vmatpush2.msra.mxu0 %v2713
    %3390 = vmatprep.subr.mxu0 %v2707
    %3391 = vmatpush2.msra.mxu0 %v2706
    %3392 = vmatprep.subr.mxu0 %v2700
    %3393 = vmatpush2.msra.mxu0 %v2699
    %3394 = vmatprep.subr.mxu0 %v2693
    %3395 = vmatpush2.msra.mxu0 %v2692
    %3396 = vmatprep.subr.mxu0 %v2686
    %3397 = vmatpush2.msra.mxu0 %v2685
    %3398 = vmatprep.subr.mxu0 %v2679
    %3399 = vmatpush2.msra.mxu0 %v2678
    %3400 = vmatprep.subr.mxu0 %v2672
    %3401 = vmatpush2.msra.mxu0 %v2671
    %3402 = vmatprep.subr.mxu0 %v2665
    %3403 = vmatpush2.msra.mxu0 %v2664
    %3404 = vmatprep.subr.mxu0 %v2658
    %3405 = vmatpush2.msra.mxu0 %v2657
    %3406 = vmatprep.mubr.f32.mxu0 %v2093
    %3407 = vmatmul.mubr.f32.gmra.mxu0 %v2092
    %v3408 = vpop.f32.mrf.mxu0
    %v3409 = vadd.f32 %v3338, %v3408
    %v3410 = vpop.f32.mrf.mxu0
    %v3411 = vadd.f32 %v3340, %v3410
    %3412 = vdwg.mxu0
    %3413 = vmatprep.subr.mxu0 %v2875
    %3414 = vmatpush1.msra.mxu0 %v2874
    %3415 = vmatprep.subr.mxu0 %v2868
    %3416 = vmatpush1.msra.mxu0 %v2867
    %3417 = vmatprep.subr.mxu0 %v2861
    %3418 = vmatpush1.msra.mxu0 %v2860
    %3419 = vmatprep.subr.mxu0 %v2854
    %3420 = vmatpush1.msra.mxu0 %v2853
    %3421 = vmatprep.subr.mxu0 %v2847
    %3422 = vmatpush1.msra.mxu0 %v2846
    %3423 = vmatprep.subr.mxu0 %v2840
    %3424 = vmatpush1.msra.mxu0 %v2839
    %3425 = vmatprep.subr.mxu0 %v2833
    %3426 = vmatpush1.msra.mxu0 %v2832
    %3427 = vmatprep.subr.mxu0 %v2826
    %3428 = vmatpush1.msra.mxu0 %v2825
    %3429 = vmatprep.subr.mxu0 %v2819
    %3430 = vmatpush1.msra.mxu0 %v2818
    %3431 = vmatprep.subr.mxu0 %v2812
    %3432 = vmatpush1.msra.mxu0 %v2811
    %3433 = vmatprep.subr.mxu0 %v2805
    %3434 = vmatpush1.msra.mxu0 %v2804
    %3435 = vmatprep.subr.mxu0 %v2798
    %3436 = vmatpush1.msra.mxu0 %v2797
    %3437 = vmatprep.subr.mxu0 %v2791
    %3438 = vmatpush1.msra.mxu0 %v2790
    %3439 = vmatprep.subr.mxu0 %v2784
    %3440 = vmatpush1.msra.mxu0 %v2783
    %3441 = vmatprep.subr.mxu0 %v2777
    %3442 = vmatpush1.msra.mxu0 %v2776
    %3443 = vmatprep.subr.mxu0 %v2770
    %3444 = vmatpush1.msra.mxu0 %v2769
    %3445 = vmatprep.subr.mxu0 0.0
    %3446 = vmatpush2.msra.mxu0 0.0
    %3447 = vmatprep.subr.mxu0 0.0
    %3448 = vmatpush2.msra.mxu0 0.0
    %3449 = vmatprep.subr.mxu0 0.0
    %3450 = vmatpush2.msra.mxu0 0.0
    %3451 = vmatprep.subr.mxu0 0.0
    %3452 = vmatpush2.msra.mxu0 0.0
    %3453 = vmatprep.subr.mxu0 0.0
    %3454 = vmatpush2.msra.mxu0 0.0
    %3455 = vmatprep.subr.mxu0 0.0
    %3456 = vmatpush2.msra.mxu0 0.0
    %3457 = vmatprep.subr.mxu0 0.0
    %3458 = vmatpush2.msra.mxu0 0.0
    %3459 = vmatprep.subr.mxu0 0.0
    %3460 = vmatpush2.msra.mxu0 0.0
    %3461 = vmatprep.subr.mxu0 0.0
    %3462 = vmatpush2.msra.mxu0 0.0
    %3463 = vmatprep.subr.mxu0 0.0
    %3464 = vmatpush2.msra.mxu0 0.0
    %3465 = vmatprep.subr.mxu0 0.0
    %3466 = vmatpush2.msra.mxu0 0.0
    %3467 = vmatprep.subr.mxu0 0.0
    %3468 = vmatpush2.msra.mxu0 0.0
    %3469 = vmatprep.subr.mxu0 0.0
    %3470 = vmatpush2.msra.mxu0 0.0
    %3471 = vmatprep.subr.mxu0 0.0
    %3472 = vmatpush2.msra.mxu0 0.0
    %3473 = vmatprep.subr.mxu0 0.0
    %3474 = vmatpush2.msra.mxu0 0.0
    %3475 = vmatprep.subr.mxu0 0.0
    %3476 = vmatpush2.msra.mxu0 0.0
    %3477 = vmatprep.mubr.f32.mxu0 0.0
    %3478 = vmatmul.mubr.f32.gmra.mxu0 %v2094
    %v3479 = vpop.f32.mrf.mxu0
    %v3480 = vadd.f32 %v3409, %v3479
    %v3481 = vpop.f32.mrf.mxu0
    %v3482 = vadd.f32 %v3411, %v3481
    %3483 = vdwg.mxu0
    %3484 = vmatprep.subr.mxu0 %v2205
    %3485 = vmatpush1.msra.mxu0 %v2204
    %3486 = vmatprep.subr.mxu0 %v2198
    %3487 = vmatpush1.msra.mxu0 %v2197
    %3488 = vmatprep.subr.mxu0 %v2191
    %3489 = vmatpush1.msra.mxu0 %v2190
    %3490 = vmatprep.subr.mxu0 %v2184
    %3491 = vmatpush1.msra.mxu0 %v2183
    %3492 = vmatprep.subr.mxu0 %v2177
    %3493 = vmatpush1.msra.mxu0 %v2176
    %3494 = vmatprep.subr.mxu0 %v2170
    %3495 = vmatpush1.msra.mxu0 %v2169
    %3496 = vmatprep.subr.mxu0 %v2163
    %3497 = vmatpush1.msra.mxu0 %v2162
    %3498 = vmatprep.subr.mxu0 %v2156
    %3499 = vmatpush1.msra.mxu0 %v2155
    %3500 = vmatprep.subr.mxu0 %v2149
    %3501 = vmatpush1.msra.mxu0 %v2148
    %3502 = vmatprep.subr.mxu0 %v2142
    %3503 = vmatpush1.msra.mxu0 %v2141
    %3504 = vmatprep.subr.mxu0 %v2135
    %3505 = vmatpush1.msra.mxu0 %v2134
    %3506 = vmatprep.subr.mxu0 %v2128
    %3507 = vmatpush1.msra.mxu0 %v2127
    %3508 = vmatprep.subr.mxu0 %v2121
    %3509 = vmatpush1.msra.mxu0 %v2120
    %3510 = vmatprep.subr.mxu0 %v2114
    %3511 = vmatpush1.msra.mxu0 %v2113
    %3512 = vmatprep.subr.mxu0 %v2107
    %3513 = vmatpush1.msra.mxu0 %v2106
    %3514 = vmatprep.subr.mxu0 %v2100
    %3515 = vmatpush1.msra.mxu0 %v2099
    %3516 = vmatprep.subr.mxu0 %v2317
    %3517 = vmatpush2.msra.mxu0 %v2316
    %3518 = vmatprep.subr.mxu0 %v2310
    %3519 = vmatpush2.msra.mxu0 %v2309
    %3520 = vmatprep.subr.mxu0 %v2303
    %3521 = vmatpush2.msra.mxu0 %v2302
    %3522 = vmatprep.subr.mxu0 %v2296
    %3523 = vmatpush2.msra.mxu0 %v2295
    %3524 = vmatprep.subr.mxu0 %v2289
    %3525 = vmatpush2.msra.mxu0 %v2288
    %3526 = vmatprep.subr.mxu0 %v2282
    %3527 = vmatpush2.msra.mxu0 %v2281
    %3528 = vmatprep.subr.mxu0 %v2275
    %3529 = vmatpush2.msra.mxu0 %v2274
    %3530 = vmatprep.subr.mxu0 %v2268
    %3531 = vmatpush2.msra.mxu0 %v2267
    %3532 = vmatprep.subr.mxu0 %v2261
    %3533 = vmatpush2.msra.mxu0 %v2260
    %3534 = vmatprep.subr.mxu0 %v2254
    %3535 = vmatpush2.msra.mxu0 %v2253
    %3536 = vmatprep.subr.mxu0 %v2247
    %3537 = vmatpush2.msra.mxu0 %v2246
    %3538 = vmatprep.subr.mxu0 %v2240
    %3539 = vmatpush2.msra.mxu0 %v2239
    %3540 = vmatprep.subr.mxu0 %v2233
    %3541 = vmatpush2.msra.mxu0 %v2232
    %3542 = vmatprep.subr.mxu0 %v2226
    %3543 = vmatpush2.msra.mxu0 %v2225
    %3544 = vmatprep.subr.mxu0 %v2219
    %3545 = vmatpush2.msra.mxu0 %v2218
    %3546 = vmatprep.subr.mxu0 %v2212
    %3547 = vmatpush2.msra.mxu0 %v2211
    %3548 = vmatprep.mubr.f32.mxu0 %v2089
    %3549 = vmatmul.mubr.f32.gmra.mxu0 %v2088
    %v3550 = vpop.f32.mrf.mxu0
    %v3551 = vadd.f32 %v2900, %v3550
    %v3552 = vpop.f32.mrf.mxu0
    %v3553 = vadd.f32 %v2904, %v3552
    %3554 = vdwg.mxu0
    %3555 = vmatprep.subr.mxu0 %v2429
    %3556 = vmatpush1.msra.mxu0 %v2428
    %3557 = vmatprep.subr.mxu0 %v2422
    %3558 = vmatpush1.msra.mxu0 %v2421
    %3559 = vmatprep.subr.mxu0 %v2415
    %3560 = vmatpush1.msra.mxu0 %v2414
    %3561 = vmatprep.subr.mxu0 %v2408
    %3562 = vmatpush1.msra.mxu0 %v2407
    %3563 = vmatprep.subr.mxu0 %v2401
    %3564 = vmatpush1.msra.mxu0 %v2400
    %3565 = vmatprep.subr.mxu0 %v2394
    %3566 = vmatpush1.msra.mxu0 %v2393
    %3567 = vmatprep.subr.mxu0 %v2387
    %3568 = vmatpush1.msra.mxu0 %v2386
    %3569 = vmatprep.subr.mxu0 %v2380
    %3570 = vmatpush1.msra.mxu0 %v2379
    %3571 = vmatprep.subr.mxu0 %v2373
    %3572 = vmatpush1.msra.mxu0 %v2372
    %3573 = vmatprep.subr.mxu0 %v2366
    %3574 = vmatpush1.msra.mxu0 %v2365
    %3575 = vmatprep.subr.mxu0 %v2359
    %3576 = vmatpush1.msra.mxu0 %v2358
    %3577 = vmatprep.subr.mxu0 %v2352
    %3578 = vmatpush1.msra.mxu0 %v2351
    %3579 = vmatprep.subr.mxu0 %v2345
    %3580 = vmatpush1.msra.mxu0 %v2344
    %3581 = vmatprep.subr.mxu0 %v2338
    %3582 = vmatpush1.msra.mxu0 %v2337
    %3583 = vmatprep.subr.mxu0 %v2331
    %3584 = vmatpush1.msra.mxu0 %v2330
    %3585 = vmatprep.subr.mxu0 %v2324
    %3586 = vmatpush1.msra.mxu0 %v2323
    %3587 = vmatprep.subr.mxu0 %v2541
    %3588 = vmatpush2.msra.mxu0 %v2540
    %3589 = vmatprep.subr.mxu0 %v2534
    %3590 = vmatpush2.msra.mxu0 %v2533
    %3591 = vmatprep.subr.mxu0 %v2527
    %3592 = vmatpush2.msra.mxu0 %v2526
    %3593 = vmatprep.subr.mxu0 %v2520
    %3594 = vmatpush2.msra.mxu0 %v2519
    %3595 = vmatprep.subr.mxu0 %v2513
    %3596 = vmatpush2.msra.mxu0 %v2512
    %3597 = vmatprep.subr.mxu0 %v2506
    %3598 = vmatpush2.msra.mxu0 %v2505
    %3599 = vmatprep.subr.mxu0 %v2499
    %3600 = vmatpush2.msra.mxu0 %v2498
    %3601 = vmatprep.subr.mxu0 %v2492
    %3602 = vmatpush2.msra.mxu0 %v2491
    %3603 = vmatprep.subr.mxu0 %v2485
    %3604 = vmatpush2.msra.mxu0 %v2484
    %3605 = vmatprep.subr.mxu0 %v2478
    %3606 = vmatpush2.msra.mxu0 %v2477
    %3607 = vmatprep.subr.mxu0 %v2471
    %3608 = vmatpush2.msra.mxu0 %v2470
    %3609 = vmatprep.subr.mxu0 %v2464
    %3610 = vmatpush2.msra.mxu0 %v2463
    %3611 = vmatprep.subr.mxu0 %v2457
    %3612 = vmatpush2.msra.mxu0 %v2456
    %3613 = vmatprep.subr.mxu0 %v2450
    %3614 = vmatpush2.msra.mxu0 %v2449
    %3615 = vmatprep.subr.mxu0 %v2443
    %3616 = vmatpush2.msra.mxu0 %v2442
    %3617 = vmatprep.subr.mxu0 %v2436
    %3618 = vmatpush2.msra.mxu0 %v2435
    %3619 = vmatprep.mubr.f32.mxu0 %v2091
    %3620 = vmatmul.mubr.f32.gmra.mxu0 %v2090
    %v3621 = vpop.f32.mrf.mxu0
    %v3622 = vadd.f32 %v3551, %v3621
    %v3623 = vpop.f32.mrf.mxu0
    %v3624 = vadd.f32 %v3553, %v3623
    %3625 = vdwg.mxu0
    %3626 = vmatprep.subr.mxu0 %v2653
    %3627 = vmatpush1.msra.mxu0 %v2652
    %3628 = vmatprep.subr.mxu0 %v2646
    %3629 = vmatpush1.msra.mxu0 %v2645
    %3630 = vmatprep.subr.mxu0 %v2639
    %3631 = vmatpush1.msra.mxu0 %v2638
    %3632 = vmatprep.subr.mxu0 %v2632
    %3633 = vmatpush1.msra.mxu0 %v2631
    %3634 = vmatprep.subr.mxu0 %v2625
    %3635 = vmatpush1.msra.mxu0 %v2624
    %3636 = vmatprep.subr.mxu0 %v2618
    %3637 = vmatpush1.msra.mxu0 %v2617
    %3638 = vmatprep.subr.mxu0 %v2611
    %3639 = vmatpush1.msra.mxu0 %v2610
    %3640 = vmatprep.subr.mxu0 %v2604
    %3641 = vmatpush1.msra.mxu0 %v2603
    %3642 = vmatprep.subr.mxu0 %v2597
    %3643 = vmatpush1.msra.mxu0 %v2596
    %3644 = vmatprep.subr.mxu0 %v2590
    %3645 = vmatpush1.msra.mxu0 %v2589
    %3646 = vmatprep.subr.mxu0 %v2583
    %3647 = vmatpush1.msra.mxu0 %v2582
    %3648 = vmatprep.subr.mxu0 %v2576
    %3649 = vmatpush1.msra.mxu0 %v2575
    %3650 = vmatprep.subr.mxu0 %v2569
    %3651 = vmatpush1.msra.mxu0 %v2568
    %3652 = vmatprep.subr.mxu0 %v2562
    %3653 = vmatpush1.msra.mxu0 %v2561
    %3654 = vmatprep.subr.mxu0 %v2555
    %3655 = vmatpush1.msra.mxu0 %v2554
    %3656 = vmatprep.subr.mxu0 %v2548
    %3657 = vmatpush1.msra.mxu0 %v2547
    %3658 = vmatprep.subr.mxu0 %v2765
    %3659 = vmatpush2.msra.mxu0 %v2764
    %3660 = vmatprep.subr.mxu0 %v2758
    %3661 = vmatpush2.msra.mxu0 %v2757
    %3662 = vmatprep.subr.mxu0 %v2751
    %3663 = vmatpush2.msra.mxu0 %v2750
    %3664 = vmatprep.subr.mxu0 %v2744
    %3665 = vmatpush2.msra.mxu0 %v2743
    %3666 = vmatprep.subr.mxu0 %v2737
    %3667 = vmatpush2.msra.mxu0 %v2736
    %3668 = vmatprep.subr.mxu0 %v2730
    %3669 = vmatpush2.msra.mxu0 %v2729
    %3670 = vmatprep.subr.mxu0 %v2723
    %3671 = vmatpush2.msra.mxu0 %v2722
    %3672 = vmatprep.subr.mxu0 %v2716
    %3673 = vmatpush2.msra.mxu0 %v2715
    %3674 = vmatprep.subr.mxu0 %v2709
    %3675 = vmatpush2.msra.mxu0 %v2708
    %3676 = vmatprep.subr.mxu0 %v2702
    %3677 = vmatpush2.msra.mxu0 %v2701
    %3678 = vmatprep.subr.mxu0 %v2695
    %3679 = vmatpush2.msra.mxu0 %v2694
    %3680 = vmatprep.subr.mxu0 %v2688
    %3681 = vmatpush2.msra.mxu0 %v2687
    %3682 = vmatprep.subr.mxu0 %v2681
    %3683 = vmatpush2.msra.mxu0 %v2680
    %3684 = vmatprep.subr.mxu0 %v2674
    %3685 = vmatpush2.msra.mxu0 %v2673
    %3686 = vmatprep.subr.mxu0 %v2667
    %3687 = vmatpush2.msra.mxu0 %v2666
    %3688 = vmatprep.subr.mxu0 %v2660
    %3689 = vmatpush2.msra.mxu0 %v2659
    %3690 = vmatprep.mubr.f32.mxu0 %v2093
    %3691 = vmatmul.mubr.f32.gmra.mxu0 %v2092
    %v3692 = vpop.f32.mrf.mxu0
    %v3693 = vadd.f32 %v3622, %v3692
    %v3694 = vpop.f32.mrf.mxu0
    %v3695 = vadd.f32 %v3624, %v3694
    %3696 = vdwg.mxu0
    %3697 = vmatprep.subr.mxu0 %v2877
    %3698 = vmatpush1.msra.mxu0 %v2876
    %3699 = vmatprep.subr.mxu0 %v2870
    %3700 = vmatpush1.msra.mxu0 %v2869
    %3701 = vmatprep.subr.mxu0 %v2863
    %3702 = vmatpush1.msra.mxu0 %v2862
    %3703 = vmatprep.subr.mxu0 %v2856
    %3704 = vmatpush1.msra.mxu0 %v2855
    %3705 = vmatprep.subr.mxu0 %v2849
    %3706 = vmatpush1.msra.mxu0 %v2848
    %3707 = vmatprep.subr.mxu0 %v2842
    %3708 = vmatpush1.msra.mxu0 %v2841
    %3709 = vmatprep.subr.mxu0 %v2835
    %3710 = vmatpush1.msra.mxu0 %v2834
    %3711 = vmatprep.subr.mxu0 %v2828
    %3712 = vmatpush1.msra.mxu0 %v2827
    %3713 = vmatprep.subr.mxu0 %v2821
    %3714 = vmatpush1.msra.mxu0 %v2820
    %3715 = vmatprep.subr.mxu0 %v2814
    %3716 = vmatpush1.msra.mxu0 %v2813
    %3717 = vmatprep.subr.mxu0 %v2807
    %3718 = vmatpush1.msra.mxu0 %v2806
    %3719 = vmatprep.subr.mxu0 %v2800
    %3720 = vmatpush1.msra.mxu0 %v2799
    %3721 = vmatprep.subr.mxu0 %v2793
    %3722 = vmatpush1.msra.mxu0 %v2792
    %3723 = vmatprep.subr.mxu0 %v2786
    %3724 = vmatpush1.msra.mxu0 %v2785
    %3725 = vmatprep.subr.mxu0 %v2779
    %3726 = vmatpush1.msra.mxu0 %v2778
    %3727 = vmatprep.subr.mxu0 %v2772
    %3728 = vmatpush1.msra.mxu0 %v2771
    %3729 = vmatprep.subr.mxu0 0.0
    %3730 = vmatpush2.msra.mxu0 0.0
    %3731 = vmatprep.subr.mxu0 0.0
    %3732 = vmatpush2.msra.mxu0 0.0
    %3733 = vmatprep.subr.mxu0 0.0
    %3734 = vmatpush2.msra.mxu0 0.0
    %3735 = vmatprep.subr.mxu0 0.0
    %3736 = vmatpush2.msra.mxu0 0.0
    %3737 = vmatprep.subr.mxu0 0.0
    %3738 = vmatpush2.msra.mxu0 0.0
    %3739 = vmatprep.subr.mxu0 0.0
    %3740 = vmatpush2.msra.mxu0 0.0
    %3741 = vmatprep.subr.mxu0 0.0
    %3742 = vmatpush2.msra.mxu0 0.0
    %3743 = vmatprep.subr.mxu0 0.0
    %3744 = vmatpush2.msra.mxu0 0.0
    %3745 = vmatprep.subr.mxu0 0.0
    %3746 = vmatpush2.msra.mxu0 0.0
    %3747 = vmatprep.subr.mxu0 0.0
    %3748 = vmatpush2.msra.mxu0 0.0
    %3749 = vmatprep.subr.mxu0 0.0
    %3750 = vmatpush2.msra.mxu0 0.0
    %3751 = vmatprep.subr.mxu0 0.0
    %3752 = vmatpush2.msra.mxu0 0.0
    %3753 = vmatprep.subr.mxu0 0.0
    %3754 = vmatpush2.msra.mxu0 0.0
    %3755 = vmatprep.subr.mxu0 0.0
    %3756 = vmatpush2.msra.mxu0 0.0
    %3757 = vmatprep.subr.mxu0 0.0
    %3758 = vmatpush2.msra.mxu0 0.0
    %3759 = vmatprep.subr.mxu0 0.0
    %3760 = vmatpush2.msra.mxu0 0.0
    %3761 = vmatprep.mubr.f32.mxu0 0.0
    %3762 = vmatmul.mubr.f32.gmra.mxu0 %v2094
    %v3763 = vpop.f32.mrf.mxu0
    %v3764 = vadd.f32 %v3693, %v3763
    %v3765 = vpop.f32.mrf.mxu0
    %v3766 = vadd.f32 %v3695, %v3765
    %3767 = vdwg.mxu0
    %3768 = vmatprep.subr.mxu0 0.0
    %3769 = vmatpush1.msra.mxu0 %v2206
    %3770 = vmatprep.subr.mxu0 0.0
    %3771 = vmatpush1.msra.mxu0 %v2199
    %3772 = vmatprep.subr.mxu0 0.0
    %3773 = vmatpush1.msra.mxu0 %v2192
    %3774 = vmatprep.subr.mxu0 0.0
    %3775 = vmatpush1.msra.mxu0 %v2185
    %3776 = vmatprep.subr.mxu0 0.0
    %3777 = vmatpush1.msra.mxu0 %v2178
    %3778 = vmatprep.subr.mxu0 0.0
    %3779 = vmatpush1.msra.mxu0 %v2171
    %3780 = vmatprep.subr.mxu0 0.0
    %3781 = vmatpush1.msra.mxu0 %v2164
    %3782 = vmatprep.subr.mxu0 0.0
    %3783 = vmatpush1.msra.mxu0 %v2157
    %3784 = vmatprep.subr.mxu0 0.0
    %3785 = vmatpush1.msra.mxu0 %v2150
    %3786 = vmatprep.subr.mxu0 0.0
    %3787 = vmatpush1.msra.mxu0 %v2143
    %3788 = vmatprep.subr.mxu0 0.0
    %3789 = vmatpush1.msra.mxu0 %v2136
    %3790 = vmatprep.subr.mxu0 0.0
    %3791 = vmatpush1.msra.mxu0 %v2129
    %3792 = vmatprep.subr.mxu0 0.0
    %3793 = vmatpush1.msra.mxu0 %v2122
    %3794 = vmatprep.subr.mxu0 0.0
    %3795 = vmatpush1.msra.mxu0 %v2115
    %3796 = vmatprep.subr.mxu0 0.0
    %3797 = vmatpush1.msra.mxu0 %v2108
    %3798 = vmatprep.subr.mxu0 0.0
    %3799 = vmatpush1.msra.mxu0 %v2101
    %3800 = vmatprep.subr.mxu0 0.0
    %3801 = vmatpush2.msra.mxu0 %v2318
    %3802 = vmatprep.subr.mxu0 0.0
    %3803 = vmatpush2.msra.mxu0 %v2311
    %3804 = vmatprep.subr.mxu0 0.0
    %3805 = vmatpush2.msra.mxu0 %v2304
    %3806 = vmatprep.subr.mxu0 0.0
    %3807 = vmatpush2.msra.mxu0 %v2297
    %3808 = vmatprep.subr.mxu0 0.0
    %3809 = vmatpush2.msra.mxu0 %v2290
    %3810 = vmatprep.subr.mxu0 0.0
    %3811 = vmatpush2.msra.mxu0 %v2283
    %3812 = vmatprep.subr.mxu0 0.0
    %3813 = vmatpush2.msra.mxu0 %v2276
    %3814 = vmatprep.subr.mxu0 0.0
    %3815 = vmatpush2.msra.mxu0 %v2269
    %3816 = vmatprep.subr.mxu0 0.0
    %3817 = vmatpush2.msra.mxu0 %v2262
    %3818 = vmatprep.subr.mxu0 0.0
    %3819 = vmatpush2.msra.mxu0 %v2255
    %3820 = vmatprep.subr.mxu0 0.0
    %3821 = vmatpush2.msra.mxu0 %v2248
    %3822 = vmatprep.subr.mxu0 0.0
    %3823 = vmatpush2.msra.mxu0 %v2241
    %3824 = vmatprep.subr.mxu0 0.0
    %3825 = vmatpush2.msra.mxu0 %v2234
    %3826 = vmatprep.subr.mxu0 0.0
    %3827 = vmatpush2.msra.mxu0 %v2227
    %3828 = vmatprep.subr.mxu0 0.0
    %3829 = vmatpush2.msra.mxu0 %v2220
    %3830 = vmatprep.subr.mxu0 0.0
    %3831 = vmatpush2.msra.mxu0 %v2213
    %3832 = vmatprep.mubr.f32.mxu0 %v2089
    %3833 = vmatmul.mubr.f32.gmra.mxu0 %v2088
    %v3834 = vpop.f32.mrf.mxu0
    %v3835 = vadd.f32 %v2908, %v3834
    %v3836 = vpop.f32.mrf.mxu0
    %3837 = vdwg.mxu0
    %3838 = vmatprep.subr.mxu0 0.0
    %3839 = vmatpush1.msra.mxu0 %v2430
    %3840 = vmatprep.subr.mxu0 0.0
    %3841 = vmatpush1.msra.mxu0 %v2423
    %3842 = vmatprep.subr.mxu0 0.0
    %3843 = vmatpush1.msra.mxu0 %v2416
    %3844 = vmatprep.subr.mxu0 0.0
    %3845 = vmatpush1.msra.mxu0 %v2409
    %3846 = vmatprep.subr.mxu0 0.0
    %3847 = vmatpush1.msra.mxu0 %v2402
    %3848 = vmatprep.subr.mxu0 0.0
    %3849 = vmatpush1.msra.mxu0 %v2395
    %3850 = vmatprep.subr.mxu0 0.0
    %3851 = vmatpush1.msra.mxu0 %v2388
    %3852 = vmatprep.subr.mxu0 0.0
    %3853 = vmatpush1.msra.mxu0 %v2381
    %3854 = vmatprep.subr.mxu0 0.0
    %3855 = vmatpush1.msra.mxu0 %v2374
    %3856 = vmatprep.subr.mxu0 0.0
    %3857 = vmatpush1.msra.mxu0 %v2367
    %3858 = vmatprep.subr.mxu0 0.0
    %3859 = vmatpush1.msra.mxu0 %v2360
    %3860 = vmatprep.subr.mxu0 0.0
    %3861 = vmatpush1.msra.mxu0 %v2353
    %3862 = vmatprep.subr.mxu0 0.0
    %3863 = vmatpush1.msra.mxu0 %v2346
    %3864 = vmatprep.subr.mxu0 0.0
    %3865 = vmatpush1.msra.mxu0 %v2339
    %3866 = vmatprep.subr.mxu0 0.0
    %3867 = vmatpush1.msra.mxu0 %v2332
    %3868 = vmatprep.subr.mxu0 0.0
    %3869 = vmatpush1.msra.mxu0 %v2325
    %3870 = vmatprep.subr.mxu0 0.0
    %3871 = vmatpush2.msra.mxu0 %v2542
    %3872 = vmatprep.subr.mxu0 0.0
    %3873 = vmatpush2.msra.mxu0 %v2535
    %3874 = vmatprep.subr.mxu0 0.0
    %3875 = vmatpush2.msra.mxu0 %v2528
    %3876 = vmatprep.subr.mxu0 0.0
    %3877 = vmatpush2.msra.mxu0 %v2521
    %3878 = vmatprep.subr.mxu0 0.0
    %3879 = vmatpush2.msra.mxu0 %v2514
    %3880 = vmatprep.subr.mxu0 0.0
    %3881 = vmatpush2.msra.mxu0 %v2507
    %3882 = vmatprep.subr.mxu0 0.0
    %3883 = vmatpush2.msra.mxu0 %v2500
    %3884 = vmatprep.subr.mxu0 0.0
    %3885 = vmatpush2.msra.mxu0 %v2493
    %3886 = vmatprep.subr.mxu0 0.0
    %3887 = vmatpush2.msra.mxu0 %v2486
    %3888 = vmatprep.subr.mxu0 0.0
    %3889 = vmatpush2.msra.mxu0 %v2479
    %3890 = vmatprep.subr.mxu0 0.0
    %3891 = vmatpush2.msra.mxu0 %v2472
    %3892 = vmatprep.subr.mxu0 0.0
    %3893 = vmatpush2.msra.mxu0 %v2465
    %3894 = vmatprep.subr.mxu0 0.0
    %3895 = vmatpush2.msra.mxu0 %v2458
    %3896 = vmatprep.subr.mxu0 0.0
    %3897 = vmatpush2.msra.mxu0 %v2451
    %3898 = vmatprep.subr.mxu0 0.0
    %3899 = vmatpush2.msra.mxu0 %v2444
    %3900 = vmatprep.subr.mxu0 0.0
    %3901 = vmatpush2.msra.mxu0 %v2437
    %3902 = vmatprep.mubr.f32.mxu0 %v2091
    %3903 = vmatmul.mubr.f32.gmra.mxu0 %v2090
    %v3904 = vpop.f32.mrf.mxu0
    %v3905 = vadd.f32 %v3835, %v3904
    %v3906 = vpop.f32.mrf.mxu0
    %3907 = vdwg.mxu0
    %3908 = vmatprep.subr.mxu0 0.0
    %3909 = vmatpush1.msra.mxu0 %v2654
    %3910 = vmatprep.subr.mxu0 0.0
    %3911 = vmatpush1.msra.mxu0 %v2647
    %3912 = vmatprep.subr.mxu0 0.0
    %3913 = vmatpush1.msra.mxu0 %v2640
    %3914 = vmatprep.subr.mxu0 0.0
    %3915 = vmatpush1.msra.mxu0 %v2633
    %3916 = vmatprep.subr.mxu0 0.0
    %3917 = vmatpush1.msra.mxu0 %v2626
    %3918 = vmatprep.subr.mxu0 0.0
    %3919 = vmatpush1.msra.mxu0 %v2619
    %3920 = vmatprep.subr.mxu0 0.0
    %3921 = vmatpush1.msra.mxu0 %v2612
    %3922 = vmatprep.subr.mxu0 0.0
    %3923 = vmatpush1.msra.mxu0 %v2605
    %3924 = vmatprep.subr.mxu0 0.0
    %3925 = vmatpush1.msra.mxu0 %v2598
    %3926 = vmatprep.subr.mxu0 0.0
    %3927 = vmatpush1.msra.mxu0 %v2591
    %3928 = vmatprep.subr.mxu0 0.0
    %3929 = vmatpush1.msra.mxu0 %v2584
    %3930 = vmatprep.subr.mxu0 0.0
    %3931 = vmatpush1.msra.mxu0 %v2577
    %3932 = vmatprep.subr.mxu0 0.0
    %3933 = vmatpush1.msra.mxu0 %v2570
    %3934 = vmatprep.subr.mxu0 0.0
    %3935 = vmatpush1.msra.mxu0 %v2563
    %3936 = vmatprep.subr.mxu0 0.0
    %3937 = vmatpush1.msra.mxu0 %v2556
    %3938 = vmatprep.subr.mxu0 0.0
    %3939 = vmatpush1.msra.mxu0 %v2549
    %3940 = vmatprep.subr.mxu0 0.0
    %3941 = vmatpush2.msra.mxu0 %v2766
    %3942 = vmatprep.subr.mxu0 0.0
    %3943 = vmatpush2.msra.mxu0 %v2759
    %3944 = vmatprep.subr.mxu0 0.0
    %3945 = vmatpush2.msra.mxu0 %v2752
    %3946 = vmatprep.subr.mxu0 0.0
    %3947 = vmatpush2.msra.mxu0 %v2745
    %3948 = vmatprep.subr.mxu0 0.0
    %3949 = vmatpush2.msra.mxu0 %v2738
    %3950 = vmatprep.subr.mxu0 0.0
    %3951 = vmatpush2.msra.mxu0 %v2731
    %3952 = vmatprep.subr.mxu0 0.0
    %3953 = vmatpush2.msra.mxu0 %v2724
    %3954 = vmatprep.subr.mxu0 0.0
    %3955 = vmatpush2.msra.mxu0 %v2717
    %3956 = vmatprep.subr.mxu0 0.0
    %3957 = vmatpush2.msra.mxu0 %v2710
    %3958 = vmatprep.subr.mxu0 0.0
    %3959 = vmatpush2.msra.mxu0 %v2703
    %3960 = vmatprep.subr.mxu0 0.0
    %3961 = vmatpush2.msra.mxu0 %v2696
    %3962 = vmatprep.subr.mxu0 0.0
    %3963 = vmatpush2.msra.mxu0 %v2689
    %3964 = vmatprep.subr.mxu0 0.0
    %3965 = vmatpush2.msra.mxu0 %v2682
    %3966 = vmatprep.subr.mxu0 0.0
    %3967 = vmatpush2.msra.mxu0 %v2675
    %3968 = vmatprep.subr.mxu0 0.0
    %3969 = vmatpush2.msra.mxu0 %v2668
    %3970 = vmatprep.subr.mxu0 0.0
    %3971 = vmatpush2.msra.mxu0 %v2661
    %3972 = vmatprep.mubr.f32.mxu0 %v2093
    %3973 = vmatmul.mubr.f32.gmra.mxu0 %v2092
    %v3974 = vpop.f32.mrf.mxu0
    %v3975 = vadd.f32 %v3905, %v3974
    %v3976 = vpop.f32.mrf.mxu0
    %3977 = vdwg.mxu0
    %3978 = vmatprep.subr.mxu0 0.0
    %3979 = vmatpush1.msra.mxu0 %v2878
    %3980 = vmatprep.subr.mxu0 0.0
    %3981 = vmatpush1.msra.mxu0 %v2871
    %3982 = vmatprep.subr.mxu0 0.0
    %3983 = vmatpush1.msra.mxu0 %v2864
    %3984 = vmatprep.subr.mxu0 0.0
    %3985 = vmatpush1.msra.mxu0 %v2857
    %3986 = vmatprep.subr.mxu0 0.0
    %3987 = vmatpush1.msra.mxu0 %v2850
    %3988 = vmatprep.subr.mxu0 0.0
    %3989 = vmatpush1.msra.mxu0 %v2843
    %3990 = vmatprep.subr.mxu0 0.0
    %3991 = vmatpush1.msra.mxu0 %v2836
    %3992 = vmatprep.subr.mxu0 0.0
    %3993 = vmatpush1.msra.mxu0 %v2829
    %3994 = vmatprep.subr.mxu0 0.0
    %3995 = vmatpush1.msra.mxu0 %v2822
    %3996 = vmatprep.subr.mxu0 0.0
    %3997 = vmatpush1.msra.mxu0 %v2815
    %3998 = vmatprep.subr.mxu0 0.0
    %3999 = vmatpush1.msra.mxu0 %v2808
    %4000 = vmatprep.subr.mxu0 0.0
    %4001 = vmatpush1.msra.mxu0 %v2801
    %4002 = vmatprep.subr.mxu0 0.0
    %4003 = vmatpush1.msra.mxu0 %v2794
    %4004 = vmatprep.subr.mxu0 0.0
    %4005 = vmatpush1.msra.mxu0 %v2787
    %4006 = vmatprep.subr.mxu0 0.0
    %4007 = vmatpush1.msra.mxu0 %v2780
    %4008 = vmatprep.subr.mxu0 0.0
    %4009 = vmatpush1.msra.mxu0 %v2773
    %4010 = vmatprep.subr.mxu0 0.0
    %4011 = vmatpush2.msra.mxu0 0.0
    %4012 = vmatprep.subr.mxu0 0.0
    %4013 = vmatpush2.msra.mxu0 0.0
    %4014 = vmatprep.subr.mxu0 0.0
    %4015 = vmatpush2.msra.mxu0 0.0
    %4016 = vmatprep.subr.mxu0 0.0
    %4017 = vmatpush2.msra.mxu0 0.0
    %4018 = vmatprep.subr.mxu0 0.0
    %4019 = vmatpush2.msra.mxu0 0.0
    %4020 = vmatprep.subr.mxu0 0.0
    %4021 = vmatpush2.msra.mxu0 0.0
    %4022 = vmatprep.subr.mxu0 0.0
    %4023 = vmatpush2.msra.mxu0 0.0
    %4024 = vmatprep.subr.mxu0 0.0
    %4025 = vmatpush2.msra.mxu0 0.0
    %4026 = vmatprep.subr.mxu0 0.0
    %4027 = vmatpush2.msra.mxu0 0.0
    %4028 = vmatprep.subr.mxu0 0.0
    %4029 = vmatpush2.msra.mxu0 0.0
    %4030 = vmatprep.subr.mxu0 0.0
    %4031 = vmatpush2.msra.mxu0 0.0
    %4032 = vmatprep.subr.mxu0 0.0
    %4033 = vmatpush2.msra.mxu0 0.0
    %4034 = vmatprep.subr.mxu0 0.0
    %4035 = vmatpush2.msra.mxu0 0.0
    %4036 = vmatprep.subr.mxu0 0.0
    %4037 = vmatpush2.msra.mxu0 0.0
    %4038 = vmatprep.subr.mxu0 0.0
    %4039 = vmatpush2.msra.mxu0 0.0
    %4040 = vmatprep.subr.mxu0 0.0
    %4041 = vmatpush2.msra.mxu0 0.0
    %4042 = vmatprep.mubr.f32.mxu0 0.0
    %4043 = vmatmul.mubr.f32.gmra.mxu0 %v2094
    %v4044 = vpop.f32.mrf.mxu0
    %v4045 = vadd.f32 %v3975, %v4044
    %v4046 = vpop.f32.mrf.mxu0
    %4047 = vdwg.mxu0
    %vm4048 = vcmp.ge.f32.partialorder %v3196, 0.0
    %vm4049 = vcmp.ge.f32.partialorder %v3198, 0.0
    %vm4050 = vcmp.ge.f32.partialorder %v3480, 0.0
    %vm4051 = vcmp.ge.f32.partialorder %v3482, 0.0
    %vm4052 = vcmp.ge.f32.partialorder %v3764, 0.0
    %vm4053 = vcmp.ge.f32.partialorder %v3766, 0.0
    %vm4054 = vcmp.ge.f32.partialorder %v4045, 0.0
    %v4055 = vmul.f32 %v3196, 0.2
    %v4056 = vmul.f32 %v3198, 0.2
    %v4057 = vmul.f32 %v3480, 0.2
    %v4058 = vmul.f32 %v3482, 0.2
    %v4059 = vmul.f32 %v3764, 0.2
    %v4060 = vmul.f32 %v3766, 0.2
    %v4061 = vmul.f32 %v4045, 0.2
    %v4062 = vsel %vm4048, %v3196, %v4055
    %v4063 = vsel %vm4049, %v3198, %v4056
    %v4064 = vsel %vm4050, %v3480, %v4057
    %v4065 = vsel %vm4051, %v3482, %v4058
    %v4066 = vsel %vm4052, %v3764, %v4059
    %v4067 = vsel %vm4053, %v3766, %v4060
    %v4068 = vsel %vm4054, %v4045, %v4061
    %v4069 = vld [vmem:[#allocation11] sm:$0xff]
    %v4070 = vld [vmem:[#allocation11 + $0x8] sm:$0xff]
    %v4071 = vld [vmem:[#allocation11 + $0x10] sm:$0xff]
    %v4072 = vld [vmem:[#allocation11 + $0x18] sm:$0xff]
    %v4073 = vld [vmem:[#allocation11 + $0x20] sm:$0xff]
    %v4074 = vld [vmem:[#allocation11 + $0x28] sm:$0xff]
    %v4075 = vld [vmem:[#allocation11 + $0x30] sm:$0xff]
    %v4076 = vld [vmem:[#allocation11 + $0x38] sm:$0xff]
    %v4077 = vld [vmem:[#allocation11 + $0x40] sm:$0xff]
    %v4078 = vld [vmem:[#allocation11 + $0x48] sm:$0xff]
    %v4079 = vld [vmem:[#allocation11 + $0x50] sm:$0xff]
    %v4080 = vld [vmem:[#allocation11 + $0x58] sm:$0xff]
    %v4081 = vld [vmem:[#allocation11 + $0x60] sm:$0xff]
    %v4082 = vld [vmem:[#allocation11 + $0x68] sm:$0xff]
    %v4083 = vld [vmem:[#allocation11 + $0x70] sm:$0xff]
    %v4084 = vld [vmem:[#allocation11 + $0x78] sm:$0xff]
    %v4085 = vld [vmem:[#allocation11 + $0x80] sm:$0xff]
    %v4086 = vld [vmem:[#allocation11 + $0x88] sm:$0xff]
    %v4087 = vld [vmem:[#allocation11 + $0x90] sm:$0xff]
    %v4088 = vld [vmem:[#allocation11 + $0x98] sm:$0xff]
    %v4089 = vld [vmem:[#allocation11 + $0xa0] sm:$0xff]
    %v4090 = vld [vmem:[#allocation11 + $0xa8] sm:$0xff]
    %v4091 = vld [vmem:[#allocation11 + $0xb0] sm:$0xff]
    %v4092 = vld [vmem:[#allocation11 + $0xb8] sm:$0xff]
    %v4093 = vld [vmem:[#allocation11 + $0xc0] sm:$0xff]
    %v4094 = vld [vmem:[#allocation11 + $0xc8] sm:$0xff]
    %v4095 = vld [vmem:[#allocation11 + $0xd0] sm:$0xff]
    %v4096 = vld [vmem:[#allocation11 + $0xd8] sm:$0xff]
    %v4097 = vld [vmem:[#allocation11 + $0xe0] sm:$0xff]
    %v4098 = vld [vmem:[#allocation11 + $0xe8] sm:$0xff]
    %v4099 = vld [vmem:[#allocation11 + $0xf0] sm:$0xff]
    %v4100 = vld [vmem:[#allocation11 + $0xf8] sm:$0xff]
    %v4101 = vld [vmem:[#allocation11 + $0x100] sm:$0xff]
    %v4102 = vld [vmem:[#allocation11 + $0x108] sm:$0xff]
    %v4103 = vld [vmem:[#allocation11 + $0x110] sm:$0xff]
    %v4104 = vld [vmem:[#allocation11 + $0x118] sm:$0xff]
    %v4105 = vld [vmem:[#allocation11 + $0x120] sm:$0xff]
    %v4106 = vld [vmem:[#allocation11 + $0x128] sm:$0xff]
    %v4107 = vld [vmem:[#allocation11 + $0x130] sm:$0xff]
    %v4108 = vld [vmem:[#allocation11 + $0x138] sm:$0xff]
    %v4109 = vld [vmem:[#allocation11 + $0x140] sm:$0xff]
    %v4110 = vld [vmem:[#allocation11 + $0x148] sm:$0xff]
    %v4111 = vld [vmem:[#allocation11 + $0x150] sm:$0xff]
    %v4112 = vld [vmem:[#allocation11 + $0x158] sm:$0xff]
    %v4113 = vld [vmem:[#allocation11 + $0x160] sm:$0xff]
    %v4114 = vld [vmem:[#allocation11 + $0x168] sm:$0xff]
    %v4115 = vld [vmem:[#allocation11 + $0x170] sm:$0xff]
    %v4116 = vld [vmem:[#allocation11 + $0x178] sm:$0xff]
    %v4117 = vld [vmem:[#allocation11 + $0x180] sm:$0xff]
    %v4118 = vld [vmem:[#allocation11 + $0x188] sm:$0xff]
    %v4119 = vld [vmem:[#allocation11 + $0x190] sm:$0xff]
    %v4120 = vld [vmem:[#allocation11 + $0x198] sm:$0xff]
    %v4121 = vld [vmem:[#allocation11 + $0x1a0] sm:$0xff]
    %v4122 = vld [vmem:[#allocation11 + $0x1a8] sm:$0xff]
    %v4123 = vld [vmem:[#allocation11 + $0x1b0] sm:$0xff]
    %v4124 = vld [vmem:[#allocation11 + $0x1b8] sm:$0xff]
    %v4125 = vld [vmem:[#allocation11 + $0x1c0] sm:$0xff]
    %v4126 = vld [vmem:[#allocation11 + $0x1c8] sm:$0xff]
    %v4127 = vld [vmem:[#allocation11 + $0x1d0] sm:$0xff]
    %v4128 = vld [vmem:[#allocation11 + $0x1d8] sm:$0xff]
    %v4129 = vld [vmem:[#allocation11 + $0x1e0] sm:$0xff]
    %v4130 = vld [vmem:[#allocation11 + $0x1e8] sm:$0xff]
    %v4131 = vld [vmem:[#allocation11 + $0x1f0] sm:$0xff]
    %v4132 = vld [vmem:[#allocation11 + $0x1f8] sm:$0xff]
    %v4133 = vld [vmem:[#allocation11 + $0x200] sm:$0xff]
    %v4134 = vld [vmem:[#allocation11 + $0x208] sm:$0xff]
    %v4135 = vld [vmem:[#allocation11 + $0x210] sm:$0xff]
    %v4136 = vld [vmem:[#allocation11 + $0x218] sm:$0xff]
    %v4137 = vld [vmem:[#allocation11 + $0x220] sm:$0xff]
    %v4138 = vld [vmem:[#allocation11 + $0x228] sm:$0xff]
    %v4139 = vld [vmem:[#allocation11 + $0x230] sm:$0xff]
    %v4140 = vld [vmem:[#allocation11 + $0x238] sm:$0xff]
    %v4141 = vld [vmem:[#allocation11 + $0x240] sm:$0xff]
    %v4142 = vld [vmem:[#allocation11 + $0x248] sm:$0xff]
    %v4143 = vld [vmem:[#allocation11 + $0x250] sm:$0xff]
    %v4144 = vld [vmem:[#allocation11 + $0x258] sm:$0xff]
    %v4145 = vld [vmem:[#allocation11 + $0x260] sm:$0xff]
    %v4146 = vld [vmem:[#allocation11 + $0x268] sm:$0xff]
    %v4147 = vld [vmem:[#allocation11 + $0x270] sm:$0xff]
    %v4148 = vld [vmem:[#allocation11 + $0x278] sm:$0xff]
    %v4149 = vld [vmem:[#allocation11 + $0x280] sm:$0xff]
    %v4150 = vld [vmem:[#allocation11 + $0x288] sm:$0xff]
    %v4151 = vld [vmem:[#allocation11 + $0x290] sm:$0xff]
    %v4152 = vld [vmem:[#allocation11 + $0x298] sm:$0xff]
    %v4153 = vld [vmem:[#allocation11 + $0x2a0] sm:$0xff]
    %v4154 = vld [vmem:[#allocation11 + $0x2a8] sm:$0xff]
    %v4155 = vld [vmem:[#allocation11 + $0x2b0] sm:$0xff]
    %v4156 = vld [vmem:[#allocation11 + $0x2b8] sm:$0xff]
    %v4157 = vld [vmem:[#allocation11 + $0x2c0] sm:$0xff]
    %v4158 = vld [vmem:[#allocation11 + $0x2c8] sm:$0xff]
    %v4159 = vld [vmem:[#allocation11 + $0x2d0] sm:$0xff]
    %v4160 = vld [vmem:[#allocation11 + $0x2d8] sm:$0xff]
    %v4161 = vld [vmem:[#allocation11 + $0x2e0] sm:$0xff]
    %v4162 = vld [vmem:[#allocation11 + $0x2e8] sm:$0xff]
    %v4163 = vld [vmem:[#allocation11 + $0x2f0] sm:$0xff]
    %v4164 = vld [vmem:[#allocation11 + $0x2f8] sm:$0xff]
    %v4165 = vld [vmem:[#allocation11 + $0x300] sm:$0xff]
    %v4166 = vld [vmem:[#allocation11 + $0x308] sm:$0xff]
    %v4167 = vld [vmem:[#allocation11 + $0x310] sm:$0xff]
    %v4168 = vld [vmem:[#allocation11 + $0x318] sm:$0xff]
    %v4169 = vld [vmem:[#allocation11 + $0x320] sm:$0xff]
    %v4170 = vld [vmem:[#allocation11 + $0x328] sm:$0xff]
    %v4171 = vld [vmem:[#allocation11 + $0x330] sm:$0xff]
    %v4172 = vld [vmem:[#allocation11 + $0x338] sm:$0xff]
    %v4173 = vld [vmem:[#allocation11 + $0x340] sm:$0xff]
    %v4174 = vld [vmem:[#allocation11 + $0x348] sm:$0xff]
    %v4175 = vld [vmem:[#allocation11 + $0x350] sm:$0xff]
    %v4176 = vld [vmem:[#allocation11 + $0x358] sm:$0xff]
    %v4177 = vld [vmem:[#allocation11 + $0x360] sm:$0xff]
    %v4178 = vld [vmem:[#allocation11 + $0x368] sm:$0xff]
    %v4179 = vld [vmem:[#allocation11 + $0x370] sm:$0xff]
    %v4180 = vld [vmem:[#allocation11 + $0x378] sm:$0xff]
    %v4181 = vld [vmem:[#allocation11 + $0x380] sm:$0xff]
    %v4182 = vld [vmem:[#allocation11 + $0x388] sm:$0xff]
    %v4183 = vld [vmem:[#allocation11 + $0x390] sm:$0xff]
    %v4184 = vld [vmem:[#allocation11 + $0x398] sm:$0xff]
    %v4185 = vld [vmem:[#allocation11 + $0x3a0] sm:$0xff]
    %v4186 = vld [vmem:[#allocation11 + $0x3a8] sm:$0xff]
    %v4187 = vld [vmem:[#allocation11 + $0x3b0] sm:$0xff]
    %v4188 = vld [vmem:[#allocation11 + $0x3b8] sm:$0xff]
    %v4189 = vld [vmem:[#allocation11 + $0x3c0] sm:$0xff]
    %v4190 = vld [vmem:[#allocation11 + $0x3c8] sm:$0xff]
    %v4191 = vld [vmem:[#allocation11 + $0x3d0] sm:$0xff]
    %v4192 = vld [vmem:[#allocation11 + $0x3d8] sm:$0xff]
    %v4193 = vld [vmem:[#allocation11 + $0x3e0] sm:$0xff]
    %v4194 = vld [vmem:[#allocation11 + $0x3e8] sm:$0xff]
    %v4195 = vld [vmem:[#allocation11 + $0x3f0] sm:$0xff]
    %v4196 = vld [vmem:[#allocation11 + $0x3f8] sm:$0xff]
    %v4197 = vld [vmem:[#allocation11 + $0x400] sm:$0xff]
    %v4198 = vld [vmem:[#allocation11 + $0x408] sm:$0xff]
    %v4199 = vld [vmem:[#allocation11 + $0x410] sm:$0xff]
    %v4200 = vld [vmem:[#allocation11 + $0x418] sm:$0xff]
    %v4201 = vld [vmem:[#allocation11 + $0x420] sm:$0xff]
    %v4202 = vld [vmem:[#allocation11 + $0x428] sm:$0xff]
    %v4203 = vld [vmem:[#allocation11 + $0x430] sm:$0xff]
    %v4204 = vld [vmem:[#allocation11 + $0x438] sm:$0xff]
    %v4205 = vld [vmem:[#allocation11 + $0x440] sm:$0xff]
    %v4206 = vld [vmem:[#allocation11 + $0x448] sm:$0xff]
    %v4207 = vld [vmem:[#allocation11 + $0x450] sm:$0xff]
    %v4208 = vld [vmem:[#allocation11 + $0x458] sm:$0xff]
    %v4209 = vld [vmem:[#allocation11 + $0x460] sm:$0xff]
    %v4210 = vld [vmem:[#allocation11 + $0x468] sm:$0xff]
    %v4211 = vld [vmem:[#allocation11 + $0x470] sm:$0xff]
    %v4212 = vld [vmem:[#allocation11 + $0x478] sm:$0xff]
    %v4213 = vld [vmem:[#allocation11 + $0x480] sm:$0xff]
    %v4214 = vld [vmem:[#allocation11 + $0x488] sm:$0xff]
    %v4215 = vld [vmem:[#allocation11 + $0x490] sm:$0xff]
    %v4216 = vld [vmem:[#allocation11 + $0x498] sm:$0xff]
    %v4217 = vld [vmem:[#allocation11 + $0x4a0] sm:$0xff]
    %v4218 = vld [vmem:[#allocation11 + $0x4a8] sm:$0xff]
    %v4219 = vld [vmem:[#allocation11 + $0x4b0] sm:$0xff]
    %v4220 = vld [vmem:[#allocation11 + $0x4b8] sm:$0xff]
    %v4221 = vld [vmem:[#allocation11 + $0x4c0] sm:$0xff]
    %v4222 = vld [vmem:[#allocation11 + $0x4c8] sm:$0xff]
    %v4223 = vld [vmem:[#allocation11 + $0x4d0] sm:$0xff]
    %v4224 = vld [vmem:[#allocation11 + $0x4d8] sm:$0xff]
    %v4225 = vld [vmem:[#allocation11 + $0x4e0] sm:$0xff]
    %v4226 = vld [vmem:[#allocation11 + $0x4e8] sm:$0xff]
    %v4227 = vld [vmem:[#allocation11 + $0x4f0] sm:$0xff]
    %v4228 = vld [vmem:[#allocation11 + $0x4f8] sm:$0xff]
    %v4229 = vld [vmem:[#allocation11 + $0x500] sm:$0xff]
    %v4230 = vld [vmem:[#allocation11 + $0x508] sm:$0xff]
    %v4231 = vld [vmem:[#allocation11 + $0x510] sm:$0xff]
    %v4232 = vld [vmem:[#allocation11 + $0x518] sm:$0xff]
    %v4233 = vld [vmem:[#allocation11 + $0x520] sm:$0xff]
    %v4234 = vld [vmem:[#allocation11 + $0x528] sm:$0xff]
    %v4235 = vld [vmem:[#allocation11 + $0x530] sm:$0xff]
    %v4236 = vld [vmem:[#allocation11 + $0x538] sm:$0xff]
    %v4237 = vld [vmem:[#allocation11 + $0x540] sm:$0xff]
    %v4238 = vld [vmem:[#allocation11 + $0x548] sm:$0xff]
    %v4239 = vld [vmem:[#allocation11 + $0x550] sm:$0xff]
    %v4240 = vld [vmem:[#allocation11 + $0x558] sm:$0xff]
    %v4241 = vld [vmem:[#allocation11 + $0x560] sm:$0xff]
    %v4242 = vld [vmem:[#allocation11 + $0x568] sm:$0xff]
    %v4243 = vld [vmem:[#allocation11 + $0x570] sm:$0xff]
    %v4244 = vld [vmem:[#allocation11 + $0x578] sm:$0xff]
    %v4245 = vld [vmem:[#allocation11 + $0x580] sm:$0xff]
    %v4246 = vld [vmem:[#allocation11 + $0x588] sm:$0xff]
    %v4247 = vld [vmem:[#allocation11 + $0x590] sm:$0xff]
    %v4248 = vld [vmem:[#allocation11 + $0x598] sm:$0xff]
    %v4249 = vld [vmem:[#allocation11 + $0x5a0] sm:$0xff]
    %v4250 = vld [vmem:[#allocation11 + $0x5a8] sm:$0xff]
    %v4251 = vld [vmem:[#allocation11 + $0x5b0] sm:$0xff]
    %v4252 = vld [vmem:[#allocation11 + $0x5b8] sm:$0xff]
    %v4253 = vld [vmem:[#allocation11 + $0x5c0] sm:$0xff]
    %v4254 = vld [vmem:[#allocation11 + $0x5c8] sm:$0xff]
    %v4255 = vld [vmem:[#allocation11 + $0x5d0] sm:$0xff]
    %v4256 = vld [vmem:[#allocation11 + $0x5d8] sm:$0xff]
    %v4257 = vld [vmem:[#allocation11 + $0x5e0] sm:$0xff]
    %v4258 = vld [vmem:[#allocation11 + $0x5e8] sm:$0xff]
    %v4259 = vld [vmem:[#allocation11 + $0x5f0] sm:$0xff]
    %v4260 = vld [vmem:[#allocation11 + $0x5f8] sm:$0xff]
    %v4261 = vld [vmem:[#allocation11 + $0x600] sm:$0xff]
    %v4262 = vld [vmem:[#allocation11 + $0x608] sm:$0xff]
    %v4263 = vld [vmem:[#allocation11 + $0x610] sm:$0xff]
    %v4264 = vld [vmem:[#allocation11 + $0x618] sm:$0xff]
    %v4265 = vld [vmem:[#allocation11 + $0x620] sm:$0xff]
    %v4266 = vld [vmem:[#allocation11 + $0x628] sm:$0xff]
    %v4267 = vld [vmem:[#allocation11 + $0x630] sm:$0xff]
    %v4268 = vld [vmem:[#allocation11 + $0x638] sm:$0xff]
    %v4269 = vld [vmem:[#allocation11 + $0x640] sm:$0xff]
    %v4270 = vld [vmem:[#allocation11 + $0x648] sm:$0xff]
    %v4271 = vld [vmem:[#allocation11 + $0x650] sm:$0xff]
    %v4272 = vld [vmem:[#allocation11 + $0x658] sm:$0xff]
    %v4273 = vld [vmem:[#allocation11 + $0x660] sm:$0xff]
    %v4274 = vld [vmem:[#allocation11 + $0x668] sm:$0xff]
    %v4275 = vld [vmem:[#allocation11 + $0x670] sm:$0xff]
    %v4276 = vld [vmem:[#allocation11 + $0x678] sm:$0xff]
    %v4277 = vld [vmem:[#allocation11 + $0x680] sm:$0xff]
    %v4278 = vld [vmem:[#allocation11 + $0x688] sm:$0xff]
    %v4279 = vld [vmem:[#allocation11 + $0x690] sm:$0xff]
    %v4280 = vld [vmem:[#allocation11 + $0x698] sm:$0xff]
    %v4281 = vld [vmem:[#allocation11 + $0x6a0] sm:$0xff]
    %v4282 = vld [vmem:[#allocation11 + $0x6a8] sm:$0xff]
    %v4283 = vld [vmem:[#allocation11 + $0x6b0] sm:$0xff]
    %v4284 = vld [vmem:[#allocation11 + $0x6b8] sm:$0xff]
    %v4285 = vld [vmem:[#allocation11 + $0x6c0] sm:$0xff]
    %v4286 = vld [vmem:[#allocation11 + $0x6c8] sm:$0xff]
    %v4287 = vld [vmem:[#allocation11 + $0x6d0] sm:$0xff]
    %v4288 = vld [vmem:[#allocation11 + $0x6d8] sm:$0xff]
    %v4289 = vld [vmem:[#allocation11 + $0x6e0] sm:$0xff]
    %v4290 = vld [vmem:[#allocation11 + $0x6e8] sm:$0xff]
    %v4291 = vld [vmem:[#allocation11 + $0x6f0] sm:$0xff]
    %v4292 = vld [vmem:[#allocation11 + $0x6f8] sm:$0xff]
    %v4293 = vld [vmem:[#allocation11 + $0x700] sm:$0xff]
    %v4294 = vld [vmem:[#allocation11 + $0x708] sm:$0xff]
    %v4295 = vld [vmem:[#allocation11 + $0x710] sm:$0xff]
    %v4296 = vld [vmem:[#allocation11 + $0x718] sm:$0xff]
    %v4297 = vld [vmem:[#allocation11 + $0x720] sm:$0xff]
    %v4298 = vld [vmem:[#allocation11 + $0x728] sm:$0xff]
    %v4299 = vld [vmem:[#allocation11 + $0x730] sm:$0xff]
    %v4300 = vld [vmem:[#allocation11 + $0x738] sm:$0xff]
    %v4301 = vld [vmem:[#allocation11 + $0x740] sm:$0xff]
    %v4302 = vld [vmem:[#allocation11 + $0x748] sm:$0xff]
    %v4303 = vld [vmem:[#allocation11 + $0x750] sm:$0xff]
    %v4304 = vld [vmem:[#allocation11 + $0x758] sm:$0xff]
    %v4305 = vld [vmem:[#allocation11 + $0x760] sm:$0xff]
    %v4306 = vld [vmem:[#allocation11 + $0x768] sm:$0xff]
    %v4307 = vld [vmem:[#allocation11 + $0x770] sm:$0xff]
    %v4308 = vld [vmem:[#allocation11 + $0x778] sm:$0xff]
    %v4309 = vld [vmem:[#allocation11 + $0x780] sm:$0xff]
    %v4310 = vld [vmem:[#allocation11 + $0x788] sm:$0xff]
    %v4311 = vld [vmem:[#allocation11 + $0x790] sm:$0xff]
    %v4312 = vld [vmem:[#allocation11 + $0x798] sm:$0xff]
    %v4313 = vld [vmem:[#allocation11 + $0x7a0] sm:$0xff]
    %v4314 = vld [vmem:[#allocation11 + $0x7a8] sm:$0xff]
    %v4315 = vld [vmem:[#allocation11 + $0x7b0] sm:$0xff]
    %v4316 = vld [vmem:[#allocation11 + $0x7b8] sm:$0xff]
    %v4317 = vld [vmem:[#allocation11 + $0x7c0] sm:$0xff]
    %v4318 = vld [vmem:[#allocation11 + $0x7c8] sm:$0xff]
    %v4319 = vld [vmem:[#allocation11 + $0x7d0] sm:$0xff]
    %v4320 = vld [vmem:[#allocation11 + $0x7d8] sm:$0xff]
    %v4321 = vld [vmem:[#allocation11 + $0x7e0] sm:$0xff]
    %v4322 = vld [vmem:[#allocation11 + $0x7e8] sm:$0xff]
    %v4323 = vld [vmem:[#allocation11 + $0x7f0] sm:$0xff]
    %v4324 = vld [vmem:[#allocation11 + $0x7f8] sm:$0xff]
    %v4325 = vld [vmem:[#allocation11 + $0x800] sm:$0xff]
    %v4326 = vld [vmem:[#allocation11 + $0x808] sm:$0xff]
    %v4327 = vld [vmem:[#allocation11 + $0x810] sm:$0xff]
    %v4328 = vld [vmem:[#allocation11 + $0x818] sm:$0xff]
    %v4329 = vld [vmem:[#allocation11 + $0x820] sm:$0xff]
    %v4330 = vld [vmem:[#allocation11 + $0x828] sm:$0xff]
    %v4331 = vld [vmem:[#allocation11 + $0x830] sm:$0xff]
    %v4332 = vld [vmem:[#allocation11 + $0x838] sm:$0xff]
    %v4333 = vld [vmem:[#allocation11 + $0x840] sm:$0xff]
    %v4334 = vld [vmem:[#allocation11 + $0x848] sm:$0xff]
    %v4335 = vld [vmem:[#allocation11 + $0x850] sm:$0xff]
    %v4336 = vld [vmem:[#allocation11 + $0x858] sm:$0xff]
    %v4337 = vld [vmem:[#allocation11 + $0x860] sm:$0xff]
    %v4338 = vld [vmem:[#allocation11 + $0x868] sm:$0xff]
    %v4339 = vld [vmem:[#allocation11 + $0x870] sm:$0xff]
    %v4340 = vld [vmem:[#allocation11 + $0x878] sm:$0xff]
    %v4341 = vld [vmem:[#allocation11 + $0x880] sm:$0xff]
    %v4342 = vld [vmem:[#allocation11 + $0x888] sm:$0xff]
    %v4343 = vld [vmem:[#allocation11 + $0x890] sm:$0xff]
    %v4344 = vld [vmem:[#allocation11 + $0x898] sm:$0xff]
    %v4345 = vld [vmem:[#allocation11 + $0x8a0] sm:$0xff]
    %v4346 = vld [vmem:[#allocation11 + $0x8a8] sm:$0xff]
    %v4347 = vld [vmem:[#allocation11 + $0x8b0] sm:$0xff]
    %v4348 = vld [vmem:[#allocation11 + $0x8b8] sm:$0xff]
    %v4349 = vld [vmem:[#allocation11 + $0x8c0] sm:$0xff]
    %v4350 = vld [vmem:[#allocation11 + $0x8c8] sm:$0xff]
    %v4351 = vld [vmem:[#allocation11 + $0x8d0] sm:$0xff]
    %v4352 = vld [vmem:[#allocation11 + $0x8d8] sm:$0xff]
    %v4353 = vld [vmem:[#allocation11 + $0x8e0] sm:$0xff]
    %v4354 = vld [vmem:[#allocation11 + $0x8e8] sm:$0xff]
    %v4355 = vld [vmem:[#allocation11 + $0x8f0] sm:$0xff]
    %v4356 = vld [vmem:[#allocation11 + $0x8f8] sm:$0xff]
    %v4357 = vld [vmem:[#allocation11 + $0x900] sm:$0xff]
    %v4358 = vld [vmem:[#allocation11 + $0x908] sm:$0xff]
    %v4359 = vld [vmem:[#allocation11 + $0x910] sm:$0xff]
    %v4360 = vld [vmem:[#allocation11 + $0x918] sm:$0xff]
    %v4361 = vld [vmem:[#allocation11 + $0x920] sm:$0xff]
    %v4362 = vld [vmem:[#allocation11 + $0x928] sm:$0xff]
    %v4363 = vld [vmem:[#allocation11 + $0x930] sm:$0xff]
    %v4364 = vld [vmem:[#allocation11 + $0x938] sm:$0xff]
    %v4365 = vld [vmem:[#allocation11 + $0x940] sm:$0xff]
    %v4366 = vld [vmem:[#allocation11 + $0x948] sm:$0xff]
    %v4367 = vld [vmem:[#allocation11 + $0x950] sm:$0xff]
    %v4368 = vld [vmem:[#allocation11 + $0x958] sm:$0xff]
    %v4369 = vld [vmem:[#allocation11 + $0x960] sm:$0xff]
    %v4370 = vld [vmem:[#allocation11 + $0x968] sm:$0xff]
    %v4371 = vld [vmem:[#allocation11 + $0x970] sm:$0xff]
    %v4372 = vld [vmem:[#allocation11 + $0x978] sm:$0xff]
    %v4373 = vld [vmem:[#allocation11 + $0x980] sm:$0xff]
    %v4374 = vld [vmem:[#allocation11 + $0x988] sm:$0xff]
    %v4375 = vld [vmem:[#allocation11 + $0x990] sm:$0xff]
    %v4376 = vld [vmem:[#allocation11 + $0x998] sm:$0xff]
    %v4377 = vld [vmem:[#allocation11 + $0x9a0] sm:$0xff]
    %v4378 = vld [vmem:[#allocation11 + $0x9a8] sm:$0xff]
    %v4379 = vld [vmem:[#allocation11 + $0x9b0] sm:$0xff]
    %v4380 = vld [vmem:[#allocation11 + $0x9b8] sm:$0xff]
    %v4381 = vld [vmem:[#allocation11 + $0x9c0] sm:$0xff]
    %v4382 = vld [vmem:[#allocation11 + $0x9c8] sm:$0xff]
    %v4383 = vld [vmem:[#allocation11 + $0x9d0] sm:$0xff]
    %v4384 = vld [vmem:[#allocation11 + $0x9d8] sm:$0xff]
    %v4385 = vld [vmem:[#allocation11 + $0x9e0] sm:$0xff]
    %v4386 = vld [vmem:[#allocation11 + $0x9e8] sm:$0xff]
    %v4387 = vld [vmem:[#allocation11 + $0x9f0] sm:$0xff]
    %v4388 = vld [vmem:[#allocation11 + $0x9f8] sm:$0xff]
    %v4389 = vld [vmem:[#allocation11 + $0xa00] sm:$0xff]
    %v4390 = vld [vmem:[#allocation11 + $0xa08] sm:$0xff]
    %v4391 = vld [vmem:[#allocation11 + $0xa10] sm:$0xff]
    %v4392 = vld [vmem:[#allocation11 + $0xa18] sm:$0xff]
    %v4393 = vld [vmem:[#allocation11 + $0xa20] sm:$0xff]
    %v4394 = vld [vmem:[#allocation11 + $0xa28] sm:$0xff]
    %v4395 = vld [vmem:[#allocation11 + $0xa30] sm:$0xff]
    %v4396 = vld [vmem:[#allocation11 + $0xa38] sm:$0xff]
    %v4397 = vld [vmem:[#allocation11 + $0xa40] sm:$0xff]
    %v4398 = vld [vmem:[#allocation11 + $0xa48] sm:$0xff]
    %v4399 = vld [vmem:[#allocation11 + $0xa50] sm:$0xff]
    %v4400 = vld [vmem:[#allocation11 + $0xa58] sm:$0xff]
    %v4401 = vld [vmem:[#allocation11 + $0xa60] sm:$0xff]
    %v4402 = vld [vmem:[#allocation11 + $0xa68] sm:$0xff]
    %v4403 = vld [vmem:[#allocation11 + $0xa70] sm:$0xff]
    %v4404 = vld [vmem:[#allocation11 + $0xa78] sm:$0xff]
    %v4405 = vld [vmem:[#allocation11 + $0xa80] sm:$0xff]
    %v4406 = vld [vmem:[#allocation11 + $0xa88] sm:$0xff]
    %v4407 = vld [vmem:[#allocation11 + $0xa90] sm:$0xff]
    %v4408 = vld [vmem:[#allocation11 + $0xa98] sm:$0xff]
    %v4409 = vld [vmem:[#allocation11 + $0xaa0] sm:$0xff]
    %v4410 = vld [vmem:[#allocation11 + $0xaa8] sm:$0xff]
    %v4411 = vld [vmem:[#allocation11 + $0xab0] sm:$0xff]
    %v4412 = vld [vmem:[#allocation11 + $0xab8] sm:$0xff]
    %v4413 = vld [vmem:[#allocation11 + $0xac0] sm:$0xff]
    %v4414 = vld [vmem:[#allocation11 + $0xac8] sm:$0xff]
    %v4415 = vld [vmem:[#allocation11 + $0xad0] sm:$0xff]
    %v4416 = vld [vmem:[#allocation11 + $0xad8] sm:$0xff]
    %v4417 = vld [vmem:[#allocation11 + $0xae0] sm:$0xff]
    %v4418 = vld [vmem:[#allocation11 + $0xae8] sm:$0xff]
    %v4419 = vld [vmem:[#allocation11 + $0xaf0] sm:$0xff]
    %v4420 = vld [vmem:[#allocation11 + $0xaf8] sm:$0xff]
    %v4421 = vld [vmem:[#allocation11 + $0xb00] sm:$0xff]
    %v4422 = vld [vmem:[#allocation11 + $0xb08] sm:$0xff]
    %v4423 = vld [vmem:[#allocation11 + $0xb10] sm:$0xff]
    %v4424 = vld [vmem:[#allocation11 + $0xb18] sm:$0xff]
    %v4425 = vld [vmem:[#allocation11 + $0xb20] sm:$0xff]
    %v4426 = vld [vmem:[#allocation11 + $0xb28] sm:$0xff]
    %v4427 = vld [vmem:[#allocation11 + $0xb30] sm:$0xff]
    %v4428 = vld [vmem:[#allocation11 + $0xb38] sm:$0xff]
    %v4429 = vld [vmem:[#allocation11 + $0xb40] sm:$0xff]
    %v4430 = vld [vmem:[#allocation11 + $0xb48] sm:$0xff]
    %v4431 = vld [vmem:[#allocation11 + $0xb50] sm:$0xff]
    %v4432 = vld [vmem:[#allocation11 + $0xb58] sm:$0xff]
    %v4433 = vld [vmem:[#allocation11 + $0xb60] sm:$0xff]
    %v4434 = vld [vmem:[#allocation11 + $0xb68] sm:$0xff]
    %v4435 = vld [vmem:[#allocation11 + $0xb70] sm:$0xff]
    %v4436 = vld [vmem:[#allocation11 + $0xb78] sm:$0xff]
    %v4437 = vld [vmem:[#allocation11 + $0xb80] sm:$0xff]
    %v4438 = vld [vmem:[#allocation11 + $0xb88] sm:$0xff]
    %v4439 = vld [vmem:[#allocation11 + $0xb90] sm:$0xff]
    %v4440 = vld [vmem:[#allocation11 + $0xb98] sm:$0xff]
    %v4441 = vld [vmem:[#allocation11 + $0xba0] sm:$0xff]
    %v4442 = vld [vmem:[#allocation11 + $0xba8] sm:$0xff]
    %v4443 = vld [vmem:[#allocation11 + $0xbb0] sm:$0xff]
    %v4444 = vld [vmem:[#allocation11 + $0xbb8] sm:$0xff]
    %v4445 = vld [vmem:[#allocation11 + $0xbc0] sm:$0xff]
    %v4446 = vld [vmem:[#allocation11 + $0xbc8] sm:$0xff]
    %v4447 = vld [vmem:[#allocation11 + $0xbd0] sm:$0xff]
    %v4448 = vld [vmem:[#allocation11 + $0xbd8] sm:$0xff]
    %v4449 = vld [vmem:[#allocation11 + $0xbe0] sm:$0xff]
    %v4450 = vld [vmem:[#allocation11 + $0xbe8] sm:$0xff]
    %v4451 = vld [vmem:[#allocation11 + $0xbf0] sm:$0xff]
    %v4452 = vld [vmem:[#allocation11 + $0xbf8] sm:$0xff]
    %v4453 = vld [vmem:[#allocation11 + $0xc00] sm:$0xff]
    %v4454 = vld [vmem:[#allocation11 + $0xc08] sm:$0xff]
    %v4455 = vld [vmem:[#allocation11 + $0xc10] sm:$0xff]
    %v4456 = vld [vmem:[#allocation11 + $0xc18] sm:$0xff]
    %v4457 = vld [vmem:[#allocation11 + $0xc20] sm:$0xff]
    %v4458 = vld [vmem:[#allocation11 + $0xc28] sm:$0xff]
    %v4459 = vld [vmem:[#allocation11 + $0xc30] sm:$0xff]
    %v4460 = vld [vmem:[#allocation11 + $0xc38] sm:$0xff]
    %v4461 = vld [vmem:[#allocation11 + $0xc40] sm:$0xff]
    %v4462 = vld [vmem:[#allocation11 + $0xc48] sm:$0xff]
    %v4463 = vld [vmem:[#allocation11 + $0xc50] sm:$0xff]
    %v4464 = vld [vmem:[#allocation11 + $0xc58] sm:$0xff]
    %v4465 = vld [vmem:[#allocation11 + $0xc60] sm:$0xff]
    %v4466 = vld [vmem:[#allocation11 + $0xc68] sm:$0xff]
    %v4467 = vld [vmem:[#allocation11 + $0xc70] sm:$0xff]
    %v4468 = vld [vmem:[#allocation11 + $0xc78] sm:$0xff]
    %v4469 = vld [vmem:[#allocation11 + $0xc80] sm:$0xff]
    %v4470 = vld [vmem:[#allocation11 + $0xc88] sm:$0xff]
    %v4471 = vld [vmem:[#allocation11 + $0xc90] sm:$0xff]
    %v4472 = vld [vmem:[#allocation11 + $0xc98] sm:$0xff]
    %v4473 = vld [vmem:[#allocation11 + $0xca0] sm:$0xff]
    %v4474 = vld [vmem:[#allocation11 + $0xca8] sm:$0xff]
    %v4475 = vld [vmem:[#allocation11 + $0xcb0] sm:$0xff]
    %v4476 = vld [vmem:[#allocation11 + $0xcb8] sm:$0xff]
    %v4477 = vld [vmem:[#allocation11 + $0xcc0] sm:$0xff]
    %v4478 = vld [vmem:[#allocation11 + $0xcc8] sm:$0xff]
    %v4479 = vld [vmem:[#allocation11 + $0xcd0] sm:$0xff]
    %v4480 = vld [vmem:[#allocation11 + $0xcd8] sm:$0xff]
    %v4481 = vld [vmem:[#allocation11 + $0xce0] sm:$0xff]
    %v4482 = vld [vmem:[#allocation11 + $0xce8] sm:$0xff]
    %v4483 = vld [vmem:[#allocation11 + $0xcf0] sm:$0xff]
    %v4484 = vld [vmem:[#allocation11 + $0xcf8] sm:$0xff]
    %v4485 = vld [vmem:[#allocation11 + $0xd00] sm:$0xff]
    %v4486 = vld [vmem:[#allocation11 + $0xd08] sm:$0xff]
    %v4487 = vld [vmem:[#allocation11 + $0xd10] sm:$0xff]
    %v4488 = vld [vmem:[#allocation11 + $0xd18] sm:$0xff]
    %v4489 = vld [vmem:[#allocation11 + $0xd20] sm:$0xff]
    %v4490 = vld [vmem:[#allocation11 + $0xd28] sm:$0xff]
    %v4491 = vld [vmem:[#allocation11 + $0xd30] sm:$0xff]
    %v4492 = vld [vmem:[#allocation11 + $0xd38] sm:$0xff]
    %v4493 = vld [vmem:[#allocation11 + $0xd40] sm:$0xff]
    %v4494 = vld [vmem:[#allocation11 + $0xd48] sm:$0xff]
    %v4495 = vld [vmem:[#allocation11 + $0xd50] sm:$0xff]
    %v4496 = vld [vmem:[#allocation11 + $0xd58] sm:$0xff]
    %v4497 = vld [vmem:[#allocation11 + $0xd60] sm:$0xff]
    %v4498 = vld [vmem:[#allocation11 + $0xd68] sm:$0xff]
    %v4499 = vld [vmem:[#allocation11 + $0xd70] sm:$0xff]
    %v4500 = vld [vmem:[#allocation11 + $0xd78] sm:$0xff]
    %v4501 = vld [vmem:[#allocation11 + $0xd80] sm:$0xff]
    %v4502 = vld [vmem:[#allocation11 + $0xd88] sm:$0xff]
    %v4503 = vld [vmem:[#allocation11 + $0xd90] sm:$0xff]
    %v4504 = vld [vmem:[#allocation11 + $0xd98] sm:$0xff]
    %v4505 = vld [vmem:[#allocation11 + $0xda0] sm:$0xff]
    %v4506 = vld [vmem:[#allocation11 + $0xda8] sm:$0xff]
    %v4507 = vld [vmem:[#allocation11 + $0xdb0] sm:$0xff]
    %v4508 = vld [vmem:[#allocation11 + $0xdb8] sm:$0xff]
    %v4509 = vld [vmem:[#allocation11 + $0xdc0] sm:$0xff]
    %v4510 = vld [vmem:[#allocation11 + $0xdc8] sm:$0xff]
    %v4511 = vld [vmem:[#allocation11 + $0xdd0] sm:$0xff]
    %v4512 = vld [vmem:[#allocation11 + $0xdd8] sm:$0xff]
    %v4513 = vld [vmem:[#allocation11 + $0xde0] sm:$0xff]
    %v4514 = vld [vmem:[#allocation11 + $0xde8] sm:$0xff]
    %v4515 = vld [vmem:[#allocation11 + $0xdf0] sm:$0xff]
    %v4516 = vld [vmem:[#allocation11 + $0xdf8] sm:$0xff]
    %v4517 = vld [vmem:[#allocation11 + $0xe00] sm:$0xff]
    %v4518 = vld [vmem:[#allocation11 + $0xe08] sm:$0xff]
    %v4519 = vld [vmem:[#allocation11 + $0xe10] sm:$0xff]
    %v4520 = vld [vmem:[#allocation11 + $0xe18] sm:$0xff]
    %v4521 = vld [vmem:[#allocation11 + $0xe20] sm:$0xff]
    %v4522 = vld [vmem:[#allocation11 + $0xe28] sm:$0xff]
    %v4523 = vld [vmem:[#allocation11 + $0xe30] sm:$0xff]
    %v4524 = vld [vmem:[#allocation11 + $0xe38] sm:$0xff]
    %v4525 = vld [vmem:[#allocation11 + $0xe40] sm:$0xff]
    %v4526 = vld [vmem:[#allocation11 + $0xe48] sm:$0xff]
    %v4527 = vld [vmem:[#allocation11 + $0xe50] sm:$0xff]
    %v4528 = vld [vmem:[#allocation11 + $0xe58] sm:$0xff]
    %v4529 = vld [vmem:[#allocation11 + $0xe60] sm:$0xff]
    %v4530 = vld [vmem:[#allocation11 + $0xe68] sm:$0xff]
    %v4531 = vld [vmem:[#allocation11 + $0xe70] sm:$0xff]
    %v4532 = vld [vmem:[#allocation11 + $0xe78] sm:$0xff]
    %v4533 = vld [vmem:[#allocation11 + $0xe80] sm:$0xff]
    %v4534 = vld [vmem:[#allocation11 + $0xe88] sm:$0xff]
    %v4535 = vld [vmem:[#allocation11 + $0xe90] sm:$0xff]
    %v4536 = vld [vmem:[#allocation11 + $0xe98] sm:$0xff]
    %v4537 = vld [vmem:[#allocation11 + $0xea0] sm:$0xff]
    %v4538 = vld [vmem:[#allocation11 + $0xea8] sm:$0xff]
    %v4539 = vld [vmem:[#allocation11 + $0xeb0] sm:$0xff]
    %v4540 = vld [vmem:[#allocation11 + $0xeb8] sm:$0xff]
    %v4541 = vld [vmem:[#allocation11 + $0xec0] sm:$0xff]
    %v4542 = vld [vmem:[#allocation11 + $0xec8] sm:$0xff]
    %v4543 = vld [vmem:[#allocation11 + $0xed0] sm:$0xff]
    %v4544 = vld [vmem:[#allocation11 + $0xed8] sm:$0xff]
    %v4545 = vld [vmem:[#allocation11 + $0xee0] sm:$0xff]
    %v4546 = vld [vmem:[#allocation11 + $0xee8] sm:$0xff]
    %v4547 = vld [vmem:[#allocation11 + $0xef0] sm:$0xff]
    %v4548 = vld [vmem:[#allocation11 + $0xef8] sm:$0xff]
    %v4549 = vld [vmem:[#allocation11 + $0xf00] sm:$0xff]
    %v4550 = vld [vmem:[#allocation11 + $0xf08] sm:$0xff]
    %v4551 = vld [vmem:[#allocation11 + $0xf10] sm:$0xff]
    %v4552 = vld [vmem:[#allocation11 + $0xf18] sm:$0xff]
    %v4553 = vld [vmem:[#allocation11 + $0xf20] sm:$0xff]
    %v4554 = vld [vmem:[#allocation11 + $0xf28] sm:$0xff]
    %v4555 = vld [vmem:[#allocation11 + $0xf30] sm:$0xff]
    %v4556 = vld [vmem:[#allocation11 + $0xf38] sm:$0xff]
    %v4557 = vld [vmem:[#allocation11 + $0xf40] sm:$0xff]
    %v4558 = vld [vmem:[#allocation11 + $0xf48] sm:$0xff]
    %v4559 = vld [vmem:[#allocation11 + $0xf50] sm:$0xff]
    %v4560 = vld [vmem:[#allocation11 + $0xf58] sm:$0xff]
    %v4561 = vld [vmem:[#allocation11 + $0xf60] sm:$0xff]
    %v4562 = vld [vmem:[#allocation11 + $0xf68] sm:$0xff]
    %v4563 = vld [vmem:[#allocation11 + $0xf70] sm:$0xff]
    %v4564 = vld [vmem:[#allocation11 + $0xf78] sm:$0xff]
    %v4565 = vld [vmem:[#allocation11 + $0xf80] sm:$0xff]
    %v4566 = vld [vmem:[#allocation11 + $0xf88] sm:$0xff]
    %v4567 = vld [vmem:[#allocation11 + $0xf90] sm:$0xff]
    %v4568 = vld [vmem:[#allocation11 + $0xf98] sm:$0xff]
    %v4569 = vld [vmem:[#allocation11 + $0xfa0] sm:$0xff]
    %v4570 = vld [vmem:[#allocation11 + $0xfa8] sm:$0xff]
    %v4571 = vld [vmem:[#allocation11 + $0xfb0] sm:$0xff]
    %v4572 = vld [vmem:[#allocation11 + $0xfb8] sm:$0xff]
    %v4573 = vld [vmem:[#allocation11 + $0xfc0] sm:$0xff]
    %v4574 = vld [vmem:[#allocation11 + $0xfc8] sm:$0xff]
    %v4575 = vld [vmem:[#allocation11 + $0xfd0] sm:$0xff]
    %v4576 = vld [vmem:[#allocation11 + $0xfd8] sm:$0xff]
    %v4577 = vld [vmem:[#allocation11 + $0xfe0] sm:$0xff]
    %v4578 = vld [vmem:[#allocation11 + $0xfe8] sm:$0xff]
    %v4579 = vld [vmem:[#allocation11 + $0xff0] sm:$0xff]
    %v4580 = vld [vmem:[#allocation11 + $0xff8] sm:$0xff]
    %v4581 = vld [vmem:[#allocation11 + $0x1000] sm:$0xff]
    %v4582 = vld [vmem:[#allocation11 + $0x1008] sm:$0xff]
    %v4583 = vld [vmem:[#allocation11 + $0x1010] sm:$0xff]
    %v4584 = vld [vmem:[#allocation11 + $0x1018] sm:$0xff]
    %v4585 = vld [vmem:[#allocation11 + $0x1020] sm:$0xff]
    %v4586 = vld [vmem:[#allocation11 + $0x1028] sm:$0xff]
    %v4587 = vld [vmem:[#allocation11 + $0x1030] sm:$0xff]
    %v4588 = vld [vmem:[#allocation11 + $0x1038] sm:$0xff]
    %v4589 = vld [vmem:[#allocation11 + $0x1040] sm:$0xff]
    %v4590 = vld [vmem:[#allocation11 + $0x1048] sm:$0xff]
    %v4591 = vld [vmem:[#allocation11 + $0x1050] sm:$0xff]
    %v4592 = vld [vmem:[#allocation11 + $0x1058] sm:$0xff]
    %v4593 = vld [vmem:[#allocation11 + $0x1060] sm:$0xff]
    %v4594 = vld [vmem:[#allocation11 + $0x1068] sm:$0xff]
    %v4595 = vld [vmem:[#allocation11 + $0x1070] sm:$0xff]
    %v4596 = vld [vmem:[#allocation11 + $0x1078] sm:$0xff]
    %v4597 = vld [vmem:[#allocation11 + $0x1080] sm:$0xff]
    %v4598 = vld [vmem:[#allocation11 + $0x1088] sm:$0xff]
    %v4599 = vld [vmem:[#allocation11 + $0x1090] sm:$0xff]
    %v4600 = vld [vmem:[#allocation11 + $0x1098] sm:$0xff]
    %v4601 = vld [vmem:[#allocation11 + $0x10a0] sm:$0xff]
    %v4602 = vld [vmem:[#allocation11 + $0x10a8] sm:$0xff]
    %v4603 = vld [vmem:[#allocation11 + $0x10b0] sm:$0xff]
    %v4604 = vld [vmem:[#allocation11 + $0x10b8] sm:$0xff]
    %v4605 = vld [vmem:[#allocation11 + $0x10c0] sm:$0xff]
    %v4606 = vld [vmem:[#allocation11 + $0x10c8] sm:$0xff]
    %v4607 = vld [vmem:[#allocation11 + $0x10d0] sm:$0xff]
    %v4608 = vld [vmem:[#allocation11 + $0x10d8] sm:$0xff]
    %v4609 = vld [vmem:[#allocation11 + $0x10e0] sm:$0xff]
    %v4610 = vld [vmem:[#allocation11 + $0x10e8] sm:$0xff]
    %v4611 = vld [vmem:[#allocation11 + $0x10f0] sm:$0xff]
    %v4612 = vld [vmem:[#allocation11 + $0x10f8] sm:$0xff]
    %v4613 = vld [vmem:[#allocation11 + $0x1100] sm:$0xff]
    %v4614 = vld [vmem:[#allocation11 + $0x1108] sm:$0xff]
    %v4615 = vld [vmem:[#allocation11 + $0x1110] sm:$0xff]
    %v4616 = vld [vmem:[#allocation11 + $0x1118] sm:$0xff]
    %v4617 = vld [vmem:[#allocation11 + $0x1120] sm:$0xff]
    %v4618 = vld [vmem:[#allocation11 + $0x1128] sm:$0xff]
    %v4619 = vld [vmem:[#allocation11 + $0x1130] sm:$0xff]
    %v4620 = vld [vmem:[#allocation11 + $0x1138] sm:$0xff]
    %v4621 = vld [vmem:[#allocation11 + $0x1140] sm:$0xff]
    %v4622 = vld [vmem:[#allocation11 + $0x1148] sm:$0xff]
    %v4623 = vld [vmem:[#allocation11 + $0x1150] sm:$0xff]
    %v4624 = vld [vmem:[#allocation11 + $0x1158] sm:$0xff]
    %v4625 = vld [vmem:[#allocation11 + $0x1160] sm:$0xff]
    %v4626 = vld [vmem:[#allocation11 + $0x1168] sm:$0xff]
    %v4627 = vld [vmem:[#allocation11 + $0x1170] sm:$0xff]
    %v4628 = vld [vmem:[#allocation11 + $0x1178] sm:$0xff]
    %v4629 = vld [vmem:[#allocation11 + $0x1180] sm:$0xff]
    %v4630 = vld [vmem:[#allocation11 + $0x1188] sm:$0xff]
    %v4631 = vld [vmem:[#allocation11 + $0x1190] sm:$0xff]
    %v4632 = vld [vmem:[#allocation11 + $0x1198] sm:$0xff]
    %v4633 = vld [vmem:[#allocation11 + $0x11a0] sm:$0xff]
    %v4634 = vld [vmem:[#allocation11 + $0x11a8] sm:$0xff]
    %v4635 = vld [vmem:[#allocation11 + $0x11b0] sm:$0xff]
    %v4636 = vld [vmem:[#allocation11 + $0x11b8] sm:$0xff]
    %v4637 = vld [vmem:[#allocation11 + $0x11c0] sm:$0xff]
    %v4638 = vld [vmem:[#allocation11 + $0x11c8] sm:$0xff]
    %v4639 = vld [vmem:[#allocation11 + $0x11d0] sm:$0xff]
    %v4640 = vld [vmem:[#allocation11 + $0x11d8] sm:$0xff]
    %v4641 = vld [vmem:[#allocation11 + $0x11e0] sm:$0xff]
    %v4642 = vld [vmem:[#allocation11 + $0x11e8] sm:$0xff]
    %v4643 = vld [vmem:[#allocation11 + $0x11f0] sm:$0xff]
    %v4644 = vld [vmem:[#allocation11 + $0x11f8] sm:$0xff]
    %v4645 = vld [vmem:[#allocation11 + $0x1200] sm:$0xff]
    %v4646 = vld [vmem:[#allocation11 + $0x1208] sm:$0xff]
    %v4647 = vld [vmem:[#allocation11 + $0x1210] sm:$0xff]
    %v4648 = vld [vmem:[#allocation11 + $0x1218] sm:$0xff]
    %v4649 = vld [vmem:[#allocation11 + $0x1220] sm:$0xff]
    %v4650 = vld [vmem:[#allocation11 + $0x1228] sm:$0xff]
    %v4651 = vld [vmem:[#allocation11 + $0x1230] sm:$0xff]
    %v4652 = vld [vmem:[#allocation11 + $0x1238] sm:$0xff]
    %v4653 = vld [vmem:[#allocation11 + $0x1240] sm:$0xff]
    %v4654 = vld [vmem:[#allocation11 + $0x1248] sm:$0xff]
    %v4655 = vld [vmem:[#allocation11 + $0x1250] sm:$0xff]
    %v4656 = vld [vmem:[#allocation11 + $0x1258] sm:$0xff]
    %v4657 = vld [vmem:[#allocation11 + $0x1260] sm:$0xff]
    %v4658 = vld [vmem:[#allocation11 + $0x1268] sm:$0xff]
    %v4659 = vld [vmem:[#allocation11 + $0x1270] sm:$0xff]
    %v4660 = vld [vmem:[#allocation11 + $0x1278] sm:$0xff]
    %v4661 = vld [vmem:[#allocation11 + $0x1280] sm:$0xff]
    %v4662 = vld [vmem:[#allocation11 + $0x1288] sm:$0xff]
    %v4663 = vld [vmem:[#allocation11 + $0x1290] sm:$0xff]
    %v4664 = vld [vmem:[#allocation11 + $0x1298] sm:$0xff]
    %v4665 = vld [vmem:[#allocation11 + $0x12a0] sm:$0xff]
    %v4666 = vld [vmem:[#allocation11 + $0x12a8] sm:$0xff]
    %v4667 = vld [vmem:[#allocation11 + $0x12b0] sm:$0xff]
    %v4668 = vld [vmem:[#allocation11 + $0x12b8] sm:$0xff]
    %v4669 = vld [vmem:[#allocation11 + $0x12c0] sm:$0xff]
    %v4670 = vld [vmem:[#allocation11 + $0x12c8] sm:$0xff]
    %v4671 = vld [vmem:[#allocation11 + $0x12d0] sm:$0xff]
    %v4672 = vld [vmem:[#allocation11 + $0x12d8] sm:$0xff]
    %v4673 = vld [vmem:[#allocation11 + $0x12e0] sm:$0xff]
    %v4674 = vld [vmem:[#allocation11 + $0x12e8] sm:$0xff]
    %v4675 = vld [vmem:[#allocation11 + $0x12f0] sm:$0xff]
    %v4676 = vld [vmem:[#allocation11 + $0x12f8] sm:$0xff]
    %v4677 = vld [vmem:[#allocation11 + $0x1300] sm:$0xff]
    %v4678 = vld [vmem:[#allocation11 + $0x1308] sm:$0xff]
    %v4679 = vld [vmem:[#allocation11 + $0x1310] sm:$0xff]
    %v4680 = vld [vmem:[#allocation11 + $0x1318] sm:$0xff]
    %v4681 = vld [vmem:[#allocation11 + $0x1320] sm:$0xff]
    %v4682 = vld [vmem:[#allocation11 + $0x1328] sm:$0xff]
    %v4683 = vld [vmem:[#allocation11 + $0x1330] sm:$0xff]
    %v4684 = vld [vmem:[#allocation11 + $0x1338] sm:$0xff]
    %v4685 = vld [vmem:[#allocation11 + $0x1340] sm:$0xff]
    %v4686 = vld [vmem:[#allocation11 + $0x1348] sm:$0xff]
    %v4687 = vld [vmem:[#allocation11 + $0x1350] sm:$0xff]
    %v4688 = vld [vmem:[#allocation11 + $0x1358] sm:$0xff]
    %v4689 = vld [vmem:[#allocation11 + $0x1360] sm:$0xff]
    %v4690 = vld [vmem:[#allocation11 + $0x1368] sm:$0xff]
    %v4691 = vld [vmem:[#allocation11 + $0x1370] sm:$0xff]
    %v4692 = vld [vmem:[#allocation11 + $0x1378] sm:$0xff]
    %v4693 = vld [vmem:[#allocation11 + $0x1380] sm:$0xff]
    %v4694 = vld [vmem:[#allocation11 + $0x1388] sm:$0xff]
    %v4695 = vld [vmem:[#allocation11 + $0x1390] sm:$0xff]
    %v4696 = vld [vmem:[#allocation11 + $0x1398] sm:$0xff]
    %v4697 = vld [vmem:[#allocation11 + $0x13a0] sm:$0xff]
    %v4698 = vld [vmem:[#allocation11 + $0x13a8] sm:$0xff]
    %v4699 = vld [vmem:[#allocation11 + $0x13b0] sm:$0xff]
    %v4700 = vld [vmem:[#allocation11 + $0x13b8] sm:$0xff]
    %v4701 = vld [vmem:[#allocation11 + $0x13c0] sm:$0xff]
    %v4702 = vld [vmem:[#allocation11 + $0x13c8] sm:$0xff]
    %v4703 = vld [vmem:[#allocation11 + $0x13d0] sm:$0xff]
    %v4704 = vld [vmem:[#allocation11 + $0x13d8] sm:$0xff]
    %v4705 = vld [vmem:[#allocation11 + $0x13e0] sm:$0xff]
    %v4706 = vld [vmem:[#allocation11 + $0x13e8] sm:$0xff]
    %v4707 = vld [vmem:[#allocation11 + $0x13f0] sm:$0xff]
    %v4708 = vld [vmem:[#allocation11 + $0x13f8] sm:$0xff]
    %v4709 = vld [vmem:[#allocation11 + $0x1400] sm:$0xff]
    %v4710 = vld [vmem:[#allocation11 + $0x1408] sm:$0xff]
    %v4711 = vld [vmem:[#allocation11 + $0x1410] sm:$0xff]
    %v4712 = vld [vmem:[#allocation11 + $0x1418] sm:$0xff]
    %v4713 = vld [vmem:[#allocation11 + $0x1420] sm:$0xff]
    %v4714 = vld [vmem:[#allocation11 + $0x1428] sm:$0xff]
    %v4715 = vld [vmem:[#allocation11 + $0x1430] sm:$0xff]
    %v4716 = vld [vmem:[#allocation11 + $0x1438] sm:$0xff]
    %v4717 = vld [vmem:[#allocation11 + $0x1440] sm:$0xff]
    %v4718 = vld [vmem:[#allocation11 + $0x1448] sm:$0xff]
    %v4719 = vld [vmem:[#allocation11 + $0x1450] sm:$0xff]
    %v4720 = vld [vmem:[#allocation11 + $0x1458] sm:$0xff]
    %v4721 = vld [vmem:[#allocation11 + $0x1460] sm:$0xff]
    %v4722 = vld [vmem:[#allocation11 + $0x1468] sm:$0xff]
    %v4723 = vld [vmem:[#allocation11 + $0x1470] sm:$0xff]
    %v4724 = vld [vmem:[#allocation11 + $0x1478] sm:$0xff]
    %v4725 = vld [vmem:[#allocation11 + $0x1480] sm:$0xff]
    %v4726 = vld [vmem:[#allocation11 + $0x1488] sm:$0xff]
    %v4727 = vld [vmem:[#allocation11 + $0x1490] sm:$0xff]
    %v4728 = vld [vmem:[#allocation11 + $0x1498] sm:$0xff]
    %v4729 = vld [vmem:[#allocation11 + $0x14a0] sm:$0xff]
    %v4730 = vld [vmem:[#allocation11 + $0x14a8] sm:$0xff]
    %v4731 = vld [vmem:[#allocation11 + $0x14b0] sm:$0xff]
    %v4732 = vld [vmem:[#allocation11 + $0x14b8] sm:$0xff]
    %v4733 = vld [vmem:[#allocation11 + $0x14c0] sm:$0xff]
    %v4734 = vld [vmem:[#allocation11 + $0x14c8] sm:$0xff]
    %v4735 = vld [vmem:[#allocation11 + $0x14d0] sm:$0xff]
    %v4736 = vld [vmem:[#allocation11 + $0x14d8] sm:$0xff]
    %v4737 = vld [vmem:[#allocation11 + $0x14e0] sm:$0xff]
    %v4738 = vld [vmem:[#allocation11 + $0x14e8] sm:$0xff]
    %v4739 = vld [vmem:[#allocation11 + $0x14f0] sm:$0xff]
    %v4740 = vld [vmem:[#allocation11 + $0x14f8] sm:$0xff]
    %v4741 = vld [vmem:[#allocation11 + $0x1500] sm:$0xff]
    %v4742 = vld [vmem:[#allocation11 + $0x1508] sm:$0xff]
    %v4743 = vld [vmem:[#allocation11 + $0x1510] sm:$0xff]
    %v4744 = vld [vmem:[#allocation11 + $0x1518] sm:$0xff]
    %v4745 = vld [vmem:[#allocation11 + $0x1520] sm:$0xff]
    %v4746 = vld [vmem:[#allocation11 + $0x1528] sm:$0xff]
    %v4747 = vld [vmem:[#allocation11 + $0x1530] sm:$0xff]
    %v4748 = vld [vmem:[#allocation11 + $0x1538] sm:$0xff]
    %v4749 = vld [vmem:[#allocation11 + $0x1540] sm:$0xff]
    %v4750 = vld [vmem:[#allocation11 + $0x1548] sm:$0xff]
    %v4751 = vld [vmem:[#allocation11 + $0x1550] sm:$0xff]
    %v4752 = vld [vmem:[#allocation11 + $0x1558] sm:$0xff]
    %v4753 = vld [vmem:[#allocation11 + $0x1560] sm:$0xff]
    %v4754 = vld [vmem:[#allocation11 + $0x1568] sm:$0xff]
    %v4755 = vld [vmem:[#allocation11 + $0x1570] sm:$0xff]
    %v4756 = vld [vmem:[#allocation11 + $0x1578] sm:$0xff]
    %v4757 = vld [vmem:[#allocation11 + $0x1580] sm:$0xff]
    %v4758 = vld [vmem:[#allocation11 + $0x1588] sm:$0xff]
    %v4759 = vld [vmem:[#allocation11 + $0x1590] sm:$0xff]
    %v4760 = vld [vmem:[#allocation11 + $0x1598] sm:$0xff]
    %v4761 = vld [vmem:[#allocation11 + $0x15a0] sm:$0xff]
    %v4762 = vld [vmem:[#allocation11 + $0x15a8] sm:$0xff]
    %v4763 = vld [vmem:[#allocation11 + $0x15b0] sm:$0xff]
    %v4764 = vld [vmem:[#allocation11 + $0x15b8] sm:$0xff]
    %v4765 = vld [vmem:[#allocation11 + $0x15c0] sm:$0xff]
    %v4766 = vld [vmem:[#allocation11 + $0x15c8] sm:$0xff]
    %v4767 = vld [vmem:[#allocation11 + $0x15d0] sm:$0xff]
    %v4768 = vld [vmem:[#allocation11 + $0x15d8] sm:$0xff]
    %v4769 = vld [vmem:[#allocation11 + $0x15e0] sm:$0xff]
    %v4770 = vld [vmem:[#allocation11 + $0x15e8] sm:$0xff]
    %v4771 = vld [vmem:[#allocation11 + $0x15f0] sm:$0xff]
    %v4772 = vld [vmem:[#allocation11 + $0x15f8] sm:$0xff]
    %v4773 = vld [vmem:[#allocation11 + $0x1600] sm:$0xff]
    %v4774 = vld [vmem:[#allocation11 + $0x1608] sm:$0xff]
    %v4775 = vld [vmem:[#allocation11 + $0x1610] sm:$0xff]
    %v4776 = vld [vmem:[#allocation11 + $0x1618] sm:$0xff]
    %v4777 = vld [vmem:[#allocation11 + $0x1620] sm:$0xff]
    %v4778 = vld [vmem:[#allocation11 + $0x1628] sm:$0xff]
    %v4779 = vld [vmem:[#allocation11 + $0x1630] sm:$0xff]
    %v4780 = vld [vmem:[#allocation11 + $0x1638] sm:$0xff]
    %v4781 = vld [vmem:[#allocation11 + $0x1640] sm:$0xff]
    %v4782 = vld [vmem:[#allocation11 + $0x1648] sm:$0xff]
    %v4783 = vld [vmem:[#allocation11 + $0x1650] sm:$0xff]
    %v4784 = vld [vmem:[#allocation11 + $0x1658] sm:$0xff]
    %v4785 = vld [vmem:[#allocation11 + $0x1660] sm:$0xff]
    %v4786 = vld [vmem:[#allocation11 + $0x1668] sm:$0xff]
    %v4787 = vld [vmem:[#allocation11 + $0x1670] sm:$0xff]
    %v4788 = vld [vmem:[#allocation11 + $0x1678] sm:$0xff]
    %v4789 = vld [vmem:[#allocation11 + $0x1680] sm:$0xff]
    %v4790 = vld [vmem:[#allocation11 + $0x1688] sm:$0xff]
    %v4791 = vld [vmem:[#allocation11 + $0x1690] sm:$0xff]
    %v4792 = vld [vmem:[#allocation11 + $0x1698] sm:$0xff]
    %v4793 = vld [vmem:[#allocation11 + $0x16a0] sm:$0xff]
    %v4794 = vld [vmem:[#allocation11 + $0x16a8] sm:$0xff]
    %v4795 = vld [vmem:[#allocation11 + $0x16b0] sm:$0xff]
    %v4796 = vld [vmem:[#allocation11 + $0x16b8] sm:$0xff]
    %v4797 = vld [vmem:[#allocation11 + $0x16c0] sm:$0xff]
    %v4798 = vld [vmem:[#allocation11 + $0x16c8] sm:$0xff]
    %v4799 = vld [vmem:[#allocation11 + $0x16d0] sm:$0xff]
    %v4800 = vld [vmem:[#allocation11 + $0x16d8] sm:$0xff]
    %v4801 = vld [vmem:[#allocation11 + $0x16e0] sm:$0xff]
    %v4802 = vld [vmem:[#allocation11 + $0x16e8] sm:$0xff]
    %v4803 = vld [vmem:[#allocation11 + $0x16f0] sm:$0xff]
    %v4804 = vld [vmem:[#allocation11 + $0x16f8] sm:$0xff]
    %v4805 = vld [vmem:[#allocation11 + $0x1700] sm:$0xff]
    %v4806 = vld [vmem:[#allocation11 + $0x1708] sm:$0xff]
    %v4807 = vld [vmem:[#allocation11 + $0x1710] sm:$0xff]
    %v4808 = vld [vmem:[#allocation11 + $0x1718] sm:$0xff]
    %v4809 = vld [vmem:[#allocation11 + $0x1720] sm:$0xff]
    %v4810 = vld [vmem:[#allocation11 + $0x1728] sm:$0xff]
    %v4811 = vld [vmem:[#allocation11 + $0x1730] sm:$0xff]
    %v4812 = vld [vmem:[#allocation11 + $0x1738] sm:$0xff]
    %v4813 = vld [vmem:[#allocation11 + $0x1740] sm:$0xff]
    %v4814 = vld [vmem:[#allocation11 + $0x1748] sm:$0xff]
    %v4815 = vld [vmem:[#allocation11 + $0x1750] sm:$0xff]
    %v4816 = vld [vmem:[#allocation11 + $0x1758] sm:$0xff]
    %v4817 = vld [vmem:[#allocation11 + $0x1760] sm:$0xff]
    %v4818 = vld [vmem:[#allocation11 + $0x1768] sm:$0xff]
    %v4819 = vld [vmem:[#allocation11 + $0x1770] sm:$0xff]
    %v4820 = vld [vmem:[#allocation11 + $0x1778] sm:$0xff]
    %v4821 = vld [vmem:[#allocation11 + $0x1780] sm:$0xff]
    %v4822 = vld [vmem:[#allocation11 + $0x1788] sm:$0xff]
    %v4823 = vld [vmem:[#allocation11 + $0x1790] sm:$0xff]
    %v4824 = vld [vmem:[#allocation11 + $0x1798] sm:$0xff]
    %v4825 = vld [vmem:[#allocation11 + $0x17a0] sm:$0xff]
    %v4826 = vld [vmem:[#allocation11 + $0x17a8] sm:$0xff]
    %v4827 = vld [vmem:[#allocation11 + $0x17b0] sm:$0xff]
    %v4828 = vld [vmem:[#allocation11 + $0x17b8] sm:$0xff]
    %v4829 = vld [vmem:[#allocation11 + $0x17c0] sm:$0xff]
    %v4830 = vld [vmem:[#allocation11 + $0x17c8] sm:$0xff]
    %v4831 = vld [vmem:[#allocation11 + $0x17d0] sm:$0xff]
    %v4832 = vld [vmem:[#allocation11 + $0x17d8] sm:$0xff]
    %v4833 = vld [vmem:[#allocation11 + $0x17e0] sm:$0xff]
    %v4834 = vld [vmem:[#allocation11 + $0x17e8] sm:$0xff]
    %v4835 = vld [vmem:[#allocation11 + $0x17f0] sm:$0xff]
    %v4836 = vld [vmem:[#allocation11 + $0x17f8] sm:$0xff]
    %v4837 = vld [vmem:[#allocation11 + $0x1800] sm:$0xff]
    %v4838 = vld [vmem:[#allocation11 + $0x1808] sm:$0xff]
    %v4839 = vld [vmem:[#allocation11 + $0x1810] sm:$0xff]
    %v4840 = vld [vmem:[#allocation11 + $0x1818] sm:$0xff]
    %v4841 = vld [vmem:[#allocation11 + $0x1820] sm:$0xff]
    %v4842 = vld [vmem:[#allocation11 + $0x1828] sm:$0xff]
    %v4843 = vld [vmem:[#allocation11 + $0x1830] sm:$0xff]
    %v4844 = vld [vmem:[#allocation11 + $0x1838] sm:$0xff]
    %v4845 = vld [vmem:[#allocation11 + $0x1840] sm:$0xff]
    %v4846 = vld [vmem:[#allocation11 + $0x1848] sm:$0xff]
    %v4847 = vld [vmem:[#allocation11 + $0x1850] sm:$0xff]
    %v4848 = vld [vmem:[#allocation11 + $0x1858] sm:$0xff]
    %v4849 = vld [vmem:[#allocation11 + $0x1860] sm:$0xff]
    %v4850 = vld [vmem:[#allocation11 + $0x1868] sm:$0xff]
    %v4851 = vld [vmem:[#allocation11 + $0x1870] sm:$0xff]
    %v4852 = vld [vmem:[#allocation11 + $0x1878] sm:$0xff]
    %v4853 = vld [vmem:[#allocation13] sm:$0xff]
    %v4855 = vlaneseq
    %v4856 = vshrl.u32 %v4855, 7
    %v4857 = vsub.s32 0, %v4856
    %v4858 = vrot.slane %v4853, %v4857
    %v4859 = vlaneseq
    %v4860 = vshrl.u32 %v4859, 7
    %v4861 = vsub.s32 1, %v4860
    %v4862 = vrot.slane %v4853, %v4861
    %v4863 = vlaneseq
    %v4864 = vshrl.u32 %v4863, 7
    %v4865 = vsub.s32 2, %v4864
    %v4866 = vrot.slane %v4853, %v4865
    %v4867 = vlaneseq
    %v4868 = vshrl.u32 %v4867, 7
    %v4869 = vsub.s32 3, %v4868
    %v4870 = vrot.slane %v4853, %v4869
    %v4871 = vlaneseq
    %v4872 = vshrl.u32 %v4871, 7
    %v4873 = vsub.s32 4, %v4872
    %v4874 = vrot.slane %v4853, %v4873
    %v4875 = vlaneseq
    %v4876 = vshrl.u32 %v4875, 7
    %v4877 = vsub.s32 5, %v4876
    %v4878 = vrot.slane %v4853, %v4877
    %v4879 = vlaneseq
    %v4880 = vshrl.u32 %v4879, 7
    %v4881 = vsub.s32 6, %v4880
    %v4882 = vrot.slane %v4853, %v4881
    %4890 = vmatprep.subr.mxu0 %v4175
    %4891 = vmatpush1.msra.mxu0 %v4174
    %4892 = vmatprep.subr.mxu0 %v4168
    %4893 = vmatpush1.msra.mxu0 %v4167
    %4894 = vmatprep.subr.mxu0 %v4161
    %4895 = vmatpush1.msra.mxu0 %v4160
    %4896 = vmatprep.subr.mxu0 %v4154
    %4897 = vmatpush1.msra.mxu0 %v4153
    %4898 = vmatprep.subr.mxu0 %v4147
    %4899 = vmatpush1.msra.mxu0 %v4146
    %4900 = vmatprep.subr.mxu0 %v4140
    %4901 = vmatpush1.msra.mxu0 %v4139
    %4902 = vmatprep.subr.mxu0 %v4133
    %4903 = vmatpush1.msra.mxu0 %v4132
    %4904 = vmatprep.subr.mxu0 %v4126
    %4905 = vmatpush1.msra.mxu0 %v4125
    %4906 = vmatprep.subr.mxu0 %v4119
    %4907 = vmatpush1.msra.mxu0 %v4118
    %4908 = vmatprep.subr.mxu0 %v4112
    %4909 = vmatpush1.msra.mxu0 %v4111
    %4910 = vmatprep.subr.mxu0 %v4105
    %4911 = vmatpush1.msra.mxu0 %v4104
    %4912 = vmatprep.subr.mxu0 %v4098
    %4913 = vmatpush1.msra.mxu0 %v4097
    %4914 = vmatprep.subr.mxu0 %v4091
    %4915 = vmatpush1.msra.mxu0 %v4090
    %4916 = vmatprep.subr.mxu0 %v4084
    %4917 = vmatpush1.msra.mxu0 %v4083
    %4918 = vmatprep.subr.mxu0 %v4077
    %4919 = vmatpush1.msra.mxu0 %v4076
    %4920 = vmatprep.subr.mxu0 %v4070
    %4921 = vmatpush1.msra.mxu0 %v4069
    %4922 = vmatprep.subr.mxu0 %v4287
    %4923 = vmatpush2.msra.mxu0 %v4286
    %4924 = vmatprep.subr.mxu0 %v4280
    %4925 = vmatpush2.msra.mxu0 %v4279
    %4926 = vmatprep.subr.mxu0 %v4273
    %4927 = vmatpush2.msra.mxu0 %v4272
    %4928 = vmatprep.subr.mxu0 %v4266
    %4929 = vmatpush2.msra.mxu0 %v4265
    %4930 = vmatprep.subr.mxu0 %v4259
    %4931 = vmatpush2.msra.mxu0 %v4258
    %4932 = vmatprep.subr.mxu0 %v4252
    %4933 = vmatpush2.msra.mxu0 %v4251
    %4934 = vmatprep.subr.mxu0 %v4245
    %4935 = vmatpush2.msra.mxu0 %v4244
    %4936 = vmatprep.subr.mxu0 %v4238
    %4937 = vmatpush2.msra.mxu0 %v4237
    %4938 = vmatprep.subr.mxu0 %v4231
    %4939 = vmatpush2.msra.mxu0 %v4230
    %4940 = vmatprep.subr.mxu0 %v4224
    %4941 = vmatpush2.msra.mxu0 %v4223
    %4942 = vmatprep.subr.mxu0 %v4217
    %4943 = vmatpush2.msra.mxu0 %v4216
    %4944 = vmatprep.subr.mxu0 %v4210
    %4945 = vmatpush2.msra.mxu0 %v4209
    %4946 = vmatprep.subr.mxu0 %v4203
    %4947 = vmatpush2.msra.mxu0 %v4202
    %4948 = vmatprep.subr.mxu0 %v4196
    %4949 = vmatpush2.msra.mxu0 %v4195
    %4950 = vmatprep.subr.mxu0 %v4189
    %4951 = vmatpush2.msra.mxu0 %v4188
    %4952 = vmatprep.subr.mxu0 %v4182
    %4953 = vmatpush2.msra.mxu0 %v4181
    %4954 = vmatprep.mubr.f32.mxu0 %v4063
    %4955 = vmatmul.mubr.f32.gmra.mxu0 %v4062
    %v4956 = vpop.f32.mrf.mxu0
    %v4957 = vadd.f32 %v4858, %v4956
    %v4958 = vpop.f32.mrf.mxu0
    %v4959 = vadd.f32 %v4862, %v4958
    %4960 = vdwg.mxu0
    %4961 = vmatprep.subr.mxu0 %v4399
    %4962 = vmatpush1.msra.mxu0 %v4398
    %4963 = vmatprep.subr.mxu0 %v4392
    %4964 = vmatpush1.msra.mxu0 %v4391
    %4965 = vmatprep.subr.mxu0 %v4385
    %4966 = vmatpush1.msra.mxu0 %v4384
    %4967 = vmatprep.subr.mxu0 %v4378
    %4968 = vmatpush1.msra.mxu0 %v4377
    %4969 = vmatprep.subr.mxu0 %v4371
    %4970 = vmatpush1.msra.mxu0 %v4370
    %4971 = vmatprep.subr.mxu0 %v4364
    %4972 = vmatpush1.msra.mxu0 %v4363
    %4973 = vmatprep.subr.mxu0 %v4357
    %4974 = vmatpush1.msra.mxu0 %v4356
    %4975 = vmatprep.subr.mxu0 %v4350
    %4976 = vmatpush1.msra.mxu0 %v4349
    %4977 = vmatprep.subr.mxu0 %v4343
    %4978 = vmatpush1.msra.mxu0 %v4342
    %4979 = vmatprep.subr.mxu0 %v4336
    %4980 = vmatpush1.msra.mxu0 %v4335
    %4981 = vmatprep.subr.mxu0 %v4329
    %4982 = vmatpush1.msra.mxu0 %v4328
    %4983 = vmatprep.subr.mxu0 %v4322
    %4984 = vmatpush1.msra.mxu0 %v4321
    %4985 = vmatprep.subr.mxu0 %v4315
    %4986 = vmatpush1.msra.mxu0 %v4314
    %4987 = vmatprep.subr.mxu0 %v4308
    %4988 = vmatpush1.msra.mxu0 %v4307
    %4989 = vmatprep.subr.mxu0 %v4301
    %4990 = vmatpush1.msra.mxu0 %v4300
    %4991 = vmatprep.subr.mxu0 %v4294
    %4992 = vmatpush1.msra.mxu0 %v4293
    %4993 = vmatprep.subr.mxu0 %v4511
    %4994 = vmatpush2.msra.mxu0 %v4510
    %4995 = vmatprep.subr.mxu0 %v4504
    %4996 = vmatpush2.msra.mxu0 %v4503
    %4997 = vmatprep.subr.mxu0 %v4497
    %4998 = vmatpush2.msra.mxu0 %v4496
    %4999 = vmatprep.subr.mxu0 %v4490
    %5000 = vmatpush2.msra.mxu0 %v4489
    %5001 = vmatprep.subr.mxu0 %v4483
    %5002 = vmatpush2.msra.mxu0 %v4482
    %5003 = vmatprep.subr.mxu0 %v4476
    %5004 = vmatpush2.msra.mxu0 %v4475
    %5005 = vmatprep.subr.mxu0 %v4469
    %5006 = vmatpush2.msra.mxu0 %v4468
    %5007 = vmatprep.subr.mxu0 %v4462
    %5008 = vmatpush2.msra.mxu0 %v4461
    %5009 = vmatprep.subr.mxu0 %v4455
    %5010 = vmatpush2.msra.mxu0 %v4454
    %5011 = vmatprep.subr.mxu0 %v4448
    %5012 = vmatpush2.msra.mxu0 %v4447
    %5013 = vmatprep.subr.mxu0 %v4441
    %5014 = vmatpush2.msra.mxu0 %v4440
    %5015 = vmatprep.subr.mxu0 %v4434
    %5016 = vmatpush2.msra.mxu0 %v4433
    %5017 = vmatprep.subr.mxu0 %v4427
    %5018 = vmatpush2.msra.mxu0 %v4426
    %5019 = vmatprep.subr.mxu0 %v4420
    %5020 = vmatpush2.msra.mxu0 %v4419
    %5021 = vmatprep.subr.mxu0 %v4413
    %5022 = vmatpush2.msra.mxu0 %v4412
    %5023 = vmatprep.subr.mxu0 %v4406
    %5024 = vmatpush2.msra.mxu0 %v4405
    %5025 = vmatprep.mubr.f32.mxu0 %v4065
    %5026 = vmatmul.mubr.f32.gmra.mxu0 %v4064
    %v5027 = vpop.f32.mrf.mxu0
    %v5028 = vadd.f32 %v4957, %v5027
    %v5029 = vpop.f32.mrf.mxu0
    %v5030 = vadd.f32 %v4959, %v5029
    %5031 = vdwg.mxu0
    %5032 = vmatprep.subr.mxu0 %v4623
    %5033 = vmatpush1.msra.mxu0 %v4622
    %5034 = vmatprep.subr.mxu0 %v4616
    %5035 = vmatpush1.msra.mxu0 %v4615
    %5036 = vmatprep.subr.mxu0 %v4609
    %5037 = vmatpush1.msra.mxu0 %v4608
    %5038 = vmatprep.subr.mxu0 %v4602
    %5039 = vmatpush1.msra.mxu0 %v4601
    %5040 = vmatprep.subr.mxu0 %v4595
    %5041 = vmatpush1.msra.mxu0 %v4594
    %5042 = vmatprep.subr.mxu0 %v4588
    %5043 = vmatpush1.msra.mxu0 %v4587
    %5044 = vmatprep.subr.mxu0 %v4581
    %5045 = vmatpush1.msra.mxu0 %v4580
    %5046 = vmatprep.subr.mxu0 %v4574
    %5047 = vmatpush1.msra.mxu0 %v4573
    %5048 = vmatprep.subr.mxu0 %v4567
    %5049 = vmatpush1.msra.mxu0 %v4566
    %5050 = vmatprep.subr.mxu0 %v4560
    %5051 = vmatpush1.msra.mxu0 %v4559
    %5052 = vmatprep.subr.mxu0 %v4553
    %5053 = vmatpush1.msra.mxu0 %v4552
    %5054 = vmatprep.subr.mxu0 %v4546
    %5055 = vmatpush1.msra.mxu0 %v4545
    %5056 = vmatprep.subr.mxu0 %v4539
    %5057 = vmatpush1.msra.mxu0 %v4538
    %5058 = vmatprep.subr.mxu0 %v4532
    %5059 = vmatpush1.msra.mxu0 %v4531
    %5060 = vmatprep.subr.mxu0 %v4525
    %5061 = vmatpush1.msra.mxu0 %v4524
    %5062 = vmatprep.subr.mxu0 %v4518
    %5063 = vmatpush1.msra.mxu0 %v4517
    %5064 = vmatprep.subr.mxu0 %v4735
    %5065 = vmatpush2.msra.mxu0 %v4734
    %5066 = vmatprep.subr.mxu0 %v4728
    %5067 = vmatpush2.msra.mxu0 %v4727
    %5068 = vmatprep.subr.mxu0 %v4721
    %5069 = vmatpush2.msra.mxu0 %v4720
    %5070 = vmatprep.subr.mxu0 %v4714
    %5071 = vmatpush2.msra.mxu0 %v4713
    %5072 = vmatprep.subr.mxu0 %v4707
    %5073 = vmatpush2.msra.mxu0 %v4706
    %5074 = vmatprep.subr.mxu0 %v4700
    %5075 = vmatpush2.msra.mxu0 %v4699
    %5076 = vmatprep.subr.mxu0 %v4693
    %5077 = vmatpush2.msra.mxu0 %v4692
    %5078 = vmatprep.subr.mxu0 %v4686
    %5079 = vmatpush2.msra.mxu0 %v4685
    %5080 = vmatprep.subr.mxu0 %v4679
    %5081 = vmatpush2.msra.mxu0 %v4678
    %5082 = vmatprep.subr.mxu0 %v4672
    %5083 = vmatpush2.msra.mxu0 %v4671
    %5084 = vmatprep.subr.mxu0 %v4665
    %5085 = vmatpush2.msra.mxu0 %v4664
    %5086 = vmatprep.subr.mxu0 %v4658
    %5087 = vmatpush2.msra.mxu0 %v4657
    %5088 = vmatprep.subr.mxu0 %v4651
    %5089 = vmatpush2.msra.mxu0 %v4650
    %5090 = vmatprep.subr.mxu0 %v4644
    %5091 = vmatpush2.msra.mxu0 %v4643
    %5092 = vmatprep.subr.mxu0 %v4637
    %5093 = vmatpush2.msra.mxu0 %v4636
    %5094 = vmatprep.subr.mxu0 %v4630
    %5095 = vmatpush2.msra.mxu0 %v4629
    %5096 = vmatprep.mubr.f32.mxu0 %v4067
    %5097 = vmatmul.mubr.f32.gmra.mxu0 %v4066
    %v5098 = vpop.f32.mrf.mxu0
    %v5099 = vadd.f32 %v5028, %v5098
    %v5100 = vpop.f32.mrf.mxu0
    %v5101 = vadd.f32 %v5030, %v5100
    %5102 = vdwg.mxu0
    %5103 = vmatprep.subr.mxu0 %v4847
    %5104 = vmatpush1.msra.mxu0 %v4846
    %5105 = vmatprep.subr.mxu0 %v4840
    %5106 = vmatpush1.msra.mxu0 %v4839
    %5107 = vmatprep.subr.mxu0 %v4833
    %5108 = vmatpush1.msra.mxu0 %v4832
    %5109 = vmatprep.subr.mxu0 %v4826
    %5110 = vmatpush1.msra.mxu0 %v4825
    %5111 = vmatprep.subr.mxu0 %v4819
    %5112 = vmatpush1.msra.mxu0 %v4818
    %5113 = vmatprep.subr.mxu0 %v4812
    %5114 = vmatpush1.msra.mxu0 %v4811
    %5115 = vmatprep.subr.mxu0 %v4805
    %5116 = vmatpush1.msra.mxu0 %v4804
    %5117 = vmatprep.subr.mxu0 %v4798
    %5118 = vmatpush1.msra.mxu0 %v4797
    %5119 = vmatprep.subr.mxu0 %v4791
    %5120 = vmatpush1.msra.mxu0 %v4790
    %5121 = vmatprep.subr.mxu0 %v4784
    %5122 = vmatpush1.msra.mxu0 %v4783
    %5123 = vmatprep.subr.mxu0 %v4777
    %5124 = vmatpush1.msra.mxu0 %v4776
    %5125 = vmatprep.subr.mxu0 %v4770
    %5126 = vmatpush1.msra.mxu0 %v4769
    %5127 = vmatprep.subr.mxu0 %v4763
    %5128 = vmatpush1.msra.mxu0 %v4762
    %5129 = vmatprep.subr.mxu0 %v4756
    %5130 = vmatpush1.msra.mxu0 %v4755
    %5131 = vmatprep.subr.mxu0 %v4749
    %5132 = vmatpush1.msra.mxu0 %v4748
    %5133 = vmatprep.subr.mxu0 %v4742
    %5134 = vmatpush1.msra.mxu0 %v4741
    %5135 = vmatprep.subr.mxu0 0.0
    %5136 = vmatpush2.msra.mxu0 0.0
    %5137 = vmatprep.subr.mxu0 0.0
    %5138 = vmatpush2.msra.mxu0 0.0
    %5139 = vmatprep.subr.mxu0 0.0
    %5140 = vmatpush2.msra.mxu0 0.0
    %5141 = vmatprep.subr.mxu0 0.0
    %5142 = vmatpush2.msra.mxu0 0.0
    %5143 = vmatprep.subr.mxu0 0.0
    %5144 = vmatpush2.msra.mxu0 0.0
    %5145 = vmatprep.subr.mxu0 0.0
    %5146 = vmatpush2.msra.mxu0 0.0
    %5147 = vmatprep.subr.mxu0 0.0
    %5148 = vmatpush2.msra.mxu0 0.0
    %5149 = vmatprep.subr.mxu0 0.0
    %5150 = vmatpush2.msra.mxu0 0.0
    %5151 = vmatprep.subr.mxu0 0.0
    %5152 = vmatpush2.msra.mxu0 0.0
    %5153 = vmatprep.subr.mxu0 0.0
    %5154 = vmatpush2.msra.mxu0 0.0
    %5155 = vmatprep.subr.mxu0 0.0
    %5156 = vmatpush2.msra.mxu0 0.0
    %5157 = vmatprep.subr.mxu0 0.0
    %5158 = vmatpush2.msra.mxu0 0.0
    %5159 = vmatprep.subr.mxu0 0.0
    %5160 = vmatpush2.msra.mxu0 0.0
    %5161 = vmatprep.subr.mxu0 0.0
    %5162 = vmatpush2.msra.mxu0 0.0
    %5163 = vmatprep.subr.mxu0 0.0
    %5164 = vmatpush2.msra.mxu0 0.0
    %5165 = vmatprep.subr.mxu0 0.0
    %5166 = vmatpush2.msra.mxu0 0.0
    %5167 = vmatprep.mubr.f32.mxu0 0.0
    %5168 = vmatmul.mubr.f32.gmra.mxu0 %v4068
    %v5169 = vpop.f32.mrf.mxu0
    %v5170 = vadd.f32 %v5099, %v5169
    %v5171 = vpop.f32.mrf.mxu0
    %v5172 = vadd.f32 %v5101, %v5171
    %5173 = vdwg.mxu0
    %5174 = vmatprep.subr.mxu0 %v4177
    %5175 = vmatpush1.msra.mxu0 %v4176
    %5176 = vmatprep.subr.mxu0 %v4170
    %5177 = vmatpush1.msra.mxu0 %v4169
    %5178 = vmatprep.subr.mxu0 %v4163
    %5179 = vmatpush1.msra.mxu0 %v4162
    %5180 = vmatprep.subr.mxu0 %v4156
    %5181 = vmatpush1.msra.mxu0 %v4155
    %5182 = vmatprep.subr.mxu0 %v4149
    %5183 = vmatpush1.msra.mxu0 %v4148
    %5184 = vmatprep.subr.mxu0 %v4142
    %5185 = vmatpush1.msra.mxu0 %v4141
    %5186 = vmatprep.subr.mxu0 %v4135
    %5187 = vmatpush1.msra.mxu0 %v4134
    %5188 = vmatprep.subr.mxu0 %v4128
    %5189 = vmatpush1.msra.mxu0 %v4127
    %5190 = vmatprep.subr.mxu0 %v4121
    %5191 = vmatpush1.msra.mxu0 %v4120
    %5192 = vmatprep.subr.mxu0 %v4114
    %5193 = vmatpush1.msra.mxu0 %v4113
    %5194 = vmatprep.subr.mxu0 %v4107
    %5195 = vmatpush1.msra.mxu0 %v4106
    %5196 = vmatprep.subr.mxu0 %v4100
    %5197 = vmatpush1.msra.mxu0 %v4099
    %5198 = vmatprep.subr.mxu0 %v4093
    %5199 = vmatpush1.msra.mxu0 %v4092
    %5200 = vmatprep.subr.mxu0 %v4086
    %5201 = vmatpush1.msra.mxu0 %v4085
    %5202 = vmatprep.subr.mxu0 %v4079
    %5203 = vmatpush1.msra.mxu0 %v4078
    %5204 = vmatprep.subr.mxu0 %v4072
    %5205 = vmatpush1.msra.mxu0 %v4071
    %5206 = vmatprep.subr.mxu0 %v4289
    %5207 = vmatpush2.msra.mxu0 %v4288
    %5208 = vmatprep.subr.mxu0 %v4282
    %5209 = vmatpush2.msra.mxu0 %v4281
    %5210 = vmatprep.subr.mxu0 %v4275
    %5211 = vmatpush2.msra.mxu0 %v4274
    %5212 = vmatprep.subr.mxu0 %v4268
    %5213 = vmatpush2.msra.mxu0 %v4267
    %5214 = vmatprep.subr.mxu0 %v4261
    %5215 = vmatpush2.msra.mxu0 %v4260
    %5216 = vmatprep.subr.mxu0 %v4254
    %5217 = vmatpush2.msra.mxu0 %v4253
    %5218 = vmatprep.subr.mxu0 %v4247
    %5219 = vmatpush2.msra.mxu0 %v4246
    %5220 = vmatprep.subr.mxu0 %v4240
    %5221 = vmatpush2.msra.mxu0 %v4239
    %5222 = vmatprep.subr.mxu0 %v4233
    %5223 = vmatpush2.msra.mxu0 %v4232
    %5224 = vmatprep.subr.mxu0 %v4226
    %5225 = vmatpush2.msra.mxu0 %v4225
    %5226 = vmatprep.subr.mxu0 %v4219
    %5227 = vmatpush2.msra.mxu0 %v4218
    %5228 = vmatprep.subr.mxu0 %v4212
    %5229 = vmatpush2.msra.mxu0 %v4211
    %5230 = vmatprep.subr.mxu0 %v4205
    %5231 = vmatpush2.msra.mxu0 %v4204
    %5232 = vmatprep.subr.mxu0 %v4198
    %5233 = vmatpush2.msra.mxu0 %v4197
    %5234 = vmatprep.subr.mxu0 %v4191
    %5235 = vmatpush2.msra.mxu0 %v4190
    %5236 = vmatprep.subr.mxu0 %v4184
    %5237 = vmatpush2.msra.mxu0 %v4183
    %5238 = vmatprep.mubr.f32.mxu0 %v4063
    %5239 = vmatmul.mubr.f32.gmra.mxu0 %v4062
    %v5240 = vpop.f32.mrf.mxu0
    %v5241 = vadd.f32 %v4866, %v5240
    %v5242 = vpop.f32.mrf.mxu0
    %v5243 = vadd.f32 %v4870, %v5242
    %5244 = vdwg.mxu0
    %5245 = vmatprep.subr.mxu0 %v4401
    %5246 = vmatpush1.msra.mxu0 %v4400
    %5247 = vmatprep.subr.mxu0 %v4394
    %5248 = vmatpush1.msra.mxu0 %v4393
    %5249 = vmatprep.subr.mxu0 %v4387
    %5250 = vmatpush1.msra.mxu0 %v4386
    %5251 = vmatprep.subr.mxu0 %v4380
    %5252 = vmatpush1.msra.mxu0 %v4379
    %5253 = vmatprep.subr.mxu0 %v4373
    %5254 = vmatpush1.msra.mxu0 %v4372
    %5255 = vmatprep.subr.mxu0 %v4366
    %5256 = vmatpush1.msra.mxu0 %v4365
    %5257 = vmatprep.subr.mxu0 %v4359
    %5258 = vmatpush1.msra.mxu0 %v4358
    %5259 = vmatprep.subr.mxu0 %v4352
    %5260 = vmatpush1.msra.mxu0 %v4351
    %5261 = vmatprep.subr.mxu0 %v4345
    %5262 = vmatpush1.msra.mxu0 %v4344
    %5263 = vmatprep.subr.mxu0 %v4338
    %5264 = vmatpush1.msra.mxu0 %v4337
    %5265 = vmatprep.subr.mxu0 %v4331
    %5266 = vmatpush1.msra.mxu0 %v4330
    %5267 = vmatprep.subr.mxu0 %v4324
    %5268 = vmatpush1.msra.mxu0 %v4323
    %5269 = vmatprep.subr.mxu0 %v4317
    %5270 = vmatpush1.msra.mxu0 %v4316
    %5271 = vmatprep.subr.mxu0 %v4310
    %5272 = vmatpush1.msra.mxu0 %v4309
    %5273 = vmatprep.subr.mxu0 %v4303
    %5274 = vmatpush1.msra.mxu0 %v4302
    %5275 = vmatprep.subr.mxu0 %v4296
    %5276 = vmatpush1.msra.mxu0 %v4295
    %5277 = vmatprep.subr.mxu0 %v4513
    %5278 = vmatpush2.msra.mxu0 %v4512
    %5279 = vmatprep.subr.mxu0 %v4506
    %5280 = vmatpush2.msra.mxu0 %v4505
    %5281 = vmatprep.subr.mxu0 %v4499
    %5282 = vmatpush2.msra.mxu0 %v4498
    %5283 = vmatprep.subr.mxu0 %v4492
    %5284 = vmatpush2.msra.mxu0 %v4491
    %5285 = vmatprep.subr.mxu0 %v4485
    %5286 = vmatpush2.msra.mxu0 %v4484
    %5287 = vmatprep.subr.mxu0 %v4478
    %5288 = vmatpush2.msra.mxu0 %v4477
    %5289 = vmatprep.subr.mxu0 %v4471
    %5290 = vmatpush2.msra.mxu0 %v4470
    %5291 = vmatprep.subr.mxu0 %v4464
    %5292 = vmatpush2.msra.mxu0 %v4463
    %5293 = vmatprep.subr.mxu0 %v4457
    %5294 = vmatpush2.msra.mxu0 %v4456
    %5295 = vmatprep.subr.mxu0 %v4450
    %5296 = vmatpush2.msra.mxu0 %v4449
    %5297 = vmatprep.subr.mxu0 %v4443
    %5298 = vmatpush2.msra.mxu0 %v4442
    %5299 = vmatprep.subr.mxu0 %v4436
    %5300 = vmatpush2.msra.mxu0 %v4435
    %5301 = vmatprep.subr.mxu0 %v4429
    %5302 = vmatpush2.msra.mxu0 %v4428
    %5303 = vmatprep.subr.mxu0 %v4422
    %5304 = vmatpush2.msra.mxu0 %v4421
    %5305 = vmatprep.subr.mxu0 %v4415
    %5306 = vmatpush2.msra.mxu0 %v4414
    %5307 = vmatprep.subr.mxu0 %v4408
    %5308 = vmatpush2.msra.mxu0 %v4407
    %5309 = vmatprep.mubr.f32.mxu0 %v4065
    %5310 = vmatmul.mubr.f32.gmra.mxu0 %v4064
    %v5311 = vpop.f32.mrf.mxu0
    %v5312 = vadd.f32 %v5241, %v5311
    %v5313 = vpop.f32.mrf.mxu0
    %v5314 = vadd.f32 %v5243, %v5313
    %5315 = vdwg.mxu0
    %5316 = vmatprep.subr.mxu0 %v4625
    %5317 = vmatpush1.msra.mxu0 %v4624
    %5318 = vmatprep.subr.mxu0 %v4618
    %5319 = vmatpush1.msra.mxu0 %v4617
    %5320 = vmatprep.subr.mxu0 %v4611
    %5321 = vmatpush1.msra.mxu0 %v4610
    %5322 = vmatprep.subr.mxu0 %v4604
    %5323 = vmatpush1.msra.mxu0 %v4603
    %5324 = vmatprep.subr.mxu0 %v4597
    %5325 = vmatpush1.msra.mxu0 %v4596
    %5326 = vmatprep.subr.mxu0 %v4590
    %5327 = vmatpush1.msra.mxu0 %v4589
    %5328 = vmatprep.subr.mxu0 %v4583
    %5329 = vmatpush1.msra.mxu0 %v4582
    %5330 = vmatprep.subr.mxu0 %v4576
    %5331 = vmatpush1.msra.mxu0 %v4575
    %5332 = vmatprep.subr.mxu0 %v4569
    %5333 = vmatpush1.msra.mxu0 %v4568
    %5334 = vmatprep.subr.mxu0 %v4562
    %5335 = vmatpush1.msra.mxu0 %v4561
    %5336 = vmatprep.subr.mxu0 %v4555
    %5337 = vmatpush1.msra.mxu0 %v4554
    %5338 = vmatprep.subr.mxu0 %v4548
    %5339 = vmatpush1.msra.mxu0 %v4547
    %5340 = vmatprep.subr.mxu0 %v4541
    %5341 = vmatpush1.msra.mxu0 %v4540
    %5342 = vmatprep.subr.mxu0 %v4534
    %5343 = vmatpush1.msra.mxu0 %v4533
    %5344 = vmatprep.subr.mxu0 %v4527
    %5345 = vmatpush1.msra.mxu0 %v4526
    %5346 = vmatprep.subr.mxu0 %v4520
    %5347 = vmatpush1.msra.mxu0 %v4519
    %5348 = vmatprep.subr.mxu0 %v4737
    %5349 = vmatpush2.msra.mxu0 %v4736
    %5350 = vmatprep.subr.mxu0 %v4730
    %5351 = vmatpush2.msra.mxu0 %v4729
    %5352 = vmatprep.subr.mxu0 %v4723
    %5353 = vmatpush2.msra.mxu0 %v4722
    %5354 = vmatprep.subr.mxu0 %v4716
    %5355 = vmatpush2.msra.mxu0 %v4715
    %5356 = vmatprep.subr.mxu0 %v4709
    %5357 = vmatpush2.msra.mxu0 %v4708
    %5358 = vmatprep.subr.mxu0 %v4702
    %5359 = vmatpush2.msra.mxu0 %v4701
    %5360 = vmatprep.subr.mxu0 %v4695
    %5361 = vmatpush2.msra.mxu0 %v4694
    %5362 = vmatprep.subr.mxu0 %v4688
    %5363 = vmatpush2.msra.mxu0 %v4687
    %5364 = vmatprep.subr.mxu0 %v4681
    %5365 = vmatpush2.msra.mxu0 %v4680
    %5366 = vmatprep.subr.mxu0 %v4674
    %5367 = vmatpush2.msra.mxu0 %v4673
    %5368 = vmatprep.subr.mxu0 %v4667
    %5369 = vmatpush2.msra.mxu0 %v4666
    %5370 = vmatprep.subr.mxu0 %v4660
    %5371 = vmatpush2.msra.mxu0 %v4659
    %5372 = vmatprep.subr.mxu0 %v4653
    %5373 = vmatpush2.msra.mxu0 %v4652
    %5374 = vmatprep.subr.mxu0 %v4646
    %5375 = vmatpush2.msra.mxu0 %v4645
    %5376 = vmatprep.subr.mxu0 %v4639
    %5377 = vmatpush2.msra.mxu0 %v4638
    %5378 = vmatprep.subr.mxu0 %v4632
    %5379 = vmatpush2.msra.mxu0 %v4631
    %5380 = vmatprep.mubr.f32.mxu0 %v4067
    %5381 = vmatmul.mubr.f32.gmra.mxu0 %v4066
    %v5382 = vpop.f32.mrf.mxu0
    %v5383 = vadd.f32 %v5312, %v5382
    %v5384 = vpop.f32.mrf.mxu0
    %v5385 = vadd.f32 %v5314, %v5384
    %5386 = vdwg.mxu0
    %5387 = vmatprep.subr.mxu0 %v4849
    %5388 = vmatpush1.msra.mxu0 %v4848
    %5389 = vmatprep.subr.mxu0 %v4842
    %5390 = vmatpush1.msra.mxu0 %v4841
    %5391 = vmatprep.subr.mxu0 %v4835
    %5392 = vmatpush1.msra.mxu0 %v4834
    %5393 = vmatprep.subr.mxu0 %v4828
    %5394 = vmatpush1.msra.mxu0 %v4827
    %5395 = vmatprep.subr.mxu0 %v4821
    %5396 = vmatpush1.msra.mxu0 %v4820
    %5397 = vmatprep.subr.mxu0 %v4814
    %5398 = vmatpush1.msra.mxu0 %v4813
    %5399 = vmatprep.subr.mxu0 %v4807
    %5400 = vmatpush1.msra.mxu0 %v4806
    %5401 = vmatprep.subr.mxu0 %v4800
    %5402 = vmatpush1.msra.mxu0 %v4799
    %5403 = vmatprep.subr.mxu0 %v4793
    %5404 = vmatpush1.msra.mxu0 %v4792
    %5405 = vmatprep.subr.mxu0 %v4786
    %5406 = vmatpush1.msra.mxu0 %v4785
    %5407 = vmatprep.subr.mxu0 %v4779
    %5408 = vmatpush1.msra.mxu0 %v4778
    %5409 = vmatprep.subr.mxu0 %v4772
    %5410 = vmatpush1.msra.mxu0 %v4771
    %5411 = vmatprep.subr.mxu0 %v4765
    %5412 = vmatpush1.msra.mxu0 %v4764
    %5413 = vmatprep.subr.mxu0 %v4758
    %5414 = vmatpush1.msra.mxu0 %v4757
    %5415 = vmatprep.subr.mxu0 %v4751
    %5416 = vmatpush1.msra.mxu0 %v4750
    %5417 = vmatprep.subr.mxu0 %v4744
    %5418 = vmatpush1.msra.mxu0 %v4743
    %5419 = vmatprep.subr.mxu0 0.0
    %5420 = vmatpush2.msra.mxu0 0.0
    %5421 = vmatprep.subr.mxu0 0.0
    %5422 = vmatpush2.msra.mxu0 0.0
    %5423 = vmatprep.subr.mxu0 0.0
    %5424 = vmatpush2.msra.mxu0 0.0
    %5425 = vmatprep.subr.mxu0 0.0
    %5426 = vmatpush2.msra.mxu0 0.0
    %5427 = vmatprep.subr.mxu0 0.0
    %5428 = vmatpush2.msra.mxu0 0.0
    %5429 = vmatprep.subr.mxu0 0.0
    %5430 = vmatpush2.msra.mxu0 0.0
    %5431 = vmatprep.subr.mxu0 0.0
    %5432 = vmatpush2.msra.mxu0 0.0
    %5433 = vmatprep.subr.mxu0 0.0
    %5434 = vmatpush2.msra.mxu0 0.0
    %5435 = vmatprep.subr.mxu0 0.0
    %5436 = vmatpush2.msra.mxu0 0.0
    %5437 = vmatprep.subr.mxu0 0.0
    %5438 = vmatpush2.msra.mxu0 0.0
    %5439 = vmatprep.subr.mxu0 0.0
    %5440 = vmatpush2.msra.mxu0 0.0
    %5441 = vmatprep.subr.mxu0 0.0
    %5442 = vmatpush2.msra.mxu0 0.0
    %5443 = vmatprep.subr.mxu0 0.0
    %5444 = vmatpush2.msra.mxu0 0.0
    %5445 = vmatprep.subr.mxu0 0.0
    %5446 = vmatpush2.msra.mxu0 0.0
    %5447 = vmatprep.subr.mxu0 0.0
    %5448 = vmatpush2.msra.mxu0 0.0
    %5449 = vmatprep.subr.mxu0 0.0
    %5450 = vmatpush2.msra.mxu0 0.0
    %5451 = vmatprep.mubr.f32.mxu0 0.0
    %5452 = vmatmul.mubr.f32.gmra.mxu0 %v4068
    %v5453 = vpop.f32.mrf.mxu0
    %v5454 = vadd.f32 %v5383, %v5453
    %v5455 = vpop.f32.mrf.mxu0
    %v5456 = vadd.f32 %v5385, %v5455
    %5457 = vdwg.mxu0
    %5458 = vmatprep.subr.mxu0 %v4179
    %5459 = vmatpush1.msra.mxu0 %v4178
    %5460 = vmatprep.subr.mxu0 %v4172
    %5461 = vmatpush1.msra.mxu0 %v4171
    %5462 = vmatprep.subr.mxu0 %v4165
    %5463 = vmatpush1.msra.mxu0 %v4164
    %5464 = vmatprep.subr.mxu0 %v4158
    %5465 = vmatpush1.msra.mxu0 %v4157
    %5466 = vmatprep.subr.mxu0 %v4151
    %5467 = vmatpush1.msra.mxu0 %v4150
    %5468 = vmatprep.subr.mxu0 %v4144
    %5469 = vmatpush1.msra.mxu0 %v4143
    %5470 = vmatprep.subr.mxu0 %v4137
    %5471 = vmatpush1.msra.mxu0 %v4136
    %5472 = vmatprep.subr.mxu0 %v4130
    %5473 = vmatpush1.msra.mxu0 %v4129
    %5474 = vmatprep.subr.mxu0 %v4123
    %5475 = vmatpush1.msra.mxu0 %v4122
    %5476 = vmatprep.subr.mxu0 %v4116
    %5477 = vmatpush1.msra.mxu0 %v4115
    %5478 = vmatprep.subr.mxu0 %v4109
    %5479 = vmatpush1.msra.mxu0 %v4108
    %5480 = vmatprep.subr.mxu0 %v4102
    %5481 = vmatpush1.msra.mxu0 %v4101
    %5482 = vmatprep.subr.mxu0 %v4095
    %5483 = vmatpush1.msra.mxu0 %v4094
    %5484 = vmatprep.subr.mxu0 %v4088
    %5485 = vmatpush1.msra.mxu0 %v4087
    %5486 = vmatprep.subr.mxu0 %v4081
    %5487 = vmatpush1.msra.mxu0 %v4080
    %5488 = vmatprep.subr.mxu0 %v4074
    %5489 = vmatpush1.msra.mxu0 %v4073
    %5490 = vmatprep.subr.mxu0 %v4291
    %5491 = vmatpush2.msra.mxu0 %v4290
    %5492 = vmatprep.subr.mxu0 %v4284
    %5493 = vmatpush2.msra.mxu0 %v4283
    %5494 = vmatprep.subr.mxu0 %v4277
    %5495 = vmatpush2.msra.mxu0 %v4276
    %5496 = vmatprep.subr.mxu0 %v4270
    %5497 = vmatpush2.msra.mxu0 %v4269
    %5498 = vmatprep.subr.mxu0 %v4263
    %5499 = vmatpush2.msra.mxu0 %v4262
    %5500 = vmatprep.subr.mxu0 %v4256
    %5501 = vmatpush2.msra.mxu0 %v4255
    %5502 = vmatprep.subr.mxu0 %v4249
    %5503 = vmatpush2.msra.mxu0 %v4248
    %5504 = vmatprep.subr.mxu0 %v4242
    %5505 = vmatpush2.msra.mxu0 %v4241
    %5506 = vmatprep.subr.mxu0 %v4235
    %5507 = vmatpush2.msra.mxu0 %v4234
    %5508 = vmatprep.subr.mxu0 %v4228
    %5509 = vmatpush2.msra.mxu0 %v4227
    %5510 = vmatprep.subr.mxu0 %v4221
    %5511 = vmatpush2.msra.mxu0 %v4220
    %5512 = vmatprep.subr.mxu0 %v4214
    %5513 = vmatpush2.msra.mxu0 %v4213
    %5514 = vmatprep.subr.mxu0 %v4207
    %5515 = vmatpush2.msra.mxu0 %v4206
    %5516 = vmatprep.subr.mxu0 %v4200
    %5517 = vmatpush2.msra.mxu0 %v4199
    %5518 = vmatprep.subr.mxu0 %v4193
    %5519 = vmatpush2.msra.mxu0 %v4192
    %5520 = vmatprep.subr.mxu0 %v4186
    %5521 = vmatpush2.msra.mxu0 %v4185
    %5522 = vmatprep.mubr.f32.mxu0 %v4063
    %5523 = vmatmul.mubr.f32.gmra.mxu0 %v4062
    %v5524 = vpop.f32.mrf.mxu0
    %v5525 = vadd.f32 %v4874, %v5524
    %v5526 = vpop.f32.mrf.mxu0
    %v5527 = vadd.f32 %v4878, %v5526
    %5528 = vdwg.mxu0
    %5529 = vmatprep.subr.mxu0 %v4403
    %5530 = vmatpush1.msra.mxu0 %v4402
    %5531 = vmatprep.subr.mxu0 %v4396
    %5532 = vmatpush1.msra.mxu0 %v4395
    %5533 = vmatprep.subr.mxu0 %v4389
    %5534 = vmatpush1.msra.mxu0 %v4388
    %5535 = vmatprep.subr.mxu0 %v4382
    %5536 = vmatpush1.msra.mxu0 %v4381
    %5537 = vmatprep.subr.mxu0 %v4375
    %5538 = vmatpush1.msra.mxu0 %v4374
    %5539 = vmatprep.subr.mxu0 %v4368
    %5540 = vmatpush1.msra.mxu0 %v4367
    %5541 = vmatprep.subr.mxu0 %v4361
    %5542 = vmatpush1.msra.mxu0 %v4360
    %5543 = vmatprep.subr.mxu0 %v4354
    %5544 = vmatpush1.msra.mxu0 %v4353
    %5545 = vmatprep.subr.mxu0 %v4347
    %5546 = vmatpush1.msra.mxu0 %v4346
    %5547 = vmatprep.subr.mxu0 %v4340
    %5548 = vmatpush1.msra.mxu0 %v4339
    %5549 = vmatprep.subr.mxu0 %v4333
    %5550 = vmatpush1.msra.mxu0 %v4332
    %5551 = vmatprep.subr.mxu0 %v4326
    %5552 = vmatpush1.msra.mxu0 %v4325
    %5553 = vmatprep.subr.mxu0 %v4319
    %5554 = vmatpush1.msra.mxu0 %v4318
    %5555 = vmatprep.subr.mxu0 %v4312
    %5556 = vmatpush1.msra.mxu0 %v4311
    %5557 = vmatprep.subr.mxu0 %v4305
    %5558 = vmatpush1.msra.mxu0 %v4304
    %5559 = vmatprep.subr.mxu0 %v4298
    %5560 = vmatpush1.msra.mxu0 %v4297
    %5561 = vmatprep.subr.mxu0 %v4515
    %5562 = vmatpush2.msra.mxu0 %v4514
    %5563 = vmatprep.subr.mxu0 %v4508
    %5564 = vmatpush2.msra.mxu0 %v4507
    %5565 = vmatprep.subr.mxu0 %v4501
    %5566 = vmatpush2.msra.mxu0 %v4500
    %5567 = vmatprep.subr.mxu0 %v4494
    %5568 = vmatpush2.msra.mxu0 %v4493
    %5569 = vmatprep.subr.mxu0 %v4487
    %5570 = vmatpush2.msra.mxu0 %v4486
    %5571 = vmatprep.subr.mxu0 %v4480
    %5572 = vmatpush2.msra.mxu0 %v4479
    %5573 = vmatprep.subr.mxu0 %v4473
    %5574 = vmatpush2.msra.mxu0 %v4472
    %5575 = vmatprep.subr.mxu0 %v4466
    %5576 = vmatpush2.msra.mxu0 %v4465
    %5577 = vmatprep.subr.mxu0 %v4459
    %5578 = vmatpush2.msra.mxu0 %v4458
    %5579 = vmatprep.subr.mxu0 %v4452
    %5580 = vmatpush2.msra.mxu0 %v4451
    %5581 = vmatprep.subr.mxu0 %v4445
    %5582 = vmatpush2.msra.mxu0 %v4444
    %5583 = vmatprep.subr.mxu0 %v4438
    %5584 = vmatpush2.msra.mxu0 %v4437
    %5585 = vmatprep.subr.mxu0 %v4431
    %5586 = vmatpush2.msra.mxu0 %v4430
    %5587 = vmatprep.subr.mxu0 %v4424
    %5588 = vmatpush2.msra.mxu0 %v4423
    %5589 = vmatprep.subr.mxu0 %v4417
    %5590 = vmatpush2.msra.mxu0 %v4416
    %5591 = vmatprep.subr.mxu0 %v4410
    %5592 = vmatpush2.msra.mxu0 %v4409
    %5593 = vmatprep.mubr.f32.mxu0 %v4065
    %5594 = vmatmul.mubr.f32.gmra.mxu0 %v4064
    %v5595 = vpop.f32.mrf.mxu0
    %v5596 = vadd.f32 %v5525, %v5595
    %v5597 = vpop.f32.mrf.mxu0
    %v5598 = vadd.f32 %v5527, %v5597
    %5599 = vdwg.mxu0
    %5600 = vmatprep.subr.mxu0 %v4627
    %5601 = vmatpush1.msra.mxu0 %v4626
    %5602 = vmatprep.subr.mxu0 %v4620
    %5603 = vmatpush1.msra.mxu0 %v4619
    %5604 = vmatprep.subr.mxu0 %v4613
    %5605 = vmatpush1.msra.mxu0 %v4612
    %5606 = vmatprep.subr.mxu0 %v4606
    %5607 = vmatpush1.msra.mxu0 %v4605
    %5608 = vmatprep.subr.mxu0 %v4599
    %5609 = vmatpush1.msra.mxu0 %v4598
    %5610 = vmatprep.subr.mxu0 %v4592
    %5611 = vmatpush1.msra.mxu0 %v4591
    %5612 = vmatprep.subr.mxu0 %v4585
    %5613 = vmatpush1.msra.mxu0 %v4584
    %5614 = vmatprep.subr.mxu0 %v4578
    %5615 = vmatpush1.msra.mxu0 %v4577
    %5616 = vmatprep.subr.mxu0 %v4571
    %5617 = vmatpush1.msra.mxu0 %v4570
    %5618 = vmatprep.subr.mxu0 %v4564
    %5619 = vmatpush1.msra.mxu0 %v4563
    %5620 = vmatprep.subr.mxu0 %v4557
    %5621 = vmatpush1.msra.mxu0 %v4556
    %5622 = vmatprep.subr.mxu0 %v4550
    %5623 = vmatpush1.msra.mxu0 %v4549
    %5624 = vmatprep.subr.mxu0 %v4543
    %5625 = vmatpush1.msra.mxu0 %v4542
    %5626 = vmatprep.subr.mxu0 %v4536
    %5627 = vmatpush1.msra.mxu0 %v4535
    %5628 = vmatprep.subr.mxu0 %v4529
    %5629 = vmatpush1.msra.mxu0 %v4528
    %5630 = vmatprep.subr.mxu0 %v4522
    %5631 = vmatpush1.msra.mxu0 %v4521
    %5632 = vmatprep.subr.mxu0 %v4739
    %5633 = vmatpush2.msra.mxu0 %v4738
    %5634 = vmatprep.subr.mxu0 %v4732
    %5635 = vmatpush2.msra.mxu0 %v4731
    %5636 = vmatprep.subr.mxu0 %v4725
    %5637 = vmatpush2.msra.mxu0 %v4724
    %5638 = vmatprep.subr.mxu0 %v4718
    %5639 = vmatpush2.msra.mxu0 %v4717
    %5640 = vmatprep.subr.mxu0 %v4711
    %5641 = vmatpush2.msra.mxu0 %v4710
    %5642 = vmatprep.subr.mxu0 %v4704
    %5643 = vmatpush2.msra.mxu0 %v4703
    %5644 = vmatprep.subr.mxu0 %v4697
    %5645 = vmatpush2.msra.mxu0 %v4696
    %5646 = vmatprep.subr.mxu0 %v4690
    %5647 = vmatpush2.msra.mxu0 %v4689
    %5648 = vmatprep.subr.mxu0 %v4683
    %5649 = vmatpush2.msra.mxu0 %v4682
    %5650 = vmatprep.subr.mxu0 %v4676
    %5651 = vmatpush2.msra.mxu0 %v4675
    %5652 = vmatprep.subr.mxu0 %v4669
    %5653 = vmatpush2.msra.mxu0 %v4668
    %5654 = vmatprep.subr.mxu0 %v4662
    %5655 = vmatpush2.msra.mxu0 %v4661
    %5656 = vmatprep.subr.mxu0 %v4655
    %5657 = vmatpush2.msra.mxu0 %v4654
    %5658 = vmatprep.subr.mxu0 %v4648
    %5659 = vmatpush2.msra.mxu0 %v4647
    %5660 = vmatprep.subr.mxu0 %v4641
    %5661 = vmatpush2.msra.mxu0 %v4640
    %5662 = vmatprep.subr.mxu0 %v4634
    %5663 = vmatpush2.msra.mxu0 %v4633
    %5664 = vmatprep.mubr.f32.mxu0 %v4067
    %5665 = vmatmul.mubr.f32.gmra.mxu0 %v4066
    %v5666 = vpop.f32.mrf.mxu0
    %v5667 = vadd.f32 %v5596, %v5666
    %v5668 = vpop.f32.mrf.mxu0
    %v5669 = vadd.f32 %v5598, %v5668
    %5670 = vdwg.mxu0
    %5671 = vmatprep.subr.mxu0 %v4851
    %5672 = vmatpush1.msra.mxu0 %v4850
    %5673 = vmatprep.subr.mxu0 %v4844
    %5674 = vmatpush1.msra.mxu0 %v4843
    %5675 = vmatprep.subr.mxu0 %v4837
    %5676 = vmatpush1.msra.mxu0 %v4836
    %5677 = vmatprep.subr.mxu0 %v4830
    %5678 = vmatpush1.msra.mxu0 %v4829
    %5679 = vmatprep.subr.mxu0 %v4823
    %5680 = vmatpush1.msra.mxu0 %v4822
    %5681 = vmatprep.subr.mxu0 %v4816
    %5682 = vmatpush1.msra.mxu0 %v4815
    %5683 = vmatprep.subr.mxu0 %v4809
    %5684 = vmatpush1.msra.mxu0 %v4808
    %5685 = vmatprep.subr.mxu0 %v4802
    %5686 = vmatpush1.msra.mxu0 %v4801
    %5687 = vmatprep.subr.mxu0 %v4795
    %5688 = vmatpush1.msra.mxu0 %v4794
    %5689 = vmatprep.subr.mxu0 %v4788
    %5690 = vmatpush1.msra.mxu0 %v4787
    %5691 = vmatprep.subr.mxu0 %v4781
    %5692 = vmatpush1.msra.mxu0 %v4780
    %5693 = vmatprep.subr.mxu0 %v4774
    %5694 = vmatpush1.msra.mxu0 %v4773
    %5695 = vmatprep.subr.mxu0 %v4767
    %5696 = vmatpush1.msra.mxu0 %v4766
    %5697 = vmatprep.subr.mxu0 %v4760
    %5698 = vmatpush1.msra.mxu0 %v4759
    %5699 = vmatprep.subr.mxu0 %v4753
    %5700 = vmatpush1.msra.mxu0 %v4752
    %5701 = vmatprep.subr.mxu0 %v4746
    %5702 = vmatpush1.msra.mxu0 %v4745
    %5703 = vmatprep.subr.mxu0 0.0
    %5704 = vmatpush2.msra.mxu0 0.0
    %5705 = vmatprep.subr.mxu0 0.0
    %5706 = vmatpush2.msra.mxu0 0.0
    %5707 = vmatprep.subr.mxu0 0.0
    %5708 = vmatpush2.msra.mxu0 0.0
    %5709 = vmatprep.subr.mxu0 0.0
    %5710 = vmatpush2.msra.mxu0 0.0
    %5711 = vmatprep.subr.mxu0 0.0
    %5712 = vmatpush2.msra.mxu0 0.0
    %5713 = vmatprep.subr.mxu0 0.0
    %5714 = vmatpush2.msra.mxu0 0.0
    %5715 = vmatprep.subr.mxu0 0.0
    %5716 = vmatpush2.msra.mxu0 0.0
    %5717 = vmatprep.subr.mxu0 0.0
    %5718 = vmatpush2.msra.mxu0 0.0
    %5719 = vmatprep.subr.mxu0 0.0
    %5720 = vmatpush2.msra.mxu0 0.0
    %5721 = vmatprep.subr.mxu0 0.0
    %5722 = vmatpush2.msra.mxu0 0.0
    %5723 = vmatprep.subr.mxu0 0.0
    %5724 = vmatpush2.msra.mxu0 0.0
    %5725 = vmatprep.subr.mxu0 0.0
    %5726 = vmatpush2.msra.mxu0 0.0
    %5727 = vmatprep.subr.mxu0 0.0
    %5728 = vmatpush2.msra.mxu0 0.0
    %5729 = vmatprep.subr.mxu0 0.0
    %5730 = vmatpush2.msra.mxu0 0.0
    %5731 = vmatprep.subr.mxu0 0.0
    %5732 = vmatpush2.msra.mxu0 0.0
    %5733 = vmatprep.subr.mxu0 0.0
    %5734 = vmatpush2.msra.mxu0 0.0
    %5735 = vmatprep.mubr.f32.mxu0 0.0
    %5736 = vmatmul.mubr.f32.gmra.mxu0 %v4068
    %v5737 = vpop.f32.mrf.mxu0
    %v5738 = vadd.f32 %v5667, %v5737
    %v5739 = vpop.f32.mrf.mxu0
    %v5740 = vadd.f32 %v5669, %v5739
    %5741 = vdwg.mxu0
    %5742 = vmatprep.subr.mxu0 0.0
    %5743 = vmatpush1.msra.mxu0 %v4180
    %5744 = vmatprep.subr.mxu0 0.0
    %5745 = vmatpush1.msra.mxu0 %v4173
    %5746 = vmatprep.subr.mxu0 0.0
    %5747 = vmatpush1.msra.mxu0 %v4166
    %5748 = vmatprep.subr.mxu0 0.0
    %5749 = vmatpush1.msra.mxu0 %v4159
    %5750 = vmatprep.subr.mxu0 0.0
    %5751 = vmatpush1.msra.mxu0 %v4152
    %5752 = vmatprep.subr.mxu0 0.0
    %5753 = vmatpush1.msra.mxu0 %v4145
    %5754 = vmatprep.subr.mxu0 0.0
    %5755 = vmatpush1.msra.mxu0 %v4138
    %5756 = vmatprep.subr.mxu0 0.0
    %5757 = vmatpush1.msra.mxu0 %v4131
    %5758 = vmatprep.subr.mxu0 0.0
    %5759 = vmatpush1.msra.mxu0 %v4124
    %5760 = vmatprep.subr.mxu0 0.0
    %5761 = vmatpush1.msra.mxu0 %v4117
    %5762 = vmatprep.subr.mxu0 0.0
    %5763 = vmatpush1.msra.mxu0 %v4110
    %5764 = vmatprep.subr.mxu0 0.0
    %5765 = vmatpush1.msra.mxu0 %v4103
    %5766 = vmatprep.subr.mxu0 0.0
    %5767 = vmatpush1.msra.mxu0 %v4096
    %5768 = vmatprep.subr.mxu0 0.0
    %5769 = vmatpush1.msra.mxu0 %v4089
    %5770 = vmatprep.subr.mxu0 0.0
    %5771 = vmatpush1.msra.mxu0 %v4082
    %5772 = vmatprep.subr.mxu0 0.0
    %5773 = vmatpush1.msra.mxu0 %v4075
    %5774 = vmatprep.subr.mxu0 0.0
    %5775 = vmatpush2.msra.mxu0 %v4292
    %5776 = vmatprep.subr.mxu0 0.0
    %5777 = vmatpush2.msra.mxu0 %v4285
    %5778 = vmatprep.subr.mxu0 0.0
    %5779 = vmatpush2.msra.mxu0 %v4278
    %5780 = vmatprep.subr.mxu0 0.0
    %5781 = vmatpush2.msra.mxu0 %v4271
    %5782 = vmatprep.subr.mxu0 0.0
    %5783 = vmatpush2.msra.mxu0 %v4264
    %5784 = vmatprep.subr.mxu0 0.0
    %5785 = vmatpush2.msra.mxu0 %v4257
    %5786 = vmatprep.subr.mxu0 0.0
    %5787 = vmatpush2.msra.mxu0 %v4250
    %5788 = vmatprep.subr.mxu0 0.0
    %5789 = vmatpush2.msra.mxu0 %v4243
    %5790 = vmatprep.subr.mxu0 0.0
    %5791 = vmatpush2.msra.mxu0 %v4236
    %5792 = vmatprep.subr.mxu0 0.0
    %5793 = vmatpush2.msra.mxu0 %v4229
    %5794 = vmatprep.subr.mxu0 0.0
    %5795 = vmatpush2.msra.mxu0 %v4222
    %5796 = vmatprep.subr.mxu0 0.0
    %5797 = vmatpush2.msra.mxu0 %v4215
    %5798 = vmatprep.subr.mxu0 0.0
    %5799 = vmatpush2.msra.mxu0 %v4208
    %5800 = vmatprep.subr.mxu0 0.0
    %5801 = vmatpush2.msra.mxu0 %v4201
    %5802 = vmatprep.subr.mxu0 0.0
    %5803 = vmatpush2.msra.mxu0 %v4194
    %5804 = vmatprep.subr.mxu0 0.0
    %5805 = vmatpush2.msra.mxu0 %v4187
    %5806 = vmatprep.mubr.f32.mxu0 %v4063
    %5807 = vmatmul.mubr.f32.gmra.mxu0 %v4062
    %v5808 = vpop.f32.mrf.mxu0
    %v5809 = vadd.f32 %v4882, %v5808
    %v5810 = vpop.f32.mrf.mxu0
    %5811 = vdwg.mxu0
    %5812 = vmatprep.subr.mxu0 0.0
    %5813 = vmatpush1.msra.mxu0 %v4404
    %5814 = vmatprep.subr.mxu0 0.0
    %5815 = vmatpush1.msra.mxu0 %v4397
    %5816 = vmatprep.subr.mxu0 0.0
    %5817 = vmatpush1.msra.mxu0 %v4390
    %5818 = vmatprep.subr.mxu0 0.0
    %5819 = vmatpush1.msra.mxu0 %v4383
    %5820 = vmatprep.subr.mxu0 0.0
    %5821 = vmatpush1.msra.mxu0 %v4376
    %5822 = vmatprep.subr.mxu0 0.0
    %5823 = vmatpush1.msra.mxu0 %v4369
    %5824 = vmatprep.subr.mxu0 0.0
    %5825 = vmatpush1.msra.mxu0 %v4362
    %5826 = vmatprep.subr.mxu0 0.0
    %5827 = vmatpush1.msra.mxu0 %v4355
    %5828 = vmatprep.subr.mxu0 0.0
    %5829 = vmatpush1.msra.mxu0 %v4348
    %5830 = vmatprep.subr.mxu0 0.0
    %5831 = vmatpush1.msra.mxu0 %v4341
    %5832 = vmatprep.subr.mxu0 0.0
    %5833 = vmatpush1.msra.mxu0 %v4334
    %5834 = vmatprep.subr.mxu0 0.0
    %5835 = vmatpush1.msra.mxu0 %v4327
    %5836 = vmatprep.subr.mxu0 0.0
    %5837 = vmatpush1.msra.mxu0 %v4320
    %5838 = vmatprep.subr.mxu0 0.0
    %5839 = vmatpush1.msra.mxu0 %v4313
    %5840 = vmatprep.subr.mxu0 0.0
    %5841 = vmatpush1.msra.mxu0 %v4306
    %5842 = vmatprep.subr.mxu0 0.0
    %5843 = vmatpush1.msra.mxu0 %v4299
    %5844 = vmatprep.subr.mxu0 0.0
    %5845 = vmatpush2.msra.mxu0 %v4516
    %5846 = vmatprep.subr.mxu0 0.0
    %5847 = vmatpush2.msra.mxu0 %v4509
    %5848 = vmatprep.subr.mxu0 0.0
    %5849 = vmatpush2.msra.mxu0 %v4502
    %5850 = vmatprep.subr.mxu0 0.0
    %5851 = vmatpush2.msra.mxu0 %v4495
    %5852 = vmatprep.subr.mxu0 0.0
    %5853 = vmatpush2.msra.mxu0 %v4488
    %5854 = vmatprep.subr.mxu0 0.0
    %5855 = vmatpush2.msra.mxu0 %v4481
    %5856 = vmatprep.subr.mxu0 0.0
    %5857 = vmatpush2.msra.mxu0 %v4474
    %5858 = vmatprep.subr.mxu0 0.0
    %5859 = vmatpush2.msra.mxu0 %v4467
    %5860 = vmatprep.subr.mxu0 0.0
    %5861 = vmatpush2.msra.mxu0 %v4460
    %5862 = vmatprep.subr.mxu0 0.0
    %5863 = vmatpush2.msra.mxu0 %v4453
    %5864 = vmatprep.subr.mxu0 0.0
    %5865 = vmatpush2.msra.mxu0 %v4446
    %5866 = vmatprep.subr.mxu0 0.0
    %5867 = vmatpush2.msra.mxu0 %v4439
    %5868 = vmatprep.subr.mxu0 0.0
    %5869 = vmatpush2.msra.mxu0 %v4432
    %5870 = vmatprep.subr.mxu0 0.0
    %5871 = vmatpush2.msra.mxu0 %v4425
    %5872 = vmatprep.subr.mxu0 0.0
    %5873 = vmatpush2.msra.mxu0 %v4418
    %5874 = vmatprep.subr.mxu0 0.0
    %5875 = vmatpush2.msra.mxu0 %v4411
    %5876 = vmatprep.mubr.f32.mxu0 %v4065
    %5877 = vmatmul.mubr.f32.gmra.mxu0 %v4064
    %v5878 = vpop.f32.mrf.mxu0
    %v5879 = vadd.f32 %v5809, %v5878
    %v5880 = vpop.f32.mrf.mxu0
    %5881 = vdwg.mxu0
    %5882 = vmatprep.subr.mxu0 0.0
    %5883 = vmatpush1.msra.mxu0 %v4628
    %5884 = vmatprep.subr.mxu0 0.0
    %5885 = vmatpush1.msra.mxu0 %v4621
    %5886 = vmatprep.subr.mxu0 0.0
    %5887 = vmatpush1.msra.mxu0 %v4614
    %5888 = vmatprep.subr.mxu0 0.0
    %5889 = vmatpush1.msra.mxu0 %v4607
    %5890 = vmatprep.subr.mxu0 0.0
    %5891 = vmatpush1.msra.mxu0 %v4600
    %5892 = vmatprep.subr.mxu0 0.0
    %5893 = vmatpush1.msra.mxu0 %v4593
    %5894 = vmatprep.subr.mxu0 0.0
    %5895 = vmatpush1.msra.mxu0 %v4586
    %5896 = vmatprep.subr.mxu0 0.0
    %5897 = vmatpush1.msra.mxu0 %v4579
    %5898 = vmatprep.subr.mxu0 0.0
    %5899 = vmatpush1.msra.mxu0 %v4572
    %5900 = vmatprep.subr.mxu0 0.0
    %5901 = vmatpush1.msra.mxu0 %v4565
    %5902 = vmatprep.subr.mxu0 0.0
    %5903 = vmatpush1.msra.mxu0 %v4558
    %5904 = vmatprep.subr.mxu0 0.0
    %5905 = vmatpush1.msra.mxu0 %v4551
    %5906 = vmatprep.subr.mxu0 0.0
    %5907 = vmatpush1.msra.mxu0 %v4544
    %5908 = vmatprep.subr.mxu0 0.0
    %5909 = vmatpush1.msra.mxu0 %v4537
    %5910 = vmatprep.subr.mxu0 0.0
    %5911 = vmatpush1.msra.mxu0 %v4530
    %5912 = vmatprep.subr.mxu0 0.0
    %5913 = vmatpush1.msra.mxu0 %v4523
    %5914 = vmatprep.subr.mxu0 0.0
    %5915 = vmatpush2.msra.mxu0 %v4740
    %5916 = vmatprep.subr.mxu0 0.0
    %5917 = vmatpush2.msra.mxu0 %v4733
    %5918 = vmatprep.subr.mxu0 0.0
    %5919 = vmatpush2.msra.mxu0 %v4726
    %5920 = vmatprep.subr.mxu0 0.0
    %5921 = vmatpush2.msra.mxu0 %v4719
    %5922 = vmatprep.subr.mxu0 0.0
    %5923 = vmatpush2.msra.mxu0 %v4712
    %5924 = vmatprep.subr.mxu0 0.0
    %5925 = vmatpush2.msra.mxu0 %v4705
    %5926 = vmatprep.subr.mxu0 0.0
    %5927 = vmatpush2.msra.mxu0 %v4698
    %5928 = vmatprep.subr.mxu0 0.0
    %5929 = vmatpush2.msra.mxu0 %v4691
    %5930 = vmatprep.subr.mxu0 0.0
    %5931 = vmatpush2.msra.mxu0 %v4684
    %5932 = vmatprep.subr.mxu0 0.0
    %5933 = vmatpush2.msra.mxu0 %v4677
    %5934 = vmatprep.subr.mxu0 0.0
    %5935 = vmatpush2.msra.mxu0 %v4670
    %5936 = vmatprep.subr.mxu0 0.0
    %5937 = vmatpush2.msra.mxu0 %v4663
    %5938 = vmatprep.subr.mxu0 0.0
    %5939 = vmatpush2.msra.mxu0 %v4656
    %5940 = vmatprep.subr.mxu0 0.0
    %5941 = vmatpush2.msra.mxu0 %v4649
    %5942 = vmatprep.subr.mxu0 0.0
    %5943 = vmatpush2.msra.mxu0 %v4642
    %5944 = vmatprep.subr.mxu0 0.0
    %5945 = vmatpush2.msra.mxu0 %v4635
    %5946 = vmatprep.mubr.f32.mxu0 %v4067
    %5947 = vmatmul.mubr.f32.gmra.mxu0 %v4066
    %v5948 = vpop.f32.mrf.mxu0
    %v5949 = vadd.f32 %v5879, %v5948
    %v5950 = vpop.f32.mrf.mxu0
    %5951 = vdwg.mxu0
    %5952 = vmatprep.subr.mxu0 0.0
    %5953 = vmatpush1.msra.mxu0 %v4852
    %5954 = vmatprep.subr.mxu0 0.0
    %5955 = vmatpush1.msra.mxu0 %v4845
    %5956 = vmatprep.subr.mxu0 0.0
    %5957 = vmatpush1.msra.mxu0 %v4838
    %5958 = vmatprep.subr.mxu0 0.0
    %5959 = vmatpush1.msra.mxu0 %v4831
    %5960 = vmatprep.subr.mxu0 0.0
    %5961 = vmatpush1.msra.mxu0 %v4824
    %5962 = vmatprep.subr.mxu0 0.0
    %5963 = vmatpush1.msra.mxu0 %v4817
    %5964 = vmatprep.subr.mxu0 0.0
    %5965 = vmatpush1.msra.mxu0 %v4810
    %5966 = vmatprep.subr.mxu0 0.0
    %5967 = vmatpush1.msra.mxu0 %v4803
    %5968 = vmatprep.subr.mxu0 0.0
    %5969 = vmatpush1.msra.mxu0 %v4796
    %5970 = vmatprep.subr.mxu0 0.0
    %5971 = vmatpush1.msra.mxu0 %v4789
    %5972 = vmatprep.subr.mxu0 0.0
    %5973 = vmatpush1.msra.mxu0 %v4782
    %5974 = vmatprep.subr.mxu0 0.0
    %5975 = vmatpush1.msra.mxu0 %v4775
    %5976 = vmatprep.subr.mxu0 0.0
    %5977 = vmatpush1.msra.mxu0 %v4768
    %5978 = vmatprep.subr.mxu0 0.0
    %5979 = vmatpush1.msra.mxu0 %v4761
    %5980 = vmatprep.subr.mxu0 0.0
    %5981 = vmatpush1.msra.mxu0 %v4754
    %5982 = vmatprep.subr.mxu0 0.0
    %5983 = vmatpush1.msra.mxu0 %v4747
    %5984 = vmatprep.subr.mxu0 0.0
    %5985 = vmatpush2.msra.mxu0 0.0
    %5986 = vmatprep.subr.mxu0 0.0
    %5987 = vmatpush2.msra.mxu0 0.0
    %5988 = vmatprep.subr.mxu0 0.0
    %5989 = vmatpush2.msra.mxu0 0.0
    %5990 = vmatprep.subr.mxu0 0.0
    %5991 = vmatpush2.msra.mxu0 0.0
    %5992 = vmatprep.subr.mxu0 0.0
    %5993 = vmatpush2.msra.mxu0 0.0
    %5994 = vmatprep.subr.mxu0 0.0
    %5995 = vmatpush2.msra.mxu0 0.0
    %5996 = vmatprep.subr.mxu0 0.0
    %5997 = vmatpush2.msra.mxu0 0.0
    %5998 = vmatprep.subr.mxu0 0.0
    %5999 = vmatpush2.msra.mxu0 0.0
    %6000 = vmatprep.subr.mxu0 0.0
    %6001 = vmatpush2.msra.mxu0 0.0
    %6002 = vmatprep.subr.mxu0 0.0
    %6003 = vmatpush2.msra.mxu0 0.0
    %6004 = vmatprep.subr.mxu0 0.0
    %6005 = vmatpush2.msra.mxu0 0.0
    %6006 = vmatprep.subr.mxu0 0.0
    %6007 = vmatpush2.msra.mxu0 0.0
    %6008 = vmatprep.subr.mxu0 0.0
    %6009 = vmatpush2.msra.mxu0 0.0
    %6010 = vmatprep.subr.mxu0 0.0
    %6011 = vmatpush2.msra.mxu0 0.0
    %6012 = vmatprep.subr.mxu0 0.0
    %6013 = vmatpush2.msra.mxu0 0.0
    %6014 = vmatprep.subr.mxu0 0.0
    %6015 = vmatpush2.msra.mxu0 0.0
    %6016 = vmatprep.mubr.f32.mxu0 0.0
    %6017 = vmatmul.mubr.f32.gmra.mxu0 %v4068
    %v6018 = vpop.f32.mrf.mxu0
    %v6019 = vadd.f32 %v5949, %v6018
    %v6020 = vpop.f32.mrf.mxu0
    %6021 = vdwg.mxu0
    %v6022 = vtanh.pop %v5170
    %v6023 = vtanh.pop %v5172
    %v6024 = vtanh.pop %v5454
    %v6025 = vtanh.pop %v5456
    %v6026 = vtanh.pop %v5738
    %v6027 = vtanh.pop %v5740
    %v6028 = vtanh.pop %v6019
    %6029 = vst [vmem:[#allocation14] sm:$0xff] %v6022
    %6030 = vst [vmem:[#allocation14 + $0x8] sm:$0xff] %v6023
    %6031 = vst [vmem:[#allocation14 + $0x10] sm:$0xff] %v6024
    %6032 = vst [vmem:[#allocation14 + $0x18] sm:$0xff] %v6025
    %6033 = vst [vmem:[#allocation14 + $0x20] sm:$0xff] %v6026
    %6034 = vst [vmem:[#allocation14 + $0x28] sm:$0xff] %v6027
    %6035 = vst [vmem:[#allocation14 + $0x30] sm:$0xff] %v6028
    // Predicated region
    $region58: #{tpu_custom_call.1} parent=1 // pred_check
      _
    $region59: #{tpu_custom_call.1} parent=1 // pred_check_branch
      %6037 = sbr.rel (0) target = $region61
    $region60: #{tpu_custom_call.1} parent=1 // pred_region
      %s6039 = ssub.s32 896, 896
      %6040 = vsyncadd [#allocation4], %s6039
      %s6042 = sshll.u32 [#allocation14], 4
      %s6043 = int_to_ptr.vmem [resolvable:$true] %s6042
      %6045 = dma.vmem_to_hbm [thread:$0]  %s6043, 896, %s7, [#allocation4]
    $region61: #{tpu_custom_call.1} parent=1 // pred_fallthru
      _
    // Predicated region
    $region62: #{tpu_custom_call.1} parent=1 // pred_check
      _
    $region63: #{tpu_custom_call.1} parent=1 // pred_check_branch
      %6047 = sbr.rel (0) target = $region65
    $region64: #{tpu_custom_call.1} parent=1 // pred_region
      %6048 = dma.done [#allocation4], 896
    $region65: #{tpu_custom_call.1} parent=1 // pred_fallthru
      _
    %6049 = vsyncpa [#allocation3], 1
    %6050 = vsyncpa [#allocation6], 1
    %6051 = vsyncpa [#allocation9], 1
    %6052 = vsyncpa [#allocation12], 1
    %6053 = vsyncpa [#allocation4], 1

</llo_original>
